<compile_context>
chip_gen: v5e
topology: v5e:2x2
jax: 0.10.0
libtpu: 0.0.40
codegen_flags: <defaults>
</compile_context>

<pallas_src>
from functools import partial

import jax
import jax.numpy as jnp
from jax.experimental import pallas as pl
from jax.experimental.pallas import tpu as pltpu

F32 = jnp.float32
BF16 = jnp.bfloat16
WEIGHT_A = 0.5  # SelfAttn.weight_a = nn.Parameter(torch.Tensor([0.5]))
LN_EPS = 1e-5


def _gelu(x):
    # exact (erf-based) GELU, matching torch.nn.GELU(approximate='none')
    return 0.5 * x * (1.0 + jax.lax.erf(x * 0.7071067811865476))


def _pick_tile_m(M, cin, cout, budget_bytes=16 * 1024 * 1024):
    """Pick an M-tile so double-buffered in/out tiles + weights stay well under
    the v7x-safe VMEM budget (64 MiB physical there, half of v5e/v6e)."""
    tm = 512
    while tm > 16:
        need = 2 * tm * cin * 4 + 2 * tm * cout * 4 + 2 * cin * cout * 2
        if need <= budget_bytes:
            break
        tm //= 2
    return min(tm, M)


# ----------------------------------------------------------------------------
# Kernel 1: (optional LayerNorm prologue) + matmul (bf16 MXU) + per-channel
#           affine (conv-bias/BatchNorm folded) + optional GELU.  Tiled over M.
# ----------------------------------------------------------------------------
def _ln_matmul_kernel(*refs, has_ln, apply_gelu, ln_eps):
    if has_ln:
        x_ref, g_ref, b_ref, w_ref, scale_ref, shift_ref, o_ref = refs
    else:
        x_ref, w_ref, scale_ref, shift_ref, o_ref = refs
        g_ref = b_ref = None
    x = x_ref[...].astype(F32)
    if has_ln:
        mu = jnp.mean(x, axis=-1, keepdims=True)
        xc = x - mu
        var = jnp.mean(xc * xc, axis=-1, keepdims=True)
        x = (xc * jax.lax.rsqrt(var + ln_eps)) * g_ref[...] + b_ref[...]
    y = jnp.dot(x.astype(BF16), w_ref[...], preferred_element_type=F32)
    y = y * scale_ref[...] + shift_ref[...]
    if apply_gelu:
        y = _gelu(y)
    o_ref[...] = y.astype(o_ref.dtype)


def ln_matmul_affine(x, w, scale, shift, ln=None, apply_gelu=False, out_dtype=F32):
    """y = gelu?((LN?(x) @ w) * scale + shift); x:(M,Cin), w:(Cin,Cout)."""
    M, Cin = x.shape
    Cout = w.shape[1]
    tm = _pick_tile_m(M, Cin, Cout)
    grid = (pl.cdiv(M, tm),)
    args = [x]
    in_specs = [pl.BlockSpec((tm, Cin), lambda i: (i, 0))]
    if ln is not None:
        g, b = ln
        args += [g.reshape(1, Cin), b.reshape(1, Cin)]
        in_specs += [pl.BlockSpec((1, Cin), lambda i: (0, 0)),
                     pl.BlockSpec((1, Cin), lambda i: (0, 0))]
    args += [w.astype(BF16), scale.reshape(1, Cout), shift.reshape(1, Cout)]
    in_specs += [pl.BlockSpec((Cin, Cout), lambda i: (0, 0)),
                 pl.BlockSpec((1, Cout), lambda i: (0, 0)),
                 pl.BlockSpec((1, Cout), lambda i: (0, 0))]
    return pl.pallas_call(
        partial(_ln_matmul_kernel, has_ln=ln is not None,
                apply_gelu=apply_gelu, ln_eps=LN_EPS),
        out_shape=jax.ShapeDtypeStruct((M, Cout), out_dtype),
        grid=grid,
        in_specs=in_specs,
        out_specs=pl.BlockSpec((tm, Cout), lambda i: (i, 0)),
        compiler_params=pltpu.CompilerParams(dimension_semantics=("parallel",)),
    )(*args)


# ----------------------------------------------------------------------------
# Kernel 2: depthwise 3x3 "same" conv.  Halo is built in a VMEM scratch slab
#           (no HBM-padded copy).  Per-channel affine epilogue, optional GELU,
#           optional residual add.  Grid over batch, "parallel".
# ----------------------------------------------------------------------------
def _dwconv_kernel(*refs, H, W, apply_gelu, has_res):
    x_ref, w_ref, scale_ref, shift_ref = refs[:4]
    res_ref = refs[4] if has_res else None
    o_ref = refs[-2]
    xpad = refs[-1]                              # VMEM scratch (H+2, W+2, C)

    xpad[...] = jnp.zeros_like(xpad)             # zero halo (cheap, in VMEM)
    xpad[1:H + 1, 1:W + 1, :] = x_ref[0].astype(F32)
    xp = xpad[...]                               # (H+2, W+2, C)
    w = w_ref[...].astype(F32)                   # (9, C), index = dy*3 + dx
    C = xp.shape[-1]
    acc = jnp.zeros((H, W, C), F32)
    k = 0
    for dy in range(3):
        for dx in range(3):
            acc = acc + xp[dy:dy + H, dx:dx + W, :] * w[k]
            k += 1
    y = acc * scale_ref[...] + shift_ref[...]
    if apply_gelu:
        y = _gelu(y)
    if has_res:
        y = y + res_ref[0].astype(F32)
    o_ref[0] = y.astype(o_ref.dtype)


def depthwise_conv3x3(x, w33c, scale, shift, residual=None, apply_gelu=False,
                      out_dtype=F32):
    """x:(B,H,W,C) NHWC; w33c:(3,3,C); zero 'same' padding."""
    B, H, W, C = x.shape
    w9 = w33c.reshape(9, C)
    args = [x, w9, scale.reshape(1, C), shift.reshape(1, C)]
    in_specs = [pl.BlockSpec((1, H, W, C), lambda b: (b, 0, 0, 0)),
                pl.BlockSpec((9, C), lambda b: (0, 0)),
                pl.BlockSpec((1, C), lambda b: (0, 0)),
                pl.BlockSpec((1, C), lambda b: (0, 0))]
    if residual is not None:
        args.append(residual)
        in_specs.append(pl.BlockSpec((1, H, W, C), lambda b: (b, 0, 0, 0)))
    return pl.pallas_call(
        partial(_dwconv_kernel, H=H, W=W, apply_gelu=apply_gelu,
                has_res=residual is not None),
        out_shape=jax.ShapeDtypeStruct((B, H, W, C), out_dtype),
        grid=(B,),
        in_specs=in_specs,
        out_specs=pl.BlockSpec((1, H, W, C), lambda b: (b, 0, 0, 0)),
        scratch_shapes=[pltpu.VMEM((H + 2, W + 2, C), F32)],
        compiler_params=pltpu.CompilerParams(dimension_semantics=("parallel",)),
    )(*args)


# ----------------------------------------------------------------------------
# Kernel 3: Partial_conv3 (dense 3x3 on first dim//4 channels, bias=False).
#           Per-tap MXU matmuls (im2col-style) instead of a VPU MAC loop.
# ----------------------------------------------------------------------------
def _pconv_kernel(x_ref, w_ref, o_ref, xpad, *, H, W, Cs):
    xpad[...] = jnp.zeros_like(xpad)
    xpad[1:H + 1, 1:W + 1, :] = x_ref[0].astype(F32)
    xp = xpad[...].astype(BF16)                  # (H+2, W+2, Cs)
    w = w_ref[...]                               # (9, Cs, Cs) bf16
    acc = jnp.zeros((H * W, Cs), F32)
    k = 0
    for dy in range(3):
        for dx in range(3):
            patch = xp[dy:dy + H, dx:dx + W, :].reshape(H * W, Cs)
            acc = acc + jnp.dot(patch, w[k], preferred_element_type=F32)
            k += 1
    o_ref[0] = acc.reshape(H, W, Cs).astype(o_ref.dtype)


def conv3x3_small(x, w33cc):
    B, H, W, Cs = x.shape
    w9 = w33cc.reshape(9, Cs, Cs).astype(BF16)
    return pl.pallas_call(
        partial(_pconv_kernel, H=H, W=W, Cs=Cs),
        out_shape=jax.ShapeDtypeStruct((B, H, W, Cs), F32),
        grid=(B,),
        in_specs=[pl.BlockSpec((1, H, W, Cs), lambda b: (b, 0, 0, 0)),
                  pl.BlockSpec((9, Cs, Cs), lambda b: (0, 0, 0))],
        out_specs=pl.BlockSpec((1, H, W, Cs), lambda b: (b, 0, 0, 0)),
        scratch_shapes=[pltpu.VMEM((H + 2, W + 2, Cs), F32)],
        compiler_params=pltpu.CompilerParams(dimension_semantics=("parallel",)),
    )(x, w9)


# ----------------------------------------------------------------------------
# Kernel 4: fused  x + SSA(LayerNorm1(x))  per batch element.
#   Single combined projection [wk | wv | wi] -> one MXU push produces k, v and
#   the softmax logits; softmax over the sequence; ctx = sum(softmax*k);
#   out = (v*ctx) @ wo + bo; residual add.
# ----------------------------------------------------------------------------
def _ssa_fused_kernel(x_ref, g_ref, b_ref, wc_ref, bc_ref, wo_ref, bo_ref,
                      o_ref, *, C, eps):
    x = x_ref[0].astype(F32)                                   # (N, C)
    mu = jnp.mean(x, axis=-1, keepdims=True)
    xc = x - mu
    var = jnp.mean(xc * xc, axis=-1, keepdims=True)
    xn = (xc * jax.lax.rsqrt(var + eps)) * g_ref[...] + b_ref[...]
    y = jnp.dot(xn.astype(BF16), wc_ref[...],
                preferred_element_type=F32) + bc_ref[...]      # (N, 2C+1)
    k = y[:, :C]
    v = y[:, C:2 * C]
    logits = y[:, 2 * C:2 * C + 1]                             # (N, 1)
    m = jnp.max(logits, axis=0, keepdims=True)
    e = jnp.exp(logits - m)
    sm = e * pl.reciprocal(jnp.sum(e, axis=0, keepdims=True), approx=True)
    ctx = jnp.sum(sm * k, axis=0, keepdims=True)               # (1, C)
    vc = v * ctx
    out = jnp.dot(vc.astype(BF16), wo_ref[...],
                  preferred_element_type=F32) + bo_ref[...]
    o_ref[0] = (x + out).astype(o_ref.dtype)


def ssa_fused(x_bnc, p):
    B, N, C = x_bnc.shape
    Cc = 2 * C + 1
    wc = jnp.concatenate([p['ssa_wk'], p['ssa_wv'], p['ssa_wi'].T],
                         axis=1).astype(BF16)                  # (C, 2C+1)
    bc = jnp.concatenate([p['ssa_bk'], p['ssa_bv'],
                          p['ssa_bi'].reshape(1)], axis=0).reshape(1, Cc)
    return pl.pallas_call(
        partial(_ssa_fused_kernel, C=C, eps=LN_EPS),
        out_shape=jax.ShapeDtypeStruct((B, N, C), F32),
        grid=(B,),
        in_specs=[pl.BlockSpec((1, N, C), lambda b: (b, 0, 0)),
                  pl.BlockSpec((1, C), lambda b: (0, 0)),
                  pl.BlockSpec((1, C), lambda b: (0, 0)),
                  pl.BlockSpec((C, Cc), lambda b: (0, 0)),
                  pl.BlockSpec((1, Cc), lambda b: (0, 0)),
                  pl.BlockSpec((C, C), lambda b: (0, 0)),
                  pl.BlockSpec((1, C), lambda b: (0, 0))],
        out_specs=pl.BlockSpec((1, N, C), lambda b: (b, 0, 0)),
        compiler_params=pltpu.CompilerParams(dimension_semantics=("parallel",)),
    )(x_bnc, p['ln1_g'].reshape(1, C), p['ln1_b'].reshape(1, C),
      wc, bc, p['ssa_wo'].astype(BF16), p['ssa_bo'].reshape(1, C))


# ----------------------------------------------------------------------------
# Kernel 5: Alpffn tail, per batch:  y = (h @ w3)*scale + shift  (conv3 + bn3)
#           then  x + (y + y.mean(seq)) * 0.5   (residual included).
# ----------------------------------------------------------------------------
def _ffn_tail_kernel(h_ref, w3_ref, scale_ref, shift_ref, xres_ref, o_ref):
    y = jnp.dot(h_ref[0].astype(BF16), w3_ref[...], preferred_element_type=F32)
    y = y * scale_ref[...] + shift_ref[...]
    m = jnp.mean(y, axis=0, keepdims=True)
    o_ref[0] = (xres_ref[0].astype(F32) + (y + m) * 0.5).astype(o_ref.dtype)


def ffn_tail(h_bnh, w3, scale, shift, xres_bnc):
    B, N, Hd = h_bnh.shape
    C = w3.shape[1]
    return pl.pallas_call(
        _ffn_tail_kernel,
        out_shape=jax.ShapeDtypeStruct((B, N, C), F32),
        grid=(B,),
        in_specs=[pl.BlockSpec((1, N, Hd), lambda b: (b, 0, 0)),
                  pl.BlockSpec((Hd, C), lambda b: (0, 0)),
                  pl.BlockSpec((1, C), lambda b: (0, 0)),
                  pl.BlockSpec((1, C), lambda b: (0, 0)),
                  pl.BlockSpec((1, N, C), lambda b: (b, 0, 0))],
        out_specs=pl.BlockSpec((1, N, C), lambda b: (b, 0, 0)),
        compiler_params=pltpu.CompilerParams(dimension_semantics=("parallel",)),
    )(h_bnh, w3.astype(BF16), scale.reshape(1, C), shift.reshape(1, C), xres_bnc)


# ----------------------------------------------------------------------------
# Kernel 6: cnn_mlp conv2 (1x1, no bias) + weighted branch fuse epilogue.
#           out = wa * x_transformer + (1-wa) * (h @ w2).   Tiled over M.
# ----------------------------------------------------------------------------
def _cnn_tail_kernel(h_ref, w2_ref, xt_ref, o_ref, *, wa):
    y = jnp.dot(h_ref[...].astype(BF16), w2_ref[...], preferred_element_type=F32)
    o_ref[...] = (wa * xt_ref[...].astype(F32)
                  + (1.0 - wa) * y).astype(o_ref.dtype)


def cnn_tail(h, w2, x_transformer, wa):
    M, Hd = h.shape
    C = w2.shape[1]
    tm = _pick_tile_m(M, Hd, C)
    return pl.pallas_call(
        partial(_cnn_tail_kernel, wa=float(wa)),
        out_shape=jax.ShapeDtypeStruct((M, C), F32),
        grid=(pl.cdiv(M, tm),),
        in_specs=[pl.BlockSpec((tm, Hd), lambda i: (i, 0)),
                  pl.BlockSpec((Hd, C), lambda i: (0, 0)),
                  pl.BlockSpec((tm, C), lambda i: (i, 0))],
        out_specs=pl.BlockSpec((tm, C), lambda i: (i, 0)),
        compiler_params=pltpu.CompilerParams(dimension_semantics=("parallel",)),
    )(h, w2.astype(BF16), x_transformer)


# ----------------------------------------------------------------------------
# Parameters (deterministic, synthetic) and BatchNorm folding helper.
# ----------------------------------------------------------------------------
def bn_fold(gamma, beta, mean, var, conv_bias=None, eps=1e-5):
    scale = gamma * jax.lax.rsqrt(var + eps)
    bias = jnp.zeros_like(mean) if conv_bias is None else conv_bias
    shift = (bias - mean) * scale + beta
    return scale, shift


def init_params(key, dim, hidden, cs):
    keys = iter(jax.random.split(key, 64))

    def n(shape, std=0.1):
        return std * jax.random.normal(next(keys), shape, F32)

    p = {}
    # SelfAttn.pos_embed: depthwise Conv2d(dim, dim, 3, padding=1, groups=dim)
    p['pos_w'] = n((3, 3, dim))
    p['pos_b'] = n((dim,))
    # LayerNorms
    p['ln1_g'] = 1.0 + n((dim,), 0.05); p['ln1_b'] = n((dim,), 0.05)
    p['ln2_g'] = 1.0 + n((dim,), 0.05); p['ln2_b'] = n((dim,), 0.05)
    # SSA linears (torch init: normal std=0.001, bias 0)
    p['ssa_wi'] = 1e-3 * jax.random.normal(next(keys), (1, dim), F32)
    p['ssa_bi'] = jnp.zeros((1, 1), F32)
    p['ssa_wk'] = 1e-3 * jax.random.normal(next(keys), (dim, dim), F32)
    p['ssa_bk'] = jnp.zeros((dim,), F32)
    p['ssa_wv'] = 1e-3 * jax.random.normal(next(keys), (dim, dim), F32)
    p['ssa_bv'] = jnp.zeros((dim,), F32)
    p['ssa_wo'] = 1e-3 * jax.random.normal(next(keys), (dim, dim), F32)
    p['ssa_bo'] = jnp.zeros((dim,), F32)
    # Alpffn convs
    p['ffn_w1'] = n((dim, hidden));     p['ffn_b1'] = n((hidden,))
    p['ffn_wdw'] = n((3, 3, hidden));   p['ffn_bdw'] = n((hidden,))
    p['ffn_w3'] = n((hidden, dim));     p['ffn_b3'] = n((dim,))
    # BatchNorms (eval mode: gamma, beta, running_mean, running_var)
    for name, c in (('bn1', hidden), ('bn2', hidden), ('bn3', dim), ('bnc', hidden)):
        p[f'{name}_g'] = 1.0 + n((c,), 0.05)
        p[f'{name}_b'] = n((c,), 0.05)
        p[f'{name}_m'] = n((c,), 0.05)
        p[f'{name}_v'] = 1.0 + jnp.abs(n((c,), 0.05))
    # Partial_conv3 (first dim//4 channels, 3x3, bias=False), layout (kh,kw,ci,co)
    p['pc_w'] = n((3, 3, cs, cs))
    # cnn_mlp: 1x1 (dim->hidden, no bias), BN, GELU, 1x1 (hidden->dim, no bias)
    p['cnn_w1'] = n((dim, hidden))
    p['cnn_w2'] = n((hidden, dim))
    return p


# ----------------------------------------------------------------------------
# GLUBlock forward (orchestration glue; all hot compute is in Pallas kernels)
# ----------------------------------------------------------------------------
def glu_block_forward(x_nchw, p):
    B, C, H, W = x_nchw.shape
    N = H * W
    assert H == W  # Alpffn reshapes N back to sqrt(N) x sqrt(N)
    x = jnp.transpose(x_nchw, (0, 2, 3, 1)).astype(F32)          # NHWC

    # -------- transformer branch --------
    # x + pos_embed(x): depthwise 3x3 conv (with bias) + residual (fused)
    xt = depthwise_conv3x3(x, p['pos_w'],
                           scale=jnp.ones((C,), F32), shift=p['pos_b'],
                           residual=x, apply_gelu=False)          # (B,H,W,C) f32
    xt_seq = xt.reshape(B, N, C)

    # x + SSA(LayerNorm1(x))  -- LN + projections + softmax + residual fused
    xt_seq = ssa_fused(xt_seq, p)

    # x + Alpffn(LayerNorm2(x))
    s1, sh1 = bn_fold(p['bn1_g'], p['bn1_b'], p['bn1_m'], p['bn1_v'], p['ffn_b1'])
    h = ln_matmul_affine(xt_seq.reshape(B * N, C), p['ffn_w1'], s1, sh1,
                         ln=(p['ln2_g'], p['ln2_b']), apply_gelu=True,
                         out_dtype=BF16)                          # LN2+conv1+bn1+gelu
    hidden = h.shape[-1]
    s2, sh2 = bn_fold(p['bn2_g'], p['bn2_b'], p['bn2_m'], p['bn2_v'], p['ffn_bdw'])
    h = depthwise_conv3x3(h.reshape(B, H, W, hidden), p['ffn_wdw'], s2, sh2,
                          apply_gelu=True, out_dtype=BF16)        # conv2+bn2+gelu
    s3, sh3 = bn_fold(p['bn3_g'], p['bn3_b'], p['bn3_m'], p['bn3_v'], p['ffn_b3'])
    # conv3+bn3 + (y + mean_seq(y))*0.5 + residual, all in one per-batch kernel
    xt_seq = ffn_tail(h.reshape(B, N, hidden), p['ffn_w3'], s3, sh3, xt_seq)
    x_transformer = xt_seq.reshape(B * N, C)

    # -------- CNN branch --------
    cs = C // 4
    x1 = conv3x3_small(x[..., :cs], p['pc_w'])                    # Partial_conv3
    x_cnn = jnp.concatenate([x1, x[..., cs:]], axis=-1)
    sc, shc = bn_fold(p['bnc_g'], p['bnc_b'], p['bnc_m'], p['bnc_v'], None)
    hc = ln_matmul_affine(x_cnn.reshape(B * N, C), p['cnn_w1'], sc, shc,
                          ln=None, apply_gelu=True, out_dtype=BF16)
    # conv2 (no bias) + weighted fuse with transformer branch (fused epilogue)
    fused = cnn_tail(hc, p['cnn_w2'], x_transformer, WEIGHT_A)

    return jnp.transpose(fused.reshape(B, H, W, C), (0, 3, 1, 2))  # back to NCHW


if __name__ == "__main__":
    B, dim, H, W = 2, 16, 8, 8       # H*W must be a perfect square (Alpffn reshape)
    mlp_ratio = 4.0
    hidden = int(dim * mlp_ratio)
    cs = dim // 4

    key = jax.random.PRNGKey(0)
    kx, kp = jax.random.split(key)
    x = jax.random.normal(kx, (B, dim, H, W), F32)
    params = init_params(kp, dim, hidden, cs)

    fwd = jax.jit(glu_block_forward)
    out = fwd(x, params)
    out = jax.block_until_ready(out)
    assert out.shape == (B, dim, H, W)
    assert bool(jnp.all(jnp.isfinite(out)))
    print("KERNEL_OK")
</pallas_src>

<mosaic_0001>
module attributes {stable_mosaic.version = 11 : i64} {
  func.func @_pconv_kernel(%arg0: i32, %arg1: memref<1x8x8x4xf32, #tpu.memory_space<vmem>>, %arg2: memref<9x4x4xbf16, #tpu.memory_space<vmem>>, %arg3: memref<1x8x8x4xf32, #tpu.memory_space<vmem>>, %arg4: memref<10x10x4xf32, #tpu.memory_space<vmem>>) attributes {dimension_semantics = [#tpu.dimension_semantics<parallel>], iteration_bounds = array<i64: 2>, scalar_prefetch = 0 : i64, scratch_operands = 1 : i64, tpu.core_type = #tpu.core_type<tc>, window_params = [{transform_indices = @transform_0, window_bounds = array<i64: 1, 8, 8, 4>}, {pipeline_mode = #tpu.pipeline_mode<synchronous>, transform_indices = @transform_1, window_bounds = array<i64: 9, 4, 4>}, {transform_indices = @transform_2, window_bounds = array<i64: 1, 8, 8, 4>}]} {
    %cst = arith.constant 0.000000e+00 : f32
    %0 = vector.broadcast %cst : f32 to vector<10x10x4xf32>
    %c0 = arith.constant 0 : index
    %c0_0 = arith.constant 0 : index
    %c0_1 = arith.constant 0 : index
    %1 = vector.load %arg4[%c0, %c0_0, %c0_1] : memref<10x10x4xf32, #tpu.memory_space<vmem>>, vector<10x10x4xf32>
    tpu.vector_store %arg4[%c0, %c0_0, %c0_1], %0 {strides = array<i32>} : memref<10x10x4xf32, #tpu.memory_space<vmem>>, vector<10x10x4xf32>,
    %c0_2 = arith.constant 0 : index
    %c0_3 = arith.constant 0 : index
    %c0_4 = arith.constant 0 : index
    %c0_5 = arith.constant 0 : index
    %2 = vector.load %arg1[%c0_2, %c0_3, %c0_4, %c0_5] : memref<1x8x8x4xf32, #tpu.memory_space<vmem>>, vector<1x8x8x4xf32>
    %3 = vector.shape_cast %2 : vector<1x8x8x4xf32> to vector<8x8x4xf32>
    %c1 = arith.constant 1 : index
    %c1_6 = arith.constant 1 : index
    %c0_7 = arith.constant 0 : index
    %4 = vector.load %arg4[%c1, %c1_6, %c0_7] : memref<10x10x4xf32, #tpu.memory_space<vmem>>, vector<8x8x4xf32>
    tpu.vector_store %arg4[%c1, %c1_6, %c0_7], %3 {strides = array<i32>} : memref<10x10x4xf32, #tpu.memory_space<vmem>>, vector<8x8x4xf32>,
    %c0_8 = arith.constant 0 : index
    %c0_9 = arith.constant 0 : index
    %c0_10 = arith.constant 0 : index
    %5 = vector.load %arg4[%c0_8, %c0_9, %c0_10] : memref<10x10x4xf32, #tpu.memory_space<vmem>>, vector<10x10x4xf32>
    %6 = arith.truncf %5 : vector<10x10x4xf32> to vector<10x10x4xbf16>
    %c0_11 = arith.constant 0 : index
    %c0_12 = arith.constant 0 : index
    %c0_13 = arith.constant 0 : index
    %7 = vector.load %arg2[%c0_11, %c0_12, %c0_13] : memref<9x4x4xbf16, #tpu.memory_space<vmem>>, vector<9x4x4xbf16>
    %cst_14 = arith.constant 0.000000e+00 : f32
    %8 = vector.broadcast %cst_14 : f32 to vector<64x4xf32>
    %9 = vector.extract_strided_slice %6 {offsets = [0, 0, 0], sizes = [8, 8, 4], strides = [1, 1, 1]} : vector<10x10x4xbf16> to vector<8x8x4xbf16>
    %10 = vector.shape_cast %9 : vector<8x8x4xbf16> to vector<64x4xbf16>
    %11 = vector.extract_strided_slice %7 {offsets = [0, 0, 0], sizes = [1, 4, 4], strides = [1, 1, 1]} : vector<9x4x4xbf16> to vector<1x4x4xbf16>
    %12 = vector.shape_cast %11 : vector<1x4x4xbf16> to vector<4x4xbf16>
    %cst_15 = arith.constant dense<0.000000e+00> : vector<64x4xf32>
    %13 = tpu.matmul %10, %12, %cst_15 {dimension_numbers = #tpu.dot_dimension_numbers<[1], [0], [0], [1], [0, 0, 1, 1], [], []>} : vector<64x4xbf16>, vector<4x4xbf16>, vector<64x4xf32> -> vector<64x4xf32>
    %14 = arith.addf %8, %13 : vector<64x4xf32>
    %15 = vector.extract_strided_slice %6 {offsets = [0, 1, 0], sizes = [8, 8, 4], strides = [1, 1, 1]} : vector<10x10x4xbf16> to vector<8x8x4xbf16>
    %16 = vector.shape_cast %15 : vector<8x8x4xbf16> to vector<64x4xbf16>
    %17 = vector.extract_strided_slice %7 {offsets = [1, 0, 0], sizes = [1, 4, 4], strides = [1, 1, 1]} : vector<9x4x4xbf16> to vector<1x4x4xbf16>
    %18 = vector.shape_cast %17 : vector<1x4x4xbf16> to vector<4x4xbf16>
    %cst_16 = arith.constant dense<0.000000e+00> : vector<64x4xf32>
    %19 = tpu.matmul %16, %18, %cst_16 {dimension_numbers = #tpu.dot_dimension_numbers<[1], [0], [0], [1], [0, 0, 1, 1], [], []>} : vector<64x4xbf16>, vector<4x4xbf16>, vector<64x4xf32> -> vector<64x4xf32>
    %20 = arith.addf %14, %19 : vector<64x4xf32>
    %21 = vector.extract_strided_slice %6 {offsets = [0, 2, 0], sizes = [8, 8, 4], strides = [1, 1, 1]} : vector<10x10x4xbf16> to vector<8x8x4xbf16>
    %22 = vector.shape_cast %21 : vector<8x8x4xbf16> to vector<64x4xbf16>
    %23 = vector.extract_strided_slice %7 {offsets = [2, 0, 0], sizes = [1, 4, 4], strides = [1, 1, 1]} : vector<9x4x4xbf16> to vector<1x4x4xbf16>
    %24 = vector.shape_cast %23 : vector<1x4x4xbf16> to vector<4x4xbf16>
    %cst_17 = arith.constant dense<0.000000e+00> : vector<64x4xf32>
    %25 = tpu.matmul %22, %24, %cst_17 {dimension_numbers = #tpu.dot_dimension_numbers<[1], [0], [0], [1], [0, 0, 1, 1], [], []>} : vector<64x4xbf16>, vector<4x4xbf16>, vector<64x4xf32> -> vector<64x4xf32>
    %26 = arith.addf %20, %25 : vector<64x4xf32>
    %27 = vector.extract_strided_slice %6 {offsets = [1, 0, 0], sizes = [8, 8, 4], strides = [1, 1, 1]} : vector<10x10x4xbf16> to vector<8x8x4xbf16>
    %28 = vector.shape_cast %27 : vector<8x8x4xbf16> to vector<64x4xbf16>
    %29 = vector.extract_strided_slice %7 {offsets = [3, 0, 0], sizes = [1, 4, 4], strides = [1, 1, 1]} : vector<9x4x4xbf16> to vector<1x4x4xbf16>
    %30 = vector.shape_cast %29 : vector<1x4x4xbf16> to vector<4x4xbf16>
    %cst_18 = arith.constant dense<0.000000e+00> : vector<64x4xf32>
    %31 = tpu.matmul %28, %30, %cst_18 {dimension_numbers = #tpu.dot_dimension_numbers<[1], [0], [0], [1], [0, 0, 1, 1], [], []>} : vector<64x4xbf16>, vector<4x4xbf16>, vector<64x4xf32> -> vector<64x4xf32>
    %32 = arith.addf %26, %31 : vector<64x4xf32>
    %33 = vector.extract_strided_slice %6 {offsets = [1, 1, 0], sizes = [8, 8, 4], strides = [1, 1, 1]} : vector<10x10x4xbf16> to vector<8x8x4xbf16>
    %34 = vector.shape_cast %33 : vector<8x8x4xbf16> to vector<64x4xbf16>
    %35 = vector.extract_strided_slice %7 {offsets = [4, 0, 0], sizes = [1, 4, 4], strides = [1, 1, 1]} : vector<9x4x4xbf16> to vector<1x4x4xbf16>
    %36 = vector.shape_cast %35 : vector<1x4x4xbf16> to vector<4x4xbf16>
    %cst_19 = arith.constant dense<0.000000e+00> : vector<64x4xf32>
    %37 = tpu.matmul %34, %36, %cst_19 {dimension_numbers = #tpu.dot_dimension_numbers<[1], [0], [0], [1], [0, 0, 1, 1], [], []>} : vector<64x4xbf16>, vector<4x4xbf16>, vector<64x4xf32> -> vector<64x4xf32>
    %38 = arith.addf %32, %37 : vector<64x4xf32>
    %39 = vector.extract_strided_slice %6 {offsets = [1, 2, 0], sizes = [8, 8, 4], strides = [1, 1, 1]} : vector<10x10x4xbf16> to vector<8x8x4xbf16>
    %40 = vector.shape_cast %39 : vector<8x8x4xbf16> to vector<64x4xbf16>
    %41 = vector.extract_strided_slice %7 {offsets = [5, 0, 0], sizes = [1, 4, 4], strides = [1, 1, 1]} : vector<9x4x4xbf16> to vector<1x4x4xbf16>
    %42 = vector.shape_cast %41 : vector<1x4x4xbf16> to vector<4x4xbf16>
    %cst_20 = arith.constant dense<0.000000e+00> : vector<64x4xf32>
    %43 = tpu.matmul %40, %42, %cst_20 {dimension_numbers = #tpu.dot_dimension_numbers<[1], [0], [0], [1], [0, 0, 1, 1], [], []>} : vector<64x4xbf16>, vector<4x4xbf16>, vector<64x4xf32> -> vector<64x4xf32>
    %44 = arith.addf %38, %43 : vector<64x4xf32>
    %45 = vector.extract_strided_slice %6 {offsets = [2, 0, 0], sizes = [8, 8, 4], strides = [1, 1, 1]} : vector<10x10x4xbf16> to vector<8x8x4xbf16>
    %46 = vector.shape_cast %45 : vector<8x8x4xbf16> to vector<64x4xbf16>
    %47 = vector.extract_strided_slice %7 {offsets = [6, 0, 0], sizes = [1, 4, 4], strides = [1, 1, 1]} : vector<9x4x4xbf16> to vector<1x4x4xbf16>
    %48 = vector.shape_cast %47 : vector<1x4x4xbf16> to vector<4x4xbf16>
    %cst_21 = arith.constant dense<0.000000e+00> : vector<64x4xf32>
    %49 = tpu.matmul %46, %48, %cst_21 {dimension_numbers = #tpu.dot_dimension_numbers<[1], [0], [0], [1], [0, 0, 1, 1], [], []>} : vector<64x4xbf16>, vector<4x4xbf16>, vector<64x4xf32> -> vector<64x4xf32>
    %50 = arith.addf %44, %49 : vector<64x4xf32>
    %51 = vector.extract_strided_slice %6 {offsets = [2, 1, 0], sizes = [8, 8, 4], strides = [1, 1, 1]} : vector<10x10x4xbf16> to vector<8x8x4xbf16>
    %52 = vector.shape_cast %51 : vector<8x8x4xbf16> to vector<64x4xbf16>
    %53 = vector.extract_strided_slice %7 {offsets = [7, 0, 0], sizes = [1, 4, 4], strides = [1, 1, 1]} : vector<9x4x4xbf16> to vector<1x4x4xbf16>
    %54 = vector.shape_cast %53 : vector<1x4x4xbf16> to vector<4x4xbf16>
    %cst_22 = arith.constant dense<0.000000e+00> : vector<64x4xf32>
    %55 = tpu.matmul %52, %54, %cst_22 {dimension_numbers = #tpu.dot_dimension_numbers<[1], [0], [0], [1], [0, 0, 1, 1], [], []>} : vector<64x4xbf16>, vector<4x4xbf16>, vector<64x4xf32> -> vector<64x4xf32>
    %56 = arith.addf %50, %55 : vector<64x4xf32>
    %57 = vector.extract_strided_slice %6 {offsets = [2, 2, 0], sizes = [8, 8, 4], strides = [1, 1, 1]} : vector<10x10x4xbf16> to vector<8x8x4xbf16>
    %58 = vector.shape_cast %57 : vector<8x8x4xbf16> to vector<64x4xbf16>
    %59 = vector.extract_strided_slice %7 {offsets = [8, 0, 0], sizes = [1, 4, 4], strides = [1, 1, 1]} : vector<9x4x4xbf16> to vector<1x4x4xbf16>
    %60 = vector.shape_cast %59 : vector<1x4x4xbf16> to vector<4x4xbf16>
    %cst_23 = arith.constant dense<0.000000e+00> : vector<64x4xf32>
    %61 = tpu.matmul %58, %60, %cst_23 {dimension_numbers = #tpu.dot_dimension_numbers<[1], [0], [0], [1], [0, 0, 1, 1], [], []>} : vector<64x4xbf16>, vector<4x4xbf16>, vector<64x4xf32> -> vector<64x4xf32>
    %62 = arith.addf %56, %61 : vector<64x4xf32>
    %63 = vector.shape_cast %62 : vector<64x4xf32> to vector<8x8x4xf32>
    %c0_24 = arith.constant 0 : index
    %c0_25 = arith.constant 0 : index
    %c0_26 = arith.constant 0 : index
    %c0_27 = arith.constant 0 : index
    %64 = vector.load %arg3[%c0_24, %c0_25, %c0_26, %c0_27] : memref<1x8x8x4xf32, #tpu.memory_space<vmem>>, vector<1x8x8x4xf32>
    %65 = vector.shape_cast %64 : vector<1x8x8x4xf32> to vector<8x8x4xf32>
    %66 = vector.shape_cast %63 : vector<8x8x4xf32> to vector<1x8x8x4xf32>
    tpu.vector_store %arg3[%c0_24, %c0_25, %c0_26, %c0_27], %66 {strides = array<i32>} : memref<1x8x8x4xf32, #tpu.memory_space<vmem>>, vector<1x8x8x4xf32>,
    return
  }
  func.func @transform_0(%arg0: i32) -> (i32, i32, i32, i32) {
    %c0_i32 = arith.constant 0 : i32
    %c0_i32_0 = arith.constant 0 : i32
    %c0_i32_1 = arith.constant 0 : i32
    %c0_i32_2 = arith.constant 0 : i32
    return %arg0, %c0_i32, %c0_i32_0, %c0_i32_1 : i32, i32, i32, i32
  }
  func.func @transform_1(%arg0: i32) -> (i32, i32, i32) {
    %c0_i32 = arith.constant 0 : i32
    %c0_i32_0 = arith.constant 0 : i32
    %c0_i32_1 = arith.constant 0 : i32
    %c0_i32_2 = arith.constant 0 : i32
    return %c0_i32, %c0_i32_0, %c0_i32_1 : i32, i32, i32
  }
  func.func @transform_2(%arg0: i32) -> (i32, i32, i32, i32) {
    %c0_i32 = arith.constant 0 : i32
    %c0_i32_0 = arith.constant 0 : i32
    %c0_i32_1 = arith.constant 0 : i32
    %c0_i32_2 = arith.constant 0 : i32
    return %arg0, %c0_i32, %c0_i32_0, %c0_i32_1 : i32, i32, i32, i32
  }
}

module attributes {stable_mosaic.version = 11 : i64} {
  func.func @_ln_matmul_kernel(%arg0: i32, %arg1: memref<128x16xf32, #tpu.memory_space<vmem>>, %arg2: memref<16x64xbf16, #tpu.memory_space<vmem>>, %arg3: memref<1x64xf32, #tpu.memory_space<vmem>>, %arg4: memref<1x64xf32, #tpu.memory_space<vmem>>, %arg5: memref<128x64xbf16, #tpu.memory_space<vmem>>) attributes {dimension_semantics = [#tpu.dimension_semantics<parallel>], iteration_bounds = array<i64: 1>, scalar_prefetch = 0 : i64, scratch_operands = 0 : i64, tpu.core_type = #tpu.core_type<tc>, window_params = [{transform_indices = @transform_0, window_bounds = array<i64: 128, 16>}, {pipeline_mode = #tpu.pipeline_mode<synchronous>, transform_indices = @transform_1, window_bounds = array<i64: 16, 64>}, {pipeline_mode = #tpu.pipeline_mode<synchronous>, transform_indices = @transform_2, window_bounds = array<i64: 1, 64>}, {pipeline_mode = #tpu.pipeline_mode<synchronous>, transform_indices = @transform_3, window_bounds = array<i64: 1, 64>}, {transform_indices = @transform_4, window_bounds = array<i64: 128, 64>}]} {
    %c0 = arith.constant 0 : index
    %c0_0 = arith.constant 0 : index
    %0 = vector.load %arg1[%c0, %c0_0] : memref<128x16xf32, #tpu.memory_space<vmem>>, vector<128x16xf32>
    %1 = arith.truncf %0 : vector<128x16xf32> to vector<128x16xbf16>
    %c0_1 = arith.constant 0 : index
    %c0_2 = arith.constant 0 : index
    %2 = vector.load %arg2[%c0_1, %c0_2] : memref<16x64xbf16, #tpu.memory_space<vmem>>, vector<16x64xbf16>
    %cst = arith.constant dense<0.000000e+00> : vector<128x64xf32>
    %3 = tpu.matmul %1, %2, %cst {dimension_numbers = #tpu.dot_dimension_numbers<[1], [0], [0], [1], [0, 0, 1, 1], [], []>} : vector<128x16xbf16>, vector<16x64xbf16>, vector<128x64xf32> -> vector<128x64xf32>
    %c0_3 = arith.constant 0 : index
    %c0_4 = arith.constant 0 : index
    %4 = vector.load %arg3[%c0_3, %c0_4] : memref<1x64xf32, #tpu.memory_space<vmem>>, vector<1x64xf32>
    %5 = vector.broadcast %4 : vector<1x64xf32> to vector<128x64xf32>
    %6 = arith.mulf %3, %5 : vector<128x64xf32>
    %c0_5 = arith.constant 0 : index
    %c0_6 = arith.constant 0 : index
    %7 = vector.load %arg4[%c0_5, %c0_6] : memref<1x64xf32, #tpu.memory_space<vmem>>, vector<1x64xf32>
    %8 = vector.broadcast %7 : vector<1x64xf32> to vector<128x64xf32>
    %9 = arith.addf %6, %8 : vector<128x64xf32>
    %cst_7 = arith.constant 5.000000e-01 : f32
    %10 = vector.broadcast %cst_7 : f32 to vector<128x64xf32>
    %11 = arith.mulf %10, %9 : vector<128x64xf32>
    %cst_8 = arith.constant 0.707106769 : f32
    %12 = vector.broadcast %cst_8 : f32 to vector<128x64xf32>
    %13 = arith.mulf %9, %12 : vector<128x64xf32>
    %14 = math.erf %13 : vector<128x64xf32>
    %cst_9 = arith.constant 1.000000e+00 : f32
    %15 = vector.broadcast %cst_9 : f32 to vector<128x64xf32>
    %16 = arith.addf %15, %14 : vector<128x64xf32>
    %17 = arith.mulf %11, %16 : vector<128x64xf32>
    %18 = arith.truncf %17 : vector<128x64xf32> to vector<128x64xbf16>
    %c0_10 = arith.constant 0 : index
    %c0_11 = arith.constant 0 : index
    %19 = vector.load %arg5[%c0_10, %c0_11] : memref<128x64xbf16, #tpu.memory_space<vmem>>, vector<128x64xbf16>
    tpu.vector_store %arg5[%c0_10, %c0_11], %18 {strides = array<i32>} : memref<128x64xbf16, #tpu.memory_space<vmem>>, vector<128x64xbf16>,
    return
  }
  func.func @transform_0(%arg0: i32) -> (i32, i32) {
    %c0_i32 = arith.constant 0 : i32
    %c0_i32_0 = arith.constant 0 : i32
    return %arg0, %c0_i32 : i32, i32
  }
  func.func @transform_1(%arg0: i32) -> (i32, i32) {
    %c0_i32 = arith.constant 0 : i32
    %c0_i32_0 = arith.constant 0 : i32
    %c0_i32_1 = arith.constant 0 : i32
    return %c0_i32, %c0_i32_0 : i32, i32
  }
  func.func @transform_2(%arg0: i32) -> (i32, i32) {
    %c0_i32 = arith.constant 0 : i32
    %c0_i32_0 = arith.constant 0 : i32
    %c0_i32_1 = arith.constant 0 : i32
    return %c0_i32, %c0_i32_0 : i32, i32
  }
  func.func @transform_3(%arg0: i32) -> (i32, i32) {
    %c0_i32 = arith.constant 0 : i32
    %c0_i32_0 = arith.constant 0 : i32
    %c0_i32_1 = arith.constant 0 : i32
    return %c0_i32, %c0_i32_0 : i32, i32
  }
  func.func @transform_4(%arg0: i32) -> (i32, i32) {
    %c0_i32 = arith.constant 0 : i32
    %c0_i32_0 = arith.constant 0 : i32
    return %arg0, %c0_i32 : i32, i32
  }
}

module attributes {stable_mosaic.version = 11 : i64} {
  func.func @_dwconv_kernel(%arg0: i32, %arg1: memref<1x8x8x16xf32, #tpu.memory_space<vmem>>, %arg2: memref<9x16xf32, #tpu.memory_space<vmem>>, %arg3: memref<1x16xf32, #tpu.memory_space<vmem>>, %arg4: memref<1x16xf32, #tpu.memory_space<vmem>>, %arg5: memref<1x8x8x16xf32, #tpu.memory_space<vmem>>, %arg6: memref<1x8x8x16xf32, #tpu.memory_space<vmem>>, %arg7: memref<10x10x16xf32, #tpu.memory_space<vmem>>) attributes {dimension_semantics = [#tpu.dimension_semantics<parallel>], iteration_bounds = array<i64: 2>, scalar_prefetch = 0 : i64, scratch_operands = 1 : i64, tpu.core_type = #tpu.core_type<tc>, window_params = [{transform_indices = @transform_0, window_bounds = array<i64: 1, 8, 8, 16>}, {pipeline_mode = #tpu.pipeline_mode<synchronous>, transform_indices = @transform_1, window_bounds = array<i64: 9, 16>}, {pipeline_mode = #tpu.pipeline_mode<synchronous>, transform_indices = @transform_2, window_bounds = array<i64: 1, 16>}, {pipeline_mode = #tpu.pipeline_mode<synchronous>, transform_indices = @transform_3, window_bounds = array<i64: 1, 16>}, {transform_indices = @transform_4, window_bounds = array<i64: 1, 8, 8, 16>}, {transform_indices = @transform_5, window_bounds = array<i64: 1, 8, 8, 16>}]} {
    %cst = arith.constant 0.000000e+00 : f32
    %0 = vector.broadcast %cst : f32 to vector<10x10x16xf32>
    %c0 = arith.constant 0 : index
    %c0_0 = arith.constant 0 : index
    %c0_1 = arith.constant 0 : index
    %1 = vector.load %arg7[%c0, %c0_0, %c0_1] : memref<10x10x16xf32, #tpu.memory_space<vmem>>, vector<10x10x16xf32>
    tpu.vector_store %arg7[%c0, %c0_0, %c0_1], %0 {strides = array<i32>} : memref<10x10x16xf32, #tpu.memory_space<vmem>>, vector<10x10x16xf32>,
    %c0_2 = arith.constant 0 : index
    %c0_3 = arith.constant 0 : index
    %c0_4 = arith.constant 0 : index
    %c0_5 = arith.constant 0 : index
    %2 = vector.load %arg1[%c0_2, %c0_3, %c0_4, %c0_5] : memref<1x8x8x16xf32, #tpu.memory_space<vmem>>, vector<1x8x8x16xf32>
    %3 = vector.shape_cast %2 : vector<1x8x8x16xf32> to vector<8x8x16xf32>
    %c1 = arith.constant 1 : index
    %c1_6 = arith.constant 1 : index
    %c0_7 = arith.constant 0 : index
    %4 = vector.load %arg7[%c1, %c1_6, %c0_7] : memref<10x10x16xf32, #tpu.memory_space<vmem>>, vector<8x8x16xf32>
    tpu.vector_store %arg7[%c1, %c1_6, %c0_7], %3 {strides = array<i32>} : memref<10x10x16xf32, #tpu.memory_space<vmem>>, vector<8x8x16xf32>,
    %c0_8 = arith.constant 0 : index
    %c0_9 = arith.constant 0 : index
    %c0_10 = arith.constant 0 : index
    %5 = vector.load %arg7[%c0_8, %c0_9, %c0_10] : memref<10x10x16xf32, #tpu.memory_space<vmem>>, vector<10x10x16xf32>
    %c0_11 = arith.constant 0 : index
    %c0_12 = arith.constant 0 : index
    %6 = vector.load %arg2[%c0_11, %c0_12] : memref<9x16xf32, #tpu.memory_space<vmem>>, vector<9x16xf32>
    %cst_13 = arith.constant 0.000000e+00 : f32
    %7 = vector.broadcast %cst_13 : f32 to vector<8x8x16xf32>
    %8 = vector.extract_strided_slice %5 {offsets = [0, 0, 0], sizes = [8, 8, 16], strides = [1, 1, 1]} : vector<10x10x16xf32> to vector<8x8x16xf32>
    %9 = vector.extract_strided_slice %6 {offsets = [0, 0], sizes = [1, 16], strides = [1, 1]} : vector<9x16xf32> to vector<1x16xf32>
    %10 = vector.shape_cast %9 : vector<1x16xf32> to vector<16xf32>
    %11 = vector.shape_cast %10 : vector<16xf32> to vector<1x1x16xf32>
    %12 = vector.broadcast %11 : vector<1x1x16xf32> to vector<8x8x16xf32>
    %13 = arith.mulf %8, %12 : vector<8x8x16xf32>
    %14 = arith.addf %7, %13 : vector<8x8x16xf32>
    %15 = vector.extract_strided_slice %5 {offsets = [0, 1, 0], sizes = [8, 8, 16], strides = [1, 1, 1]} : vector<10x10x16xf32> to vector<8x8x16xf32>
    %16 = vector.extract_strided_slice %6 {offsets = [1, 0], sizes = [1, 16], strides = [1, 1]} : vector<9x16xf32> to vector<1x16xf32>
    %17 = vector.shape_cast %16 : vector<1x16xf32> to vector<16xf32>
    %18 = vector.shape_cast %17 : vector<16xf32> to vector<1x1x16xf32>
    %19 = vector.broadcast %18 : vector<1x1x16xf32> to vector<8x8x16xf32>
    %20 = arith.mulf %15, %19 : vector<8x8x16xf32>
    %21 = arith.addf %14, %20 : vector<8x8x16xf32>
    %22 = vector.extract_strided_slice %5 {offsets = [0, 2, 0], sizes = [8, 8, 16], strides = [1, 1, 1]} : vector<10x10x16xf32> to vector<8x8x16xf32>
    %23 = vector.extract_strided_slice %6 {offsets = [2, 0], sizes = [1, 16], strides = [1, 1]} : vector<9x16xf32> to vector<1x16xf32>
    %24 = vector.shape_cast %23 : vector<1x16xf32> to vector<16xf32>
    %25 = vector.shape_cast %24 : vector<16xf32> to vector<1x1x16xf32>
    %26 = vector.broadcast %25 : vector<1x1x16xf32> to vector<8x8x16xf32>
    %27 = arith.mulf %22, %26 : vector<8x8x16xf32>
    %28 = arith.addf %21, %27 : vector<8x8x16xf32>
    %29 = vector.extract_strided_slice %5 {offsets = [1, 0, 0], sizes = [8, 8, 16], strides = [1, 1, 1]} : vector<10x10x16xf32> to vector<8x8x16xf32>
    %30 = vector.extract_strided_slice %6 {offsets = [3, 0], sizes = [1, 16], strides = [1, 1]} : vector<9x16xf32> to vector<1x16xf32>
    %31 = vector.shape_cast %30 : vector<1x16xf32> to vector<16xf32>
    %32 = vector.shape_cast %31 : vector<16xf32> to vector<1x1x16xf32>
    %33 = vector.broadcast %32 : vector<1x1x16xf32> to vector<8x8x16xf32>
    %34 = arith.mulf %29, %33 : vector<8x8x16xf32>
    %35 = arith.addf %28, %34 : vector<8x8x16xf32>
    %36 = vector.extract_strided_slice %5 {offsets = [1, 1, 0], sizes = [8, 8, 16], strides = [1, 1, 1]} : vector<10x10x16xf32> to vector<8x8x16xf32>
    %37 = vector.extract_strided_slice %6 {offsets = [4, 0], sizes = [1, 16], strides = [1, 1]} : vector<9x16xf32> to vector<1x16xf32>
    %38 = vector.shape_cast %37 : vector<1x16xf32> to vector<16xf32>
    %39 = vector.shape_cast %38 : vector<16xf32> to vector<1x1x16xf32>
    %40 = vector.broadcast %39 : vector<1x1x16xf32> to vector<8x8x16xf32>
    %41 = arith.mulf %36, %40 : vector<8x8x16xf32>
    %42 = arith.addf %35, %41 : vector<8x8x16xf32>
    %43 = vector.extract_strided_slice %5 {offsets = [1, 2, 0], sizes = [8, 8, 16], strides = [1, 1, 1]} : vector<10x10x16xf32> to vector<8x8x16xf32>
    %44 = vector.extract_strided_slice %6 {offsets = [5, 0], sizes = [1, 16], strides = [1, 1]} : vector<9x16xf32> to vector<1x16xf32>
    %45 = vector.shape_cast %44 : vector<1x16xf32> to vector<16xf32>
    %46 = vector.shape_cast %45 : vector<16xf32> to vector<1x1x16xf32>
    %47 = vector.broadcast %46 : vector<1x1x16xf32> to vector<8x8x16xf32>
    %48 = arith.mulf %43, %47 : vector<8x8x16xf32>
    %49 = arith.addf %42, %48 : vector<8x8x16xf32>
    %50 = vector.extract_strided_slice %5 {offsets = [2, 0, 0], sizes = [8, 8, 16], strides = [1, 1, 1]} : vector<10x10x16xf32> to vector<8x8x16xf32>
    %51 = vector.extract_strided_slice %6 {offsets = [6, 0], sizes = [1, 16], strides = [1, 1]} : vector<9x16xf32> to vector<1x16xf32>
    %52 = vector.shape_cast %51 : vector<1x16xf32> to vector<16xf32>
    %53 = vector.shape_cast %52 : vector<16xf32> to vector<1x1x16xf32>
    %54 = vector.broadcast %53 : vector<1x1x16xf32> to vector<8x8x16xf32>
    %55 = arith.mulf %50, %54 : vector<8x8x16xf32>
    %56 = arith.addf %49, %55 : vector<8x8x16xf32>
    %57 = vector.extract_strided_slice %5 {offsets = [2, 1, 0], sizes = [8, 8, 16], strides = [1, 1, 1]} : vector<10x10x16xf32> to vector<8x8x16xf32>
    %58 = vector.extract_strided_slice %6 {offsets = [7, 0], sizes = [1, 16], strides = [1, 1]} : vector<9x16xf32> to vector<1x16xf32>
    %59 = vector.shape_cast %58 : vector<1x16xf32> to vector<16xf32>
    %60 = vector.shape_cast %59 : vector<16xf32> to vector<1x1x16xf32>
    %61 = vector.broadcast %60 : vector<1x1x16xf32> to vector<8x8x16xf32>
    %62 = arith.mulf %57, %61 : vector<8x8x16xf32>
    %63 = arith.addf %56, %62 : vector<8x8x16xf32>
    %64 = vector.extract_strided_slice %5 {offsets = [2, 2, 0], sizes = [8, 8, 16], strides = [1, 1, 1]} : vector<10x10x16xf32> to vector<8x8x16xf32>
    %65 = vector.extract_strided_slice %6 {offsets = [8, 0], sizes = [1, 16], strides = [1, 1]} : vector<9x16xf32> to vector<1x16xf32>
    %66 = vector.shape_cast %65 : vector<1x16xf32> to vector<16xf32>
    %67 = vector.shape_cast %66 : vector<16xf32> to vector<1x1x16xf32>
    %68 = vector.broadcast %67 : vector<1x1x16xf32> to vector<8x8x16xf32>
    %69 = arith.mulf %64, %68 : vector<8x8x16xf32>
    %70 = arith.addf %63, %69 : vector<8x8x16xf32>
    %c0_14 = arith.constant 0 : index
    %c0_15 = arith.constant 0 : index
    %71 = vector.load %arg3[%c0_14, %c0_15] : memref<1x16xf32, #tpu.memory_space<vmem>>, vector<1x16xf32>
    %72 = vector.shape_cast %71 : vector<1x16xf32> to vector<1x1x16xf32>
    %73 = vector.broadcast %72 : vector<1x1x16xf32> to vector<8x8x16xf32>
    %74 = arith.mulf %70, %73 : vector<8x8x16xf32>
    %c0_16 = arith.constant 0 : index
    %c0_17 = arith.constant 0 : index
    %75 = vector.load %arg4[%c0_16, %c0_17] : memref<1x16xf32, #tpu.memory_space<vmem>>, vector<1x16xf32>
    %76 = vector.shape_cast %75 : vector<1x16xf32> to vector<1x1x16xf32>
    %77 = vector.broadcast %76 : vector<1x1x16xf32> to vector<8x8x16xf32>
    %78 = arith.addf %74, %77 : vector<8x8x16xf32>
    %c0_18 = arith.constant 0 : index
    %c0_19 = arith.constant 0 : index
    %c0_20 = arith.constant 0 : index
    %c0_21 = arith.constant 0 : index
    %79 = vector.load %arg5[%c0_18, %c0_19, %c0_20, %c0_21] : memref<1x8x8x16xf32, #tpu.memory_space<vmem>>, vector<1x8x8x16xf32>
    %80 = vector.shape_cast %79 : vector<1x8x8x16xf32> to vector<8x8x16xf32>
    %81 = arith.addf %78, %80 : vector<8x8x16xf32>
    %c0_22 = arith.constant 0 : index
    %c0_23 = arith.constant 0 : index
    %c0_24 = arith.constant 0 : index
    %c0_25 = arith.constant 0 : index
    %82 = vector.load %arg6[%c0_22, %c0_23, %c0_24, %c0_25] : memref<1x8x8x16xf32, #tpu.memory_space<vmem>>, vector<1x8x8x16xf32>
    %83 = vector.shape_cast %82 : vector<1x8x8x16xf32> to vector<8x8x16xf32>
    %84 = vector.shape_cast %81 : vector<8x8x16xf32> to vector<1x8x8x16xf32>
    tpu.vector_store %arg6[%c0_22, %c0_23, %c0_24, %c0_25], %84 {strides = array<i32>} : memref<1x8x8x16xf32, #tpu.memory_space<vmem>>, vector<1x8x8x16xf32>,
    return
  }
  func.func @transform_0(%arg0: i32) -> (i32, i32, i32, i32) {
    %c0_i32 = arith.constant 0 : i32
    %c0_i32_0 = arith.constant 0 : i32
    %c0_i32_1 = arith.constant 0 : i32
    %c0_i32_2 = arith.constant 0 : i32
    return %arg0, %c0_i32, %c0_i32_0, %c0_i32_1 : i32, i32, i32, i32
  }
  func.func @transform_1(%arg0: i32) -> (i32, i32) {
    %c0_i32 = arith.constant 0 : i32
    %c0_i32_0 = arith.constant 0 : i32
    %c0_i32_1 = arith.constant 0 : i32
    return %c0_i32, %c0_i32_0 : i32, i32
  }
  func.func @transform_2(%arg0: i32) -> (i32, i32) {
    %c0_i32 = arith.constant 0 : i32
    %c0_i32_0 = arith.constant 0 : i32
    %c0_i32_1 = arith.constant 0 : i32
    return %c0_i32, %c0_i32_0 : i32, i32
  }
  func.func @transform_3(%arg0: i32) -> (i32, i32) {
    %c0_i32 = arith.constant 0 : i32
    %c0_i32_0 = arith.constant 0 : i32
    %c0_i32_1 = arith.constant 0 : i32
    return %c0_i32, %c0_i32_0 : i32, i32
  }
  func.func @transform_4(%arg0: i32) -> (i32, i32, i32, i32) {
    %c0_i32 = arith.constant 0 : i32
    %c0_i32_0 = arith.constant 0 : i32
    %c0_i32_1 = arith.constant 0 : i32
    %c0_i32_2 = arith.constant 0 : i32
    return %arg0, %c0_i32, %c0_i32_0, %c0_i32_1 : i32, i32, i32, i32
  }
  func.func @transform_5(%arg0: i32) -> (i32, i32, i32, i32) {
    %c0_i32 = arith.constant 0 : i32
    %c0_i32_0 = arith.constant 0 : i32
    %c0_i32_1 = arith.constant 0 : i32
    %c0_i32_2 = arith.constant 0 : i32
    return %arg0, %c0_i32, %c0_i32_0, %c0_i32_1 : i32, i32, i32, i32
  }
}

module attributes {stable_mosaic.version = 11 : i64} {
  func.func @_ssa_fused_kernel(%arg0: i32, %arg1: memref<1x64x16xf32, #tpu.memory_space<vmem>>, %arg2: memref<1x16xf32, #tpu.memory_space<vmem>>, %arg3: memref<1x16xf32, #tpu.memory_space<vmem>>, %arg4: memref<16x33xbf16, #tpu.memory_space<vmem>>, %arg5: memref<1x33xf32, #tpu.memory_space<vmem>>, %arg6: memref<16x16xbf16, #tpu.memory_space<vmem>>, %arg7: memref<1x16xf32, #tpu.memory_space<vmem>>, %arg8: memref<1x64x16xf32, #tpu.memory_space<vmem>>) attributes {dimension_semantics = [#tpu.dimension_semantics<parallel>], iteration_bounds = array<i64: 2>, scalar_prefetch = 0 : i64, scratch_operands = 0 : i64, tpu.core_type = #tpu.core_type<tc>, window_params = [{transform_indices = @transform_0, window_bounds = array<i64: 1, 64, 16>}, {pipeline_mode = #tpu.pipeline_mode<synchronous>, transform_indices = @transform_1, window_bounds = array<i64: 1, 16>}, {pipeline_mode = #tpu.pipeline_mode<synchronous>, transform_indices = @transform_2, window_bounds = array<i64: 1, 16>}, {pipeline_mode = #tpu.pipeline_mode<synchronous>, transform_indices = @transform_3, window_bounds = array<i64: 16, 33>}, {pipeline_mode = #tpu.pipeline_mode<synchronous>, transform_indices = @transform_4, window_bounds = array<i64: 1, 33>}, {pipeline_mode = #tpu.pipeline_mode<synchronous>, transform_indices = @transform_5, window_bounds = array<i64: 16, 16>}, {pipeline_mode = #tpu.pipeline_mode<synchronous>, transform_indices = @transform_6, window_bounds = array<i64: 1, 16>}, {transform_indices = @transform_7, window_bounds = array<i64: 1, 64, 16>}]} {
    %c0 = arith.constant 0 : index
    %c0_0 = arith.constant 0 : index
    %c0_1 = arith.constant 0 : index
    %0 = vector.load %arg1[%c0, %c0_0, %c0_1] : memref<1x64x16xf32, #tpu.memory_space<vmem>>, vector<1x64x16xf32>
    %1 = vector.shape_cast %0 : vector<1x64x16xf32> to vector<64x16xf32>
    %cst = arith.constant dense<0.000000e+00> : vector<64xf32>
    %2 = vector.multi_reduction <add>, %1, %cst [1] : vector<64x16xf32> to vector<64xf32>
    %3 = vector.shape_cast %2 : vector<64xf32> to vector<64x1xf32>
    %cst_2 = arith.constant 1.600000e+01 : f32
    %4 = vector.broadcast %cst_2 : f32 to vector<64x1xf32>
    %5 = arith.divf %3, %4 : vector<64x1xf32>
    %6 = vector.broadcast %5 : vector<64x1xf32> to vector<64x16xf32>
    %7 = arith.subf %1, %6 : vector<64x16xf32>
    %8 = arith.mulf %7, %7 : vector<64x16xf32>
    %cst_3 = arith.constant dense<0.000000e+00> : vector<64xf32>
    %9 = vector.multi_reduction <add>, %8, %cst_3 [1] : vector<64x16xf32> to vector<64xf32>
    %10 = vector.shape_cast %9 : vector<64xf32> to vector<64x1xf32>
    %cst_4 = arith.constant 1.600000e+01 : f32
    %11 = vector.broadcast %cst_4 : f32 to vector<64x1xf32>
    %12 = arith.divf %10, %11 : vector<64x1xf32>
    %cst_5 = arith.constant 9.99999974E-6 : f32
    %13 = vector.broadcast %cst_5 : f32 to vector<64x1xf32>
    %14 = arith.addf %12, %13 : vector<64x1xf32>
    %15 = math.rsqrt %14 : vector<64x1xf32>
    %16 = vector.broadcast %15 : vector<64x1xf32> to vector<64x16xf32>
    %17 = arith.mulf %7, %16 : vector<64x16xf32>
    %c0_6 = arith.constant 0 : index
    %c0_7 = arith.constant 0 : index
    %18 = vector.load %arg2[%c0_6, %c0_7] : memref<1x16xf32, #tpu.memory_space<vmem>>, vector<1x16xf32>
    %19 = vector.broadcast %18 : vector<1x16xf32> to vector<64x16xf32>
    %20 = arith.mulf %17, %19 : vector<64x16xf32>
    %c0_8 = arith.constant 0 : index
    %c0_9 = arith.constant 0 : index
    %21 = vector.load %arg3[%c0_8, %c0_9] : memref<1x16xf32, #tpu.memory_space<vmem>>, vector<1x16xf32>
    %22 = vector.broadcast %21 : vector<1x16xf32> to vector<64x16xf32>
    %23 = arith.addf %20, %22 : vector<64x16xf32>
    %24 = arith.truncf %23 : vector<64x16xf32> to vector<64x16xbf16>
    %c0_10 = arith.constant 0 : index
    %c0_11 = arith.constant 0 : index
    %25 = vector.load %arg4[%c0_10, %c0_11] : memref<16x33xbf16, #tpu.memory_space<vmem>>, vector<16x33xbf16>
    %cst_12 = arith.constant dense<0.000000e+00> : vector<64x33xf32>
    %26 = tpu.matmul %24, %25, %cst_12 {dimension_numbers = #tpu.dot_dimension_numbers<[1], [0], [0], [1], [0, 0, 1, 1], [], []>} : vector<64x16xbf16>, vector<16x33xbf16>, vector<64x33xf32> -> vector<64x33xf32>
    %c0_13 = arith.constant 0 : index
    %c0_14 = arith.constant 0 : index
    %27 = vector.load %arg5[%c0_13, %c0_14] : memref<1x33xf32, #tpu.memory_space<vmem>>, vector<1x33xf32>
    %28 = vector.broadcast %27 : vector<1x33xf32> to vector<64x33xf32>
    %29 = arith.addf %26, %28 : vector<64x33xf32>
    %30 = vector.extract_strided_slice %29 {offsets = [0, 0], sizes = [64, 16], strides = [1, 1]} : vector<64x33xf32> to vector<64x16xf32>
    %31 = vector.extract_strided_slice %29 {offsets = [0, 16], sizes = [64, 16], strides = [1, 1]} : vector<64x33xf32> to vector<64x16xf32>
    %32 = vector.extract_strided_slice %29 {offsets = [0, 32], sizes = [64, 1], strides = [1, 1]} : vector<64x33xf32> to vector<64x1xf32>
    %cst_15 = arith.constant dense<0xFF800000> : vector<1xf32>
    %33 = vector.multi_reduction <maximumf>, %32, %cst_15 [0] : vector<64x1xf32> to vector<1xf32>
    %34 = vector.shape_cast %33 : vector<1xf32> to vector<1x1xf32>
    %35 = vector.broadcast %34 : vector<1x1xf32> to vector<64x1xf32>
    %36 = arith.subf %32, %35 : vector<64x1xf32>
    %37 = math.exp %36 : vector<64x1xf32>
    %cst_16 = arith.constant dense<0.000000e+00> : vector<1xf32>
    %38 = vector.multi_reduction <add>, %37, %cst_16 [0] : vector<64x1xf32> to vector<1xf32>
    %39 = vector.shape_cast %38 : vector<1xf32> to vector<1x1xf32>
    %40 = tpu.reciprocal %39 {approx = true} : vector<1x1xf32> -> vector<1x1xf32>
    %41 = vector.broadcast %40 : vector<1x1xf32> to vector<64x1xf32>
    %42 = arith.mulf %37, %41 : vector<64x1xf32>
    %43 = vector.broadcast %42 : vector<64x1xf32> to vector<64x16xf32>
    %44 = arith.mulf %43, %30 : vector<64x16xf32>
    %cst_17 = arith.constant dense<0.000000e+00> : vector<16xf32>
    %45 = vector.multi_reduction <add>, %44, %cst_17 [0] : vector<64x16xf32> to vector<16xf32>
    %46 = vector.shape_cast %45 : vector<16xf32> to vector<1x16xf32>
    %47 = vector.broadcast %46 : vector<1x16xf32> to vector<64x16xf32>
    %48 = arith.mulf %31, %47 : vector<64x16xf32>
    %49 = arith.truncf %48 : vector<64x16xf32> to vector<64x16xbf16>
    %c0_18 = arith.constant 0 : index
    %c0_19 = arith.constant 0 : index
    %50 = vector.load %arg6[%c0_18, %c0_19] : memref<16x16xbf16, #tpu.memory_space<vmem>>, vector<16x16xbf16>
    %cst_20 = arith.constant dense<0.000000e+00> : vector<64x16xf32>
    %51 = tpu.matmul %49, %50, %cst_20 {dimension_numbers = #tpu.dot_dimension_numbers<[1], [0], [0], [1], [0, 0, 1, 1], [], []>} : vector<64x16xbf16>, vector<16x16xbf16>, vector<64x16xf32> -> vector<64x16xf32>
    %c0_21 = arith.constant 0 : index
    %c0_22 = arith.constant 0 : index
    %52 = vector.load %arg7[%c0_21, %c0_22] : memref<1x16xf32, #tpu.memory_space<vmem>>, vector<1x16xf32>
    %53 = vector.broadcast %52 : vector<1x16xf32> to vector<64x16xf32>
    %54 = arith.addf %51, %53 : vector<64x16xf32>
    %55 = arith.addf %1, %54 : vector<64x16xf32>
    %c0_23 = arith.constant 0 : index
    %c0_24 = arith.constant 0 : index
    %c0_25 = arith.constant 0 : index
    %56 = vector.load %arg8[%c0_23, %c0_24, %c0_25] : memref<1x64x16xf32, #tpu.memory_space<vmem>>, vector<1x64x16xf32>
    %57 = vector.shape_cast %56 : vector<1x64x16xf32> to vector<64x16xf32>
    %58 = vector.shape_cast %55 : vector<64x16xf32> to vector<1x64x16xf32>
    tpu.vector_store %arg8[%c0_23, %c0_24, %c0_25], %58 {strides = array<i32>} : memref<1x64x16xf32, #tpu.memory_space<vmem>>, vector<1x64x16xf32>,
    return
  }
  func.func @transform_0(%arg0: i32) -> (i32, i32, i32) {
    %c0_i32 = arith.constant 0 : i32
    %c0_i32_0 = arith.constant 0 : i32
    %c0_i32_1 = arith.constant 0 : i32
    return %arg0, %c0_i32, %c0_i32_0 : i32, i32, i32
  }
  func.func @transform_1(%arg0: i32) -> (i32, i32) {
    %c0_i32 = arith.constant 0 : i32
    %c0_i32_0 = arith.constant 0 : i32
    %c0_i32_1 = arith.constant 0 : i32
    return %c0_i32, %c0_i32_0 : i32, i32
  }
  func.func @transform_2(%arg0: i32) -> (i32, i32) {
    %c0_i32 = arith.constant 0 : i32
    %c0_i32_0 = arith.constant 0 : i32
    %c0_i32_1 = arith.constant 0 : i32
    return %c0_i32, %c0_i32_0 : i32, i32
  }
  func.func @transform_3(%arg0: i32) -> (i32, i32) {
    %c0_i32 = arith.constant 0 : i32
    %c0_i32_0 = arith.constant 0 : i32
    %c0_i32_1 = arith.constant 0 : i32
    return %c0_i32, %c0_i32_0 : i32, i32
  }
  func.func @transform_4(%arg0: i32) -> (i32, i32) {
    %c0_i32 = arith.constant 0 : i32
    %c0_i32_0 = arith.constant 0 : i32
    %c0_i32_1 = arith.constant 0 : i32
    return %c0_i32, %c0_i32_0 : i32, i32
  }
  func.func @transform_5(%arg0: i32) -> (i32, i32) {
    %c0_i32 = arith.constant 0 : i32
    %c0_i32_0 = arith.constant 0 : i32
    %c0_i32_1 = arith.constant 0 : i32
    return %c0_i32, %c0_i32_0 : i32, i32
  }
  func.func @transform_6(%arg0: i32) -> (i32, i32) {
    %c0_i32 = arith.constant 0 : i32
    %c0_i32_0 = arith.constant 0 : i32
    %c0_i32_1 = arith.constant 0 : i32
    return %c0_i32, %c0_i32_0 : i32, i32
  }
  func.func @transform_7(%arg0: i32) -> (i32, i32, i32) {
    %c0_i32 = arith.constant 0 : i32
    %c0_i32_0 = arith.constant 0 : i32
    %c0_i32_1 = arith.constant 0 : i32
    return %arg0, %c0_i32, %c0_i32_0 : i32, i32, i32
  }
}

module attributes {stable_mosaic.version = 11 : i64} {
  func.func @_ln_matmul_kernel(%arg0: i32, %arg1: memref<128x16xf32, #tpu.memory_space<vmem>>, %arg2: memref<1x16xf32, #tpu.memory_space<vmem>>, %arg3: memref<1x16xf32, #tpu.memory_space<vmem>>, %arg4: memref<16x64xbf16, #tpu.memory_space<vmem>>, %arg5: memref<1x64xf32, #tpu.memory_space<vmem>>, %arg6: memref<1x64xf32, #tpu.memory_space<vmem>>, %arg7: memref<128x64xbf16, #tpu.memory_space<vmem>>) attributes {dimension_semantics = [#tpu.dimension_semantics<parallel>], iteration_bounds = array<i64: 1>, scalar_prefetch = 0 : i64, scratch_operands = 0 : i64, tpu.core_type = #tpu.core_type<tc>, window_params = [{transform_indices = @transform_0, window_bounds = array<i64: 128, 16>}, {pipeline_mode = #tpu.pipeline_mode<synchronous>, transform_indices = @transform_1, window_bounds = array<i64: 1, 16>}, {pipeline_mode = #tpu.pipeline_mode<synchronous>, transform_indices = @transform_2, window_bounds = array<i64: 1, 16>}, {pipeline_mode = #tpu.pipeline_mode<synchronous>, transform_indices = @transform_3, window_bounds = array<i64: 16, 64>}, {pipeline_mode = #tpu.pipeline_mode<synchronous>, transform_indices = @transform_4, window_bounds = array<i64: 1, 64>}, {pipeline_mode = #tpu.pipeline_mode<synchronous>, transform_indices = @transform_5, window_bounds = array<i64: 1, 64>}, {transform_indices = @transform_6, window_bounds = array<i64: 128, 64>}]} {
    %c0 = arith.constant 0 : index
    %c0_0 = arith.constant 0 : index
    %0 = vector.load %arg1[%c0, %c0_0] : memref<128x16xf32, #tpu.memory_space<vmem>>, vector<128x16xf32>
    %cst = arith.constant dense<0.000000e+00> : vector<128xf32>
    %1 = vector.multi_reduction <add>, %0, %cst [1] : vector<128x16xf32> to vector<128xf32>
    %2 = vector.shape_cast %1 : vector<128xf32> to vector<128x1xf32>
    %cst_1 = arith.constant 1.600000e+01 : f32
    %3 = vector.broadcast %cst_1 : f32 to vector<128x1xf32>
    %4 = arith.divf %2, %3 : vector<128x1xf32>
    %5 = vector.broadcast %4 : vector<128x1xf32> to vector<128x16xf32>
    %6 = arith.subf %0, %5 : vector<128x16xf32>
    %7 = arith.mulf %6, %6 : vector<128x16xf32>
    %cst_2 = arith.constant dense<0.000000e+00> : vector<128xf32>
    %8 = vector.multi_reduction <add>, %7, %cst_2 [1] : vector<128x16xf32> to vector<128xf32>
    %9 = vector.shape_cast %8 : vector<128xf32> to vector<128x1xf32>
    %cst_3 = arith.constant 1.600000e+01 : f32
    %10 = vector.broadcast %cst_3 : f32 to vector<128x1xf32>
    %11 = arith.divf %9, %10 : vector<128x1xf32>
    %cst_4 = arith.constant 9.99999974E-6 : f32
    %12 = vector.broadcast %cst_4 : f32 to vector<128x1xf32>
    %13 = arith.addf %11, %12 : vector<128x1xf32>
    %14 = math.rsqrt %13 : vector<128x1xf32>
    %15 = vector.broadcast %14 : vector<128x1xf32> to vector<128x16xf32>
    %16 = arith.mulf %6, %15 : vector<128x16xf32>
    %c0_5 = arith.constant 0 : index
    %c0_6 = arith.constant 0 : index
    %17 = vector.load %arg2[%c0_5, %c0_6] : memref<1x16xf32, #tpu.memory_space<vmem>>, vector<1x16xf32>
    %18 = vector.broadcast %17 : vector<1x16xf32> to vector<128x16xf32>
    %19 = arith.mulf %16, %18 : vector<128x16xf32>
    %c0_7 = arith.constant 0 : index
    %c0_8 = arith.constant 0 : index
    %20 = vector.load %arg3[%c0_7, %c0_8] : memref<1x16xf32, #tpu.memory_space<vmem>>, vector<1x16xf32>
    %21 = vector.broadcast %20 : vector<1x16xf32> to vector<128x16xf32>
    %22 = arith.addf %19, %21 : vector<128x16xf32>
    %23 = arith.truncf %22 : vector<128x16xf32> to vector<128x16xbf16>
    %c0_9 = arith.constant 0 : index
    %c0_10 = arith.constant 0 : index
    %24 = vector.load %arg4[%c0_9, %c0_10] : memref<16x64xbf16, #tpu.memory_space<vmem>>, vector<16x64xbf16>
    %cst_11 = arith.constant dense<0.000000e+00> : vector<128x64xf32>
    %25 = tpu.matmul %23, %24, %cst_11 {dimension_numbers = #tpu.dot_dimension_numbers<[1], [0], [0], [1], [0, 0, 1, 1], [], []>} : vector<128x16xbf16>, vector<16x64xbf16>, vector<128x64xf32> -> vector<128x64xf32>
    %c0_12 = arith.constant 0 : index
    %c0_13 = arith.constant 0 : index
    %26 = vector.load %arg5[%c0_12, %c0_13] : memref<1x64xf32, #tpu.memory_space<vmem>>, vector<1x64xf32>
    %27 = vector.broadcast %26 : vector<1x64xf32> to vector<128x64xf32>
    %28 = arith.mulf %25, %27 : vector<128x64xf32>
    %c0_14 = arith.constant 0 : index
    %c0_15 = arith.constant 0 : index
    %29 = vector.load %arg6[%c0_14, %c0_15] : memref<1x64xf32, #tpu.memory_space<vmem>>, vector<1x64xf32>
    %30 = vector.broadcast %29 : vector<1x64xf32> to vector<128x64xf32>
    %31 = arith.addf %28, %30 : vector<128x64xf32>
    %cst_16 = arith.constant 5.000000e-01 : f32
    %32 = vector.broadcast %cst_16 : f32 to vector<128x64xf32>
    %33 = arith.mulf %32, %31 : vector<128x64xf32>
    %cst_17 = arith.constant 0.707106769 : f32
    %34 = vector.broadcast %cst_17 : f32 to vector<128x64xf32>
    %35 = arith.mulf %31, %34 : vector<128x64xf32>
    %36 = math.erf %35 : vector<128x64xf32>
    %cst_18 = arith.constant 1.000000e+00 : f32
    %37 = vector.broadcast %cst_18 : f32 to vector<128x64xf32>
    %38 = arith.addf %37, %36 : vector<128x64xf32>
    %39 = arith.mulf %33, %38 : vector<128x64xf32>
    %40 = arith.truncf %39 : vector<128x64xf32> to vector<128x64xbf16>
    %c0_19 = arith.constant 0 : index
    %c0_20 = arith.constant 0 : index
    %41 = vector.load %arg7[%c0_19, %c0_20] : memref<128x64xbf16, #tpu.memory_space<vmem>>, vector<128x64xbf16>
    tpu.vector_store %arg7[%c0_19, %c0_20], %40 {strides = array<i32>} : memref<128x64xbf16, #tpu.memory_space<vmem>>, vector<128x64xbf16>,
    return
  }
  func.func @transform_0(%arg0: i32) -> (i32, i32) {
    %c0_i32 = arith.constant 0 : i32
    %c0_i32_0 = arith.constant 0 : i32
    return %arg0, %c0_i32 : i32, i32
  }
  func.func @transform_1(%arg0: i32) -> (i32, i32) {
    %c0_i32 = arith.constant 0 : i32
    %c0_i32_0 = arith.constant 0 : i32
    %c0_i32_1 = arith.constant 0 : i32
    return %c0_i32, %c0_i32_0 : i32, i32
  }
  func.func @transform_2(%arg0: i32) -> (i32, i32) {
    %c0_i32 = arith.constant 0 : i32
    %c0_i32_0 = arith.constant 0 : i32
    %c0_i32_1 = arith.constant 0 : i32
    return %c0_i32, %c0_i32_0 : i32, i32
  }
  func.func @transform_3(%arg0: i32) -> (i32, i32) {
    %c0_i32 = arith.constant 0 : i32
    %c0_i32_0 = arith.constant 0 : i32
    %c0_i32_1 = arith.constant 0 : i32
    return %c0_i32, %c0_i32_0 : i32, i32
  }
  func.func @transform_4(%arg0: i32) -> (i32, i32) {
    %c0_i32 = arith.constant 0 : i32
    %c0_i32_0 = arith.constant 0 : i32
    %c0_i32_1 = arith.constant 0 : i32
    return %c0_i32, %c0_i32_0 : i32, i32
  }
  func.func @transform_5(%arg0: i32) -> (i32, i32) {
    %c0_i32 = arith.constant 0 : i32
    %c0_i32_0 = arith.constant 0 : i32
    %c0_i32_1 = arith.constant 0 : i32
    return %c0_i32, %c0_i32_0 : i32, i32
  }
  func.func @transform_6(%arg0: i32) -> (i32, i32) {
    %c0_i32 = arith.constant 0 : i32
    %c0_i32_0 = arith.constant 0 : i32
    return %arg0, %c0_i32 : i32, i32
  }
}

module attributes {stable_mosaic.version = 11 : i64} {
  func.func @_dwconv_kernel(%arg0: i32, %arg1: memref<1x8x8x64xbf16, #tpu.memory_space<vmem>>, %arg2: memref<9x64xf32, #tpu.memory_space<vmem>>, %arg3: memref<1x64xf32, #tpu.memory_space<vmem>>, %arg4: memref<1x64xf32, #tpu.memory_space<vmem>>, %arg5: memref<1x8x8x64xbf16, #tpu.memory_space<vmem>>, %arg6: memref<10x10x64xf32, #tpu.memory_space<vmem>>) attributes {dimension_semantics = [#tpu.dimension_semantics<parallel>], iteration_bounds = array<i64: 2>, scalar_prefetch = 0 : i64, scratch_operands = 1 : i64, tpu.core_type = #tpu.core_type<tc>, window_params = [{transform_indices = @transform_0, window_bounds = array<i64: 1, 8, 8, 64>}, {pipeline_mode = #tpu.pipeline_mode<synchronous>, transform_indices = @transform_1, window_bounds = array<i64: 9, 64>}, {pipeline_mode = #tpu.pipeline_mode<synchronous>, transform_indices = @transform_2, window_bounds = array<i64: 1, 64>}, {pipeline_mode = #tpu.pipeline_mode<synchronous>, transform_indices = @transform_3, window_bounds = array<i64: 1, 64>}, {transform_indices = @transform_4, window_bounds = array<i64: 1, 8, 8, 64>}]} {
    %cst = arith.constant 0.000000e+00 : f32
    %0 = vector.broadcast %cst : f32 to vector<10x10x64xf32>
    %c0 = arith.constant 0 : index
    %c0_0 = arith.constant 0 : index
    %c0_1 = arith.constant 0 : index
    %1 = vector.load %arg6[%c0, %c0_0, %c0_1] : memref<10x10x64xf32, #tpu.memory_space<vmem>>, vector<10x10x64xf32>
    tpu.vector_store %arg6[%c0, %c0_0, %c0_1], %0 {strides = array<i32>} : memref<10x10x64xf32, #tpu.memory_space<vmem>>, vector<10x10x64xf32>,
    %c0_2 = arith.constant 0 : index
    %c0_3 = arith.constant 0 : index
    %c0_4 = arith.constant 0 : index
    %c0_5 = arith.constant 0 : index
    %2 = vector.load %arg1[%c0_2, %c0_3, %c0_4, %c0_5] : memref<1x8x8x64xbf16, #tpu.memory_space<vmem>>, vector<1x8x8x64xbf16>
    %3 = vector.shape_cast %2 : vector<1x8x8x64xbf16> to vector<8x8x64xbf16>
    %4 = arith.extf %3 : vector<8x8x64xbf16> to vector<8x8x64xf32>
    %c1 = arith.constant 1 : index
    %c1_6 = arith.constant 1 : index
    %c0_7 = arith.constant 0 : index
    %5 = vector.load %arg6[%c1, %c1_6, %c0_7] : memref<10x10x64xf32, #tpu.memory_space<vmem>>, vector<8x8x64xf32>
    tpu.vector_store %arg6[%c1, %c1_6, %c0_7], %4 {strides = array<i32>} : memref<10x10x64xf32, #tpu.memory_space<vmem>>, vector<8x8x64xf32>,
    %c0_8 = arith.constant 0 : index
    %c0_9 = arith.constant 0 : index
    %c0_10 = arith.constant 0 : index
    %6 = vector.load %arg6[%c0_8, %c0_9, %c0_10] : memref<10x10x64xf32, #tpu.memory_space<vmem>>, vector<10x10x64xf32>
    %c0_11 = arith.constant 0 : index
    %c0_12 = arith.constant 0 : index
    %7 = vector.load %arg2[%c0_11, %c0_12] : memref<9x64xf32, #tpu.memory_space<vmem>>, vector<9x64xf32>
    %cst_13 = arith.constant 0.000000e+00 : f32
    %8 = vector.broadcast %cst_13 : f32 to vector<8x8x64xf32>
    %9 = vector.extract_strided_slice %6 {offsets = [0, 0, 0], sizes = [8, 8, 64], strides = [1, 1, 1]} : vector<10x10x64xf32> to vector<8x8x64xf32>
    %10 = vector.extract_strided_slice %7 {offsets = [0, 0], sizes = [1, 64], strides = [1, 1]} : vector<9x64xf32> to vector<1x64xf32>
    %11 = vector.shape_cast %10 : vector<1x64xf32> to vector<64xf32>
    %12 = vector.shape_cast %11 : vector<64xf32> to vector<1x1x64xf32>
    %13 = vector.broadcast %12 : vector<1x1x64xf32> to vector<8x8x64xf32>
    %14 = arith.mulf %9, %13 : vector<8x8x64xf32>
    %15 = arith.addf %8, %14 : vector<8x8x64xf32>
    %16 = vector.extract_strided_slice %6 {offsets = [0, 1, 0], sizes = [8, 8, 64], strides = [1, 1, 1]} : vector<10x10x64xf32> to vector<8x8x64xf32>
    %17 = vector.extract_strided_slice %7 {offsets = [1, 0], sizes = [1, 64], strides = [1, 1]} : vector<9x64xf32> to vector<1x64xf32>
    %18 = vector.shape_cast %17 : vector<1x64xf32> to vector<64xf32>
    %19 = vector.shape_cast %18 : vector<64xf32> to vector<1x1x64xf32>
    %20 = vector.broadcast %19 : vector<1x1x64xf32> to vector<8x8x64xf32>
    %21 = arith.mulf %16, %20 : vector<8x8x64xf32>
    %22 = arith.addf %15, %21 : vector<8x8x64xf32>
    %23 = vector.extract_strided_slice %6 {offsets = [0, 2, 0], sizes = [8, 8, 64], strides = [1, 1, 1]} : vector<10x10x64xf32> to vector<8x8x64xf32>
    %24 = vector.extract_strided_slice %7 {offsets = [2, 0], sizes = [1, 64], strides = [1, 1]} : vector<9x64xf32> to vector<1x64xf32>
    %25 = vector.shape_cast %24 : vector<1x64xf32> to vector<64xf32>
    %26 = vector.shape_cast %25 : vector<64xf32> to vector<1x1x64xf32>
    %27 = vector.broadcast %26 : vector<1x1x64xf32> to vector<8x8x64xf32>
    %28 = arith.mulf %23, %27 : vector<8x8x64xf32>
    %29 = arith.addf %22, %28 : vector<8x8x64xf32>
    %30 = vector.extract_strided_slice %6 {offsets = [1, 0, 0], sizes = [8, 8, 64], strides = [1, 1, 1]} : vector<10x10x64xf32> to vector<8x8x64xf32>
    %31 = vector.extract_strided_slice %7 {offsets = [3, 0], sizes = [1, 64], strides = [1, 1]} : vector<9x64xf32> to vector<1x64xf32>
    %32 = vector.shape_cast %31 : vector<1x64xf32> to vector<64xf32>
    %33 = vector.shape_cast %32 : vector<64xf32> to vector<1x1x64xf32>
    %34 = vector.broadcast %33 : vector<1x1x64xf32> to vector<8x8x64xf32>
    %35 = arith.mulf %30, %34 : vector<8x8x64xf32>
    %36 = arith.addf %29, %35 : vector<8x8x64xf32>
    %37 = vector.extract_strided_slice %6 {offsets = [1, 1, 0], sizes = [8, 8, 64], strides = [1, 1, 1]} : vector<10x10x64xf32> to vector<8x8x64xf32>
    %38 = vector.extract_strided_slice %7 {offsets = [4, 0], sizes = [1, 64], strides = [1, 1]} : vector<9x64xf32> to vector<1x64xf32>
    %39 = vector.shape_cast %38 : vector<1x64xf32> to vector<64xf32>
    %40 = vector.shape_cast %39 : vector<64xf32> to vector<1x1x64xf32>
    %41 = vector.broadcast %40 : vector<1x1x64xf32> to vector<8x8x64xf32>
    %42 = arith.mulf %37, %41 : vector<8x8x64xf32>
    %43 = arith.addf %36, %42 : vector<8x8x64xf32>
    %44 = vector.extract_strided_slice %6 {offsets = [1, 2, 0], sizes = [8, 8, 64], strides = [1, 1, 1]} : vector<10x10x64xf32> to vector<8x8x64xf32>
    %45 = vector.extract_strided_slice %7 {offsets = [5, 0], sizes = [1, 64], strides = [1, 1]} : vector<9x64xf32> to vector<1x64xf32>
    %46 = vector.shape_cast %45 : vector<1x64xf32> to vector<64xf32>
    %47 = vector.shape_cast %46 : vector<64xf32> to vector<1x1x64xf32>
    %48 = vector.broadcast %47 : vector<1x1x64xf32> to vector<8x8x64xf32>
    %49 = arith.mulf %44, %48 : vector<8x8x64xf32>
    %50 = arith.addf %43, %49 : vector<8x8x64xf32>
    %51 = vector.extract_strided_slice %6 {offsets = [2, 0, 0], sizes = [8, 8, 64], strides = [1, 1, 1]} : vector<10x10x64xf32> to vector<8x8x64xf32>
    %52 = vector.extract_strided_slice %7 {offsets = [6, 0], sizes = [1, 64], strides = [1, 1]} : vector<9x64xf32> to vector<1x64xf32>
    %53 = vector.shape_cast %52 : vector<1x64xf32> to vector<64xf32>
    %54 = vector.shape_cast %53 : vector<64xf32> to vector<1x1x64xf32>
    %55 = vector.broadcast %54 : vector<1x1x64xf32> to vector<8x8x64xf32>
    %56 = arith.mulf %51, %55 : vector<8x8x64xf32>
    %57 = arith.addf %50, %56 : vector<8x8x64xf32>
    %58 = vector.extract_strided_slice %6 {offsets = [2, 1, 0], sizes = [8, 8, 64], strides = [1, 1, 1]} : vector<10x10x64xf32> to vector<8x8x64xf32>
    %59 = vector.extract_strided_slice %7 {offsets = [7, 0], sizes = [1, 64], strides = [1, 1]} : vector<9x64xf32> to vector<1x64xf32>
    %60 = vector.shape_cast %59 : vector<1x64xf32> to vector<64xf32>
    %61 = vector.shape_cast %60 : vector<64xf32> to vector<1x1x64xf32>
    %62 = vector.broadcast %61 : vector<1x1x64xf32> to vector<8x8x64xf32>
    %63 = arith.mulf %58, %62 : vector<8x8x64xf32>
    %64 = arith.addf %57, %63 : vector<8x8x64xf32>
    %65 = vector.extract_strided_slice %6 {offsets = [2, 2, 0], sizes = [8, 8, 64], strides = [1, 1, 1]} : vector<10x10x64xf32> to vector<8x8x64xf32>
    %66 = vector.extract_strided_slice %7 {offsets = [8, 0], sizes = [1, 64], strides = [1, 1]} : vector<9x64xf32> to vector<1x64xf32>
    %67 = vector.shape_cast %66 : vector<1x64xf32> to vector<64xf32>
    %68 = vector.shape_cast %67 : vector<64xf32> to vector<1x1x64xf32>
    %69 = vector.broadcast %68 : vector<1x1x64xf32> to vector<8x8x64xf32>
    %70 = arith.mulf %65, %69 : vector<8x8x64xf32>
    %71 = arith.addf %64, %70 : vector<8x8x64xf32>
    %c0_14 = arith.constant 0 : index
    %c0_15 = arith.constant 0 : index
    %72 = vector.load %arg3[%c0_14, %c0_15] : memref<1x64xf32, #tpu.memory_space<vmem>>, vector<1x64xf32>
    %73 = vector.shape_cast %72 : vector<1x64xf32> to vector<1x1x64xf32>
    %74 = vector.broadcast %73 : vector<1x1x64xf32> to vector<8x8x64xf32>
    %75 = arith.mulf %71, %74 : vector<8x8x64xf32>
    %c0_16 = arith.constant 0 : index
    %c0_17 = arith.constant 0 : index
    %76 = vector.load %arg4[%c0_16, %c0_17] : memref<1x64xf32, #tpu.memory_space<vmem>>, vector<1x64xf32>
    %77 = vector.shape_cast %76 : vector<1x64xf32> to vector<1x1x64xf32>
    %78 = vector.broadcast %77 : vector<1x1x64xf32> to vector<8x8x64xf32>
    %79 = arith.addf %75, %78 : vector<8x8x64xf32>
    %cst_18 = arith.constant 5.000000e-01 : f32
    %80 = vector.broadcast %cst_18 : f32 to vector<8x8x64xf32>
    %81 = arith.mulf %80, %79 : vector<8x8x64xf32>
    %cst_19 = arith.constant 0.707106769 : f32
    %82 = vector.broadcast %cst_19 : f32 to vector<8x8x64xf32>
    %83 = arith.mulf %79, %82 : vector<8x8x64xf32>
    %84 = math.erf %83 : vector<8x8x64xf32>
    %cst_20 = arith.constant 1.000000e+00 : f32
    %85 = vector.broadcast %cst_20 : f32 to vector<8x8x64xf32>
    %86 = arith.addf %85, %84 : vector<8x8x64xf32>
    %87 = arith.mulf %81, %86 : vector<8x8x64xf32>
    %88 = arith.truncf %87 : vector<8x8x64xf32> to vector<8x8x64xbf16>
    %c0_21 = arith.constant 0 : index
    %c0_22 = arith.constant 0 : index
    %c0_23 = arith.constant 0 : index
    %c0_24 = arith.constant 0 : index
    %89 = vector.load %arg5[%c0_21, %c0_22, %c0_23, %c0_24] : memref<1x8x8x64xbf16, #tpu.memory_space<vmem>>, vector<1x8x8x64xbf16>
    %90 = vector.shape_cast %89 : vector<1x8x8x64xbf16> to vector<8x8x64xbf16>
    %91 = vector.shape_cast %88 : vector<8x8x64xbf16> to vector<1x8x8x64xbf16>
    tpu.vector_store %arg5[%c0_21, %c0_22, %c0_23, %c0_24], %91 {strides = array<i32>} : memref<1x8x8x64xbf16, #tpu.memory_space<vmem>>, vector<1x8x8x64xbf16>,
    return
  }
  func.func @transform_0(%arg0: i32) -> (i32, i32, i32, i32) {
    %c0_i32 = arith.constant 0 : i32
    %c0_i32_0 = arith.constant 0 : i32
    %c0_i32_1 = arith.constant 0 : i32
    %c0_i32_2 = arith.constant 0 : i32
    return %arg0, %c0_i32, %c0_i32_0, %c0_i32_1 : i32, i32, i32, i32
  }
  func.func @transform_1(%arg0: i32) -> (i32, i32) {
    %c0_i32 = arith.constant 0 : i32
    %c0_i32_0 = arith.constant 0 : i32
    %c0_i32_1 = arith.constant 0 : i32
    return %c0_i32, %c0_i32_0 : i32, i32
  }
  func.func @transform_2(%arg0: i32) -> (i32, i32) {
    %c0_i32 = arith.constant 0 : i32
    %c0_i32_0 = arith.constant 0 : i32
    %c0_i32_1 = arith.constant 0 : i32
    return %c0_i32, %c0_i32_0 : i32, i32
  }
  func.func @transform_3(%arg0: i32) -> (i32, i32) {
    %c0_i32 = arith.constant 0 : i32
    %c0_i32_0 = arith.constant 0 : i32
    %c0_i32_1 = arith.constant 0 : i32
    return %c0_i32, %c0_i32_0 : i32, i32
  }
  func.func @transform_4(%arg0: i32) -> (i32, i32, i32, i32) {
    %c0_i32 = arith.constant 0 : i32
    %c0_i32_0 = arith.constant 0 : i32
    %c0_i32_1 = arith.constant 0 : i32
    %c0_i32_2 = arith.constant 0 : i32
    return %arg0, %c0_i32, %c0_i32_0, %c0_i32_1 : i32, i32, i32, i32
  }
}

module attributes {stable_mosaic.version = 11 : i64} {
  func.func @_ffn_tail_kernel(%arg0: i32, %arg1: memref<1x64x64xbf16, #tpu.memory_space<vmem>>, %arg2: memref<64x16xbf16, #tpu.memory_space<vmem>>, %arg3: memref<1x16xf32, #tpu.memory_space<vmem>>, %arg4: memref<1x16xf32, #tpu.memory_space<vmem>>, %arg5: memref<1x64x16xf32, #tpu.memory_space<vmem>>, %arg6: memref<1x64x16xf32, #tpu.memory_space<vmem>>) attributes {dimension_semantics = [#tpu.dimension_semantics<parallel>], iteration_bounds = array<i64: 2>, scalar_prefetch = 0 : i64, scratch_operands = 0 : i64, tpu.core_type = #tpu.core_type<tc>, window_params = [{transform_indices = @transform_0, window_bounds = array<i64: 1, 64, 64>}, {pipeline_mode = #tpu.pipeline_mode<synchronous>, transform_indices = @transform_1, window_bounds = array<i64: 64, 16>}, {pipeline_mode = #tpu.pipeline_mode<synchronous>, transform_indices = @transform_2, window_bounds = array<i64: 1, 16>}, {pipeline_mode = #tpu.pipeline_mode<synchronous>, transform_indices = @transform_3, window_bounds = array<i64: 1, 16>}, {transform_indices = @transform_4, window_bounds = array<i64: 1, 64, 16>}, {transform_indices = @transform_5, window_bounds = array<i64: 1, 64, 16>}]} {
    %c0 = arith.constant 0 : index
    %c0_0 = arith.constant 0 : index
    %c0_1 = arith.constant 0 : index
    %0 = vector.load %arg1[%c0, %c0_0, %c0_1] : memref<1x64x64xbf16, #tpu.memory_space<vmem>>, vector<1x64x64xbf16>
    %1 = vector.shape_cast %0 : vector<1x64x64xbf16> to vector<64x64xbf16>
    %c0_2 = arith.constant 0 : index
    %c0_3 = arith.constant 0 : index
    %2 = vector.load %arg2[%c0_2, %c0_3] : memref<64x16xbf16, #tpu.memory_space<vmem>>, vector<64x16xbf16>
    %cst = arith.constant dense<0.000000e+00> : vector<64x16xf32>
    %3 = tpu.matmul %1, %2, %cst {dimension_numbers = #tpu.dot_dimension_numbers<[1], [0], [0], [1], [0, 0, 1, 1], [], []>} : vector<64x64xbf16>, vector<64x16xbf16>, vector<64x16xf32> -> vector<64x16xf32>
    %c0_4 = arith.constant 0 : index
    %c0_5 = arith.constant 0 : index
    %4 = vector.load %arg3[%c0_4, %c0_5] : memref<1x16xf32, #tpu.memory_space<vmem>>, vector<1x16xf32>
    %5 = vector.broadcast %4 : vector<1x16xf32> to vector<64x16xf32>
    %6 = arith.mulf %3, %5 : vector<64x16xf32>
    %c0_6 = arith.constant 0 : index
    %c0_7 = arith.constant 0 : index
    %7 = vector.load %arg4[%c0_6, %c0_7] : memref<1x16xf32, #tpu.memory_space<vmem>>, vector<1x16xf32>
    %8 = vector.broadcast %7 : vector<1x16xf32> to vector<64x16xf32>
    %9 = arith.addf %6, %8 : vector<64x16xf32>
    %cst_8 = arith.constant dense<0.000000e+00> : vector<16xf32>
    %10 = vector.multi_reduction <add>, %9, %cst_8 [0] : vector<64x16xf32> to vector<16xf32>
    %11 = vector.shape_cast %10 : vector<16xf32> to vector<1x16xf32>
    %cst_9 = arith.constant 6.400000e+01 : f32
    %12 = vector.broadcast %cst_9 : f32 to vector<1x16xf32>
    %13 = arith.divf %11, %12 : vector<1x16xf32>
    %c0_10 = arith.constant 0 : index
    %c0_11 = arith.constant 0 : index
    %c0_12 = arith.constant 0 : index
    %14 = vector.load %arg5[%c0_10, %c0_11, %c0_12] : memref<1x64x16xf32, #tpu.memory_space<vmem>>, vector<1x64x16xf32>
    %15 = vector.shape_cast %14 : vector<1x64x16xf32> to vector<64x16xf32>
    %16 = vector.broadcast %13 : vector<1x16xf32> to vector<64x16xf32>
    %17 = arith.addf %9, %16 : vector<64x16xf32>
    %cst_13 = arith.constant 5.000000e-01 : f32
    %18 = vector.broadcast %cst_13 : f32 to vector<64x16xf32>
    %19 = arith.mulf %17, %18 : vector<64x16xf32>
    %20 = arith.addf %15, %19 : vector<64x16xf32>
    %c0_14 = arith.constant 0 : index
    %c0_15 = arith.constant 0 : index
    %c0_16 = arith.constant 0 : index
    %21 = vector.load %arg6[%c0_14, %c0_15, %c0_16] : memref<1x64x16xf32, #tpu.memory_space<vmem>>, vector<1x64x16xf32>
    %22 = vector.shape_cast %21 : vector<1x64x16xf32> to vector<64x16xf32>
    %23 = vector.shape_cast %20 : vector<64x16xf32> to vector<1x64x16xf32>
    tpu.vector_store %arg6[%c0_14, %c0_15, %c0_16], %23 {strides = array<i32>} : memref<1x64x16xf32, #tpu.memory_space<vmem>>, vector<1x64x16xf32>,
    return
  }
  func.func @transform_0(%arg0: i32) -> (i32, i32, i32) {
    %c0_i32 = arith.constant 0 : i32
    %c0_i32_0 = arith.constant 0 : i32
    %c0_i32_1 = arith.constant 0 : i32
    return %arg0, %c0_i32, %c0_i32_0 : i32, i32, i32
  }
  func.func @transform_1(%arg0: i32) -> (i32, i32) {
    %c0_i32 = arith.constant 0 : i32
    %c0_i32_0 = arith.constant 0 : i32
    %c0_i32_1 = arith.constant 0 : i32
    return %c0_i32, %c0_i32_0 : i32, i32
  }
  func.func @transform_2(%arg0: i32) -> (i32, i32) {
    %c0_i32 = arith.constant 0 : i32
    %c0_i32_0 = arith.constant 0 : i32
    %c0_i32_1 = arith.constant 0 : i32
    return %c0_i32, %c0_i32_0 : i32, i32
  }
  func.func @transform_3(%arg0: i32) -> (i32, i32) {
    %c0_i32 = arith.constant 0 : i32
    %c0_i32_0 = arith.constant 0 : i32
    %c0_i32_1 = arith.constant 0 : i32
    return %c0_i32, %c0_i32_0 : i32, i32
  }
  func.func @transform_4(%arg0: i32) -> (i32, i32, i32) {
    %c0_i32 = arith.constant 0 : i32
    %c0_i32_0 = arith.constant 0 : i32
    %c0_i32_1 = arith.constant 0 : i32
    return %arg0, %c0_i32, %c0_i32_0 : i32, i32, i32
  }
  func.func @transform_5(%arg0: i32) -> (i32, i32, i32) {
    %c0_i32 = arith.constant 0 : i32
    %c0_i32_0 = arith.constant 0 : i32
    %c0_i32_1 = arith.constant 0 : i32
    return %arg0, %c0_i32, %c0_i32_0 : i32, i32, i32
  }
}

module attributes {stable_mosaic.version = 11 : i64} {
  func.func @_cnn_tail_kernel(%arg0: i32, %arg1: memref<128x64xbf16, #tpu.memory_space<vmem>>, %arg2: memref<64x16xbf16, #tpu.memory_space<vmem>>, %arg3: memref<128x16xf32, #tpu.memory_space<vmem>>, %arg4: memref<128x16xf32, #tpu.memory_space<vmem>>) attributes {dimension_semantics = [#tpu.dimension_semantics<parallel>], iteration_bounds = array<i64: 1>, scalar_prefetch = 0 : i64, scratch_operands = 0 : i64, tpu.core_type = #tpu.core_type<tc>, window_params = [{transform_indices = @transform_0, window_bounds = array<i64: 128, 64>}, {pipeline_mode = #tpu.pipeline_mode<synchronous>, transform_indices = @transform_1, window_bounds = array<i64: 64, 16>}, {transform_indices = @transform_2, window_bounds = array<i64: 128, 16>}, {transform_indices = @transform_3, window_bounds = array<i64: 128, 16>}]} {
    %c0 = arith.constant 0 : index
    %c0_0 = arith.constant 0 : index
    %0 = vector.load %arg1[%c0, %c0_0] : memref<128x64xbf16, #tpu.memory_space<vmem>>, vector<128x64xbf16>
    %c0_1 = arith.constant 0 : index
    %c0_2 = arith.constant 0 : index
    %1 = vector.load %arg2[%c0_1, %c0_2] : memref<64x16xbf16, #tpu.memory_space<vmem>>, vector<64x16xbf16>
    %cst = arith.constant dense<0.000000e+00> : vector<128x16xf32>
    %2 = tpu.matmul %0, %1, %cst {dimension_numbers = #tpu.dot_dimension_numbers<[1], [0], [0], [1], [0, 0, 1, 1], [], []>} : vector<128x64xbf16>, vector<64x16xbf16>, vector<128x16xf32> -> vector<128x16xf32>
    %c0_3 = arith.constant 0 : index
    %c0_4 = arith.constant 0 : index
    %3 = vector.load %arg3[%c0_3, %c0_4] : memref<128x16xf32, #tpu.memory_space<vmem>>, vector<128x16xf32>
    %cst_5 = arith.constant 5.000000e-01 : f32
    %4 = vector.broadcast %cst_5 : f32 to vector<128x16xf32>
    %5 = arith.mulf %4, %3 : vector<128x16xf32>
    %cst_6 = arith.constant 5.000000e-01 : f32
    %6 = vector.broadcast %cst_6 : f32 to vector<128x16xf32>
    %7 = arith.mulf %6, %2 : vector<128x16xf32>
    %8 = arith.addf %5, %7 : vector<128x16xf32>
    %c0_7 = arith.constant 0 : index
    %c0_8 = arith.constant 0 : index
    %9 = vector.load %arg4[%c0_7, %c0_8] : memref<128x16xf32, #tpu.memory_space<vmem>>, vector<128x16xf32>
    tpu.vector_store %arg4[%c0_7, %c0_8], %8 {strides = array<i32>} : memref<128x16xf32, #tpu.memory_space<vmem>>, vector<128x16xf32>,
    return
  }
  func.func @transform_0(%arg0: i32) -> (i32, i32) {
    %c0_i32 = arith.constant 0 : i32
    %c0_i32_0 = arith.constant 0 : i32
    return %arg0, %c0_i32 : i32, i32
  }
  func.func @transform_1(%arg0: i32) -> (i32, i32) {
    %c0_i32 = arith.constant 0 : i32
    %c0_i32_0 = arith.constant 0 : i32
    %c0_i32_1 = arith.constant 0 : i32
    return %c0_i32, %c0_i32_0 : i32, i32
  }
  func.func @transform_2(%arg0: i32) -> (i32, i32) {
    %c0_i32 = arith.constant 0 : i32
    %c0_i32_0 = arith.constant 0 : i32
    return %arg0, %c0_i32 : i32, i32
  }
  func.func @transform_3(%arg0: i32) -> (i32, i32) {
    %c0_i32 = arith.constant 0 : i32
    %c0_i32_0 = arith.constant 0 : i32
    return %arg0, %c0_i32 : i32, i32
  }
}

</mosaic_0001>

<llo_original>
// kernel: glu_block_forward.14
$region0: #{glu_block_forward.14}
  #allocation0 [shape = 'u32[]', space=smem, size = 0x4, offset = 0x4, fixed_abs, tag = 'smem constant byte address 0x4 - core index']
  #allocation1 [shape = 'u32[72,128]{1,0:T(1,128)}', space=vmem, size = 0x9000, scoped, tag = 'internal scratch']
  %s0 = inlined_call_operand.vmem [shape: f32[128,16], index: 0, kind: input, shape index: {}]
  %s1 = inlined_call_operand.vmem [shape: bf16[16,64], index: 1, kind: input, shape index: {}]
  %s2 = inlined_call_operand.vmem [shape: f32[1,64], index: 2, kind: input, shape index: {}]
  %s3 = inlined_call_operand.vmem [shape: f32[1,64], index: 3, kind: input, shape index: {}]
  %s4 = inlined_call_operand.vmem [shape: bf16[128,64], index: 4, kind: output, shape index: {}]
  %s5 = sld [smem:[#allocation0]]
  $region26: #{glu_block_forward.14} parent=0
    _
  %s7 = ssub.s32 1, %s5
  %s8 = scalar_select 0, %s7, %s5
  // Predicated region
  $region2: #{glu_block_forward.14} parent=0 // pred_check
    _
  $region3: #{glu_block_forward.14} parent=0 // pred_check_branch
    %10 = sbr.rel (0) target = $region5
  $region4: #{glu_block_forward.14} parent=0 // pred_region
    _
  $region5: #{glu_block_forward.14} parent=0 // pred_fallthru
    _
  // Predicated region
  $region6: #{glu_block_forward.14} parent=0 // pred_check
    _
  $region7: #{glu_block_forward.14} parent=0 // pred_check_branch
    %12 = sbr.rel (0) target = $region9
  $region8: #{glu_block_forward.14} parent=0 // pred_region
    _
  $region9: #{glu_block_forward.14} parent=0 // pred_fallthru
    _
  // Predicated region
  $region10: #{glu_block_forward.14} parent=0 // pred_check
    _
  $region11: #{glu_block_forward.14} parent=0 // pred_check_branch
    %14 = sbr.rel (0) target = $region13
  $region12: #{glu_block_forward.14} parent=0 // pred_region
    _
  $region13: #{glu_block_forward.14} parent=0 // pred_fallthru
    _
  // Predicated region
  $region14: #{glu_block_forward.14} parent=0 // pred_check
    _
  $region15: #{glu_block_forward.14} parent=0 // pred_check_branch
    %16 = sbr.rel (0) target = $region17
  $region16: #{glu_block_forward.14} parent=0 // pred_region
    _
  $region17: #{glu_block_forward.14} parent=0 // pred_fallthru
    _
  %v18 = vld [vmem:[%s0] sm:$0xff]
  %v19 = vld [vmem:[%s0 + $0x8] sm:$0xff]
  %v20 = vld [vmem:[%s0 + $0x10] sm:$0xff]
  %v21 = vld [vmem:[%s0 + $0x18] sm:$0xff]
  %v22 = vld [vmem:[%s0 + $0x20] sm:$0xff]
  %v23 = vld [vmem:[%s0 + $0x28] sm:$0xff]
  %v24 = vld [vmem:[%s0 + $0x30] sm:$0xff]
  %v25 = vld [vmem:[%s0 + $0x38] sm:$0xff]
  %v26 = vld [vmem:[%s0 + $0x40] sm:$0xff]
  %v27 = vld [vmem:[%s0 + $0x48] sm:$0xff]
  %v28 = vld [vmem:[%s0 + $0x50] sm:$0xff]
  %v29 = vld [vmem:[%s0 + $0x58] sm:$0xff]
  %v30 = vld [vmem:[%s0 + $0x60] sm:$0xff]
  %v31 = vld [vmem:[%s0 + $0x68] sm:$0xff]
  %v32 = vld [vmem:[%s0 + $0x70] sm:$0xff]
  %v33 = vld [vmem:[%s0 + $0x78] sm:$0xff]
  %v34 = vpack.c.bf16 %v19, %v18
  %v35 = vpack.c.bf16 %v21, %v20
  %v36 = vpack.c.bf16 %v23, %v22
  %v37 = vpack.c.bf16 %v25, %v24
  %v38 = vpack.c.bf16 %v27, %v26
  %v39 = vpack.c.bf16 %v29, %v28
  %v40 = vpack.c.bf16 %v31, %v30
  %v41 = vpack.c.bf16 %v33, %v32
  %v42 = vld [vmem:[%s1] sm:$0xf]
  %v43 = vld [vmem:[%s1 + $0x4] sm:$0xf]
  %v46 = vunpack.c.l.b16 %v42
  %v47 = vunpack.c.l.b16 %v43
  %v48 = vpack.c.b16 %v47, %v46
  %vm50 = vcmask 130048
  %v52 = vsel %vm50, %v34, 0
  %v55 = vsel %vm50, %v35, 0
  %v58 = vsel %vm50, %v36, 0
  %v61 = vsel %vm50, %v37, 0
  %v64 = vsel %vm50, %v38, 0
  %v67 = vsel %vm50, %v39, 0
  %v70 = vsel %vm50, %v40, 0
  %v73 = vsel %vm50, %v41, 0
  %75 = vmatpush.bf16.msra.mxu0 0
  %76 = vmatpush.bf16.msra.mxu0 0
  %77 = vmatpush.bf16.msra.mxu0 0
  %78 = vmatpush.bf16.msra.mxu0 0
  %79 = vmatpush.bf16.msra.mxu0 0
  %80 = vmatpush.bf16.msra.mxu0 0
  %81 = vmatpush.bf16.msra.mxu0 0
  %82 = vmatpush.bf16.msra.mxu0 %v48
  %83 = vmatmul.bf16.gmra.mxu0 %v52
  %v84 = vpop.f32.mrf.mxu0
  %v85 = vadd.f32 0.0, %v84
  %v86 = vpop.f32.mrf.mxu0
  %v87 = vadd.f32 0.0, %v86
  %88 = vmatmul.bf16.gmra.mxu0 %v55
  %v89 = vpop.f32.mrf.mxu0
  %v90 = vadd.f32 0.0, %v89
  %v91 = vpop.f32.mrf.mxu0
  %v92 = vadd.f32 0.0, %v91
  %93 = vmatmul.bf16.gmra.mxu0 %v58
  %v94 = vpop.f32.mrf.mxu0
  %v95 = vadd.f32 0.0, %v94
  %v96 = vpop.f32.mrf.mxu0
  %v97 = vadd.f32 0.0, %v96
  %98 = vmatmul.bf16.gmra.mxu0 %v61
  %v99 = vpop.f32.mrf.mxu0
  %v100 = vadd.f32 0.0, %v99
  %v101 = vpop.f32.mrf.mxu0
  %v102 = vadd.f32 0.0, %v101
  %103 = vmatmul.bf16.gmra.mxu0 %v64
  %v104 = vpop.f32.mrf.mxu0
  %v105 = vadd.f32 0.0, %v104
  %v106 = vpop.f32.mrf.mxu0
  %v107 = vadd.f32 0.0, %v106
  %108 = vmatmul.bf16.gmra.mxu0 %v67
  %v109 = vpop.f32.mrf.mxu0
  %v110 = vadd.f32 0.0, %v109
  %v111 = vpop.f32.mrf.mxu0
  %v112 = vadd.f32 0.0, %v111
  %113 = vmatmul.bf16.gmra.mxu0 %v70
  %v114 = vpop.f32.mrf.mxu0
  %v115 = vadd.f32 0.0, %v114
  %v116 = vpop.f32.mrf.mxu0
  %v117 = vadd.f32 0.0, %v116
  %118 = vmatmul.bf16.gmra.mxu0 %v73
  %v119 = vpop.f32.mrf.mxu0
  %v120 = vadd.f32 0.0, %v119
  %v121 = vpop.f32.mrf.mxu0
  %v122 = vadd.f32 0.0, %v121
  %123 = vdwg.mxu0
  %v124 = vld [vmem:[%s2] sm:$0x1]
  %v126 = vperm.slane %v124, 0
  %v128 = vmul.f32 %v85, %v126
  %v129 = vmul.f32 %v87, %v126
  %v130 = vmul.f32 %v90, %v126
  %v131 = vmul.f32 %v92, %v126
  %v132 = vmul.f32 %v95, %v126
  %v133 = vmul.f32 %v97, %v126
  %v134 = vmul.f32 %v100, %v126
  %v135 = vmul.f32 %v102, %v126
  %v136 = vmul.f32 %v105, %v126
  %v137 = vmul.f32 %v107, %v126
  %v138 = vmul.f32 %v110, %v126
  %v139 = vmul.f32 %v112, %v126
  %v140 = vmul.f32 %v115, %v126
  %v141 = vmul.f32 %v117, %v126
  %v142 = vmul.f32 %v120, %v126
  %v143 = vmul.f32 %v122, %v126
  %v144 = vld [vmem:[%s3] sm:$0x1]
  %v146 = vperm.slane %v144, 0
  %v148 = vadd.f32 %v128, %v146
  %v149 = vadd.f32 %v129, %v146
  %v150 = vadd.f32 %v130, %v146
  %v151 = vadd.f32 %v131, %v146
  %v152 = vadd.f32 %v132, %v146
  %v153 = vadd.f32 %v133, %v146
  %v154 = vadd.f32 %v134, %v146
  %v155 = vadd.f32 %v135, %v146
  %v156 = vadd.f32 %v136, %v146
  %v157 = vadd.f32 %v137, %v146
  %v158 = vadd.f32 %v138, %v146
  %v159 = vadd.f32 %v139, %v146
  %v160 = vadd.f32 %v140, %v146
  %v161 = vadd.f32 %v141, %v146
  %v162 = vadd.f32 %v142, %v146
  %v163 = vadd.f32 %v143, %v146
  %v164 = vmul.f32 %v148, 0.5
  %v165 = vmul.f32 %v149, 0.5
  %v166 = vmul.f32 %v150, 0.5
  %v167 = vmul.f32 %v151, 0.5
  %v168 = vmul.f32 %v152, 0.5
  %v169 = vmul.f32 %v153, 0.5
  %v170 = vmul.f32 %v154, 0.5
  %v171 = vmul.f32 %v155, 0.5
  %v172 = vmul.f32 %v156, 0.5
  %v173 = vmul.f32 %v157, 0.5
  %v174 = vmul.f32 %v158, 0.5
  %v175 = vmul.f32 %v159, 0.5
  %v176 = vmul.f32 %v160, 0.5
  %v177 = vmul.f32 %v161, 0.5
  %v178 = vmul.f32 %v162, 0.5
  %v179 = vmul.f32 %v163, 0.5
  %v180 = vmul.f32 %v148, 0.70710677
  %v181 = vmul.f32 %v149, 0.70710677
  %v182 = vmul.f32 %v150, 0.70710677
  %v183 = vmul.f32 %v151, 0.70710677
  %v184 = vmul.f32 %v152, 0.70710677
  %v185 = vmul.f32 %v153, 0.70710677
  %v186 = vmul.f32 %v154, 0.70710677
  %v187 = vmul.f32 %v155, 0.70710677
  %v188 = vmul.f32 %v156, 0.70710677
  %v189 = vmul.f32 %v157, 0.70710677
  %v190 = vmul.f32 %v158, 0.70710677
  %v191 = vmul.f32 %v159, 0.70710677
  %v192 = vmul.f32 %v160, 0.70710677
  %v193 = vmul.f32 %v161, 0.70710677
  %v194 = vmul.f32 %v162, 0.70710677
  %v195 = vmul.f32 %v163, 0.70710677
  %v196 = vmul.f32 %v180, %v180
  %v197 = vmin.f32 16.0, %v196
  %v198 = vmul.f32 %v197, 2.1237322e-06
  %v199 = vadd.f32 %v198, 0.00028619796
  %v200 = vmul.f32 %v197, %v199
  %v201 = vadd.f32 %v200, 0.0036580483
  %v202 = vmul.f32 %v197, %v201
  %v203 = vadd.f32 %v202, 0.05243302
  %v204 = vmul.f32 %v197, %v203
  %v205 = vadd.f32 %v204, 0.18741608
  %v206 = vmul.f32 %v197, %v205
  %v207 = vadd.f32 %v206, 1.1283791
  %v208 = vmul.f32 %v180, %v207
  %v209 = vmul.f32 %v197, 3.8918573e-05
  %v210 = vadd.f32 %v209, 0.001143296
  %v211 = vmul.f32 %v197, %v210
  %v212 = vadd.f32 %v211, 0.014752088
  %v213 = vmul.f32 %v197, %v212
  %v214 = vadd.f32 %v213, 0.112945676
  %v215 = vmul.f32 %v197, %v214
  %v216 = vadd.f32 %v215, 0.4994258
  %v217 = vmul.f32 %v197, %v216
  %v218 = vadd.f32 %v217, 1.0
  %v219 = vrcp.pop %v218
  %v220 = vmul.f32 %v218, %v219
  %v221 = vsub.f32 1.0, %v220
  %v222 = vmul.f32 %v219, %v221
  %v223 = vadd.f32 %v219, %v222
  %vm224 = vweird.f32 %v218
  %vm225 = vweird.f32 %v219
  %vm226 = vmor %vm224, %vm225
  %v227 = vsel %vm226, %v219, %v223
  %v228 = vand.u32 2147483647, %v218
  %vm229 = vcmp.eq.f32.partialorder %v228, 8.507059e+37
  %v230 = vand.u32 %v218, 2147483648
  %v231 = vor.u32 1.1754944e-38, %v230
  %v232 = vsel %vm229, %v231, %v227
  %v233 = vmul.f32 %v208, %v232
  %v234 = vmin.f32 %v233, 1.0
  %v235 = vmax.f32 %v234, -1.0
  %v236 = vmul.f32 %v181, %v181
  %v237 = vmin.f32 16.0, %v236
  %v238 = vmul.f32 %v237, 2.1237322e-06
  %v239 = vadd.f32 %v238, 0.00028619796
  %v240 = vmul.f32 %v237, %v239
  %v241 = vadd.f32 %v240, 0.0036580483
  %v242 = vmul.f32 %v237, %v241
  %v243 = vadd.f32 %v242, 0.05243302
  %v244 = vmul.f32 %v237, %v243
  %v245 = vadd.f32 %v244, 0.18741608
  %v246 = vmul.f32 %v237, %v245
  %v247 = vadd.f32 %v246, 1.1283791
  %v248 = vmul.f32 %v181, %v247
  %v249 = vmul.f32 %v237, 3.8918573e-05
  %v250 = vadd.f32 %v249, 0.001143296
  %v251 = vmul.f32 %v237, %v250
  %v252 = vadd.f32 %v251, 0.014752088
  %v253 = vmul.f32 %v237, %v252
  %v254 = vadd.f32 %v253, 0.112945676
  %v255 = vmul.f32 %v237, %v254
  %v256 = vadd.f32 %v255, 0.4994258
  %v257 = vmul.f32 %v237, %v256
  %v258 = vadd.f32 %v257, 1.0
  %v259 = vrcp.pop %v258
  %v260 = vmul.f32 %v258, %v259
  %v261 = vsub.f32 1.0, %v260
  %v262 = vmul.f32 %v259, %v261
  %v263 = vadd.f32 %v259, %v262
  %vm264 = vweird.f32 %v258
  %vm265 = vweird.f32 %v259
  %vm266 = vmor %vm264, %vm265
  %v267 = vsel %vm266, %v259, %v263
  %v268 = vand.u32 2147483647, %v258
  %vm269 = vcmp.eq.f32.partialorder %v268, 8.507059e+37
  %v270 = vand.u32 %v258, 2147483648
  %v271 = vor.u32 1.1754944e-38, %v270
  %v272 = vsel %vm269, %v271, %v267
  %v273 = vmul.f32 %v248, %v272
  %v274 = vmin.f32 %v273, 1.0
  %v275 = vmax.f32 %v274, -1.0
  %v276 = vmul.f32 %v182, %v182
  %v277 = vmin.f32 16.0, %v276
  %v278 = vmul.f32 %v277, 2.1237322e-06
  %v279 = vadd.f32 %v278, 0.00028619796
  %v280 = vmul.f32 %v277, %v279
  %v281 = vadd.f32 %v280, 0.0036580483
  %v282 = vmul.f32 %v277, %v281
  %v283 = vadd.f32 %v282, 0.05243302
  %v284 = vmul.f32 %v277, %v283
  %v285 = vadd.f32 %v284, 0.18741608
  %v286 = vmul.f32 %v277, %v285
  %v287 = vadd.f32 %v286, 1.1283791
  %v288 = vmul.f32 %v182, %v287
  %v289 = vmul.f32 %v277, 3.8918573e-05
  %v290 = vadd.f32 %v289, 0.001143296
  %v291 = vmul.f32 %v277, %v290
  %v292 = vadd.f32 %v291, 0.014752088
  %v293 = vmul.f32 %v277, %v292
  %v294 = vadd.f32 %v293, 0.112945676
  %v295 = vmul.f32 %v277, %v294
  %v296 = vadd.f32 %v295, 0.4994258
  %v297 = vmul.f32 %v277, %v296
  %v298 = vadd.f32 %v297, 1.0
  %v299 = vrcp.pop %v298
  %v300 = vmul.f32 %v298, %v299
  %v301 = vsub.f32 1.0, %v300
  %v302 = vmul.f32 %v299, %v301
  %v303 = vadd.f32 %v299, %v302
  %vm304 = vweird.f32 %v298
  %vm305 = vweird.f32 %v299
  %vm306 = vmor %vm304, %vm305
  %v307 = vsel %vm306, %v299, %v303
  %v308 = vand.u32 2147483647, %v298
  %vm309 = vcmp.eq.f32.partialorder %v308, 8.507059e+37
  %v310 = vand.u32 %v298, 2147483648
  %v311 = vor.u32 1.1754944e-38, %v310
  %v312 = vsel %vm309, %v311, %v307
  %v313 = vmul.f32 %v288, %v312
  %v314 = vmin.f32 %v313, 1.0
  %v315 = vmax.f32 %v314, -1.0
  %v316 = vmul.f32 %v183, %v183
  %v317 = vmin.f32 16.0, %v316
  %v318 = vmul.f32 %v317, 2.1237322e-06
  %v319 = vadd.f32 %v318, 0.00028619796
  %v320 = vmul.f32 %v317, %v319
  %v321 = vadd.f32 %v320, 0.0036580483
  %v322 = vmul.f32 %v317, %v321
  %v323 = vadd.f32 %v322, 0.05243302
  %v324 = vmul.f32 %v317, %v323
  %v325 = vadd.f32 %v324, 0.18741608
  %v326 = vmul.f32 %v317, %v325
  %v327 = vadd.f32 %v326, 1.1283791
  %v328 = vmul.f32 %v183, %v327
  %v329 = vmul.f32 %v317, 3.8918573e-05
  %v330 = vadd.f32 %v329, 0.001143296
  %v331 = vmul.f32 %v317, %v330
  %v332 = vadd.f32 %v331, 0.014752088
  %v333 = vmul.f32 %v317, %v332
  %v334 = vadd.f32 %v333, 0.112945676
  %v335 = vmul.f32 %v317, %v334
  %v336 = vadd.f32 %v335, 0.4994258
  %v337 = vmul.f32 %v317, %v336
  %v338 = vadd.f32 %v337, 1.0
  %v339 = vrcp.pop %v338
  %v340 = vmul.f32 %v338, %v339
  %v341 = vsub.f32 1.0, %v340
  %v342 = vmul.f32 %v339, %v341
  %v343 = vadd.f32 %v339, %v342
  %vm344 = vweird.f32 %v338
  %vm345 = vweird.f32 %v339
  %vm346 = vmor %vm344, %vm345
  %v347 = vsel %vm346, %v339, %v343
  %v348 = vand.u32 2147483647, %v338
  %vm349 = vcmp.eq.f32.partialorder %v348, 8.507059e+37
  %v350 = vand.u32 %v338, 2147483648
  %v351 = vor.u32 1.1754944e-38, %v350
  %v352 = vsel %vm349, %v351, %v347
  %v353 = vmul.f32 %v328, %v352
  %v354 = vmin.f32 %v353, 1.0
  %v355 = vmax.f32 %v354, -1.0
  %v356 = vmul.f32 %v184, %v184
  %v357 = vmin.f32 16.0, %v356
  %v358 = vmul.f32 %v357, 2.1237322e-06
  %v359 = vadd.f32 %v358, 0.00028619796
  %v360 = vmul.f32 %v357, %v359
  %v361 = vadd.f32 %v360, 0.0036580483
  %v362 = vmul.f32 %v357, %v361
  %v363 = vadd.f32 %v362, 0.05243302
  %v364 = vmul.f32 %v357, %v363
  %v365 = vadd.f32 %v364, 0.18741608
  %v366 = vmul.f32 %v357, %v365
  %v367 = vadd.f32 %v366, 1.1283791
  %v368 = vmul.f32 %v184, %v367
  %v369 = vmul.f32 %v357, 3.8918573e-05
  %v370 = vadd.f32 %v369, 0.001143296
  %v371 = vmul.f32 %v357, %v370
  %v372 = vadd.f32 %v371, 0.014752088
  %v373 = vmul.f32 %v357, %v372
  %v374 = vadd.f32 %v373, 0.112945676
  %v375 = vmul.f32 %v357, %v374
  %v376 = vadd.f32 %v375, 0.4994258
  %v377 = vmul.f32 %v357, %v376
  %v378 = vadd.f32 %v377, 1.0
  %v379 = vrcp.pop %v378
  %v380 = vmul.f32 %v378, %v379
  %v381 = vsub.f32 1.0, %v380
  %v382 = vmul.f32 %v379, %v381
  %v383 = vadd.f32 %v379, %v382
  %vm384 = vweird.f32 %v378
  %vm385 = vweird.f32 %v379
  %vm386 = vmor %vm384, %vm385
  %v387 = vsel %vm386, %v379, %v383
  %v388 = vand.u32 2147483647, %v378
  %vm389 = vcmp.eq.f32.partialorder %v388, 8.507059e+37
  %v390 = vand.u32 %v378, 2147483648
  %v391 = vor.u32 1.1754944e-38, %v390
  %v392 = vsel %vm389, %v391, %v387
  %v393 = vmul.f32 %v368, %v392
  %v394 = vmin.f32 %v393, 1.0
  %v395 = vmax.f32 %v394, -1.0
  %v396 = vmul.f32 %v185, %v185
  %v397 = vmin.f32 16.0, %v396
  %v398 = vmul.f32 %v397, 2.1237322e-06
  %v399 = vadd.f32 %v398, 0.00028619796
  %v400 = vmul.f32 %v397, %v399
  %v401 = vadd.f32 %v400, 0.0036580483
  %v402 = vmul.f32 %v397, %v401
  %v403 = vadd.f32 %v402, 0.05243302
  %v404 = vmul.f32 %v397, %v403
  %v405 = vadd.f32 %v404, 0.18741608
  %v406 = vmul.f32 %v397, %v405
  %v407 = vadd.f32 %v406, 1.1283791
  %v408 = vmul.f32 %v185, %v407
  %v409 = vmul.f32 %v397, 3.8918573e-05
  %v410 = vadd.f32 %v409, 0.001143296
  %v411 = vmul.f32 %v397, %v410
  %v412 = vadd.f32 %v411, 0.014752088
  %v413 = vmul.f32 %v397, %v412
  %v414 = vadd.f32 %v413, 0.112945676
  %v415 = vmul.f32 %v397, %v414
  %v416 = vadd.f32 %v415, 0.4994258
  %v417 = vmul.f32 %v397, %v416
  %v418 = vadd.f32 %v417, 1.0
  %v419 = vrcp.pop %v418
  %v420 = vmul.f32 %v418, %v419
  %v421 = vsub.f32 1.0, %v420
  %v422 = vmul.f32 %v419, %v421
  %v423 = vadd.f32 %v419, %v422
  %vm424 = vweird.f32 %v418
  %vm425 = vweird.f32 %v419
  %vm426 = vmor %vm424, %vm425
  %v427 = vsel %vm426, %v419, %v423
  %v428 = vand.u32 2147483647, %v418
  %vm429 = vcmp.eq.f32.partialorder %v428, 8.507059e+37
  %v430 = vand.u32 %v418, 2147483648
  %v431 = vor.u32 1.1754944e-38, %v430
  %v432 = vsel %vm429, %v431, %v427
  %v433 = vmul.f32 %v408, %v432
  %v434 = vmin.f32 %v433, 1.0
  %v435 = vmax.f32 %v434, -1.0
  %v436 = vmul.f32 %v186, %v186
  %v437 = vmin.f32 16.0, %v436
  %v438 = vmul.f32 %v437, 2.1237322e-06
  %v439 = vadd.f32 %v438, 0.00028619796
  %v440 = vmul.f32 %v437, %v439
  %v441 = vadd.f32 %v440, 0.0036580483
  %v442 = vmul.f32 %v437, %v441
  %v443 = vadd.f32 %v442, 0.05243302
  %v444 = vmul.f32 %v437, %v443
  %v445 = vadd.f32 %v444, 0.18741608
  %v446 = vmul.f32 %v437, %v445
  %v447 = vadd.f32 %v446, 1.1283791
  %v448 = vmul.f32 %v186, %v447
  %v449 = vmul.f32 %v437, 3.8918573e-05
  %v450 = vadd.f32 %v449, 0.001143296
  %v451 = vmul.f32 %v437, %v450
  %v452 = vadd.f32 %v451, 0.014752088
  %v453 = vmul.f32 %v437, %v452
  %v454 = vadd.f32 %v453, 0.112945676
  %v455 = vmul.f32 %v437, %v454
  %v456 = vadd.f32 %v455, 0.4994258
  %v457 = vmul.f32 %v437, %v456
  %v458 = vadd.f32 %v457, 1.0
  %v459 = vrcp.pop %v458
  %v460 = vmul.f32 %v458, %v459
  %v461 = vsub.f32 1.0, %v460
  %v462 = vmul.f32 %v459, %v461
  %v463 = vadd.f32 %v459, %v462
  %vm464 = vweird.f32 %v458
  %vm465 = vweird.f32 %v459
  %vm466 = vmor %vm464, %vm465
  %v467 = vsel %vm466, %v459, %v463
  %v468 = vand.u32 2147483647, %v458
  %vm469 = vcmp.eq.f32.partialorder %v468, 8.507059e+37
  %v470 = vand.u32 %v458, 2147483648
  %v471 = vor.u32 1.1754944e-38, %v470
  %v472 = vsel %vm469, %v471, %v467
  %v473 = vmul.f32 %v448, %v472
  %v474 = vmin.f32 %v473, 1.0
  %v475 = vmax.f32 %v474, -1.0
  %v476 = vmul.f32 %v187, %v187
  %v477 = vmin.f32 16.0, %v476
  %v478 = vmul.f32 %v477, 2.1237322e-06
  %v479 = vadd.f32 %v478, 0.00028619796
  %v480 = vmul.f32 %v477, %v479
  %v481 = vadd.f32 %v480, 0.0036580483
  %v482 = vmul.f32 %v477, %v481
  %v483 = vadd.f32 %v482, 0.05243302
  %v484 = vmul.f32 %v477, %v483
  %v485 = vadd.f32 %v484, 0.18741608
  %v486 = vmul.f32 %v477, %v485
  %v487 = vadd.f32 %v486, 1.1283791
  %v488 = vmul.f32 %v187, %v487
  %v489 = vmul.f32 %v477, 3.8918573e-05
  %v490 = vadd.f32 %v489, 0.001143296
  %v491 = vmul.f32 %v477, %v490
  %v492 = vadd.f32 %v491, 0.014752088
  %v493 = vmul.f32 %v477, %v492
  %v494 = vadd.f32 %v493, 0.112945676
  %v495 = vmul.f32 %v477, %v494
  %v496 = vadd.f32 %v495, 0.4994258
  %v497 = vmul.f32 %v477, %v496
  %v498 = vadd.f32 %v497, 1.0
  %v499 = vrcp.pop %v498
  %v500 = vmul.f32 %v498, %v499
  %v501 = vsub.f32 1.0, %v500
  %v502 = vmul.f32 %v499, %v501
  %v503 = vadd.f32 %v499, %v502
  %vm504 = vweird.f32 %v498
  %vm505 = vweird.f32 %v499
  %vm506 = vmor %vm504, %vm505
  %v507 = vsel %vm506, %v499, %v503
  %v508 = vand.u32 2147483647, %v498
  %vm509 = vcmp.eq.f32.partialorder %v508, 8.507059e+37
  %v510 = vand.u32 %v498, 2147483648
  %v511 = vor.u32 1.1754944e-38, %v510
  %v512 = vsel %vm509, %v511, %v507
  %v513 = vmul.f32 %v488, %v512
  %v514 = vmin.f32 %v513, 1.0
  %v515 = vmax.f32 %v514, -1.0
  %v516 = vmul.f32 %v188, %v188
  %v517 = vmin.f32 16.0, %v516
  %v518 = vmul.f32 %v517, 2.1237322e-06
  %v519 = vadd.f32 %v518, 0.00028619796
  %v520 = vmul.f32 %v517, %v519
  %v521 = vadd.f32 %v520, 0.0036580483
  %v522 = vmul.f32 %v517, %v521
  %v523 = vadd.f32 %v522, 0.05243302
  %v524 = vmul.f32 %v517, %v523
  %v525 = vadd.f32 %v524, 0.18741608
  %v526 = vmul.f32 %v517, %v525
  %v527 = vadd.f32 %v526, 1.1283791
  %v528 = vmul.f32 %v188, %v527
  %v529 = vmul.f32 %v517, 3.8918573e-05
  %v530 = vadd.f32 %v529, 0.001143296
  %v531 = vmul.f32 %v517, %v530
  %v532 = vadd.f32 %v531, 0.014752088
  %v533 = vmul.f32 %v517, %v532
  %v534 = vadd.f32 %v533, 0.112945676
  %v535 = vmul.f32 %v517, %v534
  %v536 = vadd.f32 %v535, 0.4994258
  %v537 = vmul.f32 %v517, %v536
  %v538 = vadd.f32 %v537, 1.0
  %v539 = vrcp.pop %v538
  %v540 = vmul.f32 %v538, %v539
  %v541 = vsub.f32 1.0, %v540
  %v542 = vmul.f32 %v539, %v541
  %v543 = vadd.f32 %v539, %v542
  %vm544 = vweird.f32 %v538
  %vm545 = vweird.f32 %v539
  %vm546 = vmor %vm544, %vm545
  %v547 = vsel %vm546, %v539, %v543
  %v548 = vand.u32 2147483647, %v538
  %vm549 = vcmp.eq.f32.partialorder %v548, 8.507059e+37
  %v550 = vand.u32 %v538, 2147483648
  %v551 = vor.u32 1.1754944e-38, %v550
  %v552 = vsel %vm549, %v551, %v547
  %v553 = vmul.f32 %v528, %v552
  %v554 = vmin.f32 %v553, 1.0
  %v555 = vmax.f32 %v554, -1.0
  %v556 = vmul.f32 %v189, %v189
  %v557 = vmin.f32 16.0, %v556
  %v558 = vmul.f32 %v557, 2.1237322e-06
  %v559 = vadd.f32 %v558, 0.00028619796
  %v560 = vmul.f32 %v557, %v559
  %v561 = vadd.f32 %v560, 0.0036580483
  %v562 = vmul.f32 %v557, %v561
  %v563 = vadd.f32 %v562, 0.05243302
  %v564 = vmul.f32 %v557, %v563
  %v565 = vadd.f32 %v564, 0.18741608
  %v566 = vmul.f32 %v557, %v565
  %v567 = vadd.f32 %v566, 1.1283791
  %v568 = vmul.f32 %v189, %v567
  %v569 = vmul.f32 %v557, 3.8918573e-05
  %v570 = vadd.f32 %v569, 0.001143296
  %v571 = vmul.f32 %v557, %v570
  %v572 = vadd.f32 %v571, 0.014752088
  %v573 = vmul.f32 %v557, %v572
  %v574 = vadd.f32 %v573, 0.112945676
  %v575 = vmul.f32 %v557, %v574
  %v576 = vadd.f32 %v575, 0.4994258
  %v577 = vmul.f32 %v557, %v576
  %v578 = vadd.f32 %v577, 1.0
  %v579 = vrcp.pop %v578
  %v580 = vmul.f32 %v578, %v579
  %v581 = vsub.f32 1.0, %v580
  %v582 = vmul.f32 %v579, %v581
  %v583 = vadd.f32 %v579, %v582
  %vm584 = vweird.f32 %v578
  %vm585 = vweird.f32 %v579
  %vm586 = vmor %vm584, %vm585
  %v587 = vsel %vm586, %v579, %v583
  %v588 = vand.u32 2147483647, %v578
  %vm589 = vcmp.eq.f32.partialorder %v588, 8.507059e+37
  %v590 = vand.u32 %v578, 2147483648
  %v591 = vor.u32 1.1754944e-38, %v590
  %v592 = vsel %vm589, %v591, %v587
  %v593 = vmul.f32 %v568, %v592
  %v594 = vmin.f32 %v593, 1.0
  %v595 = vmax.f32 %v594, -1.0
  %v596 = vmul.f32 %v190, %v190
  %v597 = vmin.f32 16.0, %v596
  %v598 = vmul.f32 %v597, 2.1237322e-06
  %v599 = vadd.f32 %v598, 0.00028619796
  %v600 = vmul.f32 %v597, %v599
  %v601 = vadd.f32 %v600, 0.0036580483
  %v602 = vmul.f32 %v597, %v601
  %v603 = vadd.f32 %v602, 0.05243302
  %v604 = vmul.f32 %v597, %v603
  %v605 = vadd.f32 %v604, 0.18741608
  %v606 = vmul.f32 %v597, %v605
  %v607 = vadd.f32 %v606, 1.1283791
  %v608 = vmul.f32 %v190, %v607
  %v609 = vmul.f32 %v597, 3.8918573e-05
  %v610 = vadd.f32 %v609, 0.001143296
  %v611 = vmul.f32 %v597, %v610
  %v612 = vadd.f32 %v611, 0.014752088
  %v613 = vmul.f32 %v597, %v612
  %v614 = vadd.f32 %v613, 0.112945676
  %v615 = vmul.f32 %v597, %v614
  %v616 = vadd.f32 %v615, 0.4994258
  %v617 = vmul.f32 %v597, %v616
  %v618 = vadd.f32 %v617, 1.0
  %v619 = vrcp.pop %v618
  %v620 = vmul.f32 %v618, %v619
  %v621 = vsub.f32 1.0, %v620
  %v622 = vmul.f32 %v619, %v621
  %v623 = vadd.f32 %v619, %v622
  %vm624 = vweird.f32 %v618
  %vm625 = vweird.f32 %v619
  %vm626 = vmor %vm624, %vm625
  %v627 = vsel %vm626, %v619, %v623
  %v628 = vand.u32 2147483647, %v618
  %vm629 = vcmp.eq.f32.partialorder %v628, 8.507059e+37
  %v630 = vand.u32 %v618, 2147483648
  %v631 = vor.u32 1.1754944e-38, %v630
  %v632 = vsel %vm629, %v631, %v627
  %v633 = vmul.f32 %v608, %v632
  %v634 = vmin.f32 %v633, 1.0
  %v635 = vmax.f32 %v634, -1.0
  %v636 = vmul.f32 %v191, %v191
  %v637 = vmin.f32 16.0, %v636
  %v638 = vmul.f32 %v637, 2.1237322e-06
  %v639 = vadd.f32 %v638, 0.00028619796
  %v640 = vmul.f32 %v637, %v639
  %v641 = vadd.f32 %v640, 0.0036580483
  %v642 = vmul.f32 %v637, %v641
  %v643 = vadd.f32 %v642, 0.05243302
  %v644 = vmul.f32 %v637, %v643
  %v645 = vadd.f32 %v644, 0.18741608
  %v646 = vmul.f32 %v637, %v645
  %v647 = vadd.f32 %v646, 1.1283791
  %v648 = vmul.f32 %v191, %v647
  %v649 = vmul.f32 %v637, 3.8918573e-05
  %v650 = vadd.f32 %v649, 0.001143296
  %v651 = vmul.f32 %v637, %v650
  %v652 = vadd.f32 %v651, 0.014752088
  %v653 = vmul.f32 %v637, %v652
  %v654 = vadd.f32 %v653, 0.112945676
  %v655 = vmul.f32 %v637, %v654
  %v656 = vadd.f32 %v655, 0.4994258
  %v657 = vmul.f32 %v637, %v656
  %v658 = vadd.f32 %v657, 1.0
  %v659 = vrcp.pop %v658
  %v660 = vmul.f32 %v658, %v659
  %v661 = vsub.f32 1.0, %v660
  %v662 = vmul.f32 %v659, %v661
  %v663 = vadd.f32 %v659, %v662
  %vm664 = vweird.f32 %v658
  %vm665 = vweird.f32 %v659
  %vm666 = vmor %vm664, %vm665
  %v667 = vsel %vm666, %v659, %v663
  %v668 = vand.u32 2147483647, %v658
  %vm669 = vcmp.eq.f32.partialorder %v668, 8.507059e+37
  %v670 = vand.u32 %v658, 2147483648
  %v671 = vor.u32 1.1754944e-38, %v670
  %v672 = vsel %vm669, %v671, %v667
  %v673 = vmul.f32 %v648, %v672
  %v674 = vmin.f32 %v673, 1.0
  %v675 = vmax.f32 %v674, -1.0
  %v676 = vmul.f32 %v192, %v192
  %v677 = vmin.f32 16.0, %v676
  %v678 = vmul.f32 %v677, 2.1237322e-06
  %v679 = vadd.f32 %v678, 0.00028619796
  %v680 = vmul.f32 %v677, %v679
  %v681 = vadd.f32 %v680, 0.0036580483
  %v682 = vmul.f32 %v677, %v681
  %v683 = vadd.f32 %v682, 0.05243302
  %v684 = vmul.f32 %v677, %v683
  %v685 = vadd.f32 %v684, 0.18741608
  %v686 = vmul.f32 %v677, %v685
  %v687 = vadd.f32 %v686, 1.1283791
  %v688 = vmul.f32 %v192, %v687
  %v689 = vmul.f32 %v677, 3.8918573e-05
  %v690 = vadd.f32 %v689, 0.001143296
  %v691 = vmul.f32 %v677, %v690
  %v692 = vadd.f32 %v691, 0.014752088
  %v693 = vmul.f32 %v677, %v692
  %v694 = vadd.f32 %v693, 0.112945676
  %v695 = vmul.f32 %v677, %v694
  %v696 = vadd.f32 %v695, 0.4994258
  %v697 = vmul.f32 %v677, %v696
  %v698 = vadd.f32 %v697, 1.0
  %v699 = vrcp.pop %v698
  %v700 = vmul.f32 %v698, %v699
  %v701 = vsub.f32 1.0, %v700
  %v702 = vmul.f32 %v699, %v701
  %v703 = vadd.f32 %v699, %v702
  %vm704 = vweird.f32 %v698
  %vm705 = vweird.f32 %v699
  %vm706 = vmor %vm704, %vm705
  %v707 = vsel %vm706, %v699, %v703
  %v708 = vand.u32 2147483647, %v698
  %vm709 = vcmp.eq.f32.partialorder %v708, 8.507059e+37
  %v710 = vand.u32 %v698, 2147483648
  %v711 = vor.u32 1.1754944e-38, %v710
  %v712 = vsel %vm709, %v711, %v707
  %v713 = vmul.f32 %v688, %v712
  %v714 = vmin.f32 %v713, 1.0
  %v715 = vmax.f32 %v714, -1.0
  %v716 = vmul.f32 %v193, %v193
  %v717 = vmin.f32 16.0, %v716
  %v718 = vmul.f32 %v717, 2.1237322e-06
  %v719 = vadd.f32 %v718, 0.00028619796
  %v720 = vmul.f32 %v717, %v719
  %v721 = vadd.f32 %v720, 0.0036580483
  %v722 = vmul.f32 %v717, %v721
  %v723 = vadd.f32 %v722, 0.05243302
  %v724 = vmul.f32 %v717, %v723
  %v725 = vadd.f32 %v724, 0.18741608
  %v726 = vmul.f32 %v717, %v725
  %v727 = vadd.f32 %v726, 1.1283791
  %v728 = vmul.f32 %v193, %v727
  %v729 = vmul.f32 %v717, 3.8918573e-05
  %v730 = vadd.f32 %v729, 0.001143296
  %v731 = vmul.f32 %v717, %v730
  %v732 = vadd.f32 %v731, 0.014752088
  %v733 = vmul.f32 %v717, %v732
  %v734 = vadd.f32 %v733, 0.112945676
  %v735 = vmul.f32 %v717, %v734
  %v736 = vadd.f32 %v735, 0.4994258
  %v737 = vmul.f32 %v717, %v736
  %v738 = vadd.f32 %v737, 1.0
  %v739 = vrcp.pop %v738
  %v740 = vmul.f32 %v738, %v739
  %v741 = vsub.f32 1.0, %v740
  %v742 = vmul.f32 %v739, %v741
  %v743 = vadd.f32 %v739, %v742
  %vm744 = vweird.f32 %v738
  %vm745 = vweird.f32 %v739
  %vm746 = vmor %vm744, %vm745
  %v747 = vsel %vm746, %v739, %v743
  %v748 = vand.u32 2147483647, %v738
  %vm749 = vcmp.eq.f32.partialorder %v748, 8.507059e+37
  %v750 = vand.u32 %v738, 2147483648
  %v751 = vor.u32 1.1754944e-38, %v750
  %v752 = vsel %vm749, %v751, %v747
  %v753 = vmul.f32 %v728, %v752
  %v754 = vmin.f32 %v753, 1.0
  %v755 = vmax.f32 %v754, -1.0
  %v756 = vmul.f32 %v194, %v194
  %v757 = vmin.f32 16.0, %v756
  %v758 = vmul.f32 %v757, 2.1237322e-06
  %v759 = vadd.f32 %v758, 0.00028619796
  %v760 = vmul.f32 %v757, %v759
  %v761 = vadd.f32 %v760, 0.0036580483
  %v762 = vmul.f32 %v757, %v761
  %v763 = vadd.f32 %v762, 0.05243302
  %v764 = vmul.f32 %v757, %v763
  %v765 = vadd.f32 %v764, 0.18741608
  %v766 = vmul.f32 %v757, %v765
  %v767 = vadd.f32 %v766, 1.1283791
  %v768 = vmul.f32 %v194, %v767
  %v769 = vmul.f32 %v757, 3.8918573e-05
  %v770 = vadd.f32 %v769, 0.001143296
  %v771 = vmul.f32 %v757, %v770
  %v772 = vadd.f32 %v771, 0.014752088
  %v773 = vmul.f32 %v757, %v772
  %v774 = vadd.f32 %v773, 0.112945676
  %v775 = vmul.f32 %v757, %v774
  %v776 = vadd.f32 %v775, 0.4994258
  %v777 = vmul.f32 %v757, %v776
  %v778 = vadd.f32 %v777, 1.0
  %v779 = vrcp.pop %v778
  %v780 = vmul.f32 %v778, %v779
  %v781 = vsub.f32 1.0, %v780
  %v782 = vmul.f32 %v779, %v781
  %v783 = vadd.f32 %v779, %v782
  %vm784 = vweird.f32 %v778
  %vm785 = vweird.f32 %v779
  %vm786 = vmor %vm784, %vm785
  %v787 = vsel %vm786, %v779, %v783
  %v788 = vand.u32 2147483647, %v778
  %vm789 = vcmp.eq.f32.partialorder %v788, 8.507059e+37
  %v790 = vand.u32 %v778, 2147483648
  %v791 = vor.u32 1.1754944e-38, %v790
  %v792 = vsel %vm789, %v791, %v787
  %v793 = vmul.f32 %v768, %v792
  %v794 = vmin.f32 %v793, 1.0
  %v795 = vmax.f32 %v794, -1.0
  %v796 = vmul.f32 %v195, %v195
  %v797 = vmin.f32 16.0, %v796
  %v798 = vmul.f32 %v797, 2.1237322e-06
  %v799 = vadd.f32 %v798, 0.00028619796
  %v800 = vmul.f32 %v797, %v799
  %v801 = vadd.f32 %v800, 0.0036580483
  %v802 = vmul.f32 %v797, %v801
  %v803 = vadd.f32 %v802, 0.05243302
  %v804 = vmul.f32 %v797, %v803
  %v805 = vadd.f32 %v804, 0.18741608
  %v806 = vmul.f32 %v797, %v805
  %v807 = vadd.f32 %v806, 1.1283791
  %v808 = vmul.f32 %v195, %v807
  %v809 = vmul.f32 %v797, 3.8918573e-05
  %v810 = vadd.f32 %v809, 0.001143296
  %v811 = vmul.f32 %v797, %v810
  %v812 = vadd.f32 %v811, 0.014752088
  %v813 = vmul.f32 %v797, %v812
  %v814 = vadd.f32 %v813, 0.112945676
  %v815 = vmul.f32 %v797, %v814
  %v816 = vadd.f32 %v815, 0.4994258
  %v817 = vmul.f32 %v797, %v816
  %v818 = vadd.f32 %v817, 1.0
  %v819 = vrcp.pop %v818
  %v820 = vmul.f32 %v818, %v819
  %v821 = vsub.f32 1.0, %v820
  %v822 = vmul.f32 %v819, %v821
  %v823 = vadd.f32 %v819, %v822
  %vm824 = vweird.f32 %v818
  %vm825 = vweird.f32 %v819
  %vm826 = vmor %vm824, %vm825
  %v827 = vsel %vm826, %v819, %v823
  %v828 = vand.u32 2147483647, %v818
  %vm829 = vcmp.eq.f32.partialorder %v828, 8.507059e+37
  %v830 = vand.u32 %v818, 2147483648
  %v831 = vor.u32 1.1754944e-38, %v830
  %v832 = vsel %vm829, %v831, %v827
  %v833 = vmul.f32 %v808, %v832
  %v834 = vmin.f32 %v833, 1.0
  %v835 = vmax.f32 %v834, -1.0
  %v836 = vadd.f32 %v235, 1.0
  %v837 = vadd.f32 %v275, 1.0
  %v838 = vadd.f32 %v315, 1.0
  %v839 = vadd.f32 %v355, 1.0
  %v840 = vadd.f32 %v395, 1.0
  %v841 = vadd.f32 %v435, 1.0
  %v842 = vadd.f32 %v475, 1.0
  %v843 = vadd.f32 %v515, 1.0
  %v844 = vadd.f32 %v555, 1.0
  %v845 = vadd.f32 %v595, 1.0
  %v846 = vadd.f32 %v635, 1.0
  %v847 = vadd.f32 %v675, 1.0
  %v848 = vadd.f32 %v715, 1.0
  %v849 = vadd.f32 %v755, 1.0
  %v850 = vadd.f32 %v795, 1.0
  %v851 = vadd.f32 %v835, 1.0
  %v852 = vmul.f32 %v164, %v836
  %v853 = vmul.f32 %v165, %v837
  %v854 = vmul.f32 %v166, %v838
  %v855 = vmul.f32 %v167, %v839
  %v856 = vmul.f32 %v168, %v840
  %v857 = vmul.f32 %v169, %v841
  %v858 = vmul.f32 %v170, %v842
  %v859 = vmul.f32 %v171, %v843
  %v860 = vmul.f32 %v172, %v844
  %v861 = vmul.f32 %v173, %v845
  %v862 = vmul.f32 %v174, %v846
  %v863 = vmul.f32 %v175, %v847
  %v864 = vmul.f32 %v176, %v848
  %v865 = vmul.f32 %v177, %v849
  %v866 = vmul.f32 %v178, %v850
  %v867 = vmul.f32 %v179, %v851
  %v868 = vpack.c.bf16 %v852, %v852
  %v869 = vpack.c.bf16 %v853, %v853
  %v870 = vpack.c.bf16 %v854, %v854
  %v871 = vpack.c.bf16 %v855, %v855
  %v872 = vpack.c.bf16 %v856, %v856
  %v873 = vpack.c.bf16 %v857, %v857
  %v874 = vpack.c.bf16 %v858, %v858
  %v875 = vpack.c.bf16 %v859, %v859
  %v876 = vpack.c.bf16 %v860, %v860
  %v877 = vpack.c.bf16 %v861, %v861
  %v878 = vpack.c.bf16 %v862, %v862
  %v879 = vpack.c.bf16 %v863, %v863
  %v880 = vpack.c.bf16 %v864, %v864
  %v881 = vpack.c.bf16 %v865, %v865
  %v882 = vpack.c.bf16 %v866, %v866
  %v883 = vpack.c.bf16 %v867, %v867
  %vm884 = vcmask 519168
  %885 = vst.msk [vmem:[%s4] sm:$0xf] %vm884, %v868
  %886 = vst.msk [vmem:[%s4 + $0x4] sm:$0xf] %vm884, %v869
  %887 = vst.msk [vmem:[%s4 + $0x8] sm:$0xf] %vm884, %v870
  %888 = vst.msk [vmem:[%s4 + $0xc] sm:$0xf] %vm884, %v871
  %889 = vst.msk [vmem:[%s4 + $0x10] sm:$0xf] %vm884, %v872
  %890 = vst.msk [vmem:[%s4 + $0x14] sm:$0xf] %vm884, %v873
  %891 = vst.msk [vmem:[%s4 + $0x18] sm:$0xf] %vm884, %v874
  %892 = vst.msk [vmem:[%s4 + $0x1c] sm:$0xf] %vm884, %v875
  %893 = vst.msk [vmem:[%s4 + $0x20] sm:$0xf] %vm884, %v876
  %894 = vst.msk [vmem:[%s4 + $0x24] sm:$0xf] %vm884, %v877
  %895 = vst.msk [vmem:[%s4 + $0x28] sm:$0xf] %vm884, %v878
  %896 = vst.msk [vmem:[%s4 + $0x2c] sm:$0xf] %vm884, %v879
  %897 = vst.msk [vmem:[%s4 + $0x30] sm:$0xf] %vm884, %v880
  %898 = vst.msk [vmem:[%s4 + $0x34] sm:$0xf] %vm884, %v881
  %899 = vst.msk [vmem:[%s4 + $0x38] sm:$0xf] %vm884, %v882
  %900 = vst.msk [vmem:[%s4 + $0x3c] sm:$0xf] %vm884, %v883
  // Predicated region
  $region18: #{glu_block_forward.14} parent=0 // pred_check
    _
  $region19: #{glu_block_forward.14} parent=0 // pred_check_branch
    %902 = sbr.rel (0) target = $region21
  $region20: #{glu_block_forward.14} parent=0 // pred_region
    _
  $region21: #{glu_block_forward.14} parent=0 // pred_fallthru
    _
  // Predicated region
  $region22: #{glu_block_forward.14} parent=0 // pred_check
    _
  $region23: #{glu_block_forward.14} parent=0 // pred_check_branch
    %904 = sbr.rel (0) target = $region25
  $region24: #{glu_block_forward.14} parent=0 // pred_region
    _
  $region25: #{glu_block_forward.14} parent=0 // pred_fallthru
    _

// kernel: glu_block_forward.13
$region0: #{glu_block_forward.13}
  #allocation0 [shape = 'u32[]', space=smem, size = 0x4, offset = 0x4, fixed_abs, tag = 'smem constant byte address 0x4 - core index']
  #allocation1 [shape = 'u32[72,128]{1,0:T(1,128)}', space=vmem, size = 0x9000, scoped, tag = 'internal scratch']
  #allocation2 [shape = 'f32[10,10,4]{2,1,0:T(8,128)}', space=vmem, size = 0x14000, scoped, tag = 'scratch operand']
  %s0 = inlined_call_operand.vmem [shape: f32[2,8,8,4], index: 0, kind: input, shape index: {}]
  %s1 = inlined_call_operand.vmem [shape: bf16[9,4,4], index: 1, kind: input, shape index: {}]
  %s2 = inlined_call_operand.vmem [shape: f32[2,8,8,4], index: 2, kind: output, shape index: {}]
  %s3 = sld [smem:[#allocation0]]
  $region41: #{glu_block_forward.13} parent=0
    _
  %s5 = ssub.s32 1, %s3
  %s6 = scalar_select 0, %s5, %s3
  loop: start=0, step=1, limit=4
  $region2: #{glu_block_forward.13} parent=0 // loop_pre_header
    _
  $region3: #{glu_block_forward.13} parent=0 // loop_header
    %s8 = sphi 0, %s12
    %p9 = scmp.ge.s32.totalorder %s8, 4
    %s18 = sphi 0, %s20
    %s21 = sphi 0, %s18
    %s22 = sphi 0, %s21
    %s38 = sphi 0, %s22
    %s42 = sphi 0, %s42
    %s44 = sphi 0, %s42
    %s45 = sphi 0, %s44
    %s59 = sphi 0, %s45
    %s65 = sphi 0, %s67
    %s68 = sphi 0, %s65
    %s69 = sphi 0, %s68
    %s85 = sphi 0, %s69
  $region4: #{glu_block_forward.13} parent=0 // loop_header_branch
    %11 = sbr.rel (%p9) target = $region8
  $region5: #{glu_block_forward.13} parent=0 // loop_body
    %s13 = ssub.s32 %s8, 1
    %s14 = ssub.s32 %s8, 2
    %s15 = sadd.s32 %s8, 1
    %s16 = ssub.s32 %s8, %s15
    %p17 = scmp.eq.s32.totalorder %s16, 0
    %s19 = sadd.s32 %s18, 1
    %s20 = scalar_select %p17, %s18, %s19
    %p23 = pneg %p17
    %p24 = scmp.eq.s32.totalorder %s8, 1
    %p25 = por %p23, %p24
    %p26 = scmp.ne.s32.totalorder %s18, %s21
    %p27 = scmp.eq.s32.totalorder %s8, 0
    %p28 = por %p26, %p27
    %p29 = scmp.ne.s32.totalorder %s18, %s21
    %p30 = scmp.eq.s32.totalorder %s13, 1
    %p31 = por %p29, %p30
    %p32 = scmp.ne.s32.totalorder %s21, %s22
    %p33 = scmp.eq.s32.totalorder %s13, 0
    %p34 = por %p32, %p33
    %p35 = scmp.ne.s32.totalorder %s21, %s22
    %p36 = scmp.eq.s32.totalorder %s14, 1
    %p37 = por %p35, %p36
    %p39 = scmp.ne.s32.totalorder %s22, %s38
    %p40 = scmp.eq.s32.totalorder %s14, 0
    %p41 = por %p39, %p40
    %s43 = sadd.s32 %s42, 1
    %p46 = scmp.eq.s32.totalorder %s8, 1
    %p47 = scmp.ne.s32.totalorder %s42, %s44
    %p48 = scmp.eq.s32.totalorder %s8, 0
    %p49 = por %p47, %p48
    %p50 = scmp.ne.s32.totalorder %s42, %s44
    %p51 = scmp.eq.s32.totalorder %s13, 1
    %p52 = por %p50, %p51
    %p53 = scmp.ne.s32.totalorder %s44, %s45
    %p54 = scmp.eq.s32.totalorder %s13, 0
    %p55 = por %p53, %p54
    %p56 = scmp.ne.s32.totalorder %s44, %s45
    %p57 = scmp.eq.s32.totalorder %s14, 1
    %p58 = por %p56, %p57
    %p60 = scmp.ne.s32.totalorder %s45, %s59
    %p61 = scmp.eq.s32.totalorder %s14, 0
    %p62 = por %p60, %p61
    %s63 = ssub.s32 %s8, %s15
    %p64 = scmp.eq.s32.totalorder %s63, 0
    %s66 = sadd.s32 %s65, 1
    %s67 = scalar_select %p64, %s65, %s66
    %p70 = pneg %p64
    %p71 = scmp.eq.s32.totalorder %s8, 1
    %p72 = por %p70, %p71
    %p73 = scmp.ne.s32.totalorder %s65, %s68
    %p74 = scmp.eq.s32.totalorder %s8, 0
    %p75 = por %p73, %p74
    %p76 = scmp.ne.s32.totalorder %s65, %s68
    %p77 = scmp.eq.s32.totalorder %s13, 1
    %p78 = por %p76, %p77
    %p79 = scmp.ne.s32.totalorder %s68, %s69
    %p80 = scmp.eq.s32.totalorder %s13, 0
    %p81 = por %p79, %p80
    %p82 = scmp.ne.s32.totalorder %s68, %s69
    %p83 = scmp.eq.s32.totalorder %s14, 1
    %p84 = por %p82, %p83
    %p86 = scmp.ne.s32.totalorder %s69, %s85
    %p87 = scmp.eq.s32.totalorder %s14, 0
    %p88 = por %p86, %p87
    %p89 = scmp.le.s32.totalorder 1, %s8
    %p90 = scmp.lt.s32.totalorder %s8, 3
    %p91 = pnand %p89, %p90
    %p92 = pneg %p91
    // Predicated region
    $region9: #{glu_block_forward.13} parent=5 // pred_check
      _
    $region10: #{glu_block_forward.13} parent=5 // pred_check_branch
      %94 = sbr.rel (%p91) target = $region12
    $region11: #{glu_block_forward.13} parent=5 // pred_region
      %s95 = ssub.s32 %s8, 1
      // Predicated region
      $region13: #{glu_block_forward.13} parent=11 // pred_check
        %p96 = pneg %p55
      $region14: #{glu_block_forward.13} parent=11 // pred_check_branch
        %98 = sbr.rel (%p96) target = $region16
      $region15: #{glu_block_forward.13} parent=11 // pred_region
        _
      $region16: #{glu_block_forward.13} parent=11 // pred_fallthru
        _
    $region12: #{glu_block_forward.13} parent=5 // pred_fallthru
      _
    %p99 = scmp.lt.s32.totalorder %s8, 2
    // Predicated region
    $region17: #{glu_block_forward.13} parent=5 // pred_check
      %p100 = pneg %p99
    $region18: #{glu_block_forward.13} parent=5 // pred_check_branch
      %102 = sbr.rel (%p100) target = $region20
    $region19: #{glu_block_forward.13} parent=5 // pred_region
      // Predicated region
      $region21: #{glu_block_forward.13} parent=19 // pred_check
        %p103 = pneg %p28
      $region22: #{glu_block_forward.13} parent=19 // pred_check_branch
        %105 = sbr.rel (%p103) target = $region24
      $region23: #{glu_block_forward.13} parent=19 // pred_region
        %p106 = scmp.lt.s32.totalorder %s8, 1
        %s107 = scalar_select %p106, %s8, 1
        %s108 = smul.addr %s107, 8
        %s109 = smul.addr %s108, 8
        %s110 = scalar_lea.vmem %s0, %s109
      $region24: #{glu_block_forward.13} parent=19 // pred_fallthru
        _
    $region20: #{glu_block_forward.13} parent=5 // pred_fallthru
      _
    %p111 = scmp.le.s32.totalorder 1, %s8
    %p112 = scmp.lt.s32.totalorder %s8, 3
    %p113 = pnand %p111, %p112
    %p114 = pneg %p113
    // Predicated region
    $region25: #{glu_block_forward.13} parent=5 // pred_check
      _
    $region26: #{glu_block_forward.13} parent=5 // pred_check_branch
      %116 = sbr.rel (%p113) target = $region28
    $region27: #{glu_block_forward.13} parent=5 // pred_region
      %s117 = ssub.s32 %s8, 1
      %p118 = scmp.lt.s32.totalorder %s13, 1
      %s119 = scalar_select %p118, %s13, 1
      %s120 = smul.addr %s119, 8
      %s121 = smul.addr %s120, 8
      %s122 = scalar_lea.vmem %s0, %s121
      %p123 = pneg %p34
      %p124 = pneg %p31
      %p125 = pneg %p55
      %p126 = pneg %p52
      %p127 = pneg %p81
      %p128 = pneg %p78
      %p129 = scmp.lt.s32.totalorder %s13, 1
      %s130 = scalar_select %p129, %s13, 1
      %s131 = smul.addr %s130, 8
      %s132 = smul.addr %s131, 8
      %s133 = scalar_lea.vmem %s2, %s132
      %p134 = scmp.lt.s32.totalorder %s13, 1
      %s135 = scalar_select %p134, %s13, 1
      %s136 = smul.addr %s135, 8
      %s137 = smul.addr %s136, 8
      %s138 = scalar_lea.vmem %s0, %s137
      %p139 = scmp.lt.s32.totalorder %s13, 1
      %s140 = scalar_select %p139, %s13, 1
      %s141 = smul.addr %s140, 8
      %s142 = smul.addr %s141, 8
      %s143 = scalar_lea.vmem %s2, %s142
      %vm145 = vcmask 31744
      %146 = vst.msk [vmem:[#allocation2] sm:$0xff] %vm145, 0.0
      %vm147 = vcmask 25600
      %148 = vst.msk [vmem:[#allocation2 + $0x8] sm:$0x3] %vm147, 0.0
      %149 = vst.msk [vmem:[#allocation2 + $0x10] sm:$0xff] %vm145, 0.0
      %150 = vst.msk [vmem:[#allocation2 + $0x18] sm:$0x3] %vm147, 0.0
      %151 = vst.msk [vmem:[#allocation2 + $0x20] sm:$0xff] %vm145, 0.0
      %152 = vst.msk [vmem:[#allocation2 + $0x28] sm:$0x3] %vm147, 0.0
      %153 = vst.msk [vmem:[#allocation2 + $0x30] sm:$0xff] %vm145, 0.0
      %154 = vst.msk [vmem:[#allocation2 + $0x38] sm:$0x3] %vm147, 0.0
      %155 = vst.msk [vmem:[#allocation2 + $0x40] sm:$0xff] %vm145, 0.0
      %156 = vst.msk [vmem:[#allocation2 + $0x48] sm:$0x3] %vm147, 0.0
      %157 = vst.msk [vmem:[#allocation2 + $0x50] sm:$0xff] %vm145, 0.0
      %158 = vst.msk [vmem:[#allocation2 + $0x58] sm:$0x3] %vm147, 0.0
      %159 = vst.msk [vmem:[#allocation2 + $0x60] sm:$0xff] %vm145, 0.0
      %160 = vst.msk [vmem:[#allocation2 + $0x68] sm:$0x3] %vm147, 0.0
      %161 = vst.msk [vmem:[#allocation2 + $0x70] sm:$0xff] %vm145, 0.0
      %162 = vst.msk [vmem:[#allocation2 + $0x78] sm:$0x3] %vm147, 0.0
      %163 = vst.msk [vmem:[#allocation2 + $0x80] sm:$0xff] %vm145, 0.0
      %164 = vst.msk [vmem:[#allocation2 + $0x88] sm:$0x3] %vm147, 0.0
      %165 = vst.msk [vmem:[#allocation2 + $0x90] sm:$0xff] %vm145, 0.0
      %166 = vst.msk [vmem:[#allocation2 + $0x98] sm:$0x3] %vm147, 0.0
      %v167 = vld [vmem:[%s138] sm:$0xff]
      %v168 = vld [vmem:[%s138 + $0x8] sm:$0xff]
      %v169 = vld [vmem:[%s138 + $0x10] sm:$0xff]
      %v170 = vld [vmem:[%s138 + $0x18] sm:$0xff]
      %v171 = vld [vmem:[%s138 + $0x20] sm:$0xff]
      %v172 = vld [vmem:[%s138 + $0x28] sm:$0xff]
      %v173 = vld [vmem:[%s138 + $0x30] sm:$0xff]
      %v174 = vld [vmem:[%s138 + $0x38] sm:$0xff]
      %s175 = scalar_lea.vmem [#allocation2], 16
      %176 = vst.msk [vmem:[%s175 + $0x1] sm:$0xff] %vm145, %v167
      %177 = vst.msk [vmem:[%s175 + $0x11] sm:$0xff] %vm145, %v168
      %178 = vst.msk [vmem:[%s175 + $0x21] sm:$0xff] %vm145, %v169
      %179 = vst.msk [vmem:[%s175 + $0x31] sm:$0xff] %vm145, %v170
      %180 = vst.msk [vmem:[%s175 + $0x41] sm:$0xff] %vm145, %v171
      %181 = vst.msk [vmem:[%s175 + $0x51] sm:$0xff] %vm145, %v172
      %182 = vst.msk [vmem:[%s175 + $0x61] sm:$0xff] %vm145, %v173
      %183 = vst.msk [vmem:[%s175 + $0x71] sm:$0xff] %vm145, %v174
      %v184 = vld [vmem:[#allocation2] sm:$0xff]
      %v185 = vld [vmem:[#allocation2 + $0x8] sm:$0x3]
      %v186 = vld [vmem:[#allocation2 + $0x10] sm:$0xff]
      %v187 = vld [vmem:[#allocation2 + $0x18] sm:$0x3]
      %v188 = vld [vmem:[#allocation2 + $0x20] sm:$0xff]
      %v189 = vld [vmem:[#allocation2 + $0x28] sm:$0x3]
      %v190 = vld [vmem:[#allocation2 + $0x30] sm:$0xff]
      %v191 = vld [vmem:[#allocation2 + $0x38] sm:$0x3]
      %v192 = vld [vmem:[#allocation2 + $0x40] sm:$0xff]
      %v193 = vld [vmem:[#allocation2 + $0x48] sm:$0x3]
      %v194 = vld [vmem:[#allocation2 + $0x50] sm:$0xff]
      %v195 = vld [vmem:[#allocation2 + $0x58] sm:$0x3]
      %v196 = vld [vmem:[#allocation2 + $0x60] sm:$0xff]
      %v197 = vld [vmem:[#allocation2 + $0x68] sm:$0x3]
      %v198 = vld [vmem:[#allocation2 + $0x70] sm:$0xff]
      %v199 = vld [vmem:[#allocation2 + $0x78] sm:$0x3]
      %v200 = vld [vmem:[#allocation2 + $0x80] sm:$0xff]
      %v201 = vld [vmem:[#allocation2 + $0x88] sm:$0x3]
      %v202 = vld [vmem:[#allocation2 + $0x90] sm:$0xff]
      %v203 = vld [vmem:[#allocation2 + $0x98] sm:$0x3]
      %v204 = vpack.c.bf16 %v184, %v184
      %v205 = vpack.c.bf16 %v185, %v185
      %v206 = vpack.c.bf16 %v186, %v186
      %v207 = vpack.c.bf16 %v187, %v187
      %v208 = vpack.c.bf16 %v188, %v188
      %v209 = vpack.c.bf16 %v189, %v189
      %v210 = vpack.c.bf16 %v190, %v190
      %v211 = vpack.c.bf16 %v191, %v191
      %v212 = vpack.c.bf16 %v192, %v192
      %v213 = vpack.c.bf16 %v193, %v193
      %v214 = vpack.c.bf16 %v194, %v194
      %v215 = vpack.c.bf16 %v195, %v195
      %v216 = vpack.c.bf16 %v196, %v196
      %v217 = vpack.c.bf16 %v197, %v197
      %v218 = vpack.c.bf16 %v198, %v198
      %v219 = vpack.c.bf16 %v199, %v199
      %v220 = vpack.c.bf16 %v200, %v200
      %v221 = vpack.c.bf16 %v201, %v201
      %v222 = vpack.c.bf16 %v202, %v202
      %v223 = vpack.c.bf16 %v203, %v203
      %v224 = vld [vmem:[%s1] sm:$0x3]
      %v225 = vld [vmem:[%s1 + $0x2] sm:$0x3]
      %v226 = vld [vmem:[%s1 + $0x4] sm:$0x3]
      %v227 = vld [vmem:[%s1 + $0x6] sm:$0x3]
      %v228 = vld [vmem:[%s1 + $0x8] sm:$0x3]
      %v229 = vld [vmem:[%s1 + $0xa] sm:$0x3]
      %v230 = vld [vmem:[%s1 + $0xc] sm:$0x3]
      %v231 = vld [vmem:[%s1 + $0xe] sm:$0x3]
      %v232 = vld [vmem:[%s1 + $0x10] sm:$0x3]
      %vm233 = vsmask.f32 3328
      %vm234 = vsmask.f32 7440
      %vm235 = vmor %vm233, %vm234
      %v237 = vshrl.u32 %v204, 16
      %v239 = vrot.slane %v237, 4
      %v240 = vshll.u32 %v204, 16
      %v242 = vrot.slane %v240, 5
      %v243 = vor.u32 %v239, %v242
      %v244 = vrot.slane %v243, 4
      %v246 = vshll.u32 %v205, 16
      %v248 = vrot.slane %v246, 5
      %v249 = vsel %vm235, %v244, %v248
      %v251 = vshrl.u32 %v206, 16
      %v253 = vrot.slane %v251, 4
      %v254 = vshll.u32 %v206, 16
      %v256 = vrot.slane %v254, 5
      %v257 = vor.u32 %v253, %v256
      %v258 = vrot.slane %v257, 4
      %v260 = vshll.u32 %v207, 16
      %v262 = vrot.slane %v260, 5
      %v263 = vsel %vm235, %v258, %v262
      %v265 = vshrl.u32 %v208, 16
      %v267 = vrot.slane %v265, 4
      %v268 = vshll.u32 %v208, 16
      %v270 = vrot.slane %v268, 5
      %v271 = vor.u32 %v267, %v270
      %v272 = vrot.slane %v271, 4
      %v274 = vshll.u32 %v209, 16
      %v276 = vrot.slane %v274, 5
      %v277 = vsel %vm235, %v272, %v276
      %v279 = vshrl.u32 %v210, 16
      %v281 = vrot.slane %v279, 4
      %v282 = vshll.u32 %v210, 16
      %v284 = vrot.slane %v282, 5
      %v285 = vor.u32 %v281, %v284
      %v286 = vrot.slane %v285, 4
      %v288 = vshll.u32 %v211, 16
      %v290 = vrot.slane %v288, 5
      %v291 = vsel %vm235, %v286, %v290
      %v293 = vshrl.u32 %v212, 16
      %v295 = vrot.slane %v293, 4
      %v296 = vshll.u32 %v212, 16
      %v298 = vrot.slane %v296, 5
      %v299 = vor.u32 %v295, %v298
      %v300 = vrot.slane %v299, 4
      %v302 = vshll.u32 %v213, 16
      %v304 = vrot.slane %v302, 5
      %v305 = vsel %vm235, %v300, %v304
      %v307 = vshrl.u32 %v214, 16
      %v309 = vrot.slane %v307, 4
      %v310 = vshll.u32 %v214, 16
      %v312 = vrot.slane %v310, 5
      %v313 = vor.u32 %v309, %v312
      %v314 = vrot.slane %v313, 4
      %v316 = vshll.u32 %v215, 16
      %v318 = vrot.slane %v316, 5
      %v319 = vsel %vm235, %v314, %v318
      %v321 = vshrl.u32 %v216, 16
      %v323 = vrot.slane %v321, 4
      %v324 = vshll.u32 %v216, 16
      %v326 = vrot.slane %v324, 5
      %v327 = vor.u32 %v323, %v326
      %v328 = vrot.slane %v327, 4
      %v330 = vshll.u32 %v217, 16
      %v332 = vrot.slane %v330, 5
      %v333 = vsel %vm235, %v328, %v332
      %v335 = vshrl.u32 %v218, 16
      %v337 = vrot.slane %v335, 4
      %v338 = vshll.u32 %v218, 16
      %v340 = vrot.slane %v338, 5
      %v341 = vor.u32 %v337, %v340
      %v342 = vrot.slane %v341, 4
      %v344 = vshll.u32 %v219, 16
      %v346 = vrot.slane %v344, 5
      %v347 = vsel %vm235, %v342, %v346
      %v348 = vunpack.c.l.b16 %v249
      %v349 = vunpack.c.l.b16 %v263
      %v350 = vunpack.c.l.b16 %v277
      %v351 = vunpack.c.l.b16 %v291
      %v352 = vunpack.c.l.b16 %v305
      %v353 = vunpack.c.l.b16 %v319
      %v354 = vunpack.c.l.b16 %v333
      %v355 = vunpack.c.l.b16 %v347
      %v356 = vpack.c.b16 %v349, %v348
      %v357 = vpack.c.b16 %v351, %v350
      %v358 = vpack.c.b16 %v353, %v352
      %v359 = vpack.c.b16 %v355, %v354
      %v361 = vsel %vm145, %v356, 0
      %v364 = vsel %vm145, %v357, 0
      %v367 = vsel %vm145, %v358, 0
      %v370 = vsel %vm145, %v359, 0
      %vm372 = vcmask 1041408
      %v374 = vsel %vm372, %v225, 0
      %376 = vmatpush.bf16.msra.mxu0 0
      %377 = vmatpush.bf16.msra.mxu0 0
      %378 = vmatpush.bf16.msra.mxu0 0
      %379 = vmatpush.bf16.msra.mxu0 0
      %380 = vmatpush.bf16.msra.mxu0 0
      %381 = vmatpush.bf16.msra.mxu0 0
      %382 = vmatpush.bf16.msra.mxu0 0
      %383 = vmatpush.bf16.msra.mxu0 %v374
      %384 = vmatmul.bf16.gmra.mxu0 %v361
      %v385 = vpop.f32.mrf.mxu0
      %v386 = vadd.f32 0.0, %v385
      %v387 = vpop.f32.mrf.mxu0
      %v388 = vadd.f32 0.0, %v387
      %389 = vmatmul.bf16.gmra.mxu0 %v364
      %v390 = vpop.f32.mrf.mxu0
      %v391 = vadd.f32 0.0, %v390
      %v392 = vpop.f32.mrf.mxu0
      %v393 = vadd.f32 0.0, %v392
      %394 = vmatmul.bf16.gmra.mxu0 %v367
      %v395 = vpop.f32.mrf.mxu0
      %v396 = vadd.f32 0.0, %v395
      %v397 = vpop.f32.mrf.mxu0
      %v398 = vadd.f32 0.0, %v397
      %399 = vmatmul.bf16.gmra.mxu0 %v370
      %v400 = vpop.f32.mrf.mxu0
      %v401 = vadd.f32 0.0, %v400
      %v402 = vpop.f32.mrf.mxu0
      %v403 = vadd.f32 0.0, %v402
      %404 = vdwg.mxu0
      %v413 = vunpack.c.l.b16 %v204
      %v414 = vunpack.c.l.b16 %v206
      %v415 = vunpack.c.l.b16 %v208
      %v416 = vunpack.c.l.b16 %v210
      %v417 = vunpack.c.l.b16 %v212
      %v418 = vunpack.c.l.b16 %v214
      %v419 = vunpack.c.l.b16 %v216
      %v420 = vunpack.c.l.b16 %v218
      %v421 = vpack.c.b16 %v414, %v413
      %v422 = vpack.c.b16 %v416, %v415
      %v423 = vpack.c.b16 %v418, %v417
      %v424 = vpack.c.b16 %v420, %v419
      %v426 = vsel %vm145, %v421, 0
      %v429 = vsel %vm145, %v422, 0
      %v432 = vsel %vm145, %v423, 0
      %v435 = vsel %vm145, %v424, 0
      %v438 = vsel %vm372, %v224, 0
      %440 = vmatpush.bf16.msra.mxu0 0
      %441 = vmatpush.bf16.msra.mxu0 0
      %442 = vmatpush.bf16.msra.mxu0 0
      %443 = vmatpush.bf16.msra.mxu0 0
      %444 = vmatpush.bf16.msra.mxu0 0
      %445 = vmatpush.bf16.msra.mxu0 0
      %446 = vmatpush.bf16.msra.mxu0 0
      %447 = vmatpush.bf16.msra.mxu0 %v438
      %448 = vmatmul.bf16.gmra.mxu0 %v426
      %v449 = vpop.f32.mrf.mxu0
      %v450 = vadd.f32 %v386, %v449
      %v451 = vpop.f32.mrf.mxu0
      %v452 = vadd.f32 %v388, %v451
      %453 = vmatmul.bf16.gmra.mxu0 %v429
      %v454 = vpop.f32.mrf.mxu0
      %v455 = vadd.f32 %v391, %v454
      %v456 = vpop.f32.mrf.mxu0
      %v457 = vadd.f32 %v393, %v456
      %458 = vmatmul.bf16.gmra.mxu0 %v432
      %v459 = vpop.f32.mrf.mxu0
      %v460 = vadd.f32 %v396, %v459
      %v461 = vpop.f32.mrf.mxu0
      %v462 = vadd.f32 %v398, %v461
      %463 = vmatmul.bf16.gmra.mxu0 %v435
      %v464 = vpop.f32.mrf.mxu0
      %v465 = vadd.f32 %v401, %v464
      %v466 = vpop.f32.mrf.mxu0
      %v467 = vadd.f32 %v403, %v466
      %468 = vdwg.mxu0
      %vm477 = vcmask 1042432
      %vm478 = vcmask 1046532
      %vm479 = vmor %vm477, %vm478
      %v480 = vrot.slane %v204, 5
      %v481 = vrot.slane %v480, 4
      %v482 = vrot.slane %v205, 5
      %v483 = vsel %vm479, %v481, %v482
      %v484 = vrot.slane %v206, 5
      %v485 = vrot.slane %v484, 4
      %v486 = vrot.slane %v207, 5
      %v487 = vsel %vm479, %v485, %v486
      %v488 = vrot.slane %v208, 5
      %v489 = vrot.slane %v488, 4
      %v490 = vrot.slane %v209, 5
      %v491 = vsel %vm479, %v489, %v490
      %v492 = vrot.slane %v210, 5
      %v493 = vrot.slane %v492, 4
      %v494 = vrot.slane %v211, 5
      %v495 = vsel %vm479, %v493, %v494
      %v496 = vrot.slane %v212, 5
      %v497 = vrot.slane %v496, 4
      %v498 = vrot.slane %v213, 5
      %v499 = vsel %vm479, %v497, %v498
      %v500 = vrot.slane %v214, 5
      %v501 = vrot.slane %v500, 4
      %v502 = vrot.slane %v215, 5
      %v503 = vsel %vm479, %v501, %v502
      %v504 = vrot.slane %v216, 5
      %v505 = vrot.slane %v504, 4
      %v506 = vrot.slane %v217, 5
      %v507 = vsel %vm479, %v505, %v506
      %v508 = vrot.slane %v218, 5
      %v509 = vrot.slane %v508, 4
      %v510 = vrot.slane %v219, 5
      %v511 = vsel %vm479, %v509, %v510
      %v512 = vunpack.c.l.b16 %v483
      %v513 = vunpack.c.l.b16 %v487
      %v514 = vunpack.c.l.b16 %v491
      %v515 = vunpack.c.l.b16 %v495
      %v516 = vunpack.c.l.b16 %v499
      %v517 = vunpack.c.l.b16 %v503
      %v518 = vunpack.c.l.b16 %v507
      %v519 = vunpack.c.l.b16 %v511
      %v520 = vpack.c.b16 %v513, %v512
      %v521 = vpack.c.b16 %v515, %v514
      %v522 = vpack.c.b16 %v517, %v516
      %v523 = vpack.c.b16 %v519, %v518
      %v525 = vsel %vm145, %v520, 0
      %v528 = vsel %vm145, %v521, 0
      %v531 = vsel %vm145, %v522, 0
      %v534 = vsel %vm145, %v523, 0
      %v537 = vsel %vm372, %v226, 0
      %539 = vmatpush.bf16.msra.mxu0 0
      %540 = vmatpush.bf16.msra.mxu0 0
      %541 = vmatpush.bf16.msra.mxu0 0
      %542 = vmatpush.bf16.msra.mxu0 0
      %543 = vmatpush.bf16.msra.mxu0 0
      %544 = vmatpush.bf16.msra.mxu0 0
      %545 = vmatpush.bf16.msra.mxu0 0
      %546 = vmatpush.bf16.msra.mxu0 %v537
      %547 = vmatmul.bf16.gmra.mxu0 %v525
      %v548 = vpop.f32.mrf.mxu0
      %v549 = vadd.f32 0.0, %v548
      %v550 = vpop.f32.mrf.mxu0
      %v551 = vadd.f32 0.0, %v550
      %552 = vmatmul.bf16.gmra.mxu0 %v528
      %v553 = vpop.f32.mrf.mxu0
      %v554 = vadd.f32 0.0, %v553
      %v555 = vpop.f32.mrf.mxu0
      %v556 = vadd.f32 0.0, %v555
      %557 = vmatmul.bf16.gmra.mxu0 %v531
      %v558 = vpop.f32.mrf.mxu0
      %v559 = vadd.f32 0.0, %v558
      %v560 = vpop.f32.mrf.mxu0
      %v561 = vadd.f32 0.0, %v560
      %562 = vmatmul.bf16.gmra.mxu0 %v534
      %v563 = vpop.f32.mrf.mxu0
      %v564 = vadd.f32 0.0, %v563
      %v565 = vpop.f32.mrf.mxu0
      %v566 = vadd.f32 0.0, %v565
      %567 = vdwg.mxu0
      %v568 = vadd.f32 %v450, %v549
      %v569 = vadd.f32 %v452, %v551
      %v570 = vadd.f32 %v455, %v554
      %v571 = vadd.f32 %v457, %v556
      %v572 = vadd.f32 %v460, %v559
      %v573 = vadd.f32 %v462, %v561
      %v574 = vadd.f32 %v465, %v564
      %v575 = vadd.f32 %v467, %v566
      %v577 = vunpack.c.l.b16 %v220
      %v578 = vpack.c.b16 %v415, %v414
      %v579 = vpack.c.b16 %v417, %v416
      %v580 = vpack.c.b16 %v419, %v418
      %v581 = vpack.c.b16 %v577, %v420
      %v583 = vsel %vm145, %v578, 0
      %v586 = vsel %vm145, %v579, 0
      %v589 = vsel %vm145, %v580, 0
      %v592 = vsel %vm145, %v581, 0
      %v595 = vsel %vm372, %v227, 0
      %597 = vmatpush.bf16.msra.mxu0 0
      %598 = vmatpush.bf16.msra.mxu0 0
      %599 = vmatpush.bf16.msra.mxu0 0
      %600 = vmatpush.bf16.msra.mxu0 0
      %601 = vmatpush.bf16.msra.mxu0 0
      %602 = vmatpush.bf16.msra.mxu0 0
      %603 = vmatpush.bf16.msra.mxu0 0
      %604 = vmatpush.bf16.msra.mxu0 %v595
      %605 = vmatmul.bf16.gmra.mxu0 %v583
      %v606 = vpop.f32.mrf.mxu0
      %v607 = vadd.f32 0.0, %v606
      %v608 = vpop.f32.mrf.mxu0
      %v609 = vadd.f32 0.0, %v608
      %610 = vmatmul.bf16.gmra.mxu0 %v586
      %v611 = vpop.f32.mrf.mxu0
      %v612 = vadd.f32 0.0, %v611
      %v613 = vpop.f32.mrf.mxu0
      %v614 = vadd.f32 0.0, %v613
      %615 = vmatmul.bf16.gmra.mxu0 %v589
      %v616 = vpop.f32.mrf.mxu0
      %v617 = vadd.f32 0.0, %v616
      %v618 = vpop.f32.mrf.mxu0
      %v619 = vadd.f32 0.0, %v618
      %620 = vmatmul.bf16.gmra.mxu0 %v592
      %v621 = vpop.f32.mrf.mxu0
      %v622 = vadd.f32 0.0, %v621
      %v623 = vpop.f32.mrf.mxu0
      %v624 = vadd.f32 0.0, %v623
      %625 = vdwg.mxu0
      %v626 = vadd.f32 %v568, %v607
      %v627 = vadd.f32 %v569, %v609
      %v628 = vadd.f32 %v570, %v612
      %v629 = vadd.f32 %v571, %v614
      %v630 = vadd.f32 %v572, %v617
      %v631 = vadd.f32 %v573, %v619
      %v632 = vadd.f32 %v574, %v622
      %v633 = vadd.f32 %v575, %v624
      %v635 = vshrl.u32 %v220, 16
      %v637 = vrot.slane %v635, 4
      %v638 = vshll.u32 %v220, 16
      %v640 = vrot.slane %v638, 5
      %v641 = vor.u32 %v637, %v640
      %v642 = vrot.slane %v641, 4
      %v644 = vshll.u32 %v221, 16
      %v646 = vrot.slane %v644, 5
      %v647 = vsel %vm235, %v642, %v646
      %v648 = vunpack.c.l.b16 %v647
      %v649 = vpack.c.b16 %v350, %v349
      %v650 = vpack.c.b16 %v352, %v351
      %v651 = vpack.c.b16 %v354, %v353
      %v652 = vpack.c.b16 %v648, %v355
      %v654 = vsel %vm145, %v649, 0
      %v657 = vsel %vm145, %v650, 0
      %v660 = vsel %vm145, %v651, 0
      %v663 = vsel %vm145, %v652, 0
      %v666 = vsel %vm372, %v228, 0
      %668 = vmatpush.bf16.msra.mxu0 0
      %669 = vmatpush.bf16.msra.mxu0 0
      %670 = vmatpush.bf16.msra.mxu0 0
      %671 = vmatpush.bf16.msra.mxu0 0
      %672 = vmatpush.bf16.msra.mxu0 0
      %673 = vmatpush.bf16.msra.mxu0 0
      %674 = vmatpush.bf16.msra.mxu0 0
      %675 = vmatpush.bf16.msra.mxu0 %v666
      %676 = vmatmul.bf16.gmra.mxu0 %v654
      %v677 = vpop.f32.mrf.mxu0
      %v678 = vadd.f32 0.0, %v677
      %v679 = vpop.f32.mrf.mxu0
      %v680 = vadd.f32 0.0, %v679
      %681 = vmatmul.bf16.gmra.mxu0 %v657
      %v682 = vpop.f32.mrf.mxu0
      %v683 = vadd.f32 0.0, %v682
      %v684 = vpop.f32.mrf.mxu0
      %v685 = vadd.f32 0.0, %v684
      %686 = vmatmul.bf16.gmra.mxu0 %v660
      %v687 = vpop.f32.mrf.mxu0
      %v688 = vadd.f32 0.0, %v687
      %v689 = vpop.f32.mrf.mxu0
      %v690 = vadd.f32 0.0, %v689
      %691 = vmatmul.bf16.gmra.mxu0 %v663
      %v692 = vpop.f32.mrf.mxu0
      %v693 = vadd.f32 0.0, %v692
      %v694 = vpop.f32.mrf.mxu0
      %v695 = vadd.f32 0.0, %v694
      %696 = vdwg.mxu0
      %v697 = vadd.f32 %v626, %v678
      %v698 = vadd.f32 %v627, %v680
      %v699 = vadd.f32 %v628, %v683
      %v700 = vadd.f32 %v629, %v685
      %v701 = vadd.f32 %v630, %v688
      %v702 = vadd.f32 %v631, %v690
      %v703 = vadd.f32 %v632, %v693
      %v704 = vadd.f32 %v633, %v695
      %v706 = vrot.slane %v220, 5
      %v707 = vrot.slane %v706, 4
      %v708 = vrot.slane %v221, 5
      %v709 = vsel %vm479, %v707, %v708
      %v710 = vunpack.c.l.b16 %v709
      %v711 = vpack.c.b16 %v514, %v513
      %v712 = vpack.c.b16 %v516, %v515
      %v713 = vpack.c.b16 %v518, %v517
      %v714 = vpack.c.b16 %v710, %v519
      %v716 = vsel %vm145, %v711, 0
      %v719 = vsel %vm145, %v712, 0
      %v722 = vsel %vm145, %v713, 0
      %v725 = vsel %vm145, %v714, 0
      %v728 = vsel %vm372, %v229, 0
      %730 = vmatpush.bf16.msra.mxu0 0
      %731 = vmatpush.bf16.msra.mxu0 0
      %732 = vmatpush.bf16.msra.mxu0 0
      %733 = vmatpush.bf16.msra.mxu0 0
      %734 = vmatpush.bf16.msra.mxu0 0
      %735 = vmatpush.bf16.msra.mxu0 0
      %736 = vmatpush.bf16.msra.mxu0 0
      %737 = vmatpush.bf16.msra.mxu0 %v728
      %738 = vmatmul.bf16.gmra.mxu0 %v716
      %v739 = vpop.f32.mrf.mxu0
      %v740 = vadd.f32 0.0, %v739
      %v741 = vpop.f32.mrf.mxu0
      %v742 = vadd.f32 0.0, %v741
      %743 = vmatmul.bf16.gmra.mxu0 %v719
      %v744 = vpop.f32.mrf.mxu0
      %v745 = vadd.f32 0.0, %v744
      %v746 = vpop.f32.mrf.mxu0
      %v747 = vadd.f32 0.0, %v746
      %748 = vmatmul.bf16.gmra.mxu0 %v722
      %v749 = vpop.f32.mrf.mxu0
      %v750 = vadd.f32 0.0, %v749
      %v751 = vpop.f32.mrf.mxu0
      %v752 = vadd.f32 0.0, %v751
      %753 = vmatmul.bf16.gmra.mxu0 %v725
      %v754 = vpop.f32.mrf.mxu0
      %v755 = vadd.f32 0.0, %v754
      %v756 = vpop.f32.mrf.mxu0
      %v757 = vadd.f32 0.0, %v756
      %758 = vdwg.mxu0
      %v759 = vadd.f32 %v697, %v740
      %v760 = vadd.f32 %v698, %v742
      %v761 = vadd.f32 %v699, %v745
      %v762 = vadd.f32 %v700, %v747
      %v763 = vadd.f32 %v701, %v750
      %v764 = vadd.f32 %v702, %v752
      %v765 = vadd.f32 %v703, %v755
      %v766 = vadd.f32 %v704, %v757
      %v768 = vunpack.c.l.b16 %v222
      %v769 = vpack.c.b16 %v768, %v577
      %v771 = vsel %vm145, %v769, 0
      %v774 = vsel %vm372, %v230, 0
      %776 = vmatpush.bf16.msra.mxu0 0
      %777 = vmatpush.bf16.msra.mxu0 0
      %778 = vmatpush.bf16.msra.mxu0 0
      %779 = vmatpush.bf16.msra.mxu0 0
      %780 = vmatpush.bf16.msra.mxu0 0
      %781 = vmatpush.bf16.msra.mxu0 0
      %782 = vmatpush.bf16.msra.mxu0 0
      %783 = vmatpush.bf16.msra.mxu0 %v774
      %784 = vmatmul.bf16.gmra.mxu0 %v429
      %v785 = vpop.f32.mrf.mxu0
      %v786 = vadd.f32 0.0, %v785
      %v787 = vpop.f32.mrf.mxu0
      %v788 = vadd.f32 0.0, %v787
      %789 = vmatmul.bf16.gmra.mxu0 %v432
      %v790 = vpop.f32.mrf.mxu0
      %v791 = vadd.f32 0.0, %v790
      %v792 = vpop.f32.mrf.mxu0
      %v793 = vadd.f32 0.0, %v792
      %794 = vmatmul.bf16.gmra.mxu0 %v435
      %v795 = vpop.f32.mrf.mxu0
      %v796 = vadd.f32 0.0, %v795
      %v797 = vpop.f32.mrf.mxu0
      %v798 = vadd.f32 0.0, %v797
      %799 = vmatmul.bf16.gmra.mxu0 %v771
      %v800 = vpop.f32.mrf.mxu0
      %v801 = vadd.f32 0.0, %v800
      %v802 = vpop.f32.mrf.mxu0
      %v803 = vadd.f32 0.0, %v802
      %804 = vdwg.mxu0
      %v805 = vadd.f32 %v759, %v786
      %v806 = vadd.f32 %v760, %v788
      %v807 = vadd.f32 %v761, %v791
      %v808 = vadd.f32 %v762, %v793
      %v809 = vadd.f32 %v763, %v796
      %v810 = vadd.f32 %v764, %v798
      %v811 = vadd.f32 %v765, %v801
      %v812 = vadd.f32 %v766, %v803
      %v814 = vshrl.u32 %v222, 16
      %v816 = vrot.slane %v814, 4
      %v817 = vshll.u32 %v222, 16
      %v819 = vrot.slane %v817, 5
      %v820 = vor.u32 %v816, %v819
      %v821 = vrot.slane %v820, 4
      %v823 = vshll.u32 %v223, 16
      %v825 = vrot.slane %v823, 5
      %v826 = vsel %vm235, %v821, %v825
      %v827 = vunpack.c.l.b16 %v826
      %v828 = vpack.c.b16 %v827, %v648
      %v830 = vsel %vm145, %v828, 0
      %v833 = vsel %vm372, %v231, 0
      %835 = vmatpush.bf16.msra.mxu0 0
      %836 = vmatpush.bf16.msra.mxu0 0
      %837 = vmatpush.bf16.msra.mxu0 0
      %838 = vmatpush.bf16.msra.mxu0 0
      %839 = vmatpush.bf16.msra.mxu0 0
      %840 = vmatpush.bf16.msra.mxu0 0
      %841 = vmatpush.bf16.msra.mxu0 0
      %842 = vmatpush.bf16.msra.mxu0 %v833
      %843 = vmatmul.bf16.gmra.mxu0 %v364
      %v844 = vpop.f32.mrf.mxu0
      %v845 = vadd.f32 0.0, %v844
      %v846 = vpop.f32.mrf.mxu0
      %v847 = vadd.f32 0.0, %v846
      %848 = vmatmul.bf16.gmra.mxu0 %v367
      %v849 = vpop.f32.mrf.mxu0
      %v850 = vadd.f32 0.0, %v849
      %v851 = vpop.f32.mrf.mxu0
      %v852 = vadd.f32 0.0, %v851
      %853 = vmatmul.bf16.gmra.mxu0 %v370
      %v854 = vpop.f32.mrf.mxu0
      %v855 = vadd.f32 0.0, %v854
      %v856 = vpop.f32.mrf.mxu0
      %v857 = vadd.f32 0.0, %v856
      %858 = vmatmul.bf16.gmra.mxu0 %v830
      %v859 = vpop.f32.mrf.mxu0
      %v860 = vadd.f32 0.0, %v859
      %v861 = vpop.f32.mrf.mxu0
      %v862 = vadd.f32 0.0, %v861
      %863 = vdwg.mxu0
      %v864 = vadd.f32 %v805, %v845
      %v865 = vadd.f32 %v806, %v847
      %v866 = vadd.f32 %v807, %v850
      %v867 = vadd.f32 %v808, %v852
      %v868 = vadd.f32 %v809, %v855
      %v869 = vadd.f32 %v810, %v857
      %v870 = vadd.f32 %v811, %v860
      %v871 = vadd.f32 %v812, %v862
      %v873 = vrot.slane %v222, 5
      %v874 = vrot.slane %v873, 4
      %v875 = vrot.slane %v223, 5
      %v876 = vsel %vm479, %v874, %v875
      %v877 = vunpack.c.l.b16 %v876
      %v878 = vpack.c.b16 %v877, %v710
      %v880 = vsel %vm145, %v878, 0
      %v883 = vsel %vm372, %v232, 0
      %885 = vmatpush.bf16.msra.mxu0 0
      %886 = vmatpush.bf16.msra.mxu0 0
      %887 = vmatpush.bf16.msra.mxu0 0
      %888 = vmatpush.bf16.msra.mxu0 0
      %889 = vmatpush.bf16.msra.mxu0 0
      %890 = vmatpush.bf16.msra.mxu0 0
      %891 = vmatpush.bf16.msra.mxu0 0
      %892 = vmatpush.bf16.msra.mxu0 %v883
      %893 = vmatmul.bf16.gmra.mxu0 %v528
      %v894 = vpop.f32.mrf.mxu0
      %v895 = vadd.f32 0.0, %v894
      %v896 = vpop.f32.mrf.mxu0
      %v897 = vadd.f32 0.0, %v896
      %898 = vmatmul.bf16.gmra.mxu0 %v531
      %v899 = vpop.f32.mrf.mxu0
      %v900 = vadd.f32 0.0, %v899
      %v901 = vpop.f32.mrf.mxu0
      %v902 = vadd.f32 0.0, %v901
      %903 = vmatmul.bf16.gmra.mxu0 %v534
      %v904 = vpop.f32.mrf.mxu0
      %v905 = vadd.f32 0.0, %v904
      %v906 = vpop.f32.mrf.mxu0
      %v907 = vadd.f32 0.0, %v906
      %908 = vmatmul.bf16.gmra.mxu0 %v880
      %v909 = vpop.f32.mrf.mxu0
      %v910 = vadd.f32 0.0, %v909
      %v911 = vpop.f32.mrf.mxu0
      %v912 = vadd.f32 0.0, %v911
      %913 = vdwg.mxu0
      %v914 = vadd.f32 %v864, %v895
      %v915 = vadd.f32 %v865, %v897
      %v916 = vadd.f32 %v866, %v900
      %v917 = vadd.f32 %v867, %v902
      %v918 = vadd.f32 %v868, %v905
      %v919 = vadd.f32 %v869, %v907
      %v920 = vadd.f32 %v870, %v910
      %v921 = vadd.f32 %v871, %v912
      %922 = vst.msk [vmem:[%s143] sm:$0xff] %vm145, %v914
      %923 = vst.msk [vmem:[%s143 + $0x8] sm:$0xff] %vm145, %v915
      %924 = vst.msk [vmem:[%s143 + $0x10] sm:$0xff] %vm145, %v916
      %925 = vst.msk [vmem:[%s143 + $0x18] sm:$0xff] %vm145, %v917
      %926 = vst.msk [vmem:[%s143 + $0x20] sm:$0xff] %vm145, %v918
      %927 = vst.msk [vmem:[%s143 + $0x28] sm:$0xff] %vm145, %v919
      %928 = vst.msk [vmem:[%s143 + $0x30] sm:$0xff] %vm145, %v920
      %929 = vst.msk [vmem:[%s143 + $0x38] sm:$0xff] %vm145, %v921
      %p930 = scmp.lt.s32.totalorder %s13, 1
      %s931 = scalar_select %p930, %s13, 1
      %s932 = smul.addr %s931, 8
      %s933 = smul.addr %s932, 8
      %s934 = scalar_lea.vmem %s2, %s933
      // Predicated region
      $region29: #{glu_block_forward.13} parent=27 // pred_check
        %p935 = pneg %p78
      $region30: #{glu_block_forward.13} parent=27 // pred_check_branch
        %937 = sbr.rel (%p935) target = $region32
      $region31: #{glu_block_forward.13} parent=27 // pred_region
        _
      $region32: #{glu_block_forward.13} parent=27 // pred_fallthru
        _
    $region28: #{glu_block_forward.13} parent=5 // pred_fallthru
      _
    %p938 = scmp.le.s32.totalorder 2, %s8
    // Predicated region
    $region33: #{glu_block_forward.13} parent=5 // pred_check
      %p939 = pneg %p938
    $region34: #{glu_block_forward.13} parent=5 // pred_check_branch
      %941 = sbr.rel (%p939) target = $region36
    $region35: #{glu_block_forward.13} parent=5 // pred_region
      %s942 = ssub.s32 %s8, 2
      // Predicated region
      $region37: #{glu_block_forward.13} parent=35 // pred_check
        %p943 = pneg %p84
      $region38: #{glu_block_forward.13} parent=35 // pred_check_branch
        %945 = sbr.rel (%p943) target = $region40
      $region39: #{glu_block_forward.13} parent=35 // pred_region
        %p946 = scmp.lt.s32.totalorder %s14, 1
        %s947 = scalar_select %p946, %s14, 1
        %s948 = smul.addr %s947, 8
        %s949 = smul.addr %s948, 8
        %s950 = scalar_lea.vmem %s2, %s949
      $region40: #{glu_block_forward.13} parent=35 // pred_fallthru
        _
    $region36: #{glu_block_forward.13} parent=5 // pred_fallthru
      _
  $region6: #{glu_block_forward.13} parent=0 // loop_footer
    %s12 = sadd.s32 1, %s8
  $region7: #{glu_block_forward.13} parent=0 // loop_footer_branch
    %7 = sbr.rel target = $region3
  $region8: #{glu_block_forward.13} parent=0 // loop_exit
    _

// kernel: glu_block_forward.8
$region0: #{glu_block_forward.8}
  #allocation0 [shape = 'u32[]', space=smem, size = 0x4, offset = 0x4, fixed_abs, tag = 'smem constant byte address 0x4 - core index']
  #allocation1 [shape = 'u32[72,128]{1,0:T(1,128)}', space=vmem, size = 0x9000, scoped, tag = 'internal scratch']
  #allocation2 [shape = 'f32[10,10,16]{2,1,0:T(8,128)}', space=vmem, size = 0x14000, scoped, tag = 'scratch operand']
  %s0 = inlined_call_operand.vmem [shape: f32[2,8,8,16], index: 0, kind: input, shape index: {}, may-alias: {0,4}]
  %s1 = inlined_call_operand.vmem [shape: f32[9,16], index: 1, kind: input, shape index: {}]
  %s2 = inlined_call_operand.vmem [shape: f32[1,16], index: 2, kind: input, shape index: {}]
  %s3 = inlined_call_operand.vmem [shape: f32[1,16], index: 3, kind: input, shape index: {}]
  %s4 = inlined_call_operand.vmem [shape: f32[2,8,8,16], index: 4, kind: input, shape index: {}, may-alias: {0,4}]
  %s5 = inlined_call_operand.vmem [shape: f32[2,8,8,16], index: 5, kind: output, shape index: {}]
  %s6 = sld [smem:[#allocation0]]
  $region53: #{glu_block_forward.8} parent=0
    _
  %s8 = ssub.s32 1, %s6
  %s9 = scalar_select 0, %s8, %s6
  loop: start=0, step=1, limit=4
  $region2: #{glu_block_forward.8} parent=0 // loop_pre_header
    _
  $region3: #{glu_block_forward.8} parent=0 // loop_header
    %s11 = sphi 0, %s15
    %p12 = scmp.ge.s32.totalorder %s11, 4
    %s21 = sphi 0, %s23
    %s24 = sphi 0, %s21
    %s25 = sphi 0, %s24
    %s41 = sphi 0, %s25
    %s45 = sphi 0, %s45
    %s47 = sphi 0, %s45
    %s48 = sphi 0, %s47
    %s62 = sphi 0, %s48
    %s66 = sphi 0, %s66
    %s68 = sphi 0, %s66
    %s69 = sphi 0, %s68
    %s83 = sphi 0, %s69
    %s87 = sphi 0, %s87
    %s89 = sphi 0, %s87
    %s90 = sphi 0, %s89
    %s104 = sphi 0, %s90
    %s110 = sphi 0, %s112
    %s113 = sphi 0, %s110
    %s114 = sphi 0, %s113
    %s130 = sphi 0, %s114
    %s136 = sphi 0, %s138
    %s139 = sphi 0, %s136
    %s140 = sphi 0, %s139
    %s156 = sphi 0, %s140
  $region4: #{glu_block_forward.8} parent=0 // loop_header_branch
    %14 = sbr.rel (%p12) target = $region8
  $region5: #{glu_block_forward.8} parent=0 // loop_body
    %s16 = ssub.s32 %s11, 1
    %s17 = ssub.s32 %s11, 2
    %s18 = sadd.s32 %s11, 1
    %s19 = ssub.s32 %s11, %s18
    %p20 = scmp.eq.s32.totalorder %s19, 0
    %s22 = sadd.s32 %s21, 1
    %s23 = scalar_select %p20, %s21, %s22
    %p26 = pneg %p20
    %p27 = scmp.eq.s32.totalorder %s11, 1
    %p28 = por %p26, %p27
    %p29 = scmp.ne.s32.totalorder %s21, %s24
    %p30 = scmp.eq.s32.totalorder %s11, 0
    %p31 = por %p29, %p30
    %p32 = scmp.ne.s32.totalorder %s21, %s24
    %p33 = scmp.eq.s32.totalorder %s16, 1
    %p34 = por %p32, %p33
    %p35 = scmp.ne.s32.totalorder %s24, %s25
    %p36 = scmp.eq.s32.totalorder %s16, 0
    %p37 = por %p35, %p36
    %p38 = scmp.ne.s32.totalorder %s24, %s25
    %p39 = scmp.eq.s32.totalorder %s17, 1
    %p40 = por %p38, %p39
    %p42 = scmp.ne.s32.totalorder %s25, %s41
    %p43 = scmp.eq.s32.totalorder %s17, 0
    %p44 = por %p42, %p43
    %s46 = sadd.s32 %s45, 1
    %p49 = scmp.eq.s32.totalorder %s11, 1
    %p50 = scmp.ne.s32.totalorder %s45, %s47
    %p51 = scmp.eq.s32.totalorder %s11, 0
    %p52 = por %p50, %p51
    %p53 = scmp.ne.s32.totalorder %s45, %s47
    %p54 = scmp.eq.s32.totalorder %s16, 1
    %p55 = por %p53, %p54
    %p56 = scmp.ne.s32.totalorder %s47, %s48
    %p57 = scmp.eq.s32.totalorder %s16, 0
    %p58 = por %p56, %p57
    %p59 = scmp.ne.s32.totalorder %s47, %s48
    %p60 = scmp.eq.s32.totalorder %s17, 1
    %p61 = por %p59, %p60
    %p63 = scmp.ne.s32.totalorder %s48, %s62
    %p64 = scmp.eq.s32.totalorder %s17, 0
    %p65 = por %p63, %p64
    %s67 = sadd.s32 %s66, 1
    %p70 = scmp.eq.s32.totalorder %s11, 1
    %p71 = scmp.ne.s32.totalorder %s66, %s68
    %p72 = scmp.eq.s32.totalorder %s11, 0
    %p73 = por %p71, %p72
    %p74 = scmp.ne.s32.totalorder %s66, %s68
    %p75 = scmp.eq.s32.totalorder %s16, 1
    %p76 = por %p74, %p75
    %p77 = scmp.ne.s32.totalorder %s68, %s69
    %p78 = scmp.eq.s32.totalorder %s16, 0
    %p79 = por %p77, %p78
    %p80 = scmp.ne.s32.totalorder %s68, %s69
    %p81 = scmp.eq.s32.totalorder %s17, 1
    %p82 = por %p80, %p81
    %p84 = scmp.ne.s32.totalorder %s69, %s83
    %p85 = scmp.eq.s32.totalorder %s17, 0
    %p86 = por %p84, %p85
    %s88 = sadd.s32 %s87, 1
    %p91 = scmp.eq.s32.totalorder %s11, 1
    %p92 = scmp.ne.s32.totalorder %s87, %s89
    %p93 = scmp.eq.s32.totalorder %s11, 0
    %p94 = por %p92, %p93
    %p95 = scmp.ne.s32.totalorder %s87, %s89
    %p96 = scmp.eq.s32.totalorder %s16, 1
    %p97 = por %p95, %p96
    %p98 = scmp.ne.s32.totalorder %s89, %s90
    %p99 = scmp.eq.s32.totalorder %s16, 0
    %p100 = por %p98, %p99
    %p101 = scmp.ne.s32.totalorder %s89, %s90
    %p102 = scmp.eq.s32.totalorder %s17, 1
    %p103 = por %p101, %p102
    %p105 = scmp.ne.s32.totalorder %s90, %s104
    %p106 = scmp.eq.s32.totalorder %s17, 0
    %p107 = por %p105, %p106
    %s108 = ssub.s32 %s11, %s18
    %p109 = scmp.eq.s32.totalorder %s108, 0
    %s111 = sadd.s32 %s110, 1
    %s112 = scalar_select %p109, %s110, %s111
    %p115 = pneg %p109
    %p116 = scmp.eq.s32.totalorder %s11, 1
    %p117 = por %p115, %p116
    %p118 = scmp.ne.s32.totalorder %s110, %s113
    %p119 = scmp.eq.s32.totalorder %s11, 0
    %p120 = por %p118, %p119
    %p121 = scmp.ne.s32.totalorder %s110, %s113
    %p122 = scmp.eq.s32.totalorder %s16, 1
    %p123 = por %p121, %p122
    %p124 = scmp.ne.s32.totalorder %s113, %s114
    %p125 = scmp.eq.s32.totalorder %s16, 0
    %p126 = por %p124, %p125
    %p127 = scmp.ne.s32.totalorder %s113, %s114
    %p128 = scmp.eq.s32.totalorder %s17, 1
    %p129 = por %p127, %p128
    %p131 = scmp.ne.s32.totalorder %s114, %s130
    %p132 = scmp.eq.s32.totalorder %s17, 0
    %p133 = por %p131, %p132
    %s134 = ssub.s32 %s11, %s18
    %p135 = scmp.eq.s32.totalorder %s134, 0
    %s137 = sadd.s32 %s136, 1
    %s138 = scalar_select %p135, %s136, %s137
    %p141 = pneg %p135
    %p142 = scmp.eq.s32.totalorder %s11, 1
    %p143 = por %p141, %p142
    %p144 = scmp.ne.s32.totalorder %s136, %s139
    %p145 = scmp.eq.s32.totalorder %s11, 0
    %p146 = por %p144, %p145
    %p147 = scmp.ne.s32.totalorder %s136, %s139
    %p148 = scmp.eq.s32.totalorder %s16, 1
    %p149 = por %p147, %p148
    %p150 = scmp.ne.s32.totalorder %s139, %s140
    %p151 = scmp.eq.s32.totalorder %s16, 0
    %p152 = por %p150, %p151
    %p153 = scmp.ne.s32.totalorder %s139, %s140
    %p154 = scmp.eq.s32.totalorder %s17, 1
    %p155 = por %p153, %p154
    %p157 = scmp.ne.s32.totalorder %s140, %s156
    %p158 = scmp.eq.s32.totalorder %s17, 0
    %p159 = por %p157, %p158
    %p160 = scmp.le.s32.totalorder 1, %s11
    %p161 = scmp.lt.s32.totalorder %s11, 3
    %p162 = pnand %p160, %p161
    %p163 = pneg %p162
    // Predicated region
    $region9: #{glu_block_forward.8} parent=5 // pred_check
      _
    $region10: #{glu_block_forward.8} parent=5 // pred_check_branch
      %165 = sbr.rel (%p162) target = $region12
    $region11: #{glu_block_forward.8} parent=5 // pred_region
      %s166 = ssub.s32 %s11, 1
      // Predicated region
      $region13: #{glu_block_forward.8} parent=11 // pred_check
        %p167 = pneg %p58
      $region14: #{glu_block_forward.8} parent=11 // pred_check_branch
        %169 = sbr.rel (%p167) target = $region16
      $region15: #{glu_block_forward.8} parent=11 // pred_region
        _
      $region16: #{glu_block_forward.8} parent=11 // pred_fallthru
        _
      // Predicated region
      $region17: #{glu_block_forward.8} parent=11 // pred_check
        %p170 = pneg %p79
      $region18: #{glu_block_forward.8} parent=11 // pred_check_branch
        %172 = sbr.rel (%p170) target = $region20
      $region19: #{glu_block_forward.8} parent=11 // pred_region
        _
      $region20: #{glu_block_forward.8} parent=11 // pred_fallthru
        _
      // Predicated region
      $region21: #{glu_block_forward.8} parent=11 // pred_check
        %p173 = pneg %p100
      $region22: #{glu_block_forward.8} parent=11 // pred_check_branch
        %175 = sbr.rel (%p173) target = $region24
      $region23: #{glu_block_forward.8} parent=11 // pred_region
        _
      $region24: #{glu_block_forward.8} parent=11 // pred_fallthru
        _
    $region12: #{glu_block_forward.8} parent=5 // pred_fallthru
      _
    %p176 = scmp.lt.s32.totalorder %s11, 2
    // Predicated region
    $region25: #{glu_block_forward.8} parent=5 // pred_check
      %p177 = pneg %p176
    $region26: #{glu_block_forward.8} parent=5 // pred_check_branch
      %179 = sbr.rel (%p177) target = $region28
    $region27: #{glu_block_forward.8} parent=5 // pred_region
      // Predicated region
      $region29: #{glu_block_forward.8} parent=27 // pred_check
        %p180 = pneg %p31
      $region30: #{glu_block_forward.8} parent=27 // pred_check_branch
        %182 = sbr.rel (%p180) target = $region32
      $region31: #{glu_block_forward.8} parent=27 // pred_region
        %p183 = scmp.lt.s32.totalorder %s11, 1
        %s184 = scalar_select %p183, %s11, 1
        %s185 = smul.addr %s184, 8
        %s186 = smul.addr %s185, 8
        %s187 = scalar_lea.vmem %s0, %s186
      $region32: #{glu_block_forward.8} parent=27 // pred_fallthru
        _
      // Predicated region
      $region33: #{glu_block_forward.8} parent=27 // pred_check
        %p188 = pneg %p120
      $region34: #{glu_block_forward.8} parent=27 // pred_check_branch
        %190 = sbr.rel (%p188) target = $region36
      $region35: #{glu_block_forward.8} parent=27 // pred_region
        %p191 = scmp.lt.s32.totalorder %s11, 1
        %s192 = scalar_select %p191, %s11, 1
        %s193 = smul.addr %s192, 8
        %s194 = smul.addr %s193, 8
        %s195 = scalar_lea.vmem %s4, %s194
      $region36: #{glu_block_forward.8} parent=27 // pred_fallthru
        _
    $region28: #{glu_block_forward.8} parent=5 // pred_fallthru
      _
    %p196 = scmp.le.s32.totalorder 1, %s11
    %p197 = scmp.lt.s32.totalorder %s11, 3
    %p198 = pnand %p196, %p197
    %p199 = pneg %p198
    // Predicated region
    $region37: #{glu_block_forward.8} parent=5 // pred_check
      _
    $region38: #{glu_block_forward.8} parent=5 // pred_check_branch
      %201 = sbr.rel (%p198) target = $region40
    $region39: #{glu_block_forward.8} parent=5 // pred_region
      %s202 = ssub.s32 %s11, 1
      %p203 = scmp.lt.s32.totalorder %s16, 1
      %s204 = scalar_select %p203, %s16, 1
      %s205 = smul.addr %s204, 8
      %s206 = smul.addr %s205, 8
      %s207 = scalar_lea.vmem %s0, %s206
      %p208 = pneg %p37
      %p209 = pneg %p34
      %p210 = pneg %p58
      %p211 = pneg %p55
      %p212 = pneg %p79
      %p213 = pneg %p76
      %p214 = pneg %p100
      %p215 = pneg %p97
      %p216 = scmp.lt.s32.totalorder %s16, 1
      %s217 = scalar_select %p216, %s16, 1
      %s218 = smul.addr %s217, 8
      %s219 = smul.addr %s218, 8
      %s220 = scalar_lea.vmem %s4, %s219
      %p221 = pneg %p126
      %p222 = pneg %p123
      %p223 = pneg %p152
      %p224 = pneg %p149
      %p225 = scmp.lt.s32.totalorder %s16, 1
      %s226 = scalar_select %p225, %s16, 1
      %s227 = smul.addr %s226, 8
      %s228 = smul.addr %s227, 8
      %s229 = scalar_lea.vmem %s5, %s228
      %p230 = scmp.lt.s32.totalorder %s16, 1
      %s231 = scalar_select %p230, %s16, 1
      %s232 = smul.addr %s231, 8
      %s233 = smul.addr %s232, 8
      %s234 = scalar_lea.vmem %s0, %s233
      %p235 = scmp.lt.s32.totalorder %s16, 1
      %s236 = scalar_select %p235, %s16, 1
      %s237 = smul.addr %s236, 8
      %s238 = smul.addr %s237, 8
      %s239 = scalar_lea.vmem %s4, %s238
      %p240 = scmp.lt.s32.totalorder %s16, 1
      %s241 = scalar_select %p240, %s16, 1
      %s242 = smul.addr %s241, 8
      %s243 = smul.addr %s242, 8
      %s244 = scalar_lea.vmem %s5, %s243
      %vm245 = vcmask 130048
      %246 = vst.msk [vmem:[#allocation2] sm:$0xff] %vm245, 0.0
      %vm247 = vcmask 123904
      %248 = vst.msk [vmem:[#allocation2 + $0x8] sm:$0x3] %vm247, 0.0
      %249 = vst.msk [vmem:[#allocation2 + $0x10] sm:$0xff] %vm245, 0.0
      %250 = vst.msk [vmem:[#allocation2 + $0x18] sm:$0x3] %vm247, 0.0
      %251 = vst.msk [vmem:[#allocation2 + $0x20] sm:$0xff] %vm245, 0.0
      %252 = vst.msk [vmem:[#allocation2 + $0x28] sm:$0x3] %vm247, 0.0
      %253 = vst.msk [vmem:[#allocation2 + $0x30] sm:$0xff] %vm245, 0.0
      %254 = vst.msk [vmem:[#allocation2 + $0x38] sm:$0x3] %vm247, 0.0
      %255 = vst.msk [vmem:[#allocation2 + $0x40] sm:$0xff] %vm245, 0.0
      %256 = vst.msk [vmem:[#allocation2 + $0x48] sm:$0x3] %vm247, 0.0
      %257 = vst.msk [vmem:[#allocation2 + $0x50] sm:$0xff] %vm245, 0.0
      %258 = vst.msk [vmem:[#allocation2 + $0x58] sm:$0x3] %vm247, 0.0
      %259 = vst.msk [vmem:[#allocation2 + $0x60] sm:$0xff] %vm245, 0.0
      %260 = vst.msk [vmem:[#allocation2 + $0x68] sm:$0x3] %vm247, 0.0
      %261 = vst.msk [vmem:[#allocation2 + $0x70] sm:$0xff] %vm245, 0.0
      %262 = vst.msk [vmem:[#allocation2 + $0x78] sm:$0x3] %vm247, 0.0
      %263 = vst.msk [vmem:[#allocation2 + $0x80] sm:$0xff] %vm245, 0.0
      %264 = vst.msk [vmem:[#allocation2 + $0x88] sm:$0x3] %vm247, 0.0
      %265 = vst.msk [vmem:[#allocation2 + $0x90] sm:$0xff] %vm245, 0.0
      %266 = vst.msk [vmem:[#allocation2 + $0x98] sm:$0x3] %vm247, 0.0
      %v267 = vld [vmem:[%s234] sm:$0xff]
      %v268 = vld [vmem:[%s234 + $0x8] sm:$0xff]
      %v269 = vld [vmem:[%s234 + $0x10] sm:$0xff]
      %v270 = vld [vmem:[%s234 + $0x18] sm:$0xff]
      %v271 = vld [vmem:[%s234 + $0x20] sm:$0xff]
      %v272 = vld [vmem:[%s234 + $0x28] sm:$0xff]
      %v273 = vld [vmem:[%s234 + $0x30] sm:$0xff]
      %v274 = vld [vmem:[%s234 + $0x38] sm:$0xff]
      %s275 = scalar_lea.vmem [#allocation2], 16
      %276 = vst.msk [vmem:[%s275 + $0x1] sm:$0xff] %vm245, %v267
      %277 = vst.msk [vmem:[%s275 + $0x11] sm:$0xff] %vm245, %v268
      %278 = vst.msk [vmem:[%s275 + $0x21] sm:$0xff] %vm245, %v269
      %279 = vst.msk [vmem:[%s275 + $0x31] sm:$0xff] %vm245, %v270
      %280 = vst.msk [vmem:[%s275 + $0x41] sm:$0xff] %vm245, %v271
      %281 = vst.msk [vmem:[%s275 + $0x51] sm:$0xff] %vm245, %v272
      %282 = vst.msk [vmem:[%s275 + $0x61] sm:$0xff] %vm245, %v273
      %283 = vst.msk [vmem:[%s275 + $0x71] sm:$0xff] %vm245, %v274
      %v284 = vld [vmem:[#allocation2] sm:$0xff]
      %v285 = vld [vmem:[#allocation2 + $0x8] sm:$0x3]
      %v286 = vld [vmem:[#allocation2 + $0x10] sm:$0xff]
      %v287 = vld [vmem:[#allocation2 + $0x18] sm:$0x3]
      %v288 = vld [vmem:[#allocation2 + $0x20] sm:$0xff]
      %v289 = vld [vmem:[#allocation2 + $0x28] sm:$0x3]
      %v290 = vld [vmem:[#allocation2 + $0x30] sm:$0xff]
      %v291 = vld [vmem:[#allocation2 + $0x38] sm:$0x3]
      %v292 = vld [vmem:[#allocation2 + $0x40] sm:$0xff]
      %v293 = vld [vmem:[#allocation2 + $0x48] sm:$0x3]
      %v294 = vld [vmem:[#allocation2 + $0x50] sm:$0xff]
      %v295 = vld [vmem:[#allocation2 + $0x58] sm:$0x3]
      %v296 = vld [vmem:[#allocation2 + $0x60] sm:$0xff]
      %v297 = vld [vmem:[#allocation2 + $0x68] sm:$0x3]
      %v298 = vld [vmem:[#allocation2 + $0x70] sm:$0xff]
      %v299 = vld [vmem:[#allocation2 + $0x78] sm:$0x3]
      %v300 = vld [vmem:[#allocation2 + $0x80] sm:$0xff]
      %v301 = vld [vmem:[#allocation2 + $0x88] sm:$0x3]
      %v302 = vld [vmem:[#allocation2 + $0x90] sm:$0xff]
      %v303 = vld [vmem:[#allocation2 + $0x98] sm:$0x3]
      %v304 = vld [vmem:[%s1] sm:$0xff]
      %v305 = vld [vmem:[%s1 + $0x8] sm:$0x1]
      %v306 = vperm.slane %v304, 0
      %v307 = vmul.f32 %v284, %v306
      %v308 = vmul.f32 %v286, %v306
      %v309 = vmul.f32 %v288, %v306
      %v310 = vmul.f32 %v290, %v306
      %v311 = vmul.f32 %v292, %v306
      %v312 = vmul.f32 %v294, %v306
      %v313 = vmul.f32 %v296, %v306
      %v314 = vmul.f32 %v298, %v306
      %v315 = vadd.f32 %v307, 0.0
      %v316 = vadd.f32 %v308, 0.0
      %v317 = vadd.f32 %v309, 0.0
      %v318 = vadd.f32 %v310, 0.0
      %v319 = vadd.f32 %v311, 0.0
      %v320 = vadd.f32 %v312, 0.0
      %v321 = vadd.f32 %v313, 0.0
      %v322 = vadd.f32 %v314, 0.0
      %v323 = vperm.slane %v304, 1
      %v324 = vmul.f32 %v284, %v323
      %v325 = vmul.f32 %v285, %v323
      %v326 = vmul.f32 %v286, %v323
      %v327 = vmul.f32 %v287, %v323
      %v328 = vmul.f32 %v288, %v323
      %v329 = vmul.f32 %v289, %v323
      %v330 = vmul.f32 %v290, %v323
      %v331 = vmul.f32 %v291, %v323
      %v332 = vmul.f32 %v292, %v323
      %v333 = vmul.f32 %v293, %v323
      %v334 = vmul.f32 %v294, %v323
      %v335 = vmul.f32 %v295, %v323
      %v336 = vmul.f32 %v296, %v323
      %v337 = vmul.f32 %v297, %v323
      %v338 = vmul.f32 %v298, %v323
      %v339 = vmul.f32 %v299, %v323
      %vm356 = vcmask 1046528
      %v357 = vrot.slane %v324, 1
      %v358 = vrot.slane %v325, 1
      %v359 = vsel %vm356, %v357, %v358
      %v360 = vrot.slane %v326, 1
      %v361 = vrot.slane %v327, 1
      %v362 = vsel %vm356, %v360, %v361
      %v363 = vrot.slane %v328, 1
      %v364 = vrot.slane %v329, 1
      %v365 = vsel %vm356, %v363, %v364
      %v366 = vrot.slane %v330, 1
      %v367 = vrot.slane %v331, 1
      %v368 = vsel %vm356, %v366, %v367
      %v369 = vrot.slane %v332, 1
      %v370 = vrot.slane %v333, 1
      %v371 = vsel %vm356, %v369, %v370
      %v372 = vrot.slane %v334, 1
      %v373 = vrot.slane %v335, 1
      %v374 = vsel %vm356, %v372, %v373
      %v375 = vrot.slane %v336, 1
      %v376 = vrot.slane %v337, 1
      %v377 = vsel %vm356, %v375, %v376
      %v378 = vrot.slane %v338, 1
      %v379 = vrot.slane %v339, 1
      %v380 = vsel %vm356, %v378, %v379
      %v389 = vadd.f32 %v315, %v359
      %v390 = vadd.f32 %v316, %v362
      %v391 = vadd.f32 %v317, %v365
      %v392 = vadd.f32 %v318, %v368
      %v393 = vadd.f32 %v319, %v371
      %v394 = vadd.f32 %v320, %v374
      %v395 = vadd.f32 %v321, %v377
      %v396 = vadd.f32 %v322, %v380
      %v397 = vperm.slane %v304, 2
      %v398 = vmul.f32 %v284, %v397
      %v399 = vmul.f32 %v285, %v397
      %v400 = vmul.f32 %v286, %v397
      %v401 = vmul.f32 %v287, %v397
      %v402 = vmul.f32 %v288, %v397
      %v403 = vmul.f32 %v289, %v397
      %v404 = vmul.f32 %v290, %v397
      %v405 = vmul.f32 %v291, %v397
      %v406 = vmul.f32 %v292, %v397
      %v407 = vmul.f32 %v293, %v397
      %v408 = vmul.f32 %v294, %v397
      %v409 = vmul.f32 %v295, %v397
      %v410 = vmul.f32 %v296, %v397
      %v411 = vmul.f32 %v297, %v397
      %v412 = vmul.f32 %v298, %v397
      %v413 = vmul.f32 %v299, %v397
      %vm430 = vcmask 1045504
      %v431 = vrot.slane %v398, 2
      %v432 = vrot.slane %v399, 2
      %v433 = vsel %vm430, %v431, %v432
      %v434 = vrot.slane %v400, 2
      %v435 = vrot.slane %v401, 2
      %v436 = vsel %vm430, %v434, %v435
      %v437 = vrot.slane %v402, 2
      %v438 = vrot.slane %v403, 2
      %v439 = vsel %vm430, %v437, %v438
      %v440 = vrot.slane %v404, 2
      %v441 = vrot.slane %v405, 2
      %v442 = vsel %vm430, %v440, %v441
      %v443 = vrot.slane %v406, 2
      %v444 = vrot.slane %v407, 2
      %v445 = vsel %vm430, %v443, %v444
      %v446 = vrot.slane %v408, 2
      %v447 = vrot.slane %v409, 2
      %v448 = vsel %vm430, %v446, %v447
      %v449 = vrot.slane %v410, 2
      %v450 = vrot.slane %v411, 2
      %v451 = vsel %vm430, %v449, %v450
      %v452 = vrot.slane %v412, 2
      %v453 = vrot.slane %v413, 2
      %v454 = vsel %vm430, %v452, %v453
      %v463 = vadd.f32 %v389, %v433
      %v464 = vadd.f32 %v390, %v436
      %v465 = vadd.f32 %v391, %v439
      %v466 = vadd.f32 %v392, %v442
      %v467 = vadd.f32 %v393, %v445
      %v468 = vadd.f32 %v394, %v448
      %v469 = vadd.f32 %v395, %v451
      %v470 = vadd.f32 %v396, %v454
      %v471 = vperm.slane %v304, 3
      %v472 = vmul.f32 %v286, %v471
      %v473 = vmul.f32 %v288, %v471
      %v474 = vmul.f32 %v290, %v471
      %v475 = vmul.f32 %v292, %v471
      %v476 = vmul.f32 %v294, %v471
      %v477 = vmul.f32 %v296, %v471
      %v478 = vmul.f32 %v298, %v471
      %v479 = vmul.f32 %v300, %v471
      %v480 = vadd.f32 %v463, %v472
      %v481 = vadd.f32 %v464, %v473
      %v482 = vadd.f32 %v465, %v474
      %v483 = vadd.f32 %v466, %v475
      %v484 = vadd.f32 %v467, %v476
      %v485 = vadd.f32 %v468, %v477
      %v486 = vadd.f32 %v469, %v478
      %v487 = vadd.f32 %v470, %v479
      %v488 = vperm.slane %v304, 4
      %v489 = vmul.f32 %v286, %v488
      %v490 = vmul.f32 %v287, %v488
      %v491 = vmul.f32 %v288, %v488
      %v492 = vmul.f32 %v289, %v488
      %v493 = vmul.f32 %v290, %v488
      %v494 = vmul.f32 %v291, %v488
      %v495 = vmul.f32 %v292, %v488
      %v496 = vmul.f32 %v293, %v488
      %v497 = vmul.f32 %v294, %v488
      %v498 = vmul.f32 %v295, %v488
      %v499 = vmul.f32 %v296, %v488
      %v500 = vmul.f32 %v297, %v488
      %v501 = vmul.f32 %v298, %v488
      %v502 = vmul.f32 %v299, %v488
      %v503 = vmul.f32 %v300, %v488
      %v504 = vmul.f32 %v301, %v488
      %v521 = vrot.slane %v489, 1
      %v522 = vrot.slane %v490, 1
      %v523 = vsel %vm356, %v521, %v522
      %v524 = vrot.slane %v491, 1
      %v525 = vrot.slane %v492, 1
      %v526 = vsel %vm356, %v524, %v525
      %v527 = vrot.slane %v493, 1
      %v528 = vrot.slane %v494, 1
      %v529 = vsel %vm356, %v527, %v528
      %v530 = vrot.slane %v495, 1
      %v531 = vrot.slane %v496, 1
      %v532 = vsel %vm356, %v530, %v531
      %v533 = vrot.slane %v497, 1
      %v534 = vrot.slane %v498, 1
      %v535 = vsel %vm356, %v533, %v534
      %v536 = vrot.slane %v499, 1
      %v537 = vrot.slane %v500, 1
      %v538 = vsel %vm356, %v536, %v537
      %v539 = vrot.slane %v501, 1
      %v540 = vrot.slane %v502, 1
      %v541 = vsel %vm356, %v539, %v540
      %v542 = vrot.slane %v503, 1
      %v543 = vrot.slane %v504, 1
      %v544 = vsel %vm356, %v542, %v543
      %v553 = vadd.f32 %v480, %v523
      %v554 = vadd.f32 %v481, %v526
      %v555 = vadd.f32 %v482, %v529
      %v556 = vadd.f32 %v483, %v532
      %v557 = vadd.f32 %v484, %v535
      %v558 = vadd.f32 %v485, %v538
      %v559 = vadd.f32 %v486, %v541
      %v560 = vadd.f32 %v487, %v544
      %v561 = vperm.slane %v304, 5
      %v562 = vmul.f32 %v286, %v561
      %v563 = vmul.f32 %v287, %v561
      %v564 = vmul.f32 %v288, %v561
      %v565 = vmul.f32 %v289, %v561
      %v566 = vmul.f32 %v290, %v561
      %v567 = vmul.f32 %v291, %v561
      %v568 = vmul.f32 %v292, %v561
      %v569 = vmul.f32 %v293, %v561
      %v570 = vmul.f32 %v294, %v561
      %v571 = vmul.f32 %v295, %v561
      %v572 = vmul.f32 %v296, %v561
      %v573 = vmul.f32 %v297, %v561
      %v574 = vmul.f32 %v298, %v561
      %v575 = vmul.f32 %v299, %v561
      %v576 = vmul.f32 %v300, %v561
      %v577 = vmul.f32 %v301, %v561
      %v594 = vrot.slane %v562, 2
      %v595 = vrot.slane %v563, 2
      %v596 = vsel %vm430, %v594, %v595
      %v597 = vrot.slane %v564, 2
      %v598 = vrot.slane %v565, 2
      %v599 = vsel %vm430, %v597, %v598
      %v600 = vrot.slane %v566, 2
      %v601 = vrot.slane %v567, 2
      %v602 = vsel %vm430, %v600, %v601
      %v603 = vrot.slane %v568, 2
      %v604 = vrot.slane %v569, 2
      %v605 = vsel %vm430, %v603, %v604
      %v606 = vrot.slane %v570, 2
      %v607 = vrot.slane %v571, 2
      %v608 = vsel %vm430, %v606, %v607
      %v609 = vrot.slane %v572, 2
      %v610 = vrot.slane %v573, 2
      %v611 = vsel %vm430, %v609, %v610
      %v612 = vrot.slane %v574, 2
      %v613 = vrot.slane %v575, 2
      %v614 = vsel %vm430, %v612, %v613
      %v615 = vrot.slane %v576, 2
      %v616 = vrot.slane %v577, 2
      %v617 = vsel %vm430, %v615, %v616
      %v626 = vadd.f32 %v553, %v596
      %v627 = vadd.f32 %v554, %v599
      %v628 = vadd.f32 %v555, %v602
      %v629 = vadd.f32 %v556, %v605
      %v630 = vadd.f32 %v557, %v608
      %v631 = vadd.f32 %v558, %v611
      %v632 = vadd.f32 %v559, %v614
      %v633 = vadd.f32 %v560, %v617
      %v634 = vperm.slane %v304, 6
      %v635 = vmul.f32 %v288, %v634
      %v636 = vmul.f32 %v290, %v634
      %v637 = vmul.f32 %v292, %v634
      %v638 = vmul.f32 %v294, %v634
      %v639 = vmul.f32 %v296, %v634
      %v640 = vmul.f32 %v298, %v634
      %v641 = vmul.f32 %v300, %v634
      %v642 = vmul.f32 %v302, %v634
      %v643 = vadd.f32 %v626, %v635
      %v644 = vadd.f32 %v627, %v636
      %v645 = vadd.f32 %v628, %v637
      %v646 = vadd.f32 %v629, %v638
      %v647 = vadd.f32 %v630, %v639
      %v648 = vadd.f32 %v631, %v640
      %v649 = vadd.f32 %v632, %v641
      %v650 = vadd.f32 %v633, %v642
      %v651 = vperm.slane %v304, 7
      %v652 = vmul.f32 %v288, %v651
      %v653 = vmul.f32 %v289, %v651
      %v654 = vmul.f32 %v290, %v651
      %v655 = vmul.f32 %v291, %v651
      %v656 = vmul.f32 %v292, %v651
      %v657 = vmul.f32 %v293, %v651
      %v658 = vmul.f32 %v294, %v651
      %v659 = vmul.f32 %v295, %v651
      %v660 = vmul.f32 %v296, %v651
      %v661 = vmul.f32 %v297, %v651
      %v662 = vmul.f32 %v298, %v651
      %v663 = vmul.f32 %v299, %v651
      %v664 = vmul.f32 %v300, %v651
      %v665 = vmul.f32 %v301, %v651
      %v666 = vmul.f32 %v302, %v651
      %v667 = vmul.f32 %v303, %v651
      %v684 = vrot.slane %v652, 1
      %v685 = vrot.slane %v653, 1
      %v686 = vsel %vm356, %v684, %v685
      %v687 = vrot.slane %v654, 1
      %v688 = vrot.slane %v655, 1
      %v689 = vsel %vm356, %v687, %v688
      %v690 = vrot.slane %v656, 1
      %v691 = vrot.slane %v657, 1
      %v692 = vsel %vm356, %v690, %v691
      %v693 = vrot.slane %v658, 1
      %v694 = vrot.slane %v659, 1
      %v695 = vsel %vm356, %v693, %v694
      %v696 = vrot.slane %v660, 1
      %v697 = vrot.slane %v661, 1
      %v698 = vsel %vm356, %v696, %v697
      %v699 = vrot.slane %v662, 1
      %v700 = vrot.slane %v663, 1
      %v701 = vsel %vm356, %v699, %v700
      %v702 = vrot.slane %v664, 1
      %v703 = vrot.slane %v665, 1
      %v704 = vsel %vm356, %v702, %v703
      %v705 = vrot.slane %v666, 1
      %v706 = vrot.slane %v667, 1
      %v707 = vsel %vm356, %v705, %v706
      %v716 = vadd.f32 %v643, %v686
      %v717 = vadd.f32 %v644, %v689
      %v718 = vadd.f32 %v645, %v692
      %v719 = vadd.f32 %v646, %v695
      %v720 = vadd.f32 %v647, %v698
      %v721 = vadd.f32 %v648, %v701
      %v722 = vadd.f32 %v649, %v704
      %v723 = vadd.f32 %v650, %v707
      %v724 = vperm.slane %v305, 0
      %v725 = vmul.f32 %v288, %v724
      %v726 = vmul.f32 %v289, %v724
      %v727 = vmul.f32 %v290, %v724
      %v728 = vmul.f32 %v291, %v724
      %v729 = vmul.f32 %v292, %v724
      %v730 = vmul.f32 %v293, %v724
      %v731 = vmul.f32 %v294, %v724
      %v732 = vmul.f32 %v295, %v724
      %v733 = vmul.f32 %v296, %v724
      %v734 = vmul.f32 %v297, %v724
      %v735 = vmul.f32 %v298, %v724
      %v736 = vmul.f32 %v299, %v724
      %v737 = vmul.f32 %v300, %v724
      %v738 = vmul.f32 %v301, %v724
      %v739 = vmul.f32 %v302, %v724
      %v740 = vmul.f32 %v303, %v724
      %v757 = vrot.slane %v725, 2
      %v758 = vrot.slane %v726, 2
      %v759 = vsel %vm430, %v757, %v758
      %v760 = vrot.slane %v727, 2
      %v761 = vrot.slane %v728, 2
      %v762 = vsel %vm430, %v760, %v761
      %v763 = vrot.slane %v729, 2
      %v764 = vrot.slane %v730, 2
      %v765 = vsel %vm430, %v763, %v764
      %v766 = vrot.slane %v731, 2
      %v767 = vrot.slane %v732, 2
      %v768 = vsel %vm430, %v766, %v767
      %v769 = vrot.slane %v733, 2
      %v770 = vrot.slane %v734, 2
      %v771 = vsel %vm430, %v769, %v770
      %v772 = vrot.slane %v735, 2
      %v773 = vrot.slane %v736, 2
      %v774 = vsel %vm430, %v772, %v773
      %v775 = vrot.slane %v737, 2
      %v776 = vrot.slane %v738, 2
      %v777 = vsel %vm430, %v775, %v776
      %v778 = vrot.slane %v739, 2
      %v779 = vrot.slane %v740, 2
      %v780 = vsel %vm430, %v778, %v779
      %v789 = vadd.f32 %v716, %v759
      %v790 = vadd.f32 %v717, %v762
      %v791 = vadd.f32 %v718, %v765
      %v792 = vadd.f32 %v719, %v768
      %v793 = vadd.f32 %v720, %v771
      %v794 = vadd.f32 %v721, %v774
      %v795 = vadd.f32 %v722, %v777
      %v796 = vadd.f32 %v723, %v780
      %v797 = vld [vmem:[%s2] sm:$0x1]
      %v799 = vperm.slane %v797, 0
      %v801 = vmul.f32 %v789, %v799
      %v802 = vmul.f32 %v790, %v799
      %v803 = vmul.f32 %v791, %v799
      %v804 = vmul.f32 %v792, %v799
      %v805 = vmul.f32 %v793, %v799
      %v806 = vmul.f32 %v794, %v799
      %v807 = vmul.f32 %v795, %v799
      %v808 = vmul.f32 %v796, %v799
      %v809 = vld [vmem:[%s3] sm:$0x1]
      %v811 = vperm.slane %v809, 0
      %v813 = vadd.f32 %v801, %v811
      %v814 = vadd.f32 %v802, %v811
      %v815 = vadd.f32 %v803, %v811
      %v816 = vadd.f32 %v804, %v811
      %v817 = vadd.f32 %v805, %v811
      %v818 = vadd.f32 %v806, %v811
      %v819 = vadd.f32 %v807, %v811
      %v820 = vadd.f32 %v808, %v811
      %v821 = vld [vmem:[%s239] sm:$0xff]
      %v822 = vld [vmem:[%s239 + $0x8] sm:$0xff]
      %v823 = vld [vmem:[%s239 + $0x10] sm:$0xff]
      %v824 = vld [vmem:[%s239 + $0x18] sm:$0xff]
      %v825 = vld [vmem:[%s239 + $0x20] sm:$0xff]
      %v826 = vld [vmem:[%s239 + $0x28] sm:$0xff]
      %v827 = vld [vmem:[%s239 + $0x30] sm:$0xff]
      %v828 = vld [vmem:[%s239 + $0x38] sm:$0xff]
      %v829 = vadd.f32 %v813, %v821
      %v830 = vadd.f32 %v814, %v822
      %v831 = vadd.f32 %v815, %v823
      %v832 = vadd.f32 %v816, %v824
      %v833 = vadd.f32 %v817, %v825
      %v834 = vadd.f32 %v818, %v826
      %v835 = vadd.f32 %v819, %v827
      %v836 = vadd.f32 %v820, %v828
      %837 = vst.msk [vmem:[%s244] sm:$0xff] %vm245, %v829
      %838 = vst.msk [vmem:[%s244 + $0x8] sm:$0xff] %vm245, %v830
      %839 = vst.msk [vmem:[%s244 + $0x10] sm:$0xff] %vm245, %v831
      %840 = vst.msk [vmem:[%s244 + $0x18] sm:$0xff] %vm245, %v832
      %841 = vst.msk [vmem:[%s244 + $0x20] sm:$0xff] %vm245, %v833
      %842 = vst.msk [vmem:[%s244 + $0x28] sm:$0xff] %vm245, %v834
      %843 = vst.msk [vmem:[%s244 + $0x30] sm:$0xff] %vm245, %v835
      %844 = vst.msk [vmem:[%s244 + $0x38] sm:$0xff] %vm245, %v836
      %p845 = scmp.lt.s32.totalorder %s16, 1
      %s846 = scalar_select %p845, %s16, 1
      %s847 = smul.addr %s846, 8
      %s848 = smul.addr %s847, 8
      %s849 = scalar_lea.vmem %s5, %s848
      // Predicated region
      $region41: #{glu_block_forward.8} parent=39 // pred_check
        %p850 = pneg %p149
      $region42: #{glu_block_forward.8} parent=39 // pred_check_branch
        %852 = sbr.rel (%p850) target = $region44
      $region43: #{glu_block_forward.8} parent=39 // pred_region
        _
      $region44: #{glu_block_forward.8} parent=39 // pred_fallthru
        _
    $region40: #{glu_block_forward.8} parent=5 // pred_fallthru
      _
    %p853 = scmp.le.s32.totalorder 2, %s11
    // Predicated region
    $region45: #{glu_block_forward.8} parent=5 // pred_check
      %p854 = pneg %p853
    $region46: #{glu_block_forward.8} parent=5 // pred_check_branch
      %856 = sbr.rel (%p854) target = $region48
    $region47: #{glu_block_forward.8} parent=5 // pred_region
      %s857 = ssub.s32 %s11, 2
      // Predicated region
      $region49: #{glu_block_forward.8} parent=47 // pred_check
        %p858 = pneg %p155
      $region50: #{glu_block_forward.8} parent=47 // pred_check_branch
        %860 = sbr.rel (%p858) target = $region52
      $region51: #{glu_block_forward.8} parent=47 // pred_region
        %p861 = scmp.lt.s32.totalorder %s17, 1
        %s862 = scalar_select %p861, %s17, 1
        %s863 = smul.addr %s862, 8
        %s864 = smul.addr %s863, 8
        %s865 = scalar_lea.vmem %s5, %s864
      $region52: #{glu_block_forward.8} parent=47 // pred_fallthru
        _
    $region48: #{glu_block_forward.8} parent=5 // pred_fallthru
      _
  $region6: #{glu_block_forward.8} parent=0 // loop_footer
    %s15 = sadd.s32 1, %s11
  $region7: #{glu_block_forward.8} parent=0 // loop_footer_branch
    %10 = sbr.rel target = $region3
  $region8: #{glu_block_forward.8} parent=0 // loop_exit
    _

// kernel: glu_block_forward.9
$region0: #{glu_block_forward.9}
  #allocation0 [shape = 'u32[]', space=smem, size = 0x4, offset = 0x4, fixed_abs, tag = 'smem constant byte address 0x4 - core index']
  #allocation1 [shape = 'u32[72,128]{1,0:T(1,128)}', space=vmem, size = 0x9000, scoped, tag = 'internal scratch']
  %s0 = inlined_call_operand.vmem [shape: f32[2,64,16], index: 0, kind: input, shape index: {}]
  %s1 = inlined_call_operand.vmem [shape: f32[1,16], index: 1, kind: input, shape index: {}]
  %s2 = inlined_call_operand.vmem [shape: f32[1,16], index: 2, kind: input, shape index: {}]
  %s3 = inlined_call_operand.vmem [shape: bf16[16,33], index: 3, kind: input, shape index: {}]
  %s4 = inlined_call_operand.vmem [shape: f32[1,33], index: 4, kind: input, shape index: {}]
  %s5 = inlined_call_operand.vmem [shape: bf16[16,16], index: 5, kind: input, shape index: {}]
  %s6 = inlined_call_operand.vmem [shape: f32[1,16], index: 6, kind: input, shape index: {}]
  %s7 = inlined_call_operand.vmem [shape: f32[2,64,16], index: 7, kind: output, shape index: {}]
  %s8 = sld [smem:[#allocation0]]
  $region61: #{glu_block_forward.9} parent=0
    _
  %s10 = ssub.s32 1, %s8
  %s11 = scalar_select 0, %s10, %s8
  loop: start=0, step=1, limit=4
  $region2: #{glu_block_forward.9} parent=0 // loop_pre_header
    _
  $region3: #{glu_block_forward.9} parent=0 // loop_header
    %s13 = sphi 0, %s17
    %p14 = scmp.ge.s32.totalorder %s13, 4
    %s23 = sphi 0, %s25
    %s26 = sphi 0, %s23
    %s27 = sphi 0, %s26
    %s43 = sphi 0, %s27
    %s47 = sphi 0, %s47
    %s49 = sphi 0, %s47
    %s50 = sphi 0, %s49
    %s64 = sphi 0, %s50
    %s68 = sphi 0, %s68
    %s70 = sphi 0, %s68
    %s71 = sphi 0, %s70
    %s85 = sphi 0, %s71
    %s89 = sphi 0, %s89
    %s91 = sphi 0, %s89
    %s92 = sphi 0, %s91
    %s106 = sphi 0, %s92
    %s110 = sphi 0, %s110
    %s112 = sphi 0, %s110
    %s113 = sphi 0, %s112
    %s127 = sphi 0, %s113
    %s131 = sphi 0, %s131
    %s133 = sphi 0, %s131
    %s134 = sphi 0, %s133
    %s148 = sphi 0, %s134
    %s152 = sphi 0, %s152
    %s154 = sphi 0, %s152
    %s155 = sphi 0, %s154
    %s169 = sphi 0, %s155
    %s175 = sphi 0, %s177
    %s178 = sphi 0, %s175
    %s179 = sphi 0, %s178
    %s195 = sphi 0, %s179
  $region4: #{glu_block_forward.9} parent=0 // loop_header_branch
    %16 = sbr.rel (%p14) target = $region8
  $region5: #{glu_block_forward.9} parent=0 // loop_body
    %s18 = ssub.s32 %s13, 1
    %s19 = ssub.s32 %s13, 2
    %s20 = sadd.s32 %s13, 1
    %s21 = ssub.s32 %s13, %s20
    %p22 = scmp.eq.s32.totalorder %s21, 0
    %s24 = sadd.s32 %s23, 1
    %s25 = scalar_select %p22, %s23, %s24
    %p28 = pneg %p22
    %p29 = scmp.eq.s32.totalorder %s13, 1
    %p30 = por %p28, %p29
    %p31 = scmp.ne.s32.totalorder %s23, %s26
    %p32 = scmp.eq.s32.totalorder %s13, 0
    %p33 = por %p31, %p32
    %p34 = scmp.ne.s32.totalorder %s23, %s26
    %p35 = scmp.eq.s32.totalorder %s18, 1
    %p36 = por %p34, %p35
    %p37 = scmp.ne.s32.totalorder %s26, %s27
    %p38 = scmp.eq.s32.totalorder %s18, 0
    %p39 = por %p37, %p38
    %p40 = scmp.ne.s32.totalorder %s26, %s27
    %p41 = scmp.eq.s32.totalorder %s19, 1
    %p42 = por %p40, %p41
    %p44 = scmp.ne.s32.totalorder %s27, %s43
    %p45 = scmp.eq.s32.totalorder %s19, 0
    %p46 = por %p44, %p45
    %s48 = sadd.s32 %s47, 1
    %p51 = scmp.eq.s32.totalorder %s13, 1
    %p52 = scmp.ne.s32.totalorder %s47, %s49
    %p53 = scmp.eq.s32.totalorder %s13, 0
    %p54 = por %p52, %p53
    %p55 = scmp.ne.s32.totalorder %s47, %s49
    %p56 = scmp.eq.s32.totalorder %s18, 1
    %p57 = por %p55, %p56
    %p58 = scmp.ne.s32.totalorder %s49, %s50
    %p59 = scmp.eq.s32.totalorder %s18, 0
    %p60 = por %p58, %p59
    %p61 = scmp.ne.s32.totalorder %s49, %s50
    %p62 = scmp.eq.s32.totalorder %s19, 1
    %p63 = por %p61, %p62
    %p65 = scmp.ne.s32.totalorder %s50, %s64
    %p66 = scmp.eq.s32.totalorder %s19, 0
    %p67 = por %p65, %p66
    %s69 = sadd.s32 %s68, 1
    %p72 = scmp.eq.s32.totalorder %s13, 1
    %p73 = scmp.ne.s32.totalorder %s68, %s70
    %p74 = scmp.eq.s32.totalorder %s13, 0
    %p75 = por %p73, %p74
    %p76 = scmp.ne.s32.totalorder %s68, %s70
    %p77 = scmp.eq.s32.totalorder %s18, 1
    %p78 = por %p76, %p77
    %p79 = scmp.ne.s32.totalorder %s70, %s71
    %p80 = scmp.eq.s32.totalorder %s18, 0
    %p81 = por %p79, %p80
    %p82 = scmp.ne.s32.totalorder %s70, %s71
    %p83 = scmp.eq.s32.totalorder %s19, 1
    %p84 = por %p82, %p83
    %p86 = scmp.ne.s32.totalorder %s71, %s85
    %p87 = scmp.eq.s32.totalorder %s19, 0
    %p88 = por %p86, %p87
    %s90 = sadd.s32 %s89, 1
    %p93 = scmp.eq.s32.totalorder %s13, 1
    %p94 = scmp.ne.s32.totalorder %s89, %s91
    %p95 = scmp.eq.s32.totalorder %s13, 0
    %p96 = por %p94, %p95
    %p97 = scmp.ne.s32.totalorder %s89, %s91
    %p98 = scmp.eq.s32.totalorder %s18, 1
    %p99 = por %p97, %p98
    %p100 = scmp.ne.s32.totalorder %s91, %s92
    %p101 = scmp.eq.s32.totalorder %s18, 0
    %p102 = por %p100, %p101
    %p103 = scmp.ne.s32.totalorder %s91, %s92
    %p104 = scmp.eq.s32.totalorder %s19, 1
    %p105 = por %p103, %p104
    %p107 = scmp.ne.s32.totalorder %s92, %s106
    %p108 = scmp.eq.s32.totalorder %s19, 0
    %p109 = por %p107, %p108
    %s111 = sadd.s32 %s110, 1
    %p114 = scmp.eq.s32.totalorder %s13, 1
    %p115 = scmp.ne.s32.totalorder %s110, %s112
    %p116 = scmp.eq.s32.totalorder %s13, 0
    %p117 = por %p115, %p116
    %p118 = scmp.ne.s32.totalorder %s110, %s112
    %p119 = scmp.eq.s32.totalorder %s18, 1
    %p120 = por %p118, %p119
    %p121 = scmp.ne.s32.totalorder %s112, %s113
    %p122 = scmp.eq.s32.totalorder %s18, 0
    %p123 = por %p121, %p122
    %p124 = scmp.ne.s32.totalorder %s112, %s113
    %p125 = scmp.eq.s32.totalorder %s19, 1
    %p126 = por %p124, %p125
    %p128 = scmp.ne.s32.totalorder %s113, %s127
    %p129 = scmp.eq.s32.totalorder %s19, 0
    %p130 = por %p128, %p129
    %s132 = sadd.s32 %s131, 1
    %p135 = scmp.eq.s32.totalorder %s13, 1
    %p136 = scmp.ne.s32.totalorder %s131, %s133
    %p137 = scmp.eq.s32.totalorder %s13, 0
    %p138 = por %p136, %p137
    %p139 = scmp.ne.s32.totalorder %s131, %s133
    %p140 = scmp.eq.s32.totalorder %s18, 1
    %p141 = por %p139, %p140
    %p142 = scmp.ne.s32.totalorder %s133, %s134
    %p143 = scmp.eq.s32.totalorder %s18, 0
    %p144 = por %p142, %p143
    %p145 = scmp.ne.s32.totalorder %s133, %s134
    %p146 = scmp.eq.s32.totalorder %s19, 1
    %p147 = por %p145, %p146
    %p149 = scmp.ne.s32.totalorder %s134, %s148
    %p150 = scmp.eq.s32.totalorder %s19, 0
    %p151 = por %p149, %p150
    %s153 = sadd.s32 %s152, 1
    %p156 = scmp.eq.s32.totalorder %s13, 1
    %p157 = scmp.ne.s32.totalorder %s152, %s154
    %p158 = scmp.eq.s32.totalorder %s13, 0
    %p159 = por %p157, %p158
    %p160 = scmp.ne.s32.totalorder %s152, %s154
    %p161 = scmp.eq.s32.totalorder %s18, 1
    %p162 = por %p160, %p161
    %p163 = scmp.ne.s32.totalorder %s154, %s155
    %p164 = scmp.eq.s32.totalorder %s18, 0
    %p165 = por %p163, %p164
    %p166 = scmp.ne.s32.totalorder %s154, %s155
    %p167 = scmp.eq.s32.totalorder %s19, 1
    %p168 = por %p166, %p167
    %p170 = scmp.ne.s32.totalorder %s155, %s169
    %p171 = scmp.eq.s32.totalorder %s19, 0
    %p172 = por %p170, %p171
    %s173 = ssub.s32 %s13, %s20
    %p174 = scmp.eq.s32.totalorder %s173, 0
    %s176 = sadd.s32 %s175, 1
    %s177 = scalar_select %p174, %s175, %s176
    %p180 = pneg %p174
    %p181 = scmp.eq.s32.totalorder %s13, 1
    %p182 = por %p180, %p181
    %p183 = scmp.ne.s32.totalorder %s175, %s178
    %p184 = scmp.eq.s32.totalorder %s13, 0
    %p185 = por %p183, %p184
    %p186 = scmp.ne.s32.totalorder %s175, %s178
    %p187 = scmp.eq.s32.totalorder %s18, 1
    %p188 = por %p186, %p187
    %p189 = scmp.ne.s32.totalorder %s178, %s179
    %p190 = scmp.eq.s32.totalorder %s18, 0
    %p191 = por %p189, %p190
    %p192 = scmp.ne.s32.totalorder %s178, %s179
    %p193 = scmp.eq.s32.totalorder %s19, 1
    %p194 = por %p192, %p193
    %p196 = scmp.ne.s32.totalorder %s179, %s195
    %p197 = scmp.eq.s32.totalorder %s19, 0
    %p198 = por %p196, %p197
    %p199 = scmp.le.s32.totalorder 1, %s13
    %p200 = scmp.lt.s32.totalorder %s13, 3
    %p201 = pnand %p199, %p200
    %p202 = pneg %p201
    // Predicated region
    $region9: #{glu_block_forward.9} parent=5 // pred_check
      _
    $region10: #{glu_block_forward.9} parent=5 // pred_check_branch
      %204 = sbr.rel (%p201) target = $region12
    $region11: #{glu_block_forward.9} parent=5 // pred_region
      %s205 = ssub.s32 %s13, 1
      // Predicated region
      $region13: #{glu_block_forward.9} parent=11 // pred_check
        %p206 = pneg %p60
      $region14: #{glu_block_forward.9} parent=11 // pred_check_branch
        %208 = sbr.rel (%p206) target = $region16
      $region15: #{glu_block_forward.9} parent=11 // pred_region
        _
      $region16: #{glu_block_forward.9} parent=11 // pred_fallthru
        _
      // Predicated region
      $region17: #{glu_block_forward.9} parent=11 // pred_check
        %p209 = pneg %p81
      $region18: #{glu_block_forward.9} parent=11 // pred_check_branch
        %211 = sbr.rel (%p209) target = $region20
      $region19: #{glu_block_forward.9} parent=11 // pred_region
        _
      $region20: #{glu_block_forward.9} parent=11 // pred_fallthru
        _
      // Predicated region
      $region21: #{glu_block_forward.9} parent=11 // pred_check
        %p212 = pneg %p102
      $region22: #{glu_block_forward.9} parent=11 // pred_check_branch
        %214 = sbr.rel (%p212) target = $region24
      $region23: #{glu_block_forward.9} parent=11 // pred_region
        _
      $region24: #{glu_block_forward.9} parent=11 // pred_fallthru
        _
      // Predicated region
      $region25: #{glu_block_forward.9} parent=11 // pred_check
        %p215 = pneg %p123
      $region26: #{glu_block_forward.9} parent=11 // pred_check_branch
        %217 = sbr.rel (%p215) target = $region28
      $region27: #{glu_block_forward.9} parent=11 // pred_region
        _
      $region28: #{glu_block_forward.9} parent=11 // pred_fallthru
        _
      // Predicated region
      $region29: #{glu_block_forward.9} parent=11 // pred_check
        %p218 = pneg %p144
      $region30: #{glu_block_forward.9} parent=11 // pred_check_branch
        %220 = sbr.rel (%p218) target = $region32
      $region31: #{glu_block_forward.9} parent=11 // pred_region
        _
      $region32: #{glu_block_forward.9} parent=11 // pred_fallthru
        _
      // Predicated region
      $region33: #{glu_block_forward.9} parent=11 // pred_check
        %p221 = pneg %p165
      $region34: #{glu_block_forward.9} parent=11 // pred_check_branch
        %223 = sbr.rel (%p221) target = $region36
      $region35: #{glu_block_forward.9} parent=11 // pred_region
        _
      $region36: #{glu_block_forward.9} parent=11 // pred_fallthru
        _
    $region12: #{glu_block_forward.9} parent=5 // pred_fallthru
      _
    %p224 = scmp.lt.s32.totalorder %s13, 2
    // Predicated region
    $region37: #{glu_block_forward.9} parent=5 // pred_check
      %p225 = pneg %p224
    $region38: #{glu_block_forward.9} parent=5 // pred_check_branch
      %227 = sbr.rel (%p225) target = $region40
    $region39: #{glu_block_forward.9} parent=5 // pred_region
      // Predicated region
      $region41: #{glu_block_forward.9} parent=39 // pred_check
        %p228 = pneg %p33
      $region42: #{glu_block_forward.9} parent=39 // pred_check_branch
        %230 = sbr.rel (%p228) target = $region44
      $region43: #{glu_block_forward.9} parent=39 // pred_region
        %p231 = scmp.lt.s32.totalorder %s13, 1
        %s232 = scalar_select %p231, %s13, 1
        %s233 = smul.addr %s232, 8
        %s234 = smul.addr %s233, 8
        %s235 = scalar_lea.vmem %s0, %s234
      $region44: #{glu_block_forward.9} parent=39 // pred_fallthru
        _
    $region40: #{glu_block_forward.9} parent=5 // pred_fallthru
      _
    %p236 = scmp.le.s32.totalorder 1, %s13
    %p237 = scmp.lt.s32.totalorder %s13, 3
    %p238 = pnand %p236, %p237
    %p239 = pneg %p238
    // Predicated region
    $region45: #{glu_block_forward.9} parent=5 // pred_check
      _
    $region46: #{glu_block_forward.9} parent=5 // pred_check_branch
      %241 = sbr.rel (%p238) target = $region48
    $region47: #{glu_block_forward.9} parent=5 // pred_region
      %s242 = ssub.s32 %s13, 1
      %p243 = scmp.lt.s32.totalorder %s18, 1
      %s244 = scalar_select %p243, %s18, 1
      %s245 = smul.addr %s244, 8
      %s246 = smul.addr %s245, 8
      %s247 = scalar_lea.vmem %s0, %s246
      %p248 = pneg %p39
      %p249 = pneg %p36
      %p250 = pneg %p60
      %p251 = pneg %p57
      %p252 = pneg %p81
      %p253 = pneg %p78
      %p254 = pneg %p102
      %p255 = pneg %p99
      %p256 = pneg %p123
      %p257 = pneg %p120
      %p258 = pneg %p144
      %p259 = pneg %p141
      %p260 = pneg %p165
      %p261 = pneg %p162
      %p262 = pneg %p191
      %p263 = pneg %p188
      %p264 = scmp.lt.s32.totalorder %s18, 1
      %s265 = scalar_select %p264, %s18, 1
      %s266 = smul.addr %s265, 8
      %s267 = smul.addr %s266, 8
      %s268 = scalar_lea.vmem %s7, %s267
      %p269 = scmp.lt.s32.totalorder %s18, 1
      %s270 = scalar_select %p269, %s18, 1
      %s271 = smul.addr %s270, 8
      %s272 = smul.addr %s271, 8
      %s273 = scalar_lea.vmem %s0, %s272
      %p274 = scmp.lt.s32.totalorder %s18, 1
      %s275 = scalar_select %p274, %s18, 1
      %s276 = smul.addr %s275, 8
      %s277 = smul.addr %s276, 8
      %s278 = scalar_lea.vmem %s7, %s277
      %v280 = vld [vmem:[%s273] sm:$0xff]
      %v281 = vld [vmem:[%s273 + $0x8] sm:$0xff]
      %v282 = vld [vmem:[%s273 + $0x10] sm:$0xff]
      %v283 = vld [vmem:[%s273 + $0x18] sm:$0xff]
      %v284 = vld [vmem:[%s273 + $0x20] sm:$0xff]
      %v285 = vld [vmem:[%s273 + $0x28] sm:$0xff]
      %v286 = vld [vmem:[%s273 + $0x30] sm:$0xff]
      %v287 = vld [vmem:[%s273 + $0x38] sm:$0xff]
      %vm288 = vcmask 130048
      %v289 = vsel %vm288, %v280, 0.0
      %290 = vadd.xlane.f32.xlu0 %v289
      %v291 = vpop.xlane.xlu0 %290
      %v292 = vsel %vm288, %v281, 0.0
      %293 = vadd.xlane.f32.xlu0 %v292
      %v294 = vpop.xlane.xlu0 %293
      %v295 = vsel %vm288, %v282, 0.0
      %296 = vadd.xlane.f32.xlu0 %v295
      %v297 = vpop.xlane.xlu0 %296
      %v298 = vsel %vm288, %v283, 0.0
      %299 = vadd.xlane.f32.xlu0 %v298
      %v300 = vpop.xlane.xlu0 %299
      %v301 = vsel %vm288, %v284, 0.0
      %302 = vadd.xlane.f32.xlu0 %v301
      %v303 = vpop.xlane.xlu0 %302
      %v304 = vsel %vm288, %v285, 0.0
      %305 = vadd.xlane.f32.xlu0 %v304
      %v306 = vpop.xlane.xlu0 %305
      %v307 = vsel %vm288, %v286, 0.0
      %308 = vadd.xlane.f32.xlu0 %v307
      %v309 = vpop.xlane.xlu0 %308
      %v310 = vsel %vm288, %v287, 0.0
      %311 = vadd.xlane.f32.xlu0 %v310
      %v312 = vpop.xlane.xlu0 %311
      %v313 = vrcp.pop 16.0
      %v314 = vmul.f32 16.0, %v313
      %v315 = vsub.f32 1.0, %v314
      %v316 = vmul.f32 %v313, %v315
      %v317 = vadd.f32 %v313, %v316
      %vm318 = vweird.f32 %v313
      %v319 = vsel %vm318, %v313, %v317
      %v320 = vmul.f32 %v291, %v319
      %v321 = vmul.f32 %v294, %v319
      %v322 = vmul.f32 %v297, %v319
      %v323 = vmul.f32 %v300, %v319
      %v324 = vmul.f32 %v303, %v319
      %v325 = vmul.f32 %v306, %v319
      %v326 = vmul.f32 %v309, %v319
      %v327 = vmul.f32 %v312, %v319
      %v328 = vsub.f32 %v280, %v320
      %v329 = vsub.f32 %v281, %v321
      %v330 = vsub.f32 %v282, %v322
      %v331 = vsub.f32 %v283, %v323
      %v332 = vsub.f32 %v284, %v324
      %v333 = vsub.f32 %v285, %v325
      %v334 = vsub.f32 %v286, %v326
      %v335 = vsub.f32 %v287, %v327
      %v336 = vmul.f32 %v328, %v328
      %v337 = vmul.f32 %v329, %v329
      %v338 = vmul.f32 %v330, %v330
      %v339 = vmul.f32 %v331, %v331
      %v340 = vmul.f32 %v332, %v332
      %v341 = vmul.f32 %v333, %v333
      %v342 = vmul.f32 %v334, %v334
      %v343 = vmul.f32 %v335, %v335
      %v344 = vsel %vm288, %v336, 0.0
      %345 = vadd.xlane.f32.xlu0 %v344
      %v346 = vpop.xlane.xlu0 %345
      %v347 = vsel %vm288, %v337, 0.0
      %348 = vadd.xlane.f32.xlu0 %v347
      %v349 = vpop.xlane.xlu0 %348
      %v350 = vsel %vm288, %v338, 0.0
      %351 = vadd.xlane.f32.xlu0 %v350
      %v352 = vpop.xlane.xlu0 %351
      %v353 = vsel %vm288, %v339, 0.0
      %354 = vadd.xlane.f32.xlu0 %v353
      %v355 = vpop.xlane.xlu0 %354
      %v356 = vsel %vm288, %v340, 0.0
      %357 = vadd.xlane.f32.xlu0 %v356
      %v358 = vpop.xlane.xlu0 %357
      %v359 = vsel %vm288, %v341, 0.0
      %360 = vadd.xlane.f32.xlu0 %v359
      %v361 = vpop.xlane.xlu0 %360
      %v362 = vsel %vm288, %v342, 0.0
      %363 = vadd.xlane.f32.xlu0 %v362
      %v364 = vpop.xlane.xlu0 %363
      %v365 = vsel %vm288, %v343, 0.0
      %366 = vadd.xlane.f32.xlu0 %v365
      %v367 = vpop.xlane.xlu0 %366
      %v368 = vmul.f32 %v346, %v319
      %v369 = vmul.f32 %v349, %v319
      %v370 = vmul.f32 %v352, %v319
      %v371 = vmul.f32 %v355, %v319
      %v372 = vmul.f32 %v358, %v319
      %v373 = vmul.f32 %v361, %v319
      %v374 = vmul.f32 %v364, %v319
      %v375 = vmul.f32 %v367, %v319
      %v376 = vadd.f32 %v368, 1e-05
      %v377 = vadd.f32 %v369, 1e-05
      %v378 = vadd.f32 %v370, 1e-05
      %v379 = vadd.f32 %v371, 1e-05
      %v380 = vadd.f32 %v372, 1e-05
      %v381 = vadd.f32 %v373, 1e-05
      %v382 = vadd.f32 %v374, 1e-05
      %v383 = vadd.f32 %v375, 1e-05
      %v384 = vrsqrt.pop %v376
      %v385 = vmul.f32 %v384, %v376
      %v386 = vmul.f32 %v385, %v384
      %v387 = vmul.f32 0.5, %v386
      %v388 = vsub.f32 1.5, %v387
      %v389 = vmul.f32 %v384, %v388
      %vm390 = vweird.f32 %v376
      %vm391 = vweird.f32 %v384
      %vm392 = vmor %vm390, %vm391
      %v393 = vsel %vm392, %v384, %v389
      %v394 = vrsqrt.pop %v377
      %v395 = vmul.f32 %v394, %v377
      %v396 = vmul.f32 %v395, %v394
      %v397 = vmul.f32 0.5, %v396
      %v398 = vsub.f32 1.5, %v397
      %v399 = vmul.f32 %v394, %v398
      %vm400 = vweird.f32 %v377
      %vm401 = vweird.f32 %v394
      %vm402 = vmor %vm400, %vm401
      %v403 = vsel %vm402, %v394, %v399
      %v404 = vrsqrt.pop %v378
      %v405 = vmul.f32 %v404, %v378
      %v406 = vmul.f32 %v405, %v404
      %v407 = vmul.f32 0.5, %v406
      %v408 = vsub.f32 1.5, %v407
      %v409 = vmul.f32 %v404, %v408
      %vm410 = vweird.f32 %v378
      %vm411 = vweird.f32 %v404
      %vm412 = vmor %vm410, %vm411
      %v413 = vsel %vm412, %v404, %v409
      %v414 = vrsqrt.pop %v379
      %v415 = vmul.f32 %v414, %v379
      %v416 = vmul.f32 %v415, %v414
      %v417 = vmul.f32 0.5, %v416
      %v418 = vsub.f32 1.5, %v417
      %v419 = vmul.f32 %v414, %v418
      %vm420 = vweird.f32 %v379
      %vm421 = vweird.f32 %v414
      %vm422 = vmor %vm420, %vm421
      %v423 = vsel %vm422, %v414, %v419
      %v424 = vrsqrt.pop %v380
      %v425 = vmul.f32 %v424, %v380
      %v426 = vmul.f32 %v425, %v424
      %v427 = vmul.f32 0.5, %v426
      %v428 = vsub.f32 1.5, %v427
      %v429 = vmul.f32 %v424, %v428
      %vm430 = vweird.f32 %v380
      %vm431 = vweird.f32 %v424
      %vm432 = vmor %vm430, %vm431
      %v433 = vsel %vm432, %v424, %v429
      %v434 = vrsqrt.pop %v381
      %v435 = vmul.f32 %v434, %v381
      %v436 = vmul.f32 %v435, %v434
      %v437 = vmul.f32 0.5, %v436
      %v438 = vsub.f32 1.5, %v437
      %v439 = vmul.f32 %v434, %v438
      %vm440 = vweird.f32 %v381
      %vm441 = vweird.f32 %v434
      %vm442 = vmor %vm440, %vm441
      %v443 = vsel %vm442, %v434, %v439
      %v444 = vrsqrt.pop %v382
      %v445 = vmul.f32 %v444, %v382
      %v446 = vmul.f32 %v445, %v444
      %v447 = vmul.f32 0.5, %v446
      %v448 = vsub.f32 1.5, %v447
      %v449 = vmul.f32 %v444, %v448
      %vm450 = vweird.f32 %v382
      %vm451 = vweird.f32 %v444
      %vm452 = vmor %vm450, %vm451
      %v453 = vsel %vm452, %v444, %v449
      %v454 = vrsqrt.pop %v383
      %v455 = vmul.f32 %v454, %v383
      %v456 = vmul.f32 %v455, %v454
      %v457 = vmul.f32 0.5, %v456
      %v458 = vsub.f32 1.5, %v457
      %v459 = vmul.f32 %v454, %v458
      %vm460 = vweird.f32 %v383
      %vm461 = vweird.f32 %v454
      %vm462 = vmor %vm460, %vm461
      %v463 = vsel %vm462, %v454, %v459
      %v464 = vmul.f32 %v328, %v393
      %v465 = vmul.f32 %v329, %v403
      %v466 = vmul.f32 %v330, %v413
      %v467 = vmul.f32 %v331, %v423
      %v468 = vmul.f32 %v332, %v433
      %v469 = vmul.f32 %v333, %v443
      %v470 = vmul.f32 %v334, %v453
      %v471 = vmul.f32 %v335, %v463
      %v472 = vld [vmem:[%s1] sm:$0x1]
      %v474 = vperm.slane %v472, 0
      %v476 = vmul.f32 %v464, %v474
      %v477 = vmul.f32 %v465, %v474
      %v478 = vmul.f32 %v466, %v474
      %v479 = vmul.f32 %v467, %v474
      %v480 = vmul.f32 %v468, %v474
      %v481 = vmul.f32 %v469, %v474
      %v482 = vmul.f32 %v470, %v474
      %v483 = vmul.f32 %v471, %v474
      %v484 = vld [vmem:[%s2] sm:$0x1]
      %v486 = vperm.slane %v484, 0
      %v488 = vadd.f32 %v476, %v486
      %v489 = vadd.f32 %v477, %v486
      %v490 = vadd.f32 %v478, %v486
      %v491 = vadd.f32 %v479, %v486
      %v492 = vadd.f32 %v480, %v486
      %v493 = vadd.f32 %v481, %v486
      %v494 = vadd.f32 %v482, %v486
      %v495 = vadd.f32 %v483, %v486
      %v496 = vpack.c.bf16 %v489, %v488
      %v497 = vpack.c.bf16 %v491, %v490
      %v498 = vpack.c.bf16 %v493, %v492
      %v499 = vpack.c.bf16 %v495, %v494
      %v500 = vld [vmem:[%s3] sm:$0xf]
      %v501 = vld [vmem:[%s3 + $0x4] sm:$0xf]
      %v502 = vld [vmem:[%s4] sm:$0x1]
      %v504 = vperm.slane %v502, 0
      %v508 = vunpack.c.l.b16 %v500
      %v509 = vunpack.c.l.b16 %v501
      %v510 = vpack.c.b16 %v509, %v508
      %v513 = vsel %vm288, %v496, 0
      %v516 = vsel %vm288, %v497, 0
      %v519 = vsel %vm288, %v498, 0
      %v522 = vsel %vm288, %v499, 0
      %524 = vmatpush.bf16.msra.mxu0 0
      %525 = vmatpush.bf16.msra.mxu0 0
      %526 = vmatpush.bf16.msra.mxu0 0
      %527 = vmatpush.bf16.msra.mxu0 0
      %528 = vmatpush.bf16.msra.mxu0 0
      %529 = vmatpush.bf16.msra.mxu0 0
      %530 = vmatpush.bf16.msra.mxu0 0
      %531 = vmatpush.bf16.msra.mxu0 %v510
      %532 = vmatmul.bf16.gmra.mxu0 %v513
      %v533 = vpop.f32.mrf.mxu0
      %v534 = vadd.f32 %v504, %v533
      %v535 = vpop.f32.mrf.mxu0
      %v536 = vadd.f32 %v504, %v535
      %537 = vmatmul.bf16.gmra.mxu0 %v516
      %v538 = vpop.f32.mrf.mxu0
      %v539 = vadd.f32 %v504, %v538
      %v540 = vpop.f32.mrf.mxu0
      %v541 = vadd.f32 %v504, %v540
      %542 = vmatmul.bf16.gmra.mxu0 %v519
      %v543 = vpop.f32.mrf.mxu0
      %v544 = vadd.f32 %v504, %v543
      %v545 = vpop.f32.mrf.mxu0
      %v546 = vadd.f32 %v504, %v545
      %547 = vmatmul.bf16.gmra.mxu0 %v522
      %v548 = vpop.f32.mrf.mxu0
      %v549 = vadd.f32 %v504, %v548
      %v550 = vpop.f32.mrf.mxu0
      %v551 = vadd.f32 %v504, %v550
      %552 = vdwg.mxu0
      %vm553 = vcmask 269568
      %v554 = vsel %vm553, %v534, -inf
      %v555 = vsel %vm553, %v536, -inf
      %v556 = vsel %vm553, %v539, -inf
      %v557 = vsel %vm553, %v541, -inf
      %v558 = vsel %vm553, %v544, -inf
      %v559 = vmax.f32 %v554, %v558
      %v560 = vsel %vm553, %v546, -inf
      %v561 = vmax.f32 %v555, %v560
      %v562 = vsel %vm553, %v549, -inf
      %v563 = vmax.f32 %v556, %v562
      %v564 = vsel %vm553, %v551, -inf
      %v565 = vmax.f32 %v557, %v564
      %v566 = vmax.f32 %v559, %v561
      %v567 = vmax.f32 %v563, %v565
      %v568 = vmax.f32 %v566, %v567
      %v569 = vrot.slane %v568, 4
      %v570 = vmax.f32 %v568, %v569
      %v571 = vrot.slane %v570, 2
      %v572 = vmax.f32 %v570, %v571
      %v573 = vrot.slane %v572, 1
      %v574 = vmax.f32 %v572, %v573
      %v575 = vsub.f32 %v534, %v574
      %v576 = vsub.f32 %v536, %v574
      %v577 = vsub.f32 %v539, %v574
      %v578 = vsub.f32 %v541, %v574
      %v579 = vsub.f32 %v544, %v574
      %v580 = vsub.f32 %v546, %v574
      %v581 = vsub.f32 %v549, %v574
      %v582 = vsub.f32 %v551, %v574
      %v583 = vmul.f32 %v575, 1.442695
      %v584 = vpow.pop %v583
      %v585 = vmul.f32 %v576, 1.442695
      %v586 = vpow.pop %v585
      %v587 = vmul.f32 %v577, 1.442695
      %v588 = vpow.pop %v587
      %v589 = vmul.f32 %v578, 1.442695
      %v590 = vpow.pop %v589
      %v591 = vmul.f32 %v579, 1.442695
      %v592 = vpow.pop %v591
      %v593 = vmul.f32 %v580, 1.442695
      %v594 = vpow.pop %v593
      %v595 = vmul.f32 %v581, 1.442695
      %v596 = vpow.pop %v595
      %v597 = vmul.f32 %v582, 1.442695
      %v598 = vpow.pop %v597
      %v599 = vsel %vm553, %v584, 0.0
      %v600 = vsel %vm553, %v586, 0.0
      %v601 = vadd.f32 %v599, %v600
      %v602 = vsel %vm553, %v588, 0.0
      %v603 = vadd.f32 %v601, %v602
      %v604 = vsel %vm553, %v590, 0.0
      %v605 = vadd.f32 %v603, %v604
      %v606 = vsel %vm553, %v592, 0.0
      %v607 = vadd.f32 %v605, %v606
      %v608 = vsel %vm553, %v594, 0.0
      %v609 = vadd.f32 %v607, %v608
      %v610 = vsel %vm553, %v596, 0.0
      %v611 = vadd.f32 %v609, %v610
      %v612 = vsel %vm553, %v598, 0.0
      %v613 = vadd.f32 %v611, %v612
      %v614 = vrot.slane %v613, 4
      %v615 = vadd.f32 %v613, %v614
      %v616 = vrot.slane %v615, 2
      %v617 = vadd.f32 %v615, %v616
      %v618 = vrot.slane %v617, 1
      %v619 = vadd.f32 %v617, %v618
      %v620 = vrcp.pop %v619
      %v621 = vmul.f32 %v584, %v620
      %v622 = vmul.f32 %v586, %v620
      %v623 = vmul.f32 %v588, %v620
      %v624 = vmul.f32 %v590, %v620
      %v625 = vmul.f32 %v592, %v620
      %v626 = vmul.f32 %v594, %v620
      %v627 = vmul.f32 %v596, %v620
      %v628 = vmul.f32 %v598, %v620
      %630 = vset.pattern.permute.xlu0 32
      %631 = vperm.xlu0 %630, %v621
      %v632 = vpop.permute.xlu0 %631
      %635 = vset.pattern.permute.xlu0 32
      %636 = vperm.xlu0 %635, %v622
      %v637 = vpop.permute.xlu0 %636
      %640 = vset.pattern.permute.xlu0 32
      %641 = vperm.xlu0 %640, %v623
      %v642 = vpop.permute.xlu0 %641
      %645 = vset.pattern.permute.xlu0 32
      %646 = vperm.xlu0 %645, %v624
      %v647 = vpop.permute.xlu0 %646
      %650 = vset.pattern.permute.xlu0 32
      %651 = vperm.xlu0 %650, %v625
      %v652 = vpop.permute.xlu0 %651
      %655 = vset.pattern.permute.xlu0 32
      %656 = vperm.xlu0 %655, %v626
      %v657 = vpop.permute.xlu0 %656
      %660 = vset.pattern.permute.xlu0 32
      %661 = vperm.xlu0 %660, %v627
      %v662 = vpop.permute.xlu0 %661
      %665 = vset.pattern.permute.xlu0 32
      %666 = vperm.xlu0 %665, %v628
      %v667 = vpop.permute.xlu0 %666
      %v669 = vmul.f32 %v632, %v534
      %v670 = vmul.f32 %v637, %v536
      %v671 = vmul.f32 %v642, %v539
      %v672 = vmul.f32 %v647, %v541
      %v673 = vmul.f32 %v652, %v544
      %v674 = vmul.f32 %v657, %v546
      %v675 = vmul.f32 %v662, %v549
      %v676 = vmul.f32 %v667, %v551
      %v677 = vsel %vm288, %v669, 0.0
      %v678 = vsel %vm288, %v670, 0.0
      %v679 = vadd.f32 %v677, %v678
      %v680 = vsel %vm288, %v671, 0.0
      %v681 = vadd.f32 %v679, %v680
      %v682 = vsel %vm288, %v672, 0.0
      %v683 = vadd.f32 %v681, %v682
      %v684 = vsel %vm288, %v673, 0.0
      %v685 = vadd.f32 %v683, %v684
      %v686 = vsel %vm288, %v674, 0.0
      %v687 = vadd.f32 %v685, %v686
      %v688 = vsel %vm288, %v675, 0.0
      %v689 = vadd.f32 %v687, %v688
      %v690 = vsel %vm288, %v676, 0.0
      %v691 = vadd.f32 %v689, %v690
      %v692 = vrot.slane %v691, 4
      %v693 = vadd.f32 %v691, %v692
      %v694 = vrot.slane %v693, 2
      %v695 = vadd.f32 %v693, %v694
      %v696 = vrot.slane %v695, 1
      %v697 = vadd.f32 %v695, %v696
      %699 = vrot.lane.b32.xlu0 %v697, 16
      %v700 = vpop.permute.xlu0 %699
      %v702 = vmul.f32 %v534, %v700
      %v703 = vmul.f32 %v536, %v700
      %v704 = vmul.f32 %v539, %v700
      %v705 = vmul.f32 %v541, %v700
      %v706 = vmul.f32 %v544, %v700
      %v707 = vmul.f32 %v546, %v700
      %v708 = vmul.f32 %v549, %v700
      %v709 = vmul.f32 %v551, %v700
      %v710 = vpack.c.bf16 %v703, %v702
      %v711 = vpack.c.bf16 %v705, %v704
      %v712 = vpack.c.bf16 %v707, %v706
      %v713 = vpack.c.bf16 %v709, %v708
      %v714 = vld [vmem:[%s5] sm:$0xf]
      %v715 = vld [vmem:[%s5 + $0x4] sm:$0xf]
      %v716 = vld [vmem:[%s6] sm:$0x1]
      %v718 = vperm.slane %v716, 0
      %724 = vrot.lane.b32.xlu0 %v710, 112
      %v725 = vpop.permute.xlu0 %724
      %726 = vrot.lane.b32.xlu0 %v711, 112
      %v727 = vpop.permute.xlu0 %726
      %728 = vrot.lane.b32.xlu0 %v712, 112
      %v729 = vpop.permute.xlu0 %728
      %730 = vrot.lane.b32.xlu0 %v713, 112
      %v731 = vpop.permute.xlu0 %730
      %v734 = vunpack.c.l.b16 %v714
      %v735 = vunpack.c.l.b16 %v715
      %v736 = vpack.c.b16 %v735, %v734
      %v739 = vsel %vm288, %v725, 0
      %v742 = vsel %vm288, %v727, 0
      %v745 = vsel %vm288, %v729, 0
      %v748 = vsel %vm288, %v731, 0
      %750 = vmatpush.bf16.msra.mxu0 0
      %751 = vmatpush.bf16.msra.mxu0 0
      %752 = vmatpush.bf16.msra.mxu0 0
      %753 = vmatpush.bf16.msra.mxu0 0
      %754 = vmatpush.bf16.msra.mxu0 0
      %755 = vmatpush.bf16.msra.mxu0 0
      %756 = vmatpush.bf16.msra.mxu0 0
      %757 = vmatpush.bf16.msra.mxu0 %v736
      %758 = vmatmul.bf16.gmra.mxu0 %v739
      %v759 = vpop.f32.mrf.mxu0
      %v760 = vadd.f32 %v718, %v759
      %v761 = vpop.f32.mrf.mxu0
      %v762 = vadd.f32 %v718, %v761
      %763 = vmatmul.bf16.gmra.mxu0 %v742
      %v764 = vpop.f32.mrf.mxu0
      %v765 = vadd.f32 %v718, %v764
      %v766 = vpop.f32.mrf.mxu0
      %v767 = vadd.f32 %v718, %v766
      %768 = vmatmul.bf16.gmra.mxu0 %v745
      %v769 = vpop.f32.mrf.mxu0
      %v770 = vadd.f32 %v718, %v769
      %v771 = vpop.f32.mrf.mxu0
      %v772 = vadd.f32 %v718, %v771
      %773 = vmatmul.bf16.gmra.mxu0 %v748
      %v774 = vpop.f32.mrf.mxu0
      %v775 = vadd.f32 %v718, %v774
      %v776 = vpop.f32.mrf.mxu0
      %v777 = vadd.f32 %v718, %v776
      %778 = vdwg.mxu0
      %v779 = vadd.f32 %v280, %v760
      %v780 = vadd.f32 %v281, %v762
      %v781 = vadd.f32 %v282, %v765
      %v782 = vadd.f32 %v283, %v767
      %v783 = vadd.f32 %v284, %v770
      %v784 = vadd.f32 %v285, %v772
      %v785 = vadd.f32 %v286, %v775
      %v786 = vadd.f32 %v287, %v777
      %787 = vst.msk [vmem:[%s278] sm:$0xff] %vm288, %v779
      %788 = vst.msk [vmem:[%s278 + $0x8] sm:$0xff] %vm288, %v780
      %789 = vst.msk [vmem:[%s278 + $0x10] sm:$0xff] %vm288, %v781
      %790 = vst.msk [vmem:[%s278 + $0x18] sm:$0xff] %vm288, %v782
      %791 = vst.msk [vmem:[%s278 + $0x20] sm:$0xff] %vm288, %v783
      %792 = vst.msk [vmem:[%s278 + $0x28] sm:$0xff] %vm288, %v784
      %793 = vst.msk [vmem:[%s278 + $0x30] sm:$0xff] %vm288, %v785
      %794 = vst.msk [vmem:[%s278 + $0x38] sm:$0xff] %vm288, %v786
      %p795 = scmp.lt.s32.totalorder %s18, 1
      %s796 = scalar_select %p795, %s18, 1
      %s797 = smul.addr %s796, 8
      %s798 = smul.addr %s797, 8
      %s799 = scalar_lea.vmem %s7, %s798
      // Predicated region
      $region49: #{glu_block_forward.9} parent=47 // pred_check
        %p800 = pneg %p188
      $region50: #{glu_block_forward.9} parent=47 // pred_check_branch
        %802 = sbr.rel (%p800) target = $region52
      $region51: #{glu_block_forward.9} parent=47 // pred_region
        _
      $region52: #{glu_block_forward.9} parent=47 // pred_fallthru
        _
    $region48: #{glu_block_forward.9} parent=5 // pred_fallthru
      _
    %p803 = scmp.le.s32.totalorder 2, %s13
    // Predicated region
    $region53: #{glu_block_forward.9} parent=5 // pred_check
      %p804 = pneg %p803
    $region54: #{glu_block_forward.9} parent=5 // pred_check_branch
      %806 = sbr.rel (%p804) target = $region56
    $region55: #{glu_block_forward.9} parent=5 // pred_region
      %s807 = ssub.s32 %s13, 2
      // Predicated region
      $region57: #{glu_block_forward.9} parent=55 // pred_check
        %p808 = pneg %p194
      $region58: #{glu_block_forward.9} parent=55 // pred_check_branch
        %810 = sbr.rel (%p808) target = $region60
      $region59: #{glu_block_forward.9} parent=55 // pred_region
        %p811 = scmp.lt.s32.totalorder %s19, 1
        %s812 = scalar_select %p811, %s19, 1
        %s813 = smul.addr %s812, 8
        %s814 = smul.addr %s813, 8
        %s815 = scalar_lea.vmem %s7, %s814
      $region60: #{glu_block_forward.9} parent=55 // pred_fallthru
        _
    $region56: #{glu_block_forward.9} parent=5 // pred_fallthru
      _
  $region6: #{glu_block_forward.9} parent=0 // loop_footer
    %s17 = sadd.s32 1, %s13
  $region7: #{glu_block_forward.9} parent=0 // loop_footer_branch
    %12 = sbr.rel target = $region3
  $region8: #{glu_block_forward.9} parent=0 // loop_exit
    _

// kernel: glu_block_forward.10
$region0: #{glu_block_forward.10}
  #allocation0 [shape = 'u32[]', space=smem, size = 0x4, offset = 0x4, fixed_abs, tag = 'smem constant byte address 0x4 - core index']
  #allocation1 [shape = 'u32[72,128]{1,0:T(1,128)}', space=vmem, size = 0x9000, scoped, tag = 'internal scratch']
  %s0 = inlined_call_operand.vmem [shape: f32[128,16], index: 0, kind: input, shape index: {}]
  %s1 = inlined_call_operand.vmem [shape: f32[1,16], index: 1, kind: input, shape index: {}]
  %s2 = inlined_call_operand.vmem [shape: f32[1,16], index: 2, kind: input, shape index: {}]
  %s3 = inlined_call_operand.vmem [shape: bf16[16,64], index: 3, kind: input, shape index: {}]
  %s4 = inlined_call_operand.vmem [shape: f32[1,64], index: 4, kind: input, shape index: {}]
  %s5 = inlined_call_operand.vmem [shape: f32[1,64], index: 5, kind: input, shape index: {}]
  %s6 = inlined_call_operand.vmem [shape: bf16[128,64], index: 6, kind: output, shape index: {}]
  %s7 = sld [smem:[#allocation0]]
  $region34: #{glu_block_forward.10} parent=0
    _
  %s9 = ssub.s32 1, %s7
  %s10 = scalar_select 0, %s9, %s7
  // Predicated region
  $region2: #{glu_block_forward.10} parent=0 // pred_check
    _
  $region3: #{glu_block_forward.10} parent=0 // pred_check_branch
    %12 = sbr.rel (0) target = $region5
  $region4: #{glu_block_forward.10} parent=0 // pred_region
    _
  $region5: #{glu_block_forward.10} parent=0 // pred_fallthru
    _
  // Predicated region
  $region6: #{glu_block_forward.10} parent=0 // pred_check
    _
  $region7: #{glu_block_forward.10} parent=0 // pred_check_branch
    %14 = sbr.rel (0) target = $region9
  $region8: #{glu_block_forward.10} parent=0 // pred_region
    _
  $region9: #{glu_block_forward.10} parent=0 // pred_fallthru
    _
  // Predicated region
  $region10: #{glu_block_forward.10} parent=0 // pred_check
    _
  $region11: #{glu_block_forward.10} parent=0 // pred_check_branch
    %16 = sbr.rel (0) target = $region13
  $region12: #{glu_block_forward.10} parent=0 // pred_region
    _
  $region13: #{glu_block_forward.10} parent=0 // pred_fallthru
    _
  // Predicated region
  $region14: #{glu_block_forward.10} parent=0 // pred_check
    _
  $region15: #{glu_block_forward.10} parent=0 // pred_check_branch
    %18 = sbr.rel (0) target = $region17
  $region16: #{glu_block_forward.10} parent=0 // pred_region
    _
  $region17: #{glu_block_forward.10} parent=0 // pred_fallthru
    _
  // Predicated region
  $region18: #{glu_block_forward.10} parent=0 // pred_check
    _
  $region19: #{glu_block_forward.10} parent=0 // pred_check_branch
    %20 = sbr.rel (0) target = $region21
  $region20: #{glu_block_forward.10} parent=0 // pred_region
    _
  $region21: #{glu_block_forward.10} parent=0 // pred_fallthru
    _
  // Predicated region
  $region22: #{glu_block_forward.10} parent=0 // pred_check
    _
  $region23: #{glu_block_forward.10} parent=0 // pred_check_branch
    %22 = sbr.rel (0) target = $region25
  $region24: #{glu_block_forward.10} parent=0 // pred_region
    _
  $region25: #{glu_block_forward.10} parent=0 // pred_fallthru
    _
  %v24 = vld [vmem:[%s0] sm:$0xff]
  %v25 = vld [vmem:[%s0 + $0x8] sm:$0xff]
  %v26 = vld [vmem:[%s0 + $0x10] sm:$0xff]
  %v27 = vld [vmem:[%s0 + $0x18] sm:$0xff]
  %v28 = vld [vmem:[%s0 + $0x20] sm:$0xff]
  %v29 = vld [vmem:[%s0 + $0x28] sm:$0xff]
  %v30 = vld [vmem:[%s0 + $0x30] sm:$0xff]
  %v31 = vld [vmem:[%s0 + $0x38] sm:$0xff]
  %v32 = vld [vmem:[%s0 + $0x40] sm:$0xff]
  %v33 = vld [vmem:[%s0 + $0x48] sm:$0xff]
  %v34 = vld [vmem:[%s0 + $0x50] sm:$0xff]
  %v35 = vld [vmem:[%s0 + $0x58] sm:$0xff]
  %v36 = vld [vmem:[%s0 + $0x60] sm:$0xff]
  %v37 = vld [vmem:[%s0 + $0x68] sm:$0xff]
  %v38 = vld [vmem:[%s0 + $0x70] sm:$0xff]
  %v39 = vld [vmem:[%s0 + $0x78] sm:$0xff]
  %vm40 = vcmask 130048
  %v41 = vsel %vm40, %v24, 0.0
  %42 = vadd.xlane.f32.xlu0 %v41
  %v43 = vpop.xlane.xlu0 %42
  %v44 = vsel %vm40, %v25, 0.0
  %45 = vadd.xlane.f32.xlu0 %v44
  %v46 = vpop.xlane.xlu0 %45
  %v47 = vsel %vm40, %v26, 0.0
  %48 = vadd.xlane.f32.xlu0 %v47
  %v49 = vpop.xlane.xlu0 %48
  %v50 = vsel %vm40, %v27, 0.0
  %51 = vadd.xlane.f32.xlu0 %v50
  %v52 = vpop.xlane.xlu0 %51
  %v53 = vsel %vm40, %v28, 0.0
  %54 = vadd.xlane.f32.xlu0 %v53
  %v55 = vpop.xlane.xlu0 %54
  %v56 = vsel %vm40, %v29, 0.0
  %57 = vadd.xlane.f32.xlu0 %v56
  %v58 = vpop.xlane.xlu0 %57
  %v59 = vsel %vm40, %v30, 0.0
  %60 = vadd.xlane.f32.xlu0 %v59
  %v61 = vpop.xlane.xlu0 %60
  %v62 = vsel %vm40, %v31, 0.0
  %63 = vadd.xlane.f32.xlu0 %v62
  %v64 = vpop.xlane.xlu0 %63
  %v65 = vsel %vm40, %v32, 0.0
  %66 = vadd.xlane.f32.xlu0 %v65
  %v67 = vpop.xlane.xlu0 %66
  %v68 = vsel %vm40, %v33, 0.0
  %69 = vadd.xlane.f32.xlu0 %v68
  %v70 = vpop.xlane.xlu0 %69
  %v71 = vsel %vm40, %v34, 0.0
  %72 = vadd.xlane.f32.xlu0 %v71
  %v73 = vpop.xlane.xlu0 %72
  %v74 = vsel %vm40, %v35, 0.0
  %75 = vadd.xlane.f32.xlu0 %v74
  %v76 = vpop.xlane.xlu0 %75
  %v77 = vsel %vm40, %v36, 0.0
  %78 = vadd.xlane.f32.xlu0 %v77
  %v79 = vpop.xlane.xlu0 %78
  %v80 = vsel %vm40, %v37, 0.0
  %81 = vadd.xlane.f32.xlu0 %v80
  %v82 = vpop.xlane.xlu0 %81
  %v83 = vsel %vm40, %v38, 0.0
  %84 = vadd.xlane.f32.xlu0 %v83
  %v85 = vpop.xlane.xlu0 %84
  %v86 = vsel %vm40, %v39, 0.0
  %87 = vadd.xlane.f32.xlu0 %v86
  %v88 = vpop.xlane.xlu0 %87
  %v89 = vrcp.pop 16.0
  %v90 = vmul.f32 16.0, %v89
  %v91 = vsub.f32 1.0, %v90
  %v92 = vmul.f32 %v89, %v91
  %v93 = vadd.f32 %v89, %v92
  %vm94 = vweird.f32 %v89
  %v95 = vsel %vm94, %v89, %v93
  %v96 = vmul.f32 %v43, %v95
  %v97 = vmul.f32 %v46, %v95
  %v98 = vmul.f32 %v49, %v95
  %v99 = vmul.f32 %v52, %v95
  %v100 = vmul.f32 %v55, %v95
  %v101 = vmul.f32 %v58, %v95
  %v102 = vmul.f32 %v61, %v95
  %v103 = vmul.f32 %v64, %v95
  %v104 = vmul.f32 %v67, %v95
  %v105 = vmul.f32 %v70, %v95
  %v106 = vmul.f32 %v73, %v95
  %v107 = vmul.f32 %v76, %v95
  %v108 = vmul.f32 %v79, %v95
  %v109 = vmul.f32 %v82, %v95
  %v110 = vmul.f32 %v85, %v95
  %v111 = vmul.f32 %v88, %v95
  %v112 = vsub.f32 %v24, %v96
  %v113 = vsub.f32 %v25, %v97
  %v114 = vsub.f32 %v26, %v98
  %v115 = vsub.f32 %v27, %v99
  %v116 = vsub.f32 %v28, %v100
  %v117 = vsub.f32 %v29, %v101
  %v118 = vsub.f32 %v30, %v102
  %v119 = vsub.f32 %v31, %v103
  %v120 = vsub.f32 %v32, %v104
  %v121 = vsub.f32 %v33, %v105
  %v122 = vsub.f32 %v34, %v106
  %v123 = vsub.f32 %v35, %v107
  %v124 = vsub.f32 %v36, %v108
  %v125 = vsub.f32 %v37, %v109
  %v126 = vsub.f32 %v38, %v110
  %v127 = vsub.f32 %v39, %v111
  %v128 = vmul.f32 %v112, %v112
  %v129 = vmul.f32 %v113, %v113
  %v130 = vmul.f32 %v114, %v114
  %v131 = vmul.f32 %v115, %v115
  %v132 = vmul.f32 %v116, %v116
  %v133 = vmul.f32 %v117, %v117
  %v134 = vmul.f32 %v118, %v118
  %v135 = vmul.f32 %v119, %v119
  %v136 = vmul.f32 %v120, %v120
  %v137 = vmul.f32 %v121, %v121
  %v138 = vmul.f32 %v122, %v122
  %v139 = vmul.f32 %v123, %v123
  %v140 = vmul.f32 %v124, %v124
  %v141 = vmul.f32 %v125, %v125
  %v142 = vmul.f32 %v126, %v126
  %v143 = vmul.f32 %v127, %v127
  %v144 = vsel %vm40, %v128, 0.0
  %145 = vadd.xlane.f32.xlu0 %v144
  %v146 = vpop.xlane.xlu0 %145
  %v147 = vsel %vm40, %v129, 0.0
  %148 = vadd.xlane.f32.xlu0 %v147
  %v149 = vpop.xlane.xlu0 %148
  %v150 = vsel %vm40, %v130, 0.0
  %151 = vadd.xlane.f32.xlu0 %v150
  %v152 = vpop.xlane.xlu0 %151
  %v153 = vsel %vm40, %v131, 0.0
  %154 = vadd.xlane.f32.xlu0 %v153
  %v155 = vpop.xlane.xlu0 %154
  %v156 = vsel %vm40, %v132, 0.0
  %157 = vadd.xlane.f32.xlu0 %v156
  %v158 = vpop.xlane.xlu0 %157
  %v159 = vsel %vm40, %v133, 0.0
  %160 = vadd.xlane.f32.xlu0 %v159
  %v161 = vpop.xlane.xlu0 %160
  %v162 = vsel %vm40, %v134, 0.0
  %163 = vadd.xlane.f32.xlu0 %v162
  %v164 = vpop.xlane.xlu0 %163
  %v165 = vsel %vm40, %v135, 0.0
  %166 = vadd.xlane.f32.xlu0 %v165
  %v167 = vpop.xlane.xlu0 %166
  %v168 = vsel %vm40, %v136, 0.0
  %169 = vadd.xlane.f32.xlu0 %v168
  %v170 = vpop.xlane.xlu0 %169
  %v171 = vsel %vm40, %v137, 0.0
  %172 = vadd.xlane.f32.xlu0 %v171
  %v173 = vpop.xlane.xlu0 %172
  %v174 = vsel %vm40, %v138, 0.0
  %175 = vadd.xlane.f32.xlu0 %v174
  %v176 = vpop.xlane.xlu0 %175
  %v177 = vsel %vm40, %v139, 0.0
  %178 = vadd.xlane.f32.xlu0 %v177
  %v179 = vpop.xlane.xlu0 %178
  %v180 = vsel %vm40, %v140, 0.0
  %181 = vadd.xlane.f32.xlu0 %v180
  %v182 = vpop.xlane.xlu0 %181
  %v183 = vsel %vm40, %v141, 0.0
  %184 = vadd.xlane.f32.xlu0 %v183
  %v185 = vpop.xlane.xlu0 %184
  %v186 = vsel %vm40, %v142, 0.0
  %187 = vadd.xlane.f32.xlu0 %v186
  %v188 = vpop.xlane.xlu0 %187
  %v189 = vsel %vm40, %v143, 0.0
  %190 = vadd.xlane.f32.xlu0 %v189
  %v191 = vpop.xlane.xlu0 %190
  %v192 = vmul.f32 %v146, %v95
  %v193 = vmul.f32 %v149, %v95
  %v194 = vmul.f32 %v152, %v95
  %v195 = vmul.f32 %v155, %v95
  %v196 = vmul.f32 %v158, %v95
  %v197 = vmul.f32 %v161, %v95
  %v198 = vmul.f32 %v164, %v95
  %v199 = vmul.f32 %v167, %v95
  %v200 = vmul.f32 %v170, %v95
  %v201 = vmul.f32 %v173, %v95
  %v202 = vmul.f32 %v176, %v95
  %v203 = vmul.f32 %v179, %v95
  %v204 = vmul.f32 %v182, %v95
  %v205 = vmul.f32 %v185, %v95
  %v206 = vmul.f32 %v188, %v95
  %v207 = vmul.f32 %v191, %v95
  %v208 = vadd.f32 %v192, 1e-05
  %v209 = vadd.f32 %v193, 1e-05
  %v210 = vadd.f32 %v194, 1e-05
  %v211 = vadd.f32 %v195, 1e-05
  %v212 = vadd.f32 %v196, 1e-05
  %v213 = vadd.f32 %v197, 1e-05
  %v214 = vadd.f32 %v198, 1e-05
  %v215 = vadd.f32 %v199, 1e-05
  %v216 = vadd.f32 %v200, 1e-05
  %v217 = vadd.f32 %v201, 1e-05
  %v218 = vadd.f32 %v202, 1e-05
  %v219 = vadd.f32 %v203, 1e-05
  %v220 = vadd.f32 %v204, 1e-05
  %v221 = vadd.f32 %v205, 1e-05
  %v222 = vadd.f32 %v206, 1e-05
  %v223 = vadd.f32 %v207, 1e-05
  %v224 = vrsqrt.pop %v208
  %v225 = vmul.f32 %v224, %v208
  %v226 = vmul.f32 %v225, %v224
  %v227 = vmul.f32 0.5, %v226
  %v228 = vsub.f32 1.5, %v227
  %v229 = vmul.f32 %v224, %v228
  %vm230 = vweird.f32 %v208
  %vm231 = vweird.f32 %v224
  %vm232 = vmor %vm230, %vm231
  %v233 = vsel %vm232, %v224, %v229
  %v234 = vrsqrt.pop %v209
  %v235 = vmul.f32 %v234, %v209
  %v236 = vmul.f32 %v235, %v234
  %v237 = vmul.f32 0.5, %v236
  %v238 = vsub.f32 1.5, %v237
  %v239 = vmul.f32 %v234, %v238
  %vm240 = vweird.f32 %v209
  %vm241 = vweird.f32 %v234
  %vm242 = vmor %vm240, %vm241
  %v243 = vsel %vm242, %v234, %v239
  %v244 = vrsqrt.pop %v210
  %v245 = vmul.f32 %v244, %v210
  %v246 = vmul.f32 %v245, %v244
  %v247 = vmul.f32 0.5, %v246
  %v248 = vsub.f32 1.5, %v247
  %v249 = vmul.f32 %v244, %v248
  %vm250 = vweird.f32 %v210
  %vm251 = vweird.f32 %v244
  %vm252 = vmor %vm250, %vm251
  %v253 = vsel %vm252, %v244, %v249
  %v254 = vrsqrt.pop %v211
  %v255 = vmul.f32 %v254, %v211
  %v256 = vmul.f32 %v255, %v254
  %v257 = vmul.f32 0.5, %v256
  %v258 = vsub.f32 1.5, %v257
  %v259 = vmul.f32 %v254, %v258
  %vm260 = vweird.f32 %v211
  %vm261 = vweird.f32 %v254
  %vm262 = vmor %vm260, %vm261
  %v263 = vsel %vm262, %v254, %v259
  %v264 = vrsqrt.pop %v212
  %v265 = vmul.f32 %v264, %v212
  %v266 = vmul.f32 %v265, %v264
  %v267 = vmul.f32 0.5, %v266
  %v268 = vsub.f32 1.5, %v267
  %v269 = vmul.f32 %v264, %v268
  %vm270 = vweird.f32 %v212
  %vm271 = vweird.f32 %v264
  %vm272 = vmor %vm270, %vm271
  %v273 = vsel %vm272, %v264, %v269
  %v274 = vrsqrt.pop %v213
  %v275 = vmul.f32 %v274, %v213
  %v276 = vmul.f32 %v275, %v274
  %v277 = vmul.f32 0.5, %v276
  %v278 = vsub.f32 1.5, %v277
  %v279 = vmul.f32 %v274, %v278
  %vm280 = vweird.f32 %v213
  %vm281 = vweird.f32 %v274
  %vm282 = vmor %vm280, %vm281
  %v283 = vsel %vm282, %v274, %v279
  %v284 = vrsqrt.pop %v214
  %v285 = vmul.f32 %v284, %v214
  %v286 = vmul.f32 %v285, %v284
  %v287 = vmul.f32 0.5, %v286
  %v288 = vsub.f32 1.5, %v287
  %v289 = vmul.f32 %v284, %v288
  %vm290 = vweird.f32 %v214
  %vm291 = vweird.f32 %v284
  %vm292 = vmor %vm290, %vm291
  %v293 = vsel %vm292, %v284, %v289
  %v294 = vrsqrt.pop %v215
  %v295 = vmul.f32 %v294, %v215
  %v296 = vmul.f32 %v295, %v294
  %v297 = vmul.f32 0.5, %v296
  %v298 = vsub.f32 1.5, %v297
  %v299 = vmul.f32 %v294, %v298
  %vm300 = vweird.f32 %v215
  %vm301 = vweird.f32 %v294
  %vm302 = vmor %vm300, %vm301
  %v303 = vsel %vm302, %v294, %v299
  %v304 = vrsqrt.pop %v216
  %v305 = vmul.f32 %v304, %v216
  %v306 = vmul.f32 %v305, %v304
  %v307 = vmul.f32 0.5, %v306
  %v308 = vsub.f32 1.5, %v307
  %v309 = vmul.f32 %v304, %v308
  %vm310 = vweird.f32 %v216
  %vm311 = vweird.f32 %v304
  %vm312 = vmor %vm310, %vm311
  %v313 = vsel %vm312, %v304, %v309
  %v314 = vrsqrt.pop %v217
  %v315 = vmul.f32 %v314, %v217
  %v316 = vmul.f32 %v315, %v314
  %v317 = vmul.f32 0.5, %v316
  %v318 = vsub.f32 1.5, %v317
  %v319 = vmul.f32 %v314, %v318
  %vm320 = vweird.f32 %v217
  %vm321 = vweird.f32 %v314
  %vm322 = vmor %vm320, %vm321
  %v323 = vsel %vm322, %v314, %v319
  %v324 = vrsqrt.pop %v218
  %v325 = vmul.f32 %v324, %v218
  %v326 = vmul.f32 %v325, %v324
  %v327 = vmul.f32 0.5, %v326
  %v328 = vsub.f32 1.5, %v327
  %v329 = vmul.f32 %v324, %v328
  %vm330 = vweird.f32 %v218
  %vm331 = vweird.f32 %v324
  %vm332 = vmor %vm330, %vm331
  %v333 = vsel %vm332, %v324, %v329
  %v334 = vrsqrt.pop %v219
  %v335 = vmul.f32 %v334, %v219
  %v336 = vmul.f32 %v335, %v334
  %v337 = vmul.f32 0.5, %v336
  %v338 = vsub.f32 1.5, %v337
  %v339 = vmul.f32 %v334, %v338
  %vm340 = vweird.f32 %v219
  %vm341 = vweird.f32 %v334
  %vm342 = vmor %vm340, %vm341
  %v343 = vsel %vm342, %v334, %v339
  %v344 = vrsqrt.pop %v220
  %v345 = vmul.f32 %v344, %v220
  %v346 = vmul.f32 %v345, %v344
  %v347 = vmul.f32 0.5, %v346
  %v348 = vsub.f32 1.5, %v347
  %v349 = vmul.f32 %v344, %v348
  %vm350 = vweird.f32 %v220
  %vm351 = vweird.f32 %v344
  %vm352 = vmor %vm350, %vm351
  %v353 = vsel %vm352, %v344, %v349
  %v354 = vrsqrt.pop %v221
  %v355 = vmul.f32 %v354, %v221
  %v356 = vmul.f32 %v355, %v354
  %v357 = vmul.f32 0.5, %v356
  %v358 = vsub.f32 1.5, %v357
  %v359 = vmul.f32 %v354, %v358
  %vm360 = vweird.f32 %v221
  %vm361 = vweird.f32 %v354
  %vm362 = vmor %vm360, %vm361
  %v363 = vsel %vm362, %v354, %v359
  %v364 = vrsqrt.pop %v222
  %v365 = vmul.f32 %v364, %v222
  %v366 = vmul.f32 %v365, %v364
  %v367 = vmul.f32 0.5, %v366
  %v368 = vsub.f32 1.5, %v367
  %v369 = vmul.f32 %v364, %v368
  %vm370 = vweird.f32 %v222
  %vm371 = vweird.f32 %v364
  %vm372 = vmor %vm370, %vm371
  %v373 = vsel %vm372, %v364, %v369
  %v374 = vrsqrt.pop %v223
  %v375 = vmul.f32 %v374, %v223
  %v376 = vmul.f32 %v375, %v374
  %v377 = vmul.f32 0.5, %v376
  %v378 = vsub.f32 1.5, %v377
  %v379 = vmul.f32 %v374, %v378
  %vm380 = vweird.f32 %v223
  %vm381 = vweird.f32 %v374
  %vm382 = vmor %vm380, %vm381
  %v383 = vsel %vm382, %v374, %v379
  %v384 = vmul.f32 %v112, %v233
  %v385 = vmul.f32 %v113, %v243
  %v386 = vmul.f32 %v114, %v253
  %v387 = vmul.f32 %v115, %v263
  %v388 = vmul.f32 %v116, %v273
  %v389 = vmul.f32 %v117, %v283
  %v390 = vmul.f32 %v118, %v293
  %v391 = vmul.f32 %v119, %v303
  %v392 = vmul.f32 %v120, %v313
  %v393 = vmul.f32 %v121, %v323
  %v394 = vmul.f32 %v122, %v333
  %v395 = vmul.f32 %v123, %v343
  %v396 = vmul.f32 %v124, %v353
  %v397 = vmul.f32 %v125, %v363
  %v398 = vmul.f32 %v126, %v373
  %v399 = vmul.f32 %v127, %v383
  %v400 = vld [vmem:[%s1] sm:$0x1]
  %v402 = vperm.slane %v400, 0
  %v404 = vmul.f32 %v384, %v402
  %v405 = vmul.f32 %v385, %v402
  %v406 = vmul.f32 %v386, %v402
  %v407 = vmul.f32 %v387, %v402
  %v408 = vmul.f32 %v388, %v402
  %v409 = vmul.f32 %v389, %v402
  %v410 = vmul.f32 %v390, %v402
  %v411 = vmul.f32 %v391, %v402
  %v412 = vmul.f32 %v392, %v402
  %v413 = vmul.f32 %v393, %v402
  %v414 = vmul.f32 %v394, %v402
  %v415 = vmul.f32 %v395, %v402
  %v416 = vmul.f32 %v396, %v402
  %v417 = vmul.f32 %v397, %v402
  %v418 = vmul.f32 %v398, %v402
  %v419 = vmul.f32 %v399, %v402
  %v420 = vld [vmem:[%s2] sm:$0x1]
  %v422 = vperm.slane %v420, 0
  %v424 = vadd.f32 %v404, %v422
  %v425 = vadd.f32 %v405, %v422
  %v426 = vadd.f32 %v406, %v422
  %v427 = vadd.f32 %v407, %v422
  %v428 = vadd.f32 %v408, %v422
  %v429 = vadd.f32 %v409, %v422
  %v430 = vadd.f32 %v410, %v422
  %v431 = vadd.f32 %v411, %v422
  %v432 = vadd.f32 %v412, %v422
  %v433 = vadd.f32 %v413, %v422
  %v434 = vadd.f32 %v414, %v422
  %v435 = vadd.f32 %v415, %v422
  %v436 = vadd.f32 %v416, %v422
  %v437 = vadd.f32 %v417, %v422
  %v438 = vadd.f32 %v418, %v422
  %v439 = vadd.f32 %v419, %v422
  %v440 = vpack.c.bf16 %v425, %v424
  %v441 = vpack.c.bf16 %v427, %v426
  %v442 = vpack.c.bf16 %v429, %v428
  %v443 = vpack.c.bf16 %v431, %v430
  %v444 = vpack.c.bf16 %v433, %v432
  %v445 = vpack.c.bf16 %v435, %v434
  %v446 = vpack.c.bf16 %v437, %v436
  %v447 = vpack.c.bf16 %v439, %v438
  %v448 = vld [vmem:[%s3] sm:$0xf]
  %v449 = vld [vmem:[%s3 + $0x4] sm:$0xf]
  %v452 = vunpack.c.l.b16 %v448
  %v453 = vunpack.c.l.b16 %v449
  %v454 = vpack.c.b16 %v453, %v452
  %v457 = vsel %vm40, %v440, 0
  %v460 = vsel %vm40, %v441, 0
  %v463 = vsel %vm40, %v442, 0
  %v466 = vsel %vm40, %v443, 0
  %v469 = vsel %vm40, %v444, 0
  %v472 = vsel %vm40, %v445, 0
  %v475 = vsel %vm40, %v446, 0
  %v478 = vsel %vm40, %v447, 0
  %480 = vmatpush.bf16.msra.mxu0 0
  %481 = vmatpush.bf16.msra.mxu0 0
  %482 = vmatpush.bf16.msra.mxu0 0
  %483 = vmatpush.bf16.msra.mxu0 0
  %484 = vmatpush.bf16.msra.mxu0 0
  %485 = vmatpush.bf16.msra.mxu0 0
  %486 = vmatpush.bf16.msra.mxu0 0
  %487 = vmatpush.bf16.msra.mxu0 %v454
  %488 = vmatmul.bf16.gmra.mxu0 %v457
  %v489 = vpop.f32.mrf.mxu0
  %v490 = vadd.f32 0.0, %v489
  %v491 = vpop.f32.mrf.mxu0
  %v492 = vadd.f32 0.0, %v491
  %493 = vmatmul.bf16.gmra.mxu0 %v460
  %v494 = vpop.f32.mrf.mxu0
  %v495 = vadd.f32 0.0, %v494
  %v496 = vpop.f32.mrf.mxu0
  %v497 = vadd.f32 0.0, %v496
  %498 = vmatmul.bf16.gmra.mxu0 %v463
  %v499 = vpop.f32.mrf.mxu0
  %v500 = vadd.f32 0.0, %v499
  %v501 = vpop.f32.mrf.mxu0
  %v502 = vadd.f32 0.0, %v501
  %503 = vmatmul.bf16.gmra.mxu0 %v466
  %v504 = vpop.f32.mrf.mxu0
  %v505 = vadd.f32 0.0, %v504
  %v506 = vpop.f32.mrf.mxu0
  %v507 = vadd.f32 0.0, %v506
  %508 = vmatmul.bf16.gmra.mxu0 %v469
  %v509 = vpop.f32.mrf.mxu0
  %v510 = vadd.f32 0.0, %v509
  %v511 = vpop.f32.mrf.mxu0
  %v512 = vadd.f32 0.0, %v511
  %513 = vmatmul.bf16.gmra.mxu0 %v472
  %v514 = vpop.f32.mrf.mxu0
  %v515 = vadd.f32 0.0, %v514
  %v516 = vpop.f32.mrf.mxu0
  %v517 = vadd.f32 0.0, %v516
  %518 = vmatmul.bf16.gmra.mxu0 %v475
  %v519 = vpop.f32.mrf.mxu0
  %v520 = vadd.f32 0.0, %v519
  %v521 = vpop.f32.mrf.mxu0
  %v522 = vadd.f32 0.0, %v521
  %523 = vmatmul.bf16.gmra.mxu0 %v478
  %v524 = vpop.f32.mrf.mxu0
  %v525 = vadd.f32 0.0, %v524
  %v526 = vpop.f32.mrf.mxu0
  %v527 = vadd.f32 0.0, %v526
  %528 = vdwg.mxu0
  %v529 = vld [vmem:[%s4] sm:$0x1]
  %v531 = vperm.slane %v529, 0
  %v533 = vmul.f32 %v490, %v531
  %v534 = vmul.f32 %v492, %v531
  %v535 = vmul.f32 %v495, %v531
  %v536 = vmul.f32 %v497, %v531
  %v537 = vmul.f32 %v500, %v531
  %v538 = vmul.f32 %v502, %v531
  %v539 = vmul.f32 %v505, %v531
  %v540 = vmul.f32 %v507, %v531
  %v541 = vmul.f32 %v510, %v531
  %v542 = vmul.f32 %v512, %v531
  %v543 = vmul.f32 %v515, %v531
  %v544 = vmul.f32 %v517, %v531
  %v545 = vmul.f32 %v520, %v531
  %v546 = vmul.f32 %v522, %v531
  %v547 = vmul.f32 %v525, %v531
  %v548 = vmul.f32 %v527, %v531
  %v549 = vld [vmem:[%s5] sm:$0x1]
  %v551 = vperm.slane %v549, 0
  %v553 = vadd.f32 %v533, %v551
  %v554 = vadd.f32 %v534, %v551
  %v555 = vadd.f32 %v535, %v551
  %v556 = vadd.f32 %v536, %v551
  %v557 = vadd.f32 %v537, %v551
  %v558 = vadd.f32 %v538, %v551
  %v559 = vadd.f32 %v539, %v551
  %v560 = vadd.f32 %v540, %v551
  %v561 = vadd.f32 %v541, %v551
  %v562 = vadd.f32 %v542, %v551
  %v563 = vadd.f32 %v543, %v551
  %v564 = vadd.f32 %v544, %v551
  %v565 = vadd.f32 %v545, %v551
  %v566 = vadd.f32 %v546, %v551
  %v567 = vadd.f32 %v547, %v551
  %v568 = vadd.f32 %v548, %v551
  %v569 = vmul.f32 %v553, 0.5
  %v570 = vmul.f32 %v554, 0.5
  %v571 = vmul.f32 %v555, 0.5
  %v572 = vmul.f32 %v556, 0.5
  %v573 = vmul.f32 %v557, 0.5
  %v574 = vmul.f32 %v558, 0.5
  %v575 = vmul.f32 %v559, 0.5
  %v576 = vmul.f32 %v560, 0.5
  %v577 = vmul.f32 %v561, 0.5
  %v578 = vmul.f32 %v562, 0.5
  %v579 = vmul.f32 %v563, 0.5
  %v580 = vmul.f32 %v564, 0.5
  %v581 = vmul.f32 %v565, 0.5
  %v582 = vmul.f32 %v566, 0.5
  %v583 = vmul.f32 %v567, 0.5
  %v584 = vmul.f32 %v568, 0.5
  %v585 = vmul.f32 %v553, 0.70710677
  %v586 = vmul.f32 %v554, 0.70710677
  %v587 = vmul.f32 %v555, 0.70710677
  %v588 = vmul.f32 %v556, 0.70710677
  %v589 = vmul.f32 %v557, 0.70710677
  %v590 = vmul.f32 %v558, 0.70710677
  %v591 = vmul.f32 %v559, 0.70710677
  %v592 = vmul.f32 %v560, 0.70710677
  %v593 = vmul.f32 %v561, 0.70710677
  %v594 = vmul.f32 %v562, 0.70710677
  %v595 = vmul.f32 %v563, 0.70710677
  %v596 = vmul.f32 %v564, 0.70710677
  %v597 = vmul.f32 %v565, 0.70710677
  %v598 = vmul.f32 %v566, 0.70710677
  %v599 = vmul.f32 %v567, 0.70710677
  %v600 = vmul.f32 %v568, 0.70710677
  %v601 = vmul.f32 %v585, %v585
  %v602 = vmin.f32 16.0, %v601
  %v603 = vmul.f32 %v602, 2.1237322e-06
  %v604 = vadd.f32 %v603, 0.00028619796
  %v605 = vmul.f32 %v602, %v604
  %v606 = vadd.f32 %v605, 0.0036580483
  %v607 = vmul.f32 %v602, %v606
  %v608 = vadd.f32 %v607, 0.05243302
  %v609 = vmul.f32 %v602, %v608
  %v610 = vadd.f32 %v609, 0.18741608
  %v611 = vmul.f32 %v602, %v610
  %v612 = vadd.f32 %v611, 1.1283791
  %v613 = vmul.f32 %v585, %v612
  %v614 = vmul.f32 %v602, 3.8918573e-05
  %v615 = vadd.f32 %v614, 0.001143296
  %v616 = vmul.f32 %v602, %v615
  %v617 = vadd.f32 %v616, 0.014752088
  %v618 = vmul.f32 %v602, %v617
  %v619 = vadd.f32 %v618, 0.112945676
  %v620 = vmul.f32 %v602, %v619
  %v621 = vadd.f32 %v620, 0.4994258
  %v622 = vmul.f32 %v602, %v621
  %v623 = vadd.f32 %v622, 1.0
  %v624 = vrcp.pop %v623
  %v625 = vmul.f32 %v623, %v624
  %v626 = vsub.f32 1.0, %v625
  %v627 = vmul.f32 %v624, %v626
  %v628 = vadd.f32 %v624, %v627
  %vm629 = vweird.f32 %v623
  %vm630 = vweird.f32 %v624
  %vm631 = vmor %vm629, %vm630
  %v632 = vsel %vm631, %v624, %v628
  %v633 = vand.u32 2147483647, %v623
  %vm634 = vcmp.eq.f32.partialorder %v633, 8.507059e+37
  %v635 = vand.u32 %v623, 2147483648
  %v636 = vor.u32 1.1754944e-38, %v635
  %v637 = vsel %vm634, %v636, %v632
  %v638 = vmul.f32 %v613, %v637
  %v639 = vmin.f32 %v638, 1.0
  %v640 = vmax.f32 %v639, -1.0
  %v641 = vmul.f32 %v586, %v586
  %v642 = vmin.f32 16.0, %v641
  %v643 = vmul.f32 %v642, 2.1237322e-06
  %v644 = vadd.f32 %v643, 0.00028619796
  %v645 = vmul.f32 %v642, %v644
  %v646 = vadd.f32 %v645, 0.0036580483
  %v647 = vmul.f32 %v642, %v646
  %v648 = vadd.f32 %v647, 0.05243302
  %v649 = vmul.f32 %v642, %v648
  %v650 = vadd.f32 %v649, 0.18741608
  %v651 = vmul.f32 %v642, %v650
  %v652 = vadd.f32 %v651, 1.1283791
  %v653 = vmul.f32 %v586, %v652
  %v654 = vmul.f32 %v642, 3.8918573e-05
  %v655 = vadd.f32 %v654, 0.001143296
  %v656 = vmul.f32 %v642, %v655
  %v657 = vadd.f32 %v656, 0.014752088
  %v658 = vmul.f32 %v642, %v657
  %v659 = vadd.f32 %v658, 0.112945676
  %v660 = vmul.f32 %v642, %v659
  %v661 = vadd.f32 %v660, 0.4994258
  %v662 = vmul.f32 %v642, %v661
  %v663 = vadd.f32 %v662, 1.0
  %v664 = vrcp.pop %v663
  %v665 = vmul.f32 %v663, %v664
  %v666 = vsub.f32 1.0, %v665
  %v667 = vmul.f32 %v664, %v666
  %v668 = vadd.f32 %v664, %v667
  %vm669 = vweird.f32 %v663
  %vm670 = vweird.f32 %v664
  %vm671 = vmor %vm669, %vm670
  %v672 = vsel %vm671, %v664, %v668
  %v673 = vand.u32 2147483647, %v663
  %vm674 = vcmp.eq.f32.partialorder %v673, 8.507059e+37
  %v675 = vand.u32 %v663, 2147483648
  %v676 = vor.u32 1.1754944e-38, %v675
  %v677 = vsel %vm674, %v676, %v672
  %v678 = vmul.f32 %v653, %v677
  %v679 = vmin.f32 %v678, 1.0
  %v680 = vmax.f32 %v679, -1.0
  %v681 = vmul.f32 %v587, %v587
  %v682 = vmin.f32 16.0, %v681
  %v683 = vmul.f32 %v682, 2.1237322e-06
  %v684 = vadd.f32 %v683, 0.00028619796
  %v685 = vmul.f32 %v682, %v684
  %v686 = vadd.f32 %v685, 0.0036580483
  %v687 = vmul.f32 %v682, %v686
  %v688 = vadd.f32 %v687, 0.05243302
  %v689 = vmul.f32 %v682, %v688
  %v690 = vadd.f32 %v689, 0.18741608
  %v691 = vmul.f32 %v682, %v690
  %v692 = vadd.f32 %v691, 1.1283791
  %v693 = vmul.f32 %v587, %v692
  %v694 = vmul.f32 %v682, 3.8918573e-05
  %v695 = vadd.f32 %v694, 0.001143296
  %v696 = vmul.f32 %v682, %v695
  %v697 = vadd.f32 %v696, 0.014752088
  %v698 = vmul.f32 %v682, %v697
  %v699 = vadd.f32 %v698, 0.112945676
  %v700 = vmul.f32 %v682, %v699
  %v701 = vadd.f32 %v700, 0.4994258
  %v702 = vmul.f32 %v682, %v701
  %v703 = vadd.f32 %v702, 1.0
  %v704 = vrcp.pop %v703
  %v705 = vmul.f32 %v703, %v704
  %v706 = vsub.f32 1.0, %v705
  %v707 = vmul.f32 %v704, %v706
  %v708 = vadd.f32 %v704, %v707
  %vm709 = vweird.f32 %v703
  %vm710 = vweird.f32 %v704
  %vm711 = vmor %vm709, %vm710
  %v712 = vsel %vm711, %v704, %v708
  %v713 = vand.u32 2147483647, %v703
  %vm714 = vcmp.eq.f32.partialorder %v713, 8.507059e+37
  %v715 = vand.u32 %v703, 2147483648
  %v716 = vor.u32 1.1754944e-38, %v715
  %v717 = vsel %vm714, %v716, %v712
  %v718 = vmul.f32 %v693, %v717
  %v719 = vmin.f32 %v718, 1.0
  %v720 = vmax.f32 %v719, -1.0
  %v721 = vmul.f32 %v588, %v588
  %v722 = vmin.f32 16.0, %v721
  %v723 = vmul.f32 %v722, 2.1237322e-06
  %v724 = vadd.f32 %v723, 0.00028619796
  %v725 = vmul.f32 %v722, %v724
  %v726 = vadd.f32 %v725, 0.0036580483
  %v727 = vmul.f32 %v722, %v726
  %v728 = vadd.f32 %v727, 0.05243302
  %v729 = vmul.f32 %v722, %v728
  %v730 = vadd.f32 %v729, 0.18741608
  %v731 = vmul.f32 %v722, %v730
  %v732 = vadd.f32 %v731, 1.1283791
  %v733 = vmul.f32 %v588, %v732
  %v734 = vmul.f32 %v722, 3.8918573e-05
  %v735 = vadd.f32 %v734, 0.001143296
  %v736 = vmul.f32 %v722, %v735
  %v737 = vadd.f32 %v736, 0.014752088
  %v738 = vmul.f32 %v722, %v737
  %v739 = vadd.f32 %v738, 0.112945676
  %v740 = vmul.f32 %v722, %v739
  %v741 = vadd.f32 %v740, 0.4994258
  %v742 = vmul.f32 %v722, %v741
  %v743 = vadd.f32 %v742, 1.0
  %v744 = vrcp.pop %v743
  %v745 = vmul.f32 %v743, %v744
  %v746 = vsub.f32 1.0, %v745
  %v747 = vmul.f32 %v744, %v746
  %v748 = vadd.f32 %v744, %v747
  %vm749 = vweird.f32 %v743
  %vm750 = vweird.f32 %v744
  %vm751 = vmor %vm749, %vm750
  %v752 = vsel %vm751, %v744, %v748
  %v753 = vand.u32 2147483647, %v743
  %vm754 = vcmp.eq.f32.partialorder %v753, 8.507059e+37
  %v755 = vand.u32 %v743, 2147483648
  %v756 = vor.u32 1.1754944e-38, %v755
  %v757 = vsel %vm754, %v756, %v752
  %v758 = vmul.f32 %v733, %v757
  %v759 = vmin.f32 %v758, 1.0
  %v760 = vmax.f32 %v759, -1.0
  %v761 = vmul.f32 %v589, %v589
  %v762 = vmin.f32 16.0, %v761
  %v763 = vmul.f32 %v762, 2.1237322e-06
  %v764 = vadd.f32 %v763, 0.00028619796
  %v765 = vmul.f32 %v762, %v764
  %v766 = vadd.f32 %v765, 0.0036580483
  %v767 = vmul.f32 %v762, %v766
  %v768 = vadd.f32 %v767, 0.05243302
  %v769 = vmul.f32 %v762, %v768
  %v770 = vadd.f32 %v769, 0.18741608
  %v771 = vmul.f32 %v762, %v770
  %v772 = vadd.f32 %v771, 1.1283791
  %v773 = vmul.f32 %v589, %v772
  %v774 = vmul.f32 %v762, 3.8918573e-05
  %v775 = vadd.f32 %v774, 0.001143296
  %v776 = vmul.f32 %v762, %v775
  %v777 = vadd.f32 %v776, 0.014752088
  %v778 = vmul.f32 %v762, %v777
  %v779 = vadd.f32 %v778, 0.112945676
  %v780 = vmul.f32 %v762, %v779
  %v781 = vadd.f32 %v780, 0.4994258
  %v782 = vmul.f32 %v762, %v781
  %v783 = vadd.f32 %v782, 1.0
  %v784 = vrcp.pop %v783
  %v785 = vmul.f32 %v783, %v784
  %v786 = vsub.f32 1.0, %v785
  %v787 = vmul.f32 %v784, %v786
  %v788 = vadd.f32 %v784, %v787
  %vm789 = vweird.f32 %v783
  %vm790 = vweird.f32 %v784
  %vm791 = vmor %vm789, %vm790
  %v792 = vsel %vm791, %v784, %v788
  %v793 = vand.u32 2147483647, %v783
  %vm794 = vcmp.eq.f32.partialorder %v793, 8.507059e+37
  %v795 = vand.u32 %v783, 2147483648
  %v796 = vor.u32 1.1754944e-38, %v795
  %v797 = vsel %vm794, %v796, %v792
  %v798 = vmul.f32 %v773, %v797
  %v799 = vmin.f32 %v798, 1.0
  %v800 = vmax.f32 %v799, -1.0
  %v801 = vmul.f32 %v590, %v590
  %v802 = vmin.f32 16.0, %v801
  %v803 = vmul.f32 %v802, 2.1237322e-06
  %v804 = vadd.f32 %v803, 0.00028619796
  %v805 = vmul.f32 %v802, %v804
  %v806 = vadd.f32 %v805, 0.0036580483
  %v807 = vmul.f32 %v802, %v806
  %v808 = vadd.f32 %v807, 0.05243302
  %v809 = vmul.f32 %v802, %v808
  %v810 = vadd.f32 %v809, 0.18741608
  %v811 = vmul.f32 %v802, %v810
  %v812 = vadd.f32 %v811, 1.1283791
  %v813 = vmul.f32 %v590, %v812
  %v814 = vmul.f32 %v802, 3.8918573e-05
  %v815 = vadd.f32 %v814, 0.001143296
  %v816 = vmul.f32 %v802, %v815
  %v817 = vadd.f32 %v816, 0.014752088
  %v818 = vmul.f32 %v802, %v817
  %v819 = vadd.f32 %v818, 0.112945676
  %v820 = vmul.f32 %v802, %v819
  %v821 = vadd.f32 %v820, 0.4994258
  %v822 = vmul.f32 %v802, %v821
  %v823 = vadd.f32 %v822, 1.0
  %v824 = vrcp.pop %v823
  %v825 = vmul.f32 %v823, %v824
  %v826 = vsub.f32 1.0, %v825
  %v827 = vmul.f32 %v824, %v826
  %v828 = vadd.f32 %v824, %v827
  %vm829 = vweird.f32 %v823
  %vm830 = vweird.f32 %v824
  %vm831 = vmor %vm829, %vm830
  %v832 = vsel %vm831, %v824, %v828
  %v833 = vand.u32 2147483647, %v823
  %vm834 = vcmp.eq.f32.partialorder %v833, 8.507059e+37
  %v835 = vand.u32 %v823, 2147483648
  %v836 = vor.u32 1.1754944e-38, %v835
  %v837 = vsel %vm834, %v836, %v832
  %v838 = vmul.f32 %v813, %v837
  %v839 = vmin.f32 %v838, 1.0
  %v840 = vmax.f32 %v839, -1.0
  %v841 = vmul.f32 %v591, %v591
  %v842 = vmin.f32 16.0, %v841
  %v843 = vmul.f32 %v842, 2.1237322e-06
  %v844 = vadd.f32 %v843, 0.00028619796
  %v845 = vmul.f32 %v842, %v844
  %v846 = vadd.f32 %v845, 0.0036580483
  %v847 = vmul.f32 %v842, %v846
  %v848 = vadd.f32 %v847, 0.05243302
  %v849 = vmul.f32 %v842, %v848
  %v850 = vadd.f32 %v849, 0.18741608
  %v851 = vmul.f32 %v842, %v850
  %v852 = vadd.f32 %v851, 1.1283791
  %v853 = vmul.f32 %v591, %v852
  %v854 = vmul.f32 %v842, 3.8918573e-05
  %v855 = vadd.f32 %v854, 0.001143296
  %v856 = vmul.f32 %v842, %v855
  %v857 = vadd.f32 %v856, 0.014752088
  %v858 = vmul.f32 %v842, %v857
  %v859 = vadd.f32 %v858, 0.112945676
  %v860 = vmul.f32 %v842, %v859
  %v861 = vadd.f32 %v860, 0.4994258
  %v862 = vmul.f32 %v842, %v861
  %v863 = vadd.f32 %v862, 1.0
  %v864 = vrcp.pop %v863
  %v865 = vmul.f32 %v863, %v864
  %v866 = vsub.f32 1.0, %v865
  %v867 = vmul.f32 %v864, %v866
  %v868 = vadd.f32 %v864, %v867
  %vm869 = vweird.f32 %v863
  %vm870 = vweird.f32 %v864
  %vm871 = vmor %vm869, %vm870
  %v872 = vsel %vm871, %v864, %v868
  %v873 = vand.u32 2147483647, %v863
  %vm874 = vcmp.eq.f32.partialorder %v873, 8.507059e+37
  %v875 = vand.u32 %v863, 2147483648
  %v876 = vor.u32 1.1754944e-38, %v875
  %v877 = vsel %vm874, %v876, %v872
  %v878 = vmul.f32 %v853, %v877
  %v879 = vmin.f32 %v878, 1.0
  %v880 = vmax.f32 %v879, -1.0
  %v881 = vmul.f32 %v592, %v592
  %v882 = vmin.f32 16.0, %v881
  %v883 = vmul.f32 %v882, 2.1237322e-06
  %v884 = vadd.f32 %v883, 0.00028619796
  %v885 = vmul.f32 %v882, %v884
  %v886 = vadd.f32 %v885, 0.0036580483
  %v887 = vmul.f32 %v882, %v886
  %v888 = vadd.f32 %v887, 0.05243302
  %v889 = vmul.f32 %v882, %v888
  %v890 = vadd.f32 %v889, 0.18741608
  %v891 = vmul.f32 %v882, %v890
  %v892 = vadd.f32 %v891, 1.1283791
  %v893 = vmul.f32 %v592, %v892
  %v894 = vmul.f32 %v882, 3.8918573e-05
  %v895 = vadd.f32 %v894, 0.001143296
  %v896 = vmul.f32 %v882, %v895
  %v897 = vadd.f32 %v896, 0.014752088
  %v898 = vmul.f32 %v882, %v897
  %v899 = vadd.f32 %v898, 0.112945676
  %v900 = vmul.f32 %v882, %v899
  %v901 = vadd.f32 %v900, 0.4994258
  %v902 = vmul.f32 %v882, %v901
  %v903 = vadd.f32 %v902, 1.0
  %v904 = vrcp.pop %v903
  %v905 = vmul.f32 %v903, %v904
  %v906 = vsub.f32 1.0, %v905
  %v907 = vmul.f32 %v904, %v906
  %v908 = vadd.f32 %v904, %v907
  %vm909 = vweird.f32 %v903
  %vm910 = vweird.f32 %v904
  %vm911 = vmor %vm909, %vm910
  %v912 = vsel %vm911, %v904, %v908
  %v913 = vand.u32 2147483647, %v903
  %vm914 = vcmp.eq.f32.partialorder %v913, 8.507059e+37
  %v915 = vand.u32 %v903, 2147483648
  %v916 = vor.u32 1.1754944e-38, %v915
  %v917 = vsel %vm914, %v916, %v912
  %v918 = vmul.f32 %v893, %v917
  %v919 = vmin.f32 %v918, 1.0
  %v920 = vmax.f32 %v919, -1.0
  %v921 = vmul.f32 %v593, %v593
  %v922 = vmin.f32 16.0, %v921
  %v923 = vmul.f32 %v922, 2.1237322e-06
  %v924 = vadd.f32 %v923, 0.00028619796
  %v925 = vmul.f32 %v922, %v924
  %v926 = vadd.f32 %v925, 0.0036580483
  %v927 = vmul.f32 %v922, %v926
  %v928 = vadd.f32 %v927, 0.05243302
  %v929 = vmul.f32 %v922, %v928
  %v930 = vadd.f32 %v929, 0.18741608
  %v931 = vmul.f32 %v922, %v930
  %v932 = vadd.f32 %v931, 1.1283791
  %v933 = vmul.f32 %v593, %v932
  %v934 = vmul.f32 %v922, 3.8918573e-05
  %v935 = vadd.f32 %v934, 0.001143296
  %v936 = vmul.f32 %v922, %v935
  %v937 = vadd.f32 %v936, 0.014752088
  %v938 = vmul.f32 %v922, %v937
  %v939 = vadd.f32 %v938, 0.112945676
  %v940 = vmul.f32 %v922, %v939
  %v941 = vadd.f32 %v940, 0.4994258
  %v942 = vmul.f32 %v922, %v941
  %v943 = vadd.f32 %v942, 1.0
  %v944 = vrcp.pop %v943
  %v945 = vmul.f32 %v943, %v944
  %v946 = vsub.f32 1.0, %v945
  %v947 = vmul.f32 %v944, %v946
  %v948 = vadd.f32 %v944, %v947
  %vm949 = vweird.f32 %v943
  %vm950 = vweird.f32 %v944
  %vm951 = vmor %vm949, %vm950
  %v952 = vsel %vm951, %v944, %v948
  %v953 = vand.u32 2147483647, %v943
  %vm954 = vcmp.eq.f32.partialorder %v953, 8.507059e+37
  %v955 = vand.u32 %v943, 2147483648
  %v956 = vor.u32 1.1754944e-38, %v955
  %v957 = vsel %vm954, %v956, %v952
  %v958 = vmul.f32 %v933, %v957
  %v959 = vmin.f32 %v958, 1.0
  %v960 = vmax.f32 %v959, -1.0
  %v961 = vmul.f32 %v594, %v594
  %v962 = vmin.f32 16.0, %v961
  %v963 = vmul.f32 %v962, 2.1237322e-06
  %v964 = vadd.f32 %v963, 0.00028619796
  %v965 = vmul.f32 %v962, %v964
  %v966 = vadd.f32 %v965, 0.0036580483
  %v967 = vmul.f32 %v962, %v966
  %v968 = vadd.f32 %v967, 0.05243302
  %v969 = vmul.f32 %v962, %v968
  %v970 = vadd.f32 %v969, 0.18741608
  %v971 = vmul.f32 %v962, %v970
  %v972 = vadd.f32 %v971, 1.1283791
  %v973 = vmul.f32 %v594, %v972
  %v974 = vmul.f32 %v962, 3.8918573e-05
  %v975 = vadd.f32 %v974, 0.001143296
  %v976 = vmul.f32 %v962, %v975
  %v977 = vadd.f32 %v976, 0.014752088
  %v978 = vmul.f32 %v962, %v977
  %v979 = vadd.f32 %v978, 0.112945676
  %v980 = vmul.f32 %v962, %v979
  %v981 = vadd.f32 %v980, 0.4994258
  %v982 = vmul.f32 %v962, %v981
  %v983 = vadd.f32 %v982, 1.0
  %v984 = vrcp.pop %v983
  %v985 = vmul.f32 %v983, %v984
  %v986 = vsub.f32 1.0, %v985
  %v987 = vmul.f32 %v984, %v986
  %v988 = vadd.f32 %v984, %v987
  %vm989 = vweird.f32 %v983
  %vm990 = vweird.f32 %v984
  %vm991 = vmor %vm989, %vm990
  %v992 = vsel %vm991, %v984, %v988
  %v993 = vand.u32 2147483647, %v983
  %vm994 = vcmp.eq.f32.partialorder %v993, 8.507059e+37
  %v995 = vand.u32 %v983, 2147483648
  %v996 = vor.u32 1.1754944e-38, %v995
  %v997 = vsel %vm994, %v996, %v992
  %v998 = vmul.f32 %v973, %v997
  %v999 = vmin.f32 %v998, 1.0
  %v1000 = vmax.f32 %v999, -1.0
  %v1001 = vmul.f32 %v595, %v595
  %v1002 = vmin.f32 16.0, %v1001
  %v1003 = vmul.f32 %v1002, 2.1237322e-06
  %v1004 = vadd.f32 %v1003, 0.00028619796
  %v1005 = vmul.f32 %v1002, %v1004
  %v1006 = vadd.f32 %v1005, 0.0036580483
  %v1007 = vmul.f32 %v1002, %v1006
  %v1008 = vadd.f32 %v1007, 0.05243302
  %v1009 = vmul.f32 %v1002, %v1008
  %v1010 = vadd.f32 %v1009, 0.18741608
  %v1011 = vmul.f32 %v1002, %v1010
  %v1012 = vadd.f32 %v1011, 1.1283791
  %v1013 = vmul.f32 %v595, %v1012
  %v1014 = vmul.f32 %v1002, 3.8918573e-05
  %v1015 = vadd.f32 %v1014, 0.001143296
  %v1016 = vmul.f32 %v1002, %v1015
  %v1017 = vadd.f32 %v1016, 0.014752088
  %v1018 = vmul.f32 %v1002, %v1017
  %v1019 = vadd.f32 %v1018, 0.112945676
  %v1020 = vmul.f32 %v1002, %v1019
  %v1021 = vadd.f32 %v1020, 0.4994258
  %v1022 = vmul.f32 %v1002, %v1021
  %v1023 = vadd.f32 %v1022, 1.0
  %v1024 = vrcp.pop %v1023
  %v1025 = vmul.f32 %v1023, %v1024
  %v1026 = vsub.f32 1.0, %v1025
  %v1027 = vmul.f32 %v1024, %v1026
  %v1028 = vadd.f32 %v1024, %v1027
  %vm1029 = vweird.f32 %v1023
  %vm1030 = vweird.f32 %v1024
  %vm1031 = vmor %vm1029, %vm1030
  %v1032 = vsel %vm1031, %v1024, %v1028
  %v1033 = vand.u32 2147483647, %v1023
  %vm1034 = vcmp.eq.f32.partialorder %v1033, 8.507059e+37
  %v1035 = vand.u32 %v1023, 2147483648
  %v1036 = vor.u32 1.1754944e-38, %v1035
  %v1037 = vsel %vm1034, %v1036, %v1032
  %v1038 = vmul.f32 %v1013, %v1037
  %v1039 = vmin.f32 %v1038, 1.0
  %v1040 = vmax.f32 %v1039, -1.0
  %v1041 = vmul.f32 %v596, %v596
  %v1042 = vmin.f32 16.0, %v1041
  %v1043 = vmul.f32 %v1042, 2.1237322e-06
  %v1044 = vadd.f32 %v1043, 0.00028619796
  %v1045 = vmul.f32 %v1042, %v1044
  %v1046 = vadd.f32 %v1045, 0.0036580483
  %v1047 = vmul.f32 %v1042, %v1046
  %v1048 = vadd.f32 %v1047, 0.05243302
  %v1049 = vmul.f32 %v1042, %v1048
  %v1050 = vadd.f32 %v1049, 0.18741608
  %v1051 = vmul.f32 %v1042, %v1050
  %v1052 = vadd.f32 %v1051, 1.1283791
  %v1053 = vmul.f32 %v596, %v1052
  %v1054 = vmul.f32 %v1042, 3.8918573e-05
  %v1055 = vadd.f32 %v1054, 0.001143296
  %v1056 = vmul.f32 %v1042, %v1055
  %v1057 = vadd.f32 %v1056, 0.014752088
  %v1058 = vmul.f32 %v1042, %v1057
  %v1059 = vadd.f32 %v1058, 0.112945676
  %v1060 = vmul.f32 %v1042, %v1059
  %v1061 = vadd.f32 %v1060, 0.4994258
  %v1062 = vmul.f32 %v1042, %v1061
  %v1063 = vadd.f32 %v1062, 1.0
  %v1064 = vrcp.pop %v1063
  %v1065 = vmul.f32 %v1063, %v1064
  %v1066 = vsub.f32 1.0, %v1065
  %v1067 = vmul.f32 %v1064, %v1066
  %v1068 = vadd.f32 %v1064, %v1067
  %vm1069 = vweird.f32 %v1063
  %vm1070 = vweird.f32 %v1064
  %vm1071 = vmor %vm1069, %vm1070
  %v1072 = vsel %vm1071, %v1064, %v1068
  %v1073 = vand.u32 2147483647, %v1063
  %vm1074 = vcmp.eq.f32.partialorder %v1073, 8.507059e+37
  %v1075 = vand.u32 %v1063, 2147483648
  %v1076 = vor.u32 1.1754944e-38, %v1075
  %v1077 = vsel %vm1074, %v1076, %v1072
  %v1078 = vmul.f32 %v1053, %v1077
  %v1079 = vmin.f32 %v1078, 1.0
  %v1080 = vmax.f32 %v1079, -1.0
  %v1081 = vmul.f32 %v597, %v597
  %v1082 = vmin.f32 16.0, %v1081
  %v1083 = vmul.f32 %v1082, 2.1237322e-06
  %v1084 = vadd.f32 %v1083, 0.00028619796
  %v1085 = vmul.f32 %v1082, %v1084
  %v1086 = vadd.f32 %v1085, 0.0036580483
  %v1087 = vmul.f32 %v1082, %v1086
  %v1088 = vadd.f32 %v1087, 0.05243302
  %v1089 = vmul.f32 %v1082, %v1088
  %v1090 = vadd.f32 %v1089, 0.18741608
  %v1091 = vmul.f32 %v1082, %v1090
  %v1092 = vadd.f32 %v1091, 1.1283791
  %v1093 = vmul.f32 %v597, %v1092
  %v1094 = vmul.f32 %v1082, 3.8918573e-05
  %v1095 = vadd.f32 %v1094, 0.001143296
  %v1096 = vmul.f32 %v1082, %v1095
  %v1097 = vadd.f32 %v1096, 0.014752088
  %v1098 = vmul.f32 %v1082, %v1097
  %v1099 = vadd.f32 %v1098, 0.112945676
  %v1100 = vmul.f32 %v1082, %v1099
  %v1101 = vadd.f32 %v1100, 0.4994258
  %v1102 = vmul.f32 %v1082, %v1101
  %v1103 = vadd.f32 %v1102, 1.0
  %v1104 = vrcp.pop %v1103
  %v1105 = vmul.f32 %v1103, %v1104
  %v1106 = vsub.f32 1.0, %v1105
  %v1107 = vmul.f32 %v1104, %v1106
  %v1108 = vadd.f32 %v1104, %v1107
  %vm1109 = vweird.f32 %v1103
  %vm1110 = vweird.f32 %v1104
  %vm1111 = vmor %vm1109, %vm1110
  %v1112 = vsel %vm1111, %v1104, %v1108
  %v1113 = vand.u32 2147483647, %v1103
  %vm1114 = vcmp.eq.f32.partialorder %v1113, 8.507059e+37
  %v1115 = vand.u32 %v1103, 2147483648
  %v1116 = vor.u32 1.1754944e-38, %v1115
  %v1117 = vsel %vm1114, %v1116, %v1112
  %v1118 = vmul.f32 %v1093, %v1117
  %v1119 = vmin.f32 %v1118, 1.0
  %v1120 = vmax.f32 %v1119, -1.0
  %v1121 = vmul.f32 %v598, %v598
  %v1122 = vmin.f32 16.0, %v1121
  %v1123 = vmul.f32 %v1122, 2.1237322e-06
  %v1124 = vadd.f32 %v1123, 0.00028619796
  %v1125 = vmul.f32 %v1122, %v1124
  %v1126 = vadd.f32 %v1125, 0.0036580483
  %v1127 = vmul.f32 %v1122, %v1126
  %v1128 = vadd.f32 %v1127, 0.05243302
  %v1129 = vmul.f32 %v1122, %v1128
  %v1130 = vadd.f32 %v1129, 0.18741608
  %v1131 = vmul.f32 %v1122, %v1130
  %v1132 = vadd.f32 %v1131, 1.1283791
  %v1133 = vmul.f32 %v598, %v1132
  %v1134 = vmul.f32 %v1122, 3.8918573e-05
  %v1135 = vadd.f32 %v1134, 0.001143296
  %v1136 = vmul.f32 %v1122, %v1135
  %v1137 = vadd.f32 %v1136, 0.014752088
  %v1138 = vmul.f32 %v1122, %v1137
  %v1139 = vadd.f32 %v1138, 0.112945676
  %v1140 = vmul.f32 %v1122, %v1139
  %v1141 = vadd.f32 %v1140, 0.4994258
  %v1142 = vmul.f32 %v1122, %v1141
  %v1143 = vadd.f32 %v1142, 1.0
  %v1144 = vrcp.pop %v1143
  %v1145 = vmul.f32 %v1143, %v1144
  %v1146 = vsub.f32 1.0, %v1145
  %v1147 = vmul.f32 %v1144, %v1146
  %v1148 = vadd.f32 %v1144, %v1147
  %vm1149 = vweird.f32 %v1143
  %vm1150 = vweird.f32 %v1144
  %vm1151 = vmor %vm1149, %vm1150
  %v1152 = vsel %vm1151, %v1144, %v1148
  %v1153 = vand.u32 2147483647, %v1143
  %vm1154 = vcmp.eq.f32.partialorder %v1153, 8.507059e+37
  %v1155 = vand.u32 %v1143, 2147483648
  %v1156 = vor.u32 1.1754944e-38, %v1155
  %v1157 = vsel %vm1154, %v1156, %v1152
  %v1158 = vmul.f32 %v1133, %v1157
  %v1159 = vmin.f32 %v1158, 1.0
  %v1160 = vmax.f32 %v1159, -1.0
  %v1161 = vmul.f32 %v599, %v599
  %v1162 = vmin.f32 16.0, %v1161
  %v1163 = vmul.f32 %v1162, 2.1237322e-06
  %v1164 = vadd.f32 %v1163, 0.00028619796
  %v1165 = vmul.f32 %v1162, %v1164
  %v1166 = vadd.f32 %v1165, 0.0036580483
  %v1167 = vmul.f32 %v1162, %v1166
  %v1168 = vadd.f32 %v1167, 0.05243302
  %v1169 = vmul.f32 %v1162, %v1168
  %v1170 = vadd.f32 %v1169, 0.18741608
  %v1171 = vmul.f32 %v1162, %v1170
  %v1172 = vadd.f32 %v1171, 1.1283791
  %v1173 = vmul.f32 %v599, %v1172
  %v1174 = vmul.f32 %v1162, 3.8918573e-05
  %v1175 = vadd.f32 %v1174, 0.001143296
  %v1176 = vmul.f32 %v1162, %v1175
  %v1177 = vadd.f32 %v1176, 0.014752088
  %v1178 = vmul.f32 %v1162, %v1177
  %v1179 = vadd.f32 %v1178, 0.112945676
  %v1180 = vmul.f32 %v1162, %v1179
  %v1181 = vadd.f32 %v1180, 0.4994258
  %v1182 = vmul.f32 %v1162, %v1181
  %v1183 = vadd.f32 %v1182, 1.0
  %v1184 = vrcp.pop %v1183
  %v1185 = vmul.f32 %v1183, %v1184
  %v1186 = vsub.f32 1.0, %v1185
  %v1187 = vmul.f32 %v1184, %v1186
  %v1188 = vadd.f32 %v1184, %v1187
  %vm1189 = vweird.f32 %v1183
  %vm1190 = vweird.f32 %v1184
  %vm1191 = vmor %vm1189, %vm1190
  %v1192 = vsel %vm1191, %v1184, %v1188
  %v1193 = vand.u32 2147483647, %v1183
  %vm1194 = vcmp.eq.f32.partialorder %v1193, 8.507059e+37
  %v1195 = vand.u32 %v1183, 2147483648
  %v1196 = vor.u32 1.1754944e-38, %v1195
  %v1197 = vsel %vm1194, %v1196, %v1192
  %v1198 = vmul.f32 %v1173, %v1197
  %v1199 = vmin.f32 %v1198, 1.0
  %v1200 = vmax.f32 %v1199, -1.0
  %v1201 = vmul.f32 %v600, %v600
  %v1202 = vmin.f32 16.0, %v1201
  %v1203 = vmul.f32 %v1202, 2.1237322e-06
  %v1204 = vadd.f32 %v1203, 0.00028619796
  %v1205 = vmul.f32 %v1202, %v1204
  %v1206 = vadd.f32 %v1205, 0.0036580483
  %v1207 = vmul.f32 %v1202, %v1206
  %v1208 = vadd.f32 %v1207, 0.05243302
  %v1209 = vmul.f32 %v1202, %v1208
  %v1210 = vadd.f32 %v1209, 0.18741608
  %v1211 = vmul.f32 %v1202, %v1210
  %v1212 = vadd.f32 %v1211, 1.1283791
  %v1213 = vmul.f32 %v600, %v1212
  %v1214 = vmul.f32 %v1202, 3.8918573e-05
  %v1215 = vadd.f32 %v1214, 0.001143296
  %v1216 = vmul.f32 %v1202, %v1215
  %v1217 = vadd.f32 %v1216, 0.014752088
  %v1218 = vmul.f32 %v1202, %v1217
  %v1219 = vadd.f32 %v1218, 0.112945676
  %v1220 = vmul.f32 %v1202, %v1219
  %v1221 = vadd.f32 %v1220, 0.4994258
  %v1222 = vmul.f32 %v1202, %v1221
  %v1223 = vadd.f32 %v1222, 1.0
  %v1224 = vrcp.pop %v1223
  %v1225 = vmul.f32 %v1223, %v1224
  %v1226 = vsub.f32 1.0, %v1225
  %v1227 = vmul.f32 %v1224, %v1226
  %v1228 = vadd.f32 %v1224, %v1227
  %vm1229 = vweird.f32 %v1223
  %vm1230 = vweird.f32 %v1224
  %vm1231 = vmor %vm1229, %vm1230
  %v1232 = vsel %vm1231, %v1224, %v1228
  %v1233 = vand.u32 2147483647, %v1223
  %vm1234 = vcmp.eq.f32.partialorder %v1233, 8.507059e+37
  %v1235 = vand.u32 %v1223, 2147483648
  %v1236 = vor.u32 1.1754944e-38, %v1235
  %v1237 = vsel %vm1234, %v1236, %v1232
  %v1238 = vmul.f32 %v1213, %v1237
  %v1239 = vmin.f32 %v1238, 1.0
  %v1240 = vmax.f32 %v1239, -1.0
  %v1241 = vadd.f32 %v640, 1.0
  %v1242 = vadd.f32 %v680, 1.0
  %v1243 = vadd.f32 %v720, 1.0
  %v1244 = vadd.f32 %v760, 1.0
  %v1245 = vadd.f32 %v800, 1.0
  %v1246 = vadd.f32 %v840, 1.0
  %v1247 = vadd.f32 %v880, 1.0
  %v1248 = vadd.f32 %v920, 1.0
  %v1249 = vadd.f32 %v960, 1.0
  %v1250 = vadd.f32 %v1000, 1.0
  %v1251 = vadd.f32 %v1040, 1.0
  %v1252 = vadd.f32 %v1080, 1.0
  %v1253 = vadd.f32 %v1120, 1.0
  %v1254 = vadd.f32 %v1160, 1.0
  %v1255 = vadd.f32 %v1200, 1.0
  %v1256 = vadd.f32 %v1240, 1.0
  %v1257 = vmul.f32 %v569, %v1241
  %v1258 = vmul.f32 %v570, %v1242
  %v1259 = vmul.f32 %v571, %v1243
  %v1260 = vmul.f32 %v572, %v1244
  %v1261 = vmul.f32 %v573, %v1245
  %v1262 = vmul.f32 %v574, %v1246
  %v1263 = vmul.f32 %v575, %v1247
  %v1264 = vmul.f32 %v576, %v1248
  %v1265 = vmul.f32 %v577, %v1249
  %v1266 = vmul.f32 %v578, %v1250
  %v1267 = vmul.f32 %v579, %v1251
  %v1268 = vmul.f32 %v580, %v1252
  %v1269 = vmul.f32 %v581, %v1253
  %v1270 = vmul.f32 %v582, %v1254
  %v1271 = vmul.f32 %v583, %v1255
  %v1272 = vmul.f32 %v584, %v1256
  %v1273 = vpack.c.bf16 %v1257, %v1257
  %v1274 = vpack.c.bf16 %v1258, %v1258
  %v1275 = vpack.c.bf16 %v1259, %v1259
  %v1276 = vpack.c.bf16 %v1260, %v1260
  %v1277 = vpack.c.bf16 %v1261, %v1261
  %v1278 = vpack.c.bf16 %v1262, %v1262
  %v1279 = vpack.c.bf16 %v1263, %v1263
  %v1280 = vpack.c.bf16 %v1264, %v1264
  %v1281 = vpack.c.bf16 %v1265, %v1265
  %v1282 = vpack.c.bf16 %v1266, %v1266
  %v1283 = vpack.c.bf16 %v1267, %v1267
  %v1284 = vpack.c.bf16 %v1268, %v1268
  %v1285 = vpack.c.bf16 %v1269, %v1269
  %v1286 = vpack.c.bf16 %v1270, %v1270
  %v1287 = vpack.c.bf16 %v1271, %v1271
  %v1288 = vpack.c.bf16 %v1272, %v1272
  %vm1289 = vcmask 519168
  %1290 = vst.msk [vmem:[%s6] sm:$0xf] %vm1289, %v1273
  %1291 = vst.msk [vmem:[%s6 + $0x4] sm:$0xf] %vm1289, %v1274
  %1292 = vst.msk [vmem:[%s6 + $0x8] sm:$0xf] %vm1289, %v1275
  %1293 = vst.msk [vmem:[%s6 + $0xc] sm:$0xf] %vm1289, %v1276
  %1294 = vst.msk [vmem:[%s6 + $0x10] sm:$0xf] %vm1289, %v1277
  %1295 = vst.msk [vmem:[%s6 + $0x14] sm:$0xf] %vm1289, %v1278
  %1296 = vst.msk [vmem:[%s6 + $0x18] sm:$0xf] %vm1289, %v1279
  %1297 = vst.msk [vmem:[%s6 + $0x1c] sm:$0xf] %vm1289, %v1280
  %1298 = vst.msk [vmem:[%s6 + $0x20] sm:$0xf] %vm1289, %v1281
  %1299 = vst.msk [vmem:[%s6 + $0x24] sm:$0xf] %vm1289, %v1282
  %1300 = vst.msk [vmem:[%s6 + $0x28] sm:$0xf] %vm1289, %v1283
  %1301 = vst.msk [vmem:[%s6 + $0x2c] sm:$0xf] %vm1289, %v1284
  %1302 = vst.msk [vmem:[%s6 + $0x30] sm:$0xf] %vm1289, %v1285
  %1303 = vst.msk [vmem:[%s6 + $0x34] sm:$0xf] %vm1289, %v1286
  %1304 = vst.msk [vmem:[%s6 + $0x38] sm:$0xf] %vm1289, %v1287
  %1305 = vst.msk [vmem:[%s6 + $0x3c] sm:$0xf] %vm1289, %v1288
  // Predicated region
  $region26: #{glu_block_forward.10} parent=0 // pred_check
    _
  $region27: #{glu_block_forward.10} parent=0 // pred_check_branch
    %1307 = sbr.rel (0) target = $region29
  $region28: #{glu_block_forward.10} parent=0 // pred_region
    _
  $region29: #{glu_block_forward.10} parent=0 // pred_fallthru
    _
  // Predicated region
  $region30: #{glu_block_forward.10} parent=0 // pred_check
    _
  $region31: #{glu_block_forward.10} parent=0 // pred_check_branch
    %1309 = sbr.rel (0) target = $region33
  $region32: #{glu_block_forward.10} parent=0 // pred_region
    _
  $region33: #{glu_block_forward.10} parent=0 // pred_fallthru
    _

// kernel: glu_block_forward.12
$region0: #{glu_block_forward.12}
  #allocation0 [shape = 'u32[]', space=smem, size = 0x4, offset = 0x4, fixed_abs, tag = 'smem constant byte address 0x4 - core index']
  #allocation1 [shape = 'u32[72,128]{1,0:T(1,128)}', space=vmem, size = 0x9000, scoped, tag = 'internal scratch']
  %s0 = inlined_call_operand.vmem [shape: bf16[2,64,64], index: 0, kind: input, shape index: {}]
  %s1 = inlined_call_operand.vmem [shape: bf16[64,16], index: 1, kind: input, shape index: {}]
  %s2 = inlined_call_operand.vmem [shape: f32[1,16], index: 2, kind: input, shape index: {}]
  %s3 = inlined_call_operand.vmem [shape: f32[1,16], index: 3, kind: input, shape index: {}]
  %s4 = inlined_call_operand.vmem [shape: f32[2,64,16], index: 4, kind: input, shape index: {}]
  %s5 = inlined_call_operand.vmem [shape: f32[2,64,16], index: 5, kind: output, shape index: {}]
  %s6 = sld [smem:[#allocation0]]
  $region53: #{glu_block_forward.12} parent=0
    _
  %s8 = ssub.s32 1, %s6
  %s9 = scalar_select 0, %s8, %s6
  loop: start=0, step=1, limit=4
  $region2: #{glu_block_forward.12} parent=0 // loop_pre_header
    _
  $region3: #{glu_block_forward.12} parent=0 // loop_header
    %s11 = sphi 0, %s15
    %p12 = scmp.ge.s32.totalorder %s11, 4
    %s21 = sphi 0, %s23
    %s24 = sphi 0, %s21
    %s25 = sphi 0, %s24
    %s41 = sphi 0, %s25
    %s45 = sphi 0, %s45
    %s47 = sphi 0, %s45
    %s48 = sphi 0, %s47
    %s62 = sphi 0, %s48
    %s66 = sphi 0, %s66
    %s68 = sphi 0, %s66
    %s69 = sphi 0, %s68
    %s83 = sphi 0, %s69
    %s87 = sphi 0, %s87
    %s89 = sphi 0, %s87
    %s90 = sphi 0, %s89
    %s104 = sphi 0, %s90
    %s110 = sphi 0, %s112
    %s113 = sphi 0, %s110
    %s114 = sphi 0, %s113
    %s130 = sphi 0, %s114
    %s136 = sphi 0, %s138
    %s139 = sphi 0, %s136
    %s140 = sphi 0, %s139
    %s156 = sphi 0, %s140
  $region4: #{glu_block_forward.12} parent=0 // loop_header_branch
    %14 = sbr.rel (%p12) target = $region8
  $region5: #{glu_block_forward.12} parent=0 // loop_body
    %s16 = ssub.s32 %s11, 1
    %s17 = ssub.s32 %s11, 2
    %s18 = sadd.s32 %s11, 1
    %s19 = ssub.s32 %s11, %s18
    %p20 = scmp.eq.s32.totalorder %s19, 0
    %s22 = sadd.s32 %s21, 1
    %s23 = scalar_select %p20, %s21, %s22
    %p26 = pneg %p20
    %p27 = scmp.eq.s32.totalorder %s11, 1
    %p28 = por %p26, %p27
    %p29 = scmp.ne.s32.totalorder %s21, %s24
    %p30 = scmp.eq.s32.totalorder %s11, 0
    %p31 = por %p29, %p30
    %p32 = scmp.ne.s32.totalorder %s21, %s24
    %p33 = scmp.eq.s32.totalorder %s16, 1
    %p34 = por %p32, %p33
    %p35 = scmp.ne.s32.totalorder %s24, %s25
    %p36 = scmp.eq.s32.totalorder %s16, 0
    %p37 = por %p35, %p36
    %p38 = scmp.ne.s32.totalorder %s24, %s25
    %p39 = scmp.eq.s32.totalorder %s17, 1
    %p40 = por %p38, %p39
    %p42 = scmp.ne.s32.totalorder %s25, %s41
    %p43 = scmp.eq.s32.totalorder %s17, 0
    %p44 = por %p42, %p43
    %s46 = sadd.s32 %s45, 1
    %p49 = scmp.eq.s32.totalorder %s11, 1
    %p50 = scmp.ne.s32.totalorder %s45, %s47
    %p51 = scmp.eq.s32.totalorder %s11, 0
    %p52 = por %p50, %p51
    %p53 = scmp.ne.s32.totalorder %s45, %s47
    %p54 = scmp.eq.s32.totalorder %s16, 1
    %p55 = por %p53, %p54
    %p56 = scmp.ne.s32.totalorder %s47, %s48
    %p57 = scmp.eq.s32.totalorder %s16, 0
    %p58 = por %p56, %p57
    %p59 = scmp.ne.s32.totalorder %s47, %s48
    %p60 = scmp.eq.s32.totalorder %s17, 1
    %p61 = por %p59, %p60
    %p63 = scmp.ne.s32.totalorder %s48, %s62
    %p64 = scmp.eq.s32.totalorder %s17, 0
    %p65 = por %p63, %p64
    %s67 = sadd.s32 %s66, 1
    %p70 = scmp.eq.s32.totalorder %s11, 1
    %p71 = scmp.ne.s32.totalorder %s66, %s68
    %p72 = scmp.eq.s32.totalorder %s11, 0
    %p73 = por %p71, %p72
    %p74 = scmp.ne.s32.totalorder %s66, %s68
    %p75 = scmp.eq.s32.totalorder %s16, 1
    %p76 = por %p74, %p75
    %p77 = scmp.ne.s32.totalorder %s68, %s69
    %p78 = scmp.eq.s32.totalorder %s16, 0
    %p79 = por %p77, %p78
    %p80 = scmp.ne.s32.totalorder %s68, %s69
    %p81 = scmp.eq.s32.totalorder %s17, 1
    %p82 = por %p80, %p81
    %p84 = scmp.ne.s32.totalorder %s69, %s83
    %p85 = scmp.eq.s32.totalorder %s17, 0
    %p86 = por %p84, %p85
    %s88 = sadd.s32 %s87, 1
    %p91 = scmp.eq.s32.totalorder %s11, 1
    %p92 = scmp.ne.s32.totalorder %s87, %s89
    %p93 = scmp.eq.s32.totalorder %s11, 0
    %p94 = por %p92, %p93
    %p95 = scmp.ne.s32.totalorder %s87, %s89
    %p96 = scmp.eq.s32.totalorder %s16, 1
    %p97 = por %p95, %p96
    %p98 = scmp.ne.s32.totalorder %s89, %s90
    %p99 = scmp.eq.s32.totalorder %s16, 0
    %p100 = por %p98, %p99
    %p101 = scmp.ne.s32.totalorder %s89, %s90
    %p102 = scmp.eq.s32.totalorder %s17, 1
    %p103 = por %p101, %p102
    %p105 = scmp.ne.s32.totalorder %s90, %s104
    %p106 = scmp.eq.s32.totalorder %s17, 0
    %p107 = por %p105, %p106
    %s108 = ssub.s32 %s11, %s18
    %p109 = scmp.eq.s32.totalorder %s108, 0
    %s111 = sadd.s32 %s110, 1
    %s112 = scalar_select %p109, %s110, %s111
    %p115 = pneg %p109
    %p116 = scmp.eq.s32.totalorder %s11, 1
    %p117 = por %p115, %p116
    %p118 = scmp.ne.s32.totalorder %s110, %s113
    %p119 = scmp.eq.s32.totalorder %s11, 0
    %p120 = por %p118, %p119
    %p121 = scmp.ne.s32.totalorder %s110, %s113
    %p122 = scmp.eq.s32.totalorder %s16, 1
    %p123 = por %p121, %p122
    %p124 = scmp.ne.s32.totalorder %s113, %s114
    %p125 = scmp.eq.s32.totalorder %s16, 0
    %p126 = por %p124, %p125
    %p127 = scmp.ne.s32.totalorder %s113, %s114
    %p128 = scmp.eq.s32.totalorder %s17, 1
    %p129 = por %p127, %p128
    %p131 = scmp.ne.s32.totalorder %s114, %s130
    %p132 = scmp.eq.s32.totalorder %s17, 0
    %p133 = por %p131, %p132
    %s134 = ssub.s32 %s11, %s18
    %p135 = scmp.eq.s32.totalorder %s134, 0
    %s137 = sadd.s32 %s136, 1
    %s138 = scalar_select %p135, %s136, %s137
    %p141 = pneg %p135
    %p142 = scmp.eq.s32.totalorder %s11, 1
    %p143 = por %p141, %p142
    %p144 = scmp.ne.s32.totalorder %s136, %s139
    %p145 = scmp.eq.s32.totalorder %s11, 0
    %p146 = por %p144, %p145
    %p147 = scmp.ne.s32.totalorder %s136, %s139
    %p148 = scmp.eq.s32.totalorder %s16, 1
    %p149 = por %p147, %p148
    %p150 = scmp.ne.s32.totalorder %s139, %s140
    %p151 = scmp.eq.s32.totalorder %s16, 0
    %p152 = por %p150, %p151
    %p153 = scmp.ne.s32.totalorder %s139, %s140
    %p154 = scmp.eq.s32.totalorder %s17, 1
    %p155 = por %p153, %p154
    %p157 = scmp.ne.s32.totalorder %s140, %s156
    %p158 = scmp.eq.s32.totalorder %s17, 0
    %p159 = por %p157, %p158
    %p160 = scmp.le.s32.totalorder 1, %s11
    %p161 = scmp.lt.s32.totalorder %s11, 3
    %p162 = pnand %p160, %p161
    %p163 = pneg %p162
    // Predicated region
    $region9: #{glu_block_forward.12} parent=5 // pred_check
      _
    $region10: #{glu_block_forward.12} parent=5 // pred_check_branch
      %165 = sbr.rel (%p162) target = $region12
    $region11: #{glu_block_forward.12} parent=5 // pred_region
      %s166 = ssub.s32 %s11, 1
      // Predicated region
      $region13: #{glu_block_forward.12} parent=11 // pred_check
        %p167 = pneg %p58
      $region14: #{glu_block_forward.12} parent=11 // pred_check_branch
        %169 = sbr.rel (%p167) target = $region16
      $region15: #{glu_block_forward.12} parent=11 // pred_region
        _
      $region16: #{glu_block_forward.12} parent=11 // pred_fallthru
        _
      // Predicated region
      $region17: #{glu_block_forward.12} parent=11 // pred_check
        %p170 = pneg %p79
      $region18: #{glu_block_forward.12} parent=11 // pred_check_branch
        %172 = sbr.rel (%p170) target = $region20
      $region19: #{glu_block_forward.12} parent=11 // pred_region
        _
      $region20: #{glu_block_forward.12} parent=11 // pred_fallthru
        _
      // Predicated region
      $region21: #{glu_block_forward.12} parent=11 // pred_check
        %p173 = pneg %p100
      $region22: #{glu_block_forward.12} parent=11 // pred_check_branch
        %175 = sbr.rel (%p173) target = $region24
      $region23: #{glu_block_forward.12} parent=11 // pred_region
        _
      $region24: #{glu_block_forward.12} parent=11 // pred_fallthru
        _
    $region12: #{glu_block_forward.12} parent=5 // pred_fallthru
      _
    %p176 = scmp.lt.s32.totalorder %s11, 2
    // Predicated region
    $region25: #{glu_block_forward.12} parent=5 // pred_check
      %p177 = pneg %p176
    $region26: #{glu_block_forward.12} parent=5 // pred_check_branch
      %179 = sbr.rel (%p177) target = $region28
    $region27: #{glu_block_forward.12} parent=5 // pred_region
      // Predicated region
      $region29: #{glu_block_forward.12} parent=27 // pred_check
        %p180 = pneg %p31
      $region30: #{glu_block_forward.12} parent=27 // pred_check_branch
        %182 = sbr.rel (%p180) target = $region32
      $region31: #{glu_block_forward.12} parent=27 // pred_region
        %p183 = scmp.lt.s32.totalorder %s11, 1
        %s184 = scalar_select %p183, %s11, 1
        %s185 = smul.addr %s184, 8
        %s186 = smul.addr %s185, 4
        %s187 = scalar_lea.vmem %s0, %s186
      $region32: #{glu_block_forward.12} parent=27 // pred_fallthru
        _
      // Predicated region
      $region33: #{glu_block_forward.12} parent=27 // pred_check
        %p188 = pneg %p120
      $region34: #{glu_block_forward.12} parent=27 // pred_check_branch
        %190 = sbr.rel (%p188) target = $region36
      $region35: #{glu_block_forward.12} parent=27 // pred_region
        %p191 = scmp.lt.s32.totalorder %s11, 1
        %s192 = scalar_select %p191, %s11, 1
        %s193 = smul.addr %s192, 8
        %s194 = smul.addr %s193, 8
        %s195 = scalar_lea.vmem %s4, %s194
      $region36: #{glu_block_forward.12} parent=27 // pred_fallthru
        _
    $region28: #{glu_block_forward.12} parent=5 // pred_fallthru
      _
    %p196 = scmp.le.s32.totalorder 1, %s11
    %p197 = scmp.lt.s32.totalorder %s11, 3
    %p198 = pnand %p196, %p197
    %p199 = pneg %p198
    // Predicated region
    $region37: #{glu_block_forward.12} parent=5 // pred_check
      _
    $region38: #{glu_block_forward.12} parent=5 // pred_check_branch
      %201 = sbr.rel (%p198) target = $region40
    $region39: #{glu_block_forward.12} parent=5 // pred_region
      %s202 = ssub.s32 %s11, 1
      %p203 = scmp.lt.s32.totalorder %s16, 1
      %s204 = scalar_select %p203, %s16, 1
      %s205 = smul.addr %s204, 8
      %s206 = smul.addr %s205, 4
      %s207 = scalar_lea.vmem %s0, %s206
      %p208 = pneg %p37
      %p209 = pneg %p34
      %p210 = pneg %p58
      %p211 = pneg %p55
      %p212 = pneg %p79
      %p213 = pneg %p76
      %p214 = pneg %p100
      %p215 = pneg %p97
      %p216 = scmp.lt.s32.totalorder %s16, 1
      %s217 = scalar_select %p216, %s16, 1
      %s218 = smul.addr %s217, 8
      %s219 = smul.addr %s218, 8
      %s220 = scalar_lea.vmem %s4, %s219
      %p221 = pneg %p126
      %p222 = pneg %p123
      %p223 = pneg %p152
      %p224 = pneg %p149
      %p225 = scmp.lt.s32.totalorder %s16, 1
      %s226 = scalar_select %p225, %s16, 1
      %s227 = smul.addr %s226, 8
      %s228 = smul.addr %s227, 8
      %s229 = scalar_lea.vmem %s5, %s228
      %p230 = scmp.lt.s32.totalorder %s16, 1
      %s231 = scalar_select %p230, %s16, 1
      %s232 = smul.addr %s231, 8
      %s233 = smul.addr %s232, 4
      %s234 = scalar_lea.vmem %s0, %s233
      %p235 = scmp.lt.s32.totalorder %s16, 1
      %s236 = scalar_select %p235, %s16, 1
      %s237 = smul.addr %s236, 8
      %s238 = smul.addr %s237, 8
      %s239 = scalar_lea.vmem %s4, %s238
      %p240 = scmp.lt.s32.totalorder %s16, 1
      %s241 = scalar_select %p240, %s16, 1
      %s242 = smul.addr %s241, 8
      %s243 = smul.addr %s242, 8
      %s244 = scalar_lea.vmem %s5, %s243
      %v246 = vld [vmem:[%s234] sm:$0xf]
      %v247 = vld [vmem:[%s234 + $0x4] sm:$0xf]
      %v248 = vld [vmem:[%s234 + $0x8] sm:$0xf]
      %v249 = vld [vmem:[%s234 + $0xc] sm:$0xf]
      %v250 = vld [vmem:[%s234 + $0x10] sm:$0xf]
      %v251 = vld [vmem:[%s234 + $0x14] sm:$0xf]
      %v252 = vld [vmem:[%s234 + $0x18] sm:$0xf]
      %v253 = vld [vmem:[%s234 + $0x1c] sm:$0xf]
      %v254 = vld [vmem:[%s1] sm:$0xf]
      %v255 = vld [vmem:[%s1 + $0x4] sm:$0xf]
      %v256 = vld [vmem:[%s1 + $0x8] sm:$0xf]
      %v257 = vld [vmem:[%s1 + $0xc] sm:$0xf]
      %v258 = vld [vmem:[%s1 + $0x10] sm:$0xf]
      %v259 = vld [vmem:[%s1 + $0x14] sm:$0xf]
      %v260 = vld [vmem:[%s1 + $0x18] sm:$0xf]
      %v261 = vld [vmem:[%s1 + $0x1c] sm:$0xf]
      %v270 = vunpack.c.l.b16 %v246
      %v271 = vunpack.c.l.b16 %v247
      %v272 = vunpack.c.l.b16 %v248
      %v273 = vunpack.c.l.b16 %v249
      %v274 = vunpack.c.l.b16 %v250
      %v275 = vunpack.c.l.b16 %v251
      %v276 = vunpack.c.l.b16 %v252
      %v277 = vunpack.c.l.b16 %v253
      %v278 = vpack.c.b16 %v271, %v270
      %v279 = vpack.c.b16 %v273, %v272
      %v280 = vpack.c.b16 %v275, %v274
      %v281 = vpack.c.b16 %v277, %v276
      %v290 = vunpack.c.l.b16 %v254
      %v291 = vunpack.c.l.b16 %v255
      %v292 = vunpack.c.l.b16 %v256
      %v293 = vunpack.c.l.b16 %v257
      %v294 = vunpack.c.l.b16 %v258
      %v295 = vunpack.c.l.b16 %v259
      %v296 = vunpack.c.l.b16 %v260
      %v297 = vunpack.c.l.b16 %v261
      %v298 = vpack.c.b16 %v291, %v290
      %v299 = vpack.c.b16 %v293, %v292
      %v300 = vpack.c.b16 %v295, %v294
      %v301 = vpack.c.b16 %v297, %v296
      %vm306 = vcmask 523264
      %v308 = vsel %vm306, %v278, 0
      %v311 = vsel %vm306, %v279, 0
      %v314 = vsel %vm306, %v280, 0
      %v317 = vsel %vm306, %v281, 0
      %319 = vmatpush.bf16.msra.mxu0 0
      %320 = vmatpush.bf16.msra.mxu0 0
      %321 = vmatpush.bf16.msra.mxu0 0
      %322 = vmatpush.bf16.msra.mxu0 0
      %323 = vmatpush.bf16.msra.mxu0 %v301
      %324 = vmatpush.bf16.msra.mxu0 %v300
      %325 = vmatpush.bf16.msra.mxu0 %v299
      %326 = vmatpush.bf16.msra.mxu0 %v298
      %327 = vmatmul.bf16.gmra.mxu0 %v308
      %v328 = vpop.f32.mrf.mxu0
      %v329 = vadd.f32 0.0, %v328
      %v330 = vpop.f32.mrf.mxu0
      %v331 = vadd.f32 0.0, %v330
      %332 = vmatmul.bf16.gmra.mxu0 %v311
      %v333 = vpop.f32.mrf.mxu0
      %v334 = vadd.f32 0.0, %v333
      %v335 = vpop.f32.mrf.mxu0
      %v336 = vadd.f32 0.0, %v335
      %337 = vmatmul.bf16.gmra.mxu0 %v314
      %v338 = vpop.f32.mrf.mxu0
      %v339 = vadd.f32 0.0, %v338
      %v340 = vpop.f32.mrf.mxu0
      %v341 = vadd.f32 0.0, %v340
      %342 = vmatmul.bf16.gmra.mxu0 %v317
      %v343 = vpop.f32.mrf.mxu0
      %v344 = vadd.f32 0.0, %v343
      %v345 = vpop.f32.mrf.mxu0
      %v346 = vadd.f32 0.0, %v345
      %347 = vdwg.mxu0
      %v348 = vld [vmem:[%s2] sm:$0x1]
      %v350 = vperm.slane %v348, 0
      %v352 = vmul.f32 %v329, %v350
      %v353 = vmul.f32 %v331, %v350
      %v354 = vmul.f32 %v334, %v350
      %v355 = vmul.f32 %v336, %v350
      %v356 = vmul.f32 %v339, %v350
      %v357 = vmul.f32 %v341, %v350
      %v358 = vmul.f32 %v344, %v350
      %v359 = vmul.f32 %v346, %v350
      %v360 = vld [vmem:[%s3] sm:$0x1]
      %v362 = vperm.slane %v360, 0
      %v364 = vadd.f32 %v352, %v362
      %v365 = vadd.f32 %v353, %v362
      %v366 = vadd.f32 %v354, %v362
      %v367 = vadd.f32 %v355, %v362
      %v368 = vadd.f32 %v356, %v362
      %v369 = vadd.f32 %v357, %v362
      %v370 = vadd.f32 %v358, %v362
      %v371 = vadd.f32 %v359, %v362
      %vm372 = vcmask 130048
      %v373 = vsel %vm372, %v364, 0.0
      %v374 = vsel %vm372, %v365, 0.0
      %v375 = vadd.f32 %v373, %v374
      %v376 = vsel %vm372, %v366, 0.0
      %v377 = vadd.f32 %v375, %v376
      %v378 = vsel %vm372, %v367, 0.0
      %v379 = vadd.f32 %v377, %v378
      %v380 = vsel %vm372, %v368, 0.0
      %v381 = vadd.f32 %v379, %v380
      %v382 = vsel %vm372, %v369, 0.0
      %v383 = vadd.f32 %v381, %v382
      %v384 = vsel %vm372, %v370, 0.0
      %v385 = vadd.f32 %v383, %v384
      %v386 = vsel %vm372, %v371, 0.0
      %v387 = vadd.f32 %v385, %v386
      %v388 = vrot.slane %v387, 4
      %v389 = vadd.f32 %v387, %v388
      %v390 = vrot.slane %v389, 2
      %v391 = vadd.f32 %v389, %v390
      %v392 = vrot.slane %v391, 1
      %v393 = vadd.f32 %v391, %v392
      %v394 = vrcp.pop 64.0
      %v395 = vmul.f32 64.0, %v394
      %v396 = vsub.f32 1.0, %v395
      %v397 = vmul.f32 %v394, %v396
      %v398 = vadd.f32 %v394, %v397
      %vm399 = vweird.f32 %v394
      %v400 = vsel %vm399, %v394, %v398
      %v401 = vmul.f32 %v393, %v400
      %v402 = vld [vmem:[%s239] sm:$0xff]
      %v403 = vld [vmem:[%s239 + $0x8] sm:$0xff]
      %v404 = vld [vmem:[%s239 + $0x10] sm:$0xff]
      %v405 = vld [vmem:[%s239 + $0x18] sm:$0xff]
      %v406 = vld [vmem:[%s239 + $0x20] sm:$0xff]
      %v407 = vld [vmem:[%s239 + $0x28] sm:$0xff]
      %v408 = vld [vmem:[%s239 + $0x30] sm:$0xff]
      %v409 = vld [vmem:[%s239 + $0x38] sm:$0xff]
      %v410 = vadd.f32 %v364, %v401
      %v411 = vadd.f32 %v365, %v401
      %v412 = vadd.f32 %v366, %v401
      %v413 = vadd.f32 %v367, %v401
      %v414 = vadd.f32 %v368, %v401
      %v415 = vadd.f32 %v369, %v401
      %v416 = vadd.f32 %v370, %v401
      %v417 = vadd.f32 %v371, %v401
      %v418 = vmul.f32 %v410, 0.5
      %v419 = vmul.f32 %v411, 0.5
      %v420 = vmul.f32 %v412, 0.5
      %v421 = vmul.f32 %v413, 0.5
      %v422 = vmul.f32 %v414, 0.5
      %v423 = vmul.f32 %v415, 0.5
      %v424 = vmul.f32 %v416, 0.5
      %v425 = vmul.f32 %v417, 0.5
      %v426 = vadd.f32 %v402, %v418
      %v427 = vadd.f32 %v403, %v419
      %v428 = vadd.f32 %v404, %v420
      %v429 = vadd.f32 %v405, %v421
      %v430 = vadd.f32 %v406, %v422
      %v431 = vadd.f32 %v407, %v423
      %v432 = vadd.f32 %v408, %v424
      %v433 = vadd.f32 %v409, %v425
      %434 = vst.msk [vmem:[%s244] sm:$0xff] %vm372, %v426
      %435 = vst.msk [vmem:[%s244 + $0x8] sm:$0xff] %vm372, %v427
      %436 = vst.msk [vmem:[%s244 + $0x10] sm:$0xff] %vm372, %v428
      %437 = vst.msk [vmem:[%s244 + $0x18] sm:$0xff] %vm372, %v429
      %438 = vst.msk [vmem:[%s244 + $0x20] sm:$0xff] %vm372, %v430
      %439 = vst.msk [vmem:[%s244 + $0x28] sm:$0xff] %vm372, %v431
      %440 = vst.msk [vmem:[%s244 + $0x30] sm:$0xff] %vm372, %v432
      %441 = vst.msk [vmem:[%s244 + $0x38] sm:$0xff] %vm372, %v433
      %p442 = scmp.lt.s32.totalorder %s16, 1
      %s443 = scalar_select %p442, %s16, 1
      %s444 = smul.addr %s443, 8
      %s445 = smul.addr %s444, 8
      %s446 = scalar_lea.vmem %s5, %s445
      // Predicated region
      $region41: #{glu_block_forward.12} parent=39 // pred_check
        %p447 = pneg %p149
      $region42: #{glu_block_forward.12} parent=39 // pred_check_branch
        %449 = sbr.rel (%p447) target = $region44
      $region43: #{glu_block_forward.12} parent=39 // pred_region
        _
      $region44: #{glu_block_forward.12} parent=39 // pred_fallthru
        _
    $region40: #{glu_block_forward.12} parent=5 // pred_fallthru
      _
    %p450 = scmp.le.s32.totalorder 2, %s11
    // Predicated region
    $region45: #{glu_block_forward.12} parent=5 // pred_check
      %p451 = pneg %p450
    $region46: #{glu_block_forward.12} parent=5 // pred_check_branch
      %453 = sbr.rel (%p451) target = $region48
    $region47: #{glu_block_forward.12} parent=5 // pred_region
      %s454 = ssub.s32 %s11, 2
      // Predicated region
      $region49: #{glu_block_forward.12} parent=47 // pred_check
        %p455 = pneg %p155
      $region50: #{glu_block_forward.12} parent=47 // pred_check_branch
        %457 = sbr.rel (%p455) target = $region52
      $region51: #{glu_block_forward.12} parent=47 // pred_region
        %p458 = scmp.lt.s32.totalorder %s17, 1
        %s459 = scalar_select %p458, %s17, 1
        %s460 = smul.addr %s459, 8
        %s461 = smul.addr %s460, 8
        %s462 = scalar_lea.vmem %s5, %s461
      $region52: #{glu_block_forward.12} parent=47 // pred_fallthru
        _
    $region48: #{glu_block_forward.12} parent=5 // pred_fallthru
      _
  $region6: #{glu_block_forward.12} parent=0 // loop_footer
    %s15 = sadd.s32 1, %s11
  $region7: #{glu_block_forward.12} parent=0 // loop_footer_branch
    %10 = sbr.rel target = $region3
  $region8: #{glu_block_forward.12} parent=0 // loop_exit
    _

// kernel: glu_block_forward.11
$region0: #{glu_block_forward.11}
  #allocation0 [shape = 'u32[]', space=smem, size = 0x4, offset = 0x4, fixed_abs, tag = 'smem constant byte address 0x4 - core index']
  #allocation1 [shape = 'u32[72,128]{1,0:T(1,128)}', space=vmem, size = 0x9000, scoped, tag = 'internal scratch']
  #allocation2 [shape = 'f32[10,10,64]{2,1,0:T(8,128)}', space=vmem, size = 0x14000, scoped, tag = 'scratch operand']
  %s0 = inlined_call_operand.vmem [shape: bf16[2,8,8,64], index: 0, kind: input, shape index: {}]
  %s1 = inlined_call_operand.vmem [shape: f32[9,64], index: 1, kind: input, shape index: {}]
  %s2 = inlined_call_operand.vmem [shape: f32[1,64], index: 2, kind: input, shape index: {}]
  %s3 = inlined_call_operand.vmem [shape: f32[1,64], index: 3, kind: input, shape index: {}]
  %s4 = inlined_call_operand.vmem [shape: bf16[2,8,8,64], index: 4, kind: output, shape index: {}]
  %s5 = sld [smem:[#allocation0]]
  $region49: #{glu_block_forward.11} parent=0
    _
  %s7 = ssub.s32 1, %s5
  %s8 = scalar_select 0, %s7, %s5
  loop: start=0, step=1, limit=4
  $region2: #{glu_block_forward.11} parent=0 // loop_pre_header
    _
  $region3: #{glu_block_forward.11} parent=0 // loop_header
    %s10 = sphi 0, %s14
    %p11 = scmp.ge.s32.totalorder %s10, 4
    %s20 = sphi 0, %s22
    %s23 = sphi 0, %s20
    %s24 = sphi 0, %s23
    %s40 = sphi 0, %s24
    %s44 = sphi 0, %s44
    %s46 = sphi 0, %s44
    %s47 = sphi 0, %s46
    %s61 = sphi 0, %s47
    %s65 = sphi 0, %s65
    %s67 = sphi 0, %s65
    %s68 = sphi 0, %s67
    %s82 = sphi 0, %s68
    %s86 = sphi 0, %s86
    %s88 = sphi 0, %s86
    %s89 = sphi 0, %s88
    %s103 = sphi 0, %s89
    %s109 = sphi 0, %s111
    %s112 = sphi 0, %s109
    %s113 = sphi 0, %s112
    %s129 = sphi 0, %s113
  $region4: #{glu_block_forward.11} parent=0 // loop_header_branch
    %13 = sbr.rel (%p11) target = $region8
  $region5: #{glu_block_forward.11} parent=0 // loop_body
    %s15 = ssub.s32 %s10, 1
    %s16 = ssub.s32 %s10, 2
    %s17 = sadd.s32 %s10, 1
    %s18 = ssub.s32 %s10, %s17
    %p19 = scmp.eq.s32.totalorder %s18, 0
    %s21 = sadd.s32 %s20, 1
    %s22 = scalar_select %p19, %s20, %s21
    %p25 = pneg %p19
    %p26 = scmp.eq.s32.totalorder %s10, 1
    %p27 = por %p25, %p26
    %p28 = scmp.ne.s32.totalorder %s20, %s23
    %p29 = scmp.eq.s32.totalorder %s10, 0
    %p30 = por %p28, %p29
    %p31 = scmp.ne.s32.totalorder %s20, %s23
    %p32 = scmp.eq.s32.totalorder %s15, 1
    %p33 = por %p31, %p32
    %p34 = scmp.ne.s32.totalorder %s23, %s24
    %p35 = scmp.eq.s32.totalorder %s15, 0
    %p36 = por %p34, %p35
    %p37 = scmp.ne.s32.totalorder %s23, %s24
    %p38 = scmp.eq.s32.totalorder %s16, 1
    %p39 = por %p37, %p38
    %p41 = scmp.ne.s32.totalorder %s24, %s40
    %p42 = scmp.eq.s32.totalorder %s16, 0
    %p43 = por %p41, %p42
    %s45 = sadd.s32 %s44, 1
    %p48 = scmp.eq.s32.totalorder %s10, 1
    %p49 = scmp.ne.s32.totalorder %s44, %s46
    %p50 = scmp.eq.s32.totalorder %s10, 0
    %p51 = por %p49, %p50
    %p52 = scmp.ne.s32.totalorder %s44, %s46
    %p53 = scmp.eq.s32.totalorder %s15, 1
    %p54 = por %p52, %p53
    %p55 = scmp.ne.s32.totalorder %s46, %s47
    %p56 = scmp.eq.s32.totalorder %s15, 0
    %p57 = por %p55, %p56
    %p58 = scmp.ne.s32.totalorder %s46, %s47
    %p59 = scmp.eq.s32.totalorder %s16, 1
    %p60 = por %p58, %p59
    %p62 = scmp.ne.s32.totalorder %s47, %s61
    %p63 = scmp.eq.s32.totalorder %s16, 0
    %p64 = por %p62, %p63
    %s66 = sadd.s32 %s65, 1
    %p69 = scmp.eq.s32.totalorder %s10, 1
    %p70 = scmp.ne.s32.totalorder %s65, %s67
    %p71 = scmp.eq.s32.totalorder %s10, 0
    %p72 = por %p70, %p71
    %p73 = scmp.ne.s32.totalorder %s65, %s67
    %p74 = scmp.eq.s32.totalorder %s15, 1
    %p75 = por %p73, %p74
    %p76 = scmp.ne.s32.totalorder %s67, %s68
    %p77 = scmp.eq.s32.totalorder %s15, 0
    %p78 = por %p76, %p77
    %p79 = scmp.ne.s32.totalorder %s67, %s68
    %p80 = scmp.eq.s32.totalorder %s16, 1
    %p81 = por %p79, %p80
    %p83 = scmp.ne.s32.totalorder %s68, %s82
    %p84 = scmp.eq.s32.totalorder %s16, 0
    %p85 = por %p83, %p84
    %s87 = sadd.s32 %s86, 1
    %p90 = scmp.eq.s32.totalorder %s10, 1
    %p91 = scmp.ne.s32.totalorder %s86, %s88
    %p92 = scmp.eq.s32.totalorder %s10, 0
    %p93 = por %p91, %p92
    %p94 = scmp.ne.s32.totalorder %s86, %s88
    %p95 = scmp.eq.s32.totalorder %s15, 1
    %p96 = por %p94, %p95
    %p97 = scmp.ne.s32.totalorder %s88, %s89
    %p98 = scmp.eq.s32.totalorder %s15, 0
    %p99 = por %p97, %p98
    %p100 = scmp.ne.s32.totalorder %s88, %s89
    %p101 = scmp.eq.s32.totalorder %s16, 1
    %p102 = por %p100, %p101
    %p104 = scmp.ne.s32.totalorder %s89, %s103
    %p105 = scmp.eq.s32.totalorder %s16, 0
    %p106 = por %p104, %p105
    %s107 = ssub.s32 %s10, %s17
    %p108 = scmp.eq.s32.totalorder %s107, 0
    %s110 = sadd.s32 %s109, 1
    %s111 = scalar_select %p108, %s109, %s110
    %p114 = pneg %p108
    %p115 = scmp.eq.s32.totalorder %s10, 1
    %p116 = por %p114, %p115
    %p117 = scmp.ne.s32.totalorder %s109, %s112
    %p118 = scmp.eq.s32.totalorder %s10, 0
    %p119 = por %p117, %p118
    %p120 = scmp.ne.s32.totalorder %s109, %s112
    %p121 = scmp.eq.s32.totalorder %s15, 1
    %p122 = por %p120, %p121
    %p123 = scmp.ne.s32.totalorder %s112, %s113
    %p124 = scmp.eq.s32.totalorder %s15, 0
    %p125 = por %p123, %p124
    %p126 = scmp.ne.s32.totalorder %s112, %s113
    %p127 = scmp.eq.s32.totalorder %s16, 1
    %p128 = por %p126, %p127
    %p130 = scmp.ne.s32.totalorder %s113, %s129
    %p131 = scmp.eq.s32.totalorder %s16, 0
    %p132 = por %p130, %p131
    %p133 = scmp.le.s32.totalorder 1, %s10
    %p134 = scmp.lt.s32.totalorder %s10, 3
    %p135 = pnand %p133, %p134
    %p136 = pneg %p135
    // Predicated region
    $region9: #{glu_block_forward.11} parent=5 // pred_check
      _
    $region10: #{glu_block_forward.11} parent=5 // pred_check_branch
      %138 = sbr.rel (%p135) target = $region12
    $region11: #{glu_block_forward.11} parent=5 // pred_region
      %s139 = ssub.s32 %s10, 1
      // Predicated region
      $region13: #{glu_block_forward.11} parent=11 // pred_check
        %p140 = pneg %p57
      $region14: #{glu_block_forward.11} parent=11 // pred_check_branch
        %142 = sbr.rel (%p140) target = $region16
      $region15: #{glu_block_forward.11} parent=11 // pred_region
        _
      $region16: #{glu_block_forward.11} parent=11 // pred_fallthru
        _
      // Predicated region
      $region17: #{glu_block_forward.11} parent=11 // pred_check
        %p143 = pneg %p78
      $region18: #{glu_block_forward.11} parent=11 // pred_check_branch
        %145 = sbr.rel (%p143) target = $region20
      $region19: #{glu_block_forward.11} parent=11 // pred_region
        _
      $region20: #{glu_block_forward.11} parent=11 // pred_fallthru
        _
      // Predicated region
      $region21: #{glu_block_forward.11} parent=11 // pred_check
        %p146 = pneg %p99
      $region22: #{glu_block_forward.11} parent=11 // pred_check_branch
        %148 = sbr.rel (%p146) target = $region24
      $region23: #{glu_block_forward.11} parent=11 // pred_region
        _
      $region24: #{glu_block_forward.11} parent=11 // pred_fallthru
        _
    $region12: #{glu_block_forward.11} parent=5 // pred_fallthru
      _
    %p149 = scmp.lt.s32.totalorder %s10, 2
    // Predicated region
    $region25: #{glu_block_forward.11} parent=5 // pred_check
      %p150 = pneg %p149
    $region26: #{glu_block_forward.11} parent=5 // pred_check_branch
      %152 = sbr.rel (%p150) target = $region28
    $region27: #{glu_block_forward.11} parent=5 // pred_region
      // Predicated region
      $region29: #{glu_block_forward.11} parent=27 // pred_check
        %p153 = pneg %p30
      $region30: #{glu_block_forward.11} parent=27 // pred_check_branch
        %155 = sbr.rel (%p153) target = $region32
      $region31: #{glu_block_forward.11} parent=27 // pred_region
        %p156 = scmp.lt.s32.totalorder %s10, 1
        %s157 = scalar_select %p156, %s10, 1
        %s158 = smul.addr %s157, 8
        %s159 = smul.addr %s158, 4
        %s160 = scalar_lea.vmem %s0, %s159
      $region32: #{glu_block_forward.11} parent=27 // pred_fallthru
        _
    $region28: #{glu_block_forward.11} parent=5 // pred_fallthru
      _
    %p161 = scmp.le.s32.totalorder 1, %s10
    %p162 = scmp.lt.s32.totalorder %s10, 3
    %p163 = pnand %p161, %p162
    %p164 = pneg %p163
    // Predicated region
    $region33: #{glu_block_forward.11} parent=5 // pred_check
      _
    $region34: #{glu_block_forward.11} parent=5 // pred_check_branch
      %166 = sbr.rel (%p163) target = $region36
    $region35: #{glu_block_forward.11} parent=5 // pred_region
      %s167 = ssub.s32 %s10, 1
      %p168 = scmp.lt.s32.totalorder %s15, 1
      %s169 = scalar_select %p168, %s15, 1
      %s170 = smul.addr %s169, 8
      %s171 = smul.addr %s170, 4
      %s172 = scalar_lea.vmem %s0, %s171
      %p173 = pneg %p36
      %p174 = pneg %p33
      %p175 = pneg %p57
      %p176 = pneg %p54
      %p177 = pneg %p78
      %p178 = pneg %p75
      %p179 = pneg %p99
      %p180 = pneg %p96
      %p181 = pneg %p125
      %p182 = pneg %p122
      %p183 = scmp.lt.s32.totalorder %s15, 1
      %s184 = scalar_select %p183, %s15, 1
      %s185 = smul.addr %s184, 8
      %s186 = smul.addr %s185, 4
      %s187 = scalar_lea.vmem %s4, %s186
      %p188 = scmp.lt.s32.totalorder %s15, 1
      %s189 = scalar_select %p188, %s15, 1
      %s190 = smul.addr %s189, 8
      %s191 = smul.addr %s190, 4
      %s192 = scalar_lea.vmem %s0, %s191
      %p193 = scmp.lt.s32.totalorder %s15, 1
      %s194 = scalar_select %p193, %s15, 1
      %s195 = smul.addr %s194, 8
      %s196 = smul.addr %s195, 4
      %s197 = scalar_lea.vmem %s4, %s196
      %vm198 = vcmask 523264
      %199 = vst.msk [vmem:[#allocation2] sm:$0xff] %vm198, 0.0
      %vm200 = vcmask 517120
      %201 = vst.msk [vmem:[#allocation2 + $0x8] sm:$0x3] %vm200, 0.0
      %202 = vst.msk [vmem:[#allocation2 + $0x10] sm:$0xff] %vm198, 0.0
      %203 = vst.msk [vmem:[#allocation2 + $0x18] sm:$0x3] %vm200, 0.0
      %204 = vst.msk [vmem:[#allocation2 + $0x20] sm:$0xff] %vm198, 0.0
      %205 = vst.msk [vmem:[#allocation2 + $0x28] sm:$0x3] %vm200, 0.0
      %206 = vst.msk [vmem:[#allocation2 + $0x30] sm:$0xff] %vm198, 0.0
      %207 = vst.msk [vmem:[#allocation2 + $0x38] sm:$0x3] %vm200, 0.0
      %208 = vst.msk [vmem:[#allocation2 + $0x40] sm:$0xff] %vm198, 0.0
      %209 = vst.msk [vmem:[#allocation2 + $0x48] sm:$0x3] %vm200, 0.0
      %210 = vst.msk [vmem:[#allocation2 + $0x50] sm:$0xff] %vm198, 0.0
      %211 = vst.msk [vmem:[#allocation2 + $0x58] sm:$0x3] %vm200, 0.0
      %212 = vst.msk [vmem:[#allocation2 + $0x60] sm:$0xff] %vm198, 0.0
      %213 = vst.msk [vmem:[#allocation2 + $0x68] sm:$0x3] %vm200, 0.0
      %214 = vst.msk [vmem:[#allocation2 + $0x70] sm:$0xff] %vm198, 0.0
      %215 = vst.msk [vmem:[#allocation2 + $0x78] sm:$0x3] %vm200, 0.0
      %216 = vst.msk [vmem:[#allocation2 + $0x80] sm:$0xff] %vm198, 0.0
      %217 = vst.msk [vmem:[#allocation2 + $0x88] sm:$0x3] %vm200, 0.0
      %218 = vst.msk [vmem:[#allocation2 + $0x90] sm:$0xff] %vm198, 0.0
      %219 = vst.msk [vmem:[#allocation2 + $0x98] sm:$0x3] %vm200, 0.0
      %v220 = vld [vmem:[%s192] sm:$0xf]
      %v221 = vld [vmem:[%s192 + $0x4] sm:$0xf]
      %v222 = vld [vmem:[%s192 + $0x8] sm:$0xf]
      %v223 = vld [vmem:[%s192 + $0xc] sm:$0xf]
      %v224 = vld [vmem:[%s192 + $0x10] sm:$0xf]
      %v225 = vld [vmem:[%s192 + $0x14] sm:$0xf]
      %v226 = vld [vmem:[%s192 + $0x18] sm:$0xf]
      %v227 = vld [vmem:[%s192 + $0x1c] sm:$0xf]
      %v228 = vunpack.c.l.bf16 %v220
      %v229 = vunpack.c.l.bf16 %v221
      %v230 = vunpack.c.l.bf16 %v222
      %v231 = vunpack.c.l.bf16 %v223
      %v232 = vunpack.c.l.bf16 %v224
      %v233 = vunpack.c.l.bf16 %v225
      %v234 = vunpack.c.l.bf16 %v226
      %v235 = vunpack.c.l.bf16 %v227
      %s236 = scalar_lea.vmem [#allocation2], 16
      %237 = vst.msk [vmem:[%s236 + $0x1] sm:$0xff] %vm198, %v228
      %238 = vst.msk [vmem:[%s236 + $0x11] sm:$0xff] %vm198, %v229
      %239 = vst.msk [vmem:[%s236 + $0x21] sm:$0xff] %vm198, %v230
      %240 = vst.msk [vmem:[%s236 + $0x31] sm:$0xff] %vm198, %v231
      %241 = vst.msk [vmem:[%s236 + $0x41] sm:$0xff] %vm198, %v232
      %242 = vst.msk [vmem:[%s236 + $0x51] sm:$0xff] %vm198, %v233
      %243 = vst.msk [vmem:[%s236 + $0x61] sm:$0xff] %vm198, %v234
      %244 = vst.msk [vmem:[%s236 + $0x71] sm:$0xff] %vm198, %v235
      %v245 = vld [vmem:[#allocation2] sm:$0xff]
      %v246 = vld [vmem:[#allocation2 + $0x8] sm:$0x3]
      %v247 = vld [vmem:[#allocation2 + $0x10] sm:$0xff]
      %v248 = vld [vmem:[#allocation2 + $0x18] sm:$0x3]
      %v249 = vld [vmem:[#allocation2 + $0x20] sm:$0xff]
      %v250 = vld [vmem:[#allocation2 + $0x28] sm:$0x3]
      %v251 = vld [vmem:[#allocation2 + $0x30] sm:$0xff]
      %v252 = vld [vmem:[#allocation2 + $0x38] sm:$0x3]
      %v253 = vld [vmem:[#allocation2 + $0x40] sm:$0xff]
      %v254 = vld [vmem:[#allocation2 + $0x48] sm:$0x3]
      %v255 = vld [vmem:[#allocation2 + $0x50] sm:$0xff]
      %v256 = vld [vmem:[#allocation2 + $0x58] sm:$0x3]
      %v257 = vld [vmem:[#allocation2 + $0x60] sm:$0xff]
      %v258 = vld [vmem:[#allocation2 + $0x68] sm:$0x3]
      %v259 = vld [vmem:[#allocation2 + $0x70] sm:$0xff]
      %v260 = vld [vmem:[#allocation2 + $0x78] sm:$0x3]
      %v261 = vld [vmem:[#allocation2 + $0x80] sm:$0xff]
      %v262 = vld [vmem:[#allocation2 + $0x88] sm:$0x3]
      %v263 = vld [vmem:[#allocation2 + $0x90] sm:$0xff]
      %v264 = vld [vmem:[#allocation2 + $0x98] sm:$0x3]
      %v265 = vld [vmem:[%s1] sm:$0xff]
      %v266 = vld [vmem:[%s1 + $0x8] sm:$0x1]
      %v267 = vperm.slane %v265, 0
      %v268 = vmul.f32 %v245, %v267
      %v269 = vmul.f32 %v247, %v267
      %v270 = vmul.f32 %v249, %v267
      %v271 = vmul.f32 %v251, %v267
      %v272 = vmul.f32 %v253, %v267
      %v273 = vmul.f32 %v255, %v267
      %v274 = vmul.f32 %v257, %v267
      %v275 = vmul.f32 %v259, %v267
      %v276 = vadd.f32 %v268, 0.0
      %v277 = vadd.f32 %v269, 0.0
      %v278 = vadd.f32 %v270, 0.0
      %v279 = vadd.f32 %v271, 0.0
      %v280 = vadd.f32 %v272, 0.0
      %v281 = vadd.f32 %v273, 0.0
      %v282 = vadd.f32 %v274, 0.0
      %v283 = vadd.f32 %v275, 0.0
      %v284 = vperm.slane %v265, 1
      %v285 = vmul.f32 %v245, %v284
      %v286 = vmul.f32 %v246, %v284
      %v287 = vmul.f32 %v247, %v284
      %v288 = vmul.f32 %v248, %v284
      %v289 = vmul.f32 %v249, %v284
      %v290 = vmul.f32 %v250, %v284
      %v291 = vmul.f32 %v251, %v284
      %v292 = vmul.f32 %v252, %v284
      %v293 = vmul.f32 %v253, %v284
      %v294 = vmul.f32 %v254, %v284
      %v295 = vmul.f32 %v255, %v284
      %v296 = vmul.f32 %v256, %v284
      %v297 = vmul.f32 %v257, %v284
      %v298 = vmul.f32 %v258, %v284
      %v299 = vmul.f32 %v259, %v284
      %v300 = vmul.f32 %v260, %v284
      %vm317 = vcmask 1046528
      %v318 = vrot.slane %v285, 1
      %v319 = vrot.slane %v286, 1
      %v320 = vsel %vm317, %v318, %v319
      %v321 = vrot.slane %v287, 1
      %v322 = vrot.slane %v288, 1
      %v323 = vsel %vm317, %v321, %v322
      %v324 = vrot.slane %v289, 1
      %v325 = vrot.slane %v290, 1
      %v326 = vsel %vm317, %v324, %v325
      %v327 = vrot.slane %v291, 1
      %v328 = vrot.slane %v292, 1
      %v329 = vsel %vm317, %v327, %v328
      %v330 = vrot.slane %v293, 1
      %v331 = vrot.slane %v294, 1
      %v332 = vsel %vm317, %v330, %v331
      %v333 = vrot.slane %v295, 1
      %v334 = vrot.slane %v296, 1
      %v335 = vsel %vm317, %v333, %v334
      %v336 = vrot.slane %v297, 1
      %v337 = vrot.slane %v298, 1
      %v338 = vsel %vm317, %v336, %v337
      %v339 = vrot.slane %v299, 1
      %v340 = vrot.slane %v300, 1
      %v341 = vsel %vm317, %v339, %v340
      %v350 = vadd.f32 %v276, %v320
      %v351 = vadd.f32 %v277, %v323
      %v352 = vadd.f32 %v278, %v326
      %v353 = vadd.f32 %v279, %v329
      %v354 = vadd.f32 %v280, %v332
      %v355 = vadd.f32 %v281, %v335
      %v356 = vadd.f32 %v282, %v338
      %v357 = vadd.f32 %v283, %v341
      %v358 = vperm.slane %v265, 2
      %v359 = vmul.f32 %v245, %v358
      %v360 = vmul.f32 %v246, %v358
      %v361 = vmul.f32 %v247, %v358
      %v362 = vmul.f32 %v248, %v358
      %v363 = vmul.f32 %v249, %v358
      %v364 = vmul.f32 %v250, %v358
      %v365 = vmul.f32 %v251, %v358
      %v366 = vmul.f32 %v252, %v358
      %v367 = vmul.f32 %v253, %v358
      %v368 = vmul.f32 %v254, %v358
      %v369 = vmul.f32 %v255, %v358
      %v370 = vmul.f32 %v256, %v358
      %v371 = vmul.f32 %v257, %v358
      %v372 = vmul.f32 %v258, %v358
      %v373 = vmul.f32 %v259, %v358
      %v374 = vmul.f32 %v260, %v358
      %vm391 = vcmask 1045504
      %v392 = vrot.slane %v359, 2
      %v393 = vrot.slane %v360, 2
      %v394 = vsel %vm391, %v392, %v393
      %v395 = vrot.slane %v361, 2
      %v396 = vrot.slane %v362, 2
      %v397 = vsel %vm391, %v395, %v396
      %v398 = vrot.slane %v363, 2
      %v399 = vrot.slane %v364, 2
      %v400 = vsel %vm391, %v398, %v399
      %v401 = vrot.slane %v365, 2
      %v402 = vrot.slane %v366, 2
      %v403 = vsel %vm391, %v401, %v402
      %v404 = vrot.slane %v367, 2
      %v405 = vrot.slane %v368, 2
      %v406 = vsel %vm391, %v404, %v405
      %v407 = vrot.slane %v369, 2
      %v408 = vrot.slane %v370, 2
      %v409 = vsel %vm391, %v407, %v408
      %v410 = vrot.slane %v371, 2
      %v411 = vrot.slane %v372, 2
      %v412 = vsel %vm391, %v410, %v411
      %v413 = vrot.slane %v373, 2
      %v414 = vrot.slane %v374, 2
      %v415 = vsel %vm391, %v413, %v414
      %v424 = vadd.f32 %v350, %v394
      %v425 = vadd.f32 %v351, %v397
      %v426 = vadd.f32 %v352, %v400
      %v427 = vadd.f32 %v353, %v403
      %v428 = vadd.f32 %v354, %v406
      %v429 = vadd.f32 %v355, %v409
      %v430 = vadd.f32 %v356, %v412
      %v431 = vadd.f32 %v357, %v415
      %v432 = vperm.slane %v265, 3
      %v433 = vmul.f32 %v247, %v432
      %v434 = vmul.f32 %v249, %v432
      %v435 = vmul.f32 %v251, %v432
      %v436 = vmul.f32 %v253, %v432
      %v437 = vmul.f32 %v255, %v432
      %v438 = vmul.f32 %v257, %v432
      %v439 = vmul.f32 %v259, %v432
      %v440 = vmul.f32 %v261, %v432
      %v441 = vadd.f32 %v424, %v433
      %v442 = vadd.f32 %v425, %v434
      %v443 = vadd.f32 %v426, %v435
      %v444 = vadd.f32 %v427, %v436
      %v445 = vadd.f32 %v428, %v437
      %v446 = vadd.f32 %v429, %v438
      %v447 = vadd.f32 %v430, %v439
      %v448 = vadd.f32 %v431, %v440
      %v449 = vperm.slane %v265, 4
      %v450 = vmul.f32 %v247, %v449
      %v451 = vmul.f32 %v248, %v449
      %v452 = vmul.f32 %v249, %v449
      %v453 = vmul.f32 %v250, %v449
      %v454 = vmul.f32 %v251, %v449
      %v455 = vmul.f32 %v252, %v449
      %v456 = vmul.f32 %v253, %v449
      %v457 = vmul.f32 %v254, %v449
      %v458 = vmul.f32 %v255, %v449
      %v459 = vmul.f32 %v256, %v449
      %v460 = vmul.f32 %v257, %v449
      %v461 = vmul.f32 %v258, %v449
      %v462 = vmul.f32 %v259, %v449
      %v463 = vmul.f32 %v260, %v449
      %v464 = vmul.f32 %v261, %v449
      %v465 = vmul.f32 %v262, %v449
      %v482 = vrot.slane %v450, 1
      %v483 = vrot.slane %v451, 1
      %v484 = vsel %vm317, %v482, %v483
      %v485 = vrot.slane %v452, 1
      %v486 = vrot.slane %v453, 1
      %v487 = vsel %vm317, %v485, %v486
      %v488 = vrot.slane %v454, 1
      %v489 = vrot.slane %v455, 1
      %v490 = vsel %vm317, %v488, %v489
      %v491 = vrot.slane %v456, 1
      %v492 = vrot.slane %v457, 1
      %v493 = vsel %vm317, %v491, %v492
      %v494 = vrot.slane %v458, 1
      %v495 = vrot.slane %v459, 1
      %v496 = vsel %vm317, %v494, %v495
      %v497 = vrot.slane %v460, 1
      %v498 = vrot.slane %v461, 1
      %v499 = vsel %vm317, %v497, %v498
      %v500 = vrot.slane %v462, 1
      %v501 = vrot.slane %v463, 1
      %v502 = vsel %vm317, %v500, %v501
      %v503 = vrot.slane %v464, 1
      %v504 = vrot.slane %v465, 1
      %v505 = vsel %vm317, %v503, %v504
      %v514 = vadd.f32 %v441, %v484
      %v515 = vadd.f32 %v442, %v487
      %v516 = vadd.f32 %v443, %v490
      %v517 = vadd.f32 %v444, %v493
      %v518 = vadd.f32 %v445, %v496
      %v519 = vadd.f32 %v446, %v499
      %v520 = vadd.f32 %v447, %v502
      %v521 = vadd.f32 %v448, %v505
      %v522 = vperm.slane %v265, 5
      %v523 = vmul.f32 %v247, %v522
      %v524 = vmul.f32 %v248, %v522
      %v525 = vmul.f32 %v249, %v522
      %v526 = vmul.f32 %v250, %v522
      %v527 = vmul.f32 %v251, %v522
      %v528 = vmul.f32 %v252, %v522
      %v529 = vmul.f32 %v253, %v522
      %v530 = vmul.f32 %v254, %v522
      %v531 = vmul.f32 %v255, %v522
      %v532 = vmul.f32 %v256, %v522
      %v533 = vmul.f32 %v257, %v522
      %v534 = vmul.f32 %v258, %v522
      %v535 = vmul.f32 %v259, %v522
      %v536 = vmul.f32 %v260, %v522
      %v537 = vmul.f32 %v261, %v522
      %v538 = vmul.f32 %v262, %v522
      %v555 = vrot.slane %v523, 2
      %v556 = vrot.slane %v524, 2
      %v557 = vsel %vm391, %v555, %v556
      %v558 = vrot.slane %v525, 2
      %v559 = vrot.slane %v526, 2
      %v560 = vsel %vm391, %v558, %v559
      %v561 = vrot.slane %v527, 2
      %v562 = vrot.slane %v528, 2
      %v563 = vsel %vm391, %v561, %v562
      %v564 = vrot.slane %v529, 2
      %v565 = vrot.slane %v530, 2
      %v566 = vsel %vm391, %v564, %v565
      %v567 = vrot.slane %v531, 2
      %v568 = vrot.slane %v532, 2
      %v569 = vsel %vm391, %v567, %v568
      %v570 = vrot.slane %v533, 2
      %v571 = vrot.slane %v534, 2
      %v572 = vsel %vm391, %v570, %v571
      %v573 = vrot.slane %v535, 2
      %v574 = vrot.slane %v536, 2
      %v575 = vsel %vm391, %v573, %v574
      %v576 = vrot.slane %v537, 2
      %v577 = vrot.slane %v538, 2
      %v578 = vsel %vm391, %v576, %v577
      %v587 = vadd.f32 %v514, %v557
      %v588 = vadd.f32 %v515, %v560
      %v589 = vadd.f32 %v516, %v563
      %v590 = vadd.f32 %v517, %v566
      %v591 = vadd.f32 %v518, %v569
      %v592 = vadd.f32 %v519, %v572
      %v593 = vadd.f32 %v520, %v575
      %v594 = vadd.f32 %v521, %v578
      %v595 = vperm.slane %v265, 6
      %v596 = vmul.f32 %v249, %v595
      %v597 = vmul.f32 %v251, %v595
      %v598 = vmul.f32 %v253, %v595
      %v599 = vmul.f32 %v255, %v595
      %v600 = vmul.f32 %v257, %v595
      %v601 = vmul.f32 %v259, %v595
      %v602 = vmul.f32 %v261, %v595
      %v603 = vmul.f32 %v263, %v595
      %v604 = vadd.f32 %v587, %v596
      %v605 = vadd.f32 %v588, %v597
      %v606 = vadd.f32 %v589, %v598
      %v607 = vadd.f32 %v590, %v599
      %v608 = vadd.f32 %v591, %v600
      %v609 = vadd.f32 %v592, %v601
      %v610 = vadd.f32 %v593, %v602
      %v611 = vadd.f32 %v594, %v603
      %v612 = vperm.slane %v265, 7
      %v613 = vmul.f32 %v249, %v612
      %v614 = vmul.f32 %v250, %v612
      %v615 = vmul.f32 %v251, %v612
      %v616 = vmul.f32 %v252, %v612
      %v617 = vmul.f32 %v253, %v612
      %v618 = vmul.f32 %v254, %v612
      %v619 = vmul.f32 %v255, %v612
      %v620 = vmul.f32 %v256, %v612
      %v621 = vmul.f32 %v257, %v612
      %v622 = vmul.f32 %v258, %v612
      %v623 = vmul.f32 %v259, %v612
      %v624 = vmul.f32 %v260, %v612
      %v625 = vmul.f32 %v261, %v612
      %v626 = vmul.f32 %v262, %v612
      %v627 = vmul.f32 %v263, %v612
      %v628 = vmul.f32 %v264, %v612
      %v645 = vrot.slane %v613, 1
      %v646 = vrot.slane %v614, 1
      %v647 = vsel %vm317, %v645, %v646
      %v648 = vrot.slane %v615, 1
      %v649 = vrot.slane %v616, 1
      %v650 = vsel %vm317, %v648, %v649
      %v651 = vrot.slane %v617, 1
      %v652 = vrot.slane %v618, 1
      %v653 = vsel %vm317, %v651, %v652
      %v654 = vrot.slane %v619, 1
      %v655 = vrot.slane %v620, 1
      %v656 = vsel %vm317, %v654, %v655
      %v657 = vrot.slane %v621, 1
      %v658 = vrot.slane %v622, 1
      %v659 = vsel %vm317, %v657, %v658
      %v660 = vrot.slane %v623, 1
      %v661 = vrot.slane %v624, 1
      %v662 = vsel %vm317, %v660, %v661
      %v663 = vrot.slane %v625, 1
      %v664 = vrot.slane %v626, 1
      %v665 = vsel %vm317, %v663, %v664
      %v666 = vrot.slane %v627, 1
      %v667 = vrot.slane %v628, 1
      %v668 = vsel %vm317, %v666, %v667
      %v677 = vadd.f32 %v604, %v647
      %v678 = vadd.f32 %v605, %v650
      %v679 = vadd.f32 %v606, %v653
      %v680 = vadd.f32 %v607, %v656
      %v681 = vadd.f32 %v608, %v659
      %v682 = vadd.f32 %v609, %v662
      %v683 = vadd.f32 %v610, %v665
      %v684 = vadd.f32 %v611, %v668
      %v685 = vperm.slane %v266, 0
      %v686 = vmul.f32 %v249, %v685
      %v687 = vmul.f32 %v250, %v685
      %v688 = vmul.f32 %v251, %v685
      %v689 = vmul.f32 %v252, %v685
      %v690 = vmul.f32 %v253, %v685
      %v691 = vmul.f32 %v254, %v685
      %v692 = vmul.f32 %v255, %v685
      %v693 = vmul.f32 %v256, %v685
      %v694 = vmul.f32 %v257, %v685
      %v695 = vmul.f32 %v258, %v685
      %v696 = vmul.f32 %v259, %v685
      %v697 = vmul.f32 %v260, %v685
      %v698 = vmul.f32 %v261, %v685
      %v699 = vmul.f32 %v262, %v685
      %v700 = vmul.f32 %v263, %v685
      %v701 = vmul.f32 %v264, %v685
      %v718 = vrot.slane %v686, 2
      %v719 = vrot.slane %v687, 2
      %v720 = vsel %vm391, %v718, %v719
      %v721 = vrot.slane %v688, 2
      %v722 = vrot.slane %v689, 2
      %v723 = vsel %vm391, %v721, %v722
      %v724 = vrot.slane %v690, 2
      %v725 = vrot.slane %v691, 2
      %v726 = vsel %vm391, %v724, %v725
      %v727 = vrot.slane %v692, 2
      %v728 = vrot.slane %v693, 2
      %v729 = vsel %vm391, %v727, %v728
      %v730 = vrot.slane %v694, 2
      %v731 = vrot.slane %v695, 2
      %v732 = vsel %vm391, %v730, %v731
      %v733 = vrot.slane %v696, 2
      %v734 = vrot.slane %v697, 2
      %v735 = vsel %vm391, %v733, %v734
      %v736 = vrot.slane %v698, 2
      %v737 = vrot.slane %v699, 2
      %v738 = vsel %vm391, %v736, %v737
      %v739 = vrot.slane %v700, 2
      %v740 = vrot.slane %v701, 2
      %v741 = vsel %vm391, %v739, %v740
      %v750 = vadd.f32 %v677, %v720
      %v751 = vadd.f32 %v678, %v723
      %v752 = vadd.f32 %v679, %v726
      %v753 = vadd.f32 %v680, %v729
      %v754 = vadd.f32 %v681, %v732
      %v755 = vadd.f32 %v682, %v735
      %v756 = vadd.f32 %v683, %v738
      %v757 = vadd.f32 %v684, %v741
      %v758 = vld [vmem:[%s2] sm:$0x1]
      %v760 = vperm.slane %v758, 0
      %v762 = vmul.f32 %v750, %v760
      %v763 = vmul.f32 %v751, %v760
      %v764 = vmul.f32 %v752, %v760
      %v765 = vmul.f32 %v753, %v760
      %v766 = vmul.f32 %v754, %v760
      %v767 = vmul.f32 %v755, %v760
      %v768 = vmul.f32 %v756, %v760
      %v769 = vmul.f32 %v757, %v760
      %v770 = vld [vmem:[%s3] sm:$0x1]
      %v772 = vperm.slane %v770, 0
      %v774 = vadd.f32 %v762, %v772
      %v775 = vadd.f32 %v763, %v772
      %v776 = vadd.f32 %v764, %v772
      %v777 = vadd.f32 %v765, %v772
      %v778 = vadd.f32 %v766, %v772
      %v779 = vadd.f32 %v767, %v772
      %v780 = vadd.f32 %v768, %v772
      %v781 = vadd.f32 %v769, %v772
      %v782 = vmul.f32 %v774, 0.5
      %v783 = vmul.f32 %v775, 0.5
      %v784 = vmul.f32 %v776, 0.5
      %v785 = vmul.f32 %v777, 0.5
      %v786 = vmul.f32 %v778, 0.5
      %v787 = vmul.f32 %v779, 0.5
      %v788 = vmul.f32 %v780, 0.5
      %v789 = vmul.f32 %v781, 0.5
      %v790 = vmul.f32 %v774, 0.70710677
      %v791 = vmul.f32 %v775, 0.70710677
      %v792 = vmul.f32 %v776, 0.70710677
      %v793 = vmul.f32 %v777, 0.70710677
      %v794 = vmul.f32 %v778, 0.70710677
      %v795 = vmul.f32 %v779, 0.70710677
      %v796 = vmul.f32 %v780, 0.70710677
      %v797 = vmul.f32 %v781, 0.70710677
      %v798 = vmul.f32 %v790, %v790
      %v799 = vmin.f32 16.0, %v798
      %v800 = vmul.f32 %v799, 2.1237322e-06
      %v801 = vadd.f32 %v800, 0.00028619796
      %v802 = vmul.f32 %v799, %v801
      %v803 = vadd.f32 %v802, 0.0036580483
      %v804 = vmul.f32 %v799, %v803
      %v805 = vadd.f32 %v804, 0.05243302
      %v806 = vmul.f32 %v799, %v805
      %v807 = vadd.f32 %v806, 0.18741608
      %v808 = vmul.f32 %v799, %v807
      %v809 = vadd.f32 %v808, 1.1283791
      %v810 = vmul.f32 %v790, %v809
      %v811 = vmul.f32 %v799, 3.8918573e-05
      %v812 = vadd.f32 %v811, 0.001143296
      %v813 = vmul.f32 %v799, %v812
      %v814 = vadd.f32 %v813, 0.014752088
      %v815 = vmul.f32 %v799, %v814
      %v816 = vadd.f32 %v815, 0.112945676
      %v817 = vmul.f32 %v799, %v816
      %v818 = vadd.f32 %v817, 0.4994258
      %v819 = vmul.f32 %v799, %v818
      %v820 = vadd.f32 %v819, 1.0
      %v821 = vrcp.pop %v820
      %v822 = vmul.f32 %v820, %v821
      %v823 = vsub.f32 1.0, %v822
      %v824 = vmul.f32 %v821, %v823
      %v825 = vadd.f32 %v821, %v824
      %vm826 = vweird.f32 %v820
      %vm827 = vweird.f32 %v821
      %vm828 = vmor %vm826, %vm827
      %v829 = vsel %vm828, %v821, %v825
      %v830 = vand.u32 2147483647, %v820
      %vm831 = vcmp.eq.f32.partialorder %v830, 8.507059e+37
      %v832 = vand.u32 %v820, 2147483648
      %v833 = vor.u32 1.1754944e-38, %v832
      %v834 = vsel %vm831, %v833, %v829
      %v835 = vmul.f32 %v810, %v834
      %v836 = vmin.f32 %v835, 1.0
      %v837 = vmax.f32 %v836, -1.0
      %v838 = vmul.f32 %v791, %v791
      %v839 = vmin.f32 16.0, %v838
      %v840 = vmul.f32 %v839, 2.1237322e-06
      %v841 = vadd.f32 %v840, 0.00028619796
      %v842 = vmul.f32 %v839, %v841
      %v843 = vadd.f32 %v842, 0.0036580483
      %v844 = vmul.f32 %v839, %v843
      %v845 = vadd.f32 %v844, 0.05243302
      %v846 = vmul.f32 %v839, %v845
      %v847 = vadd.f32 %v846, 0.18741608
      %v848 = vmul.f32 %v839, %v847
      %v849 = vadd.f32 %v848, 1.1283791
      %v850 = vmul.f32 %v791, %v849
      %v851 = vmul.f32 %v839, 3.8918573e-05
      %v852 = vadd.f32 %v851, 0.001143296
      %v853 = vmul.f32 %v839, %v852
      %v854 = vadd.f32 %v853, 0.014752088
      %v855 = vmul.f32 %v839, %v854
      %v856 = vadd.f32 %v855, 0.112945676
      %v857 = vmul.f32 %v839, %v856
      %v858 = vadd.f32 %v857, 0.4994258
      %v859 = vmul.f32 %v839, %v858
      %v860 = vadd.f32 %v859, 1.0
      %v861 = vrcp.pop %v860
      %v862 = vmul.f32 %v860, %v861
      %v863 = vsub.f32 1.0, %v862
      %v864 = vmul.f32 %v861, %v863
      %v865 = vadd.f32 %v861, %v864
      %vm866 = vweird.f32 %v860
      %vm867 = vweird.f32 %v861
      %vm868 = vmor %vm866, %vm867
      %v869 = vsel %vm868, %v861, %v865
      %v870 = vand.u32 2147483647, %v860
      %vm871 = vcmp.eq.f32.partialorder %v870, 8.507059e+37
      %v872 = vand.u32 %v860, 2147483648
      %v873 = vor.u32 1.1754944e-38, %v872
      %v874 = vsel %vm871, %v873, %v869
      %v875 = vmul.f32 %v850, %v874
      %v876 = vmin.f32 %v875, 1.0
      %v877 = vmax.f32 %v876, -1.0
      %v878 = vmul.f32 %v792, %v792
      %v879 = vmin.f32 16.0, %v878
      %v880 = vmul.f32 %v879, 2.1237322e-06
      %v881 = vadd.f32 %v880, 0.00028619796
      %v882 = vmul.f32 %v879, %v881
      %v883 = vadd.f32 %v882, 0.0036580483
      %v884 = vmul.f32 %v879, %v883
      %v885 = vadd.f32 %v884, 0.05243302
      %v886 = vmul.f32 %v879, %v885
      %v887 = vadd.f32 %v886, 0.18741608
      %v888 = vmul.f32 %v879, %v887
      %v889 = vadd.f32 %v888, 1.1283791
      %v890 = vmul.f32 %v792, %v889
      %v891 = vmul.f32 %v879, 3.8918573e-05
      %v892 = vadd.f32 %v891, 0.001143296
      %v893 = vmul.f32 %v879, %v892
      %v894 = vadd.f32 %v893, 0.014752088
      %v895 = vmul.f32 %v879, %v894
      %v896 = vadd.f32 %v895, 0.112945676
      %v897 = vmul.f32 %v879, %v896
      %v898 = vadd.f32 %v897, 0.4994258
      %v899 = vmul.f32 %v879, %v898
      %v900 = vadd.f32 %v899, 1.0
      %v901 = vrcp.pop %v900
      %v902 = vmul.f32 %v900, %v901
      %v903 = vsub.f32 1.0, %v902
      %v904 = vmul.f32 %v901, %v903
      %v905 = vadd.f32 %v901, %v904
      %vm906 = vweird.f32 %v900
      %vm907 = vweird.f32 %v901
      %vm908 = vmor %vm906, %vm907
      %v909 = vsel %vm908, %v901, %v905
      %v910 = vand.u32 2147483647, %v900
      %vm911 = vcmp.eq.f32.partialorder %v910, 8.507059e+37
      %v912 = vand.u32 %v900, 2147483648
      %v913 = vor.u32 1.1754944e-38, %v912
      %v914 = vsel %vm911, %v913, %v909
      %v915 = vmul.f32 %v890, %v914
      %v916 = vmin.f32 %v915, 1.0
      %v917 = vmax.f32 %v916, -1.0
      %v918 = vmul.f32 %v793, %v793
      %v919 = vmin.f32 16.0, %v918
      %v920 = vmul.f32 %v919, 2.1237322e-06
      %v921 = vadd.f32 %v920, 0.00028619796
      %v922 = vmul.f32 %v919, %v921
      %v923 = vadd.f32 %v922, 0.0036580483
      %v924 = vmul.f32 %v919, %v923
      %v925 = vadd.f32 %v924, 0.05243302
      %v926 = vmul.f32 %v919, %v925
      %v927 = vadd.f32 %v926, 0.18741608
      %v928 = vmul.f32 %v919, %v927
      %v929 = vadd.f32 %v928, 1.1283791
      %v930 = vmul.f32 %v793, %v929
      %v931 = vmul.f32 %v919, 3.8918573e-05
      %v932 = vadd.f32 %v931, 0.001143296
      %v933 = vmul.f32 %v919, %v932
      %v934 = vadd.f32 %v933, 0.014752088
      %v935 = vmul.f32 %v919, %v934
      %v936 = vadd.f32 %v935, 0.112945676
      %v937 = vmul.f32 %v919, %v936
      %v938 = vadd.f32 %v937, 0.4994258
      %v939 = vmul.f32 %v919, %v938
      %v940 = vadd.f32 %v939, 1.0
      %v941 = vrcp.pop %v940
      %v942 = vmul.f32 %v940, %v941
      %v943 = vsub.f32 1.0, %v942
      %v944 = vmul.f32 %v941, %v943
      %v945 = vadd.f32 %v941, %v944
      %vm946 = vweird.f32 %v940
      %vm947 = vweird.f32 %v941
      %vm948 = vmor %vm946, %vm947
      %v949 = vsel %vm948, %v941, %v945
      %v950 = vand.u32 2147483647, %v940
      %vm951 = vcmp.eq.f32.partialorder %v950, 8.507059e+37
      %v952 = vand.u32 %v940, 2147483648
      %v953 = vor.u32 1.1754944e-38, %v952
      %v954 = vsel %vm951, %v953, %v949
      %v955 = vmul.f32 %v930, %v954
      %v956 = vmin.f32 %v955, 1.0
      %v957 = vmax.f32 %v956, -1.0
      %v958 = vmul.f32 %v794, %v794
      %v959 = vmin.f32 16.0, %v958
      %v960 = vmul.f32 %v959, 2.1237322e-06
      %v961 = vadd.f32 %v960, 0.00028619796
      %v962 = vmul.f32 %v959, %v961
      %v963 = vadd.f32 %v962, 0.0036580483
      %v964 = vmul.f32 %v959, %v963
      %v965 = vadd.f32 %v964, 0.05243302
      %v966 = vmul.f32 %v959, %v965
      %v967 = vadd.f32 %v966, 0.18741608
      %v968 = vmul.f32 %v959, %v967
      %v969 = vadd.f32 %v968, 1.1283791
      %v970 = vmul.f32 %v794, %v969
      %v971 = vmul.f32 %v959, 3.8918573e-05
      %v972 = vadd.f32 %v971, 0.001143296
      %v973 = vmul.f32 %v959, %v972
      %v974 = vadd.f32 %v973, 0.014752088
      %v975 = vmul.f32 %v959, %v974
      %v976 = vadd.f32 %v975, 0.112945676
      %v977 = vmul.f32 %v959, %v976
      %v978 = vadd.f32 %v977, 0.4994258
      %v979 = vmul.f32 %v959, %v978
      %v980 = vadd.f32 %v979, 1.0
      %v981 = vrcp.pop %v980
      %v982 = vmul.f32 %v980, %v981
      %v983 = vsub.f32 1.0, %v982
      %v984 = vmul.f32 %v981, %v983
      %v985 = vadd.f32 %v981, %v984
      %vm986 = vweird.f32 %v980
      %vm987 = vweird.f32 %v981
      %vm988 = vmor %vm986, %vm987
      %v989 = vsel %vm988, %v981, %v985
      %v990 = vand.u32 2147483647, %v980
      %vm991 = vcmp.eq.f32.partialorder %v990, 8.507059e+37
      %v992 = vand.u32 %v980, 2147483648
      %v993 = vor.u32 1.1754944e-38, %v992
      %v994 = vsel %vm991, %v993, %v989
      %v995 = vmul.f32 %v970, %v994
      %v996 = vmin.f32 %v995, 1.0
      %v997 = vmax.f32 %v996, -1.0
      %v998 = vmul.f32 %v795, %v795
      %v999 = vmin.f32 16.0, %v998
      %v1000 = vmul.f32 %v999, 2.1237322e-06
      %v1001 = vadd.f32 %v1000, 0.00028619796
      %v1002 = vmul.f32 %v999, %v1001
      %v1003 = vadd.f32 %v1002, 0.0036580483
      %v1004 = vmul.f32 %v999, %v1003
      %v1005 = vadd.f32 %v1004, 0.05243302
      %v1006 = vmul.f32 %v999, %v1005
      %v1007 = vadd.f32 %v1006, 0.18741608
      %v1008 = vmul.f32 %v999, %v1007
      %v1009 = vadd.f32 %v1008, 1.1283791
      %v1010 = vmul.f32 %v795, %v1009
      %v1011 = vmul.f32 %v999, 3.8918573e-05
      %v1012 = vadd.f32 %v1011, 0.001143296
      %v1013 = vmul.f32 %v999, %v1012
      %v1014 = vadd.f32 %v1013, 0.014752088
      %v1015 = vmul.f32 %v999, %v1014
      %v1016 = vadd.f32 %v1015, 0.112945676
      %v1017 = vmul.f32 %v999, %v1016
      %v1018 = vadd.f32 %v1017, 0.4994258
      %v1019 = vmul.f32 %v999, %v1018
      %v1020 = vadd.f32 %v1019, 1.0
      %v1021 = vrcp.pop %v1020
      %v1022 = vmul.f32 %v1020, %v1021
      %v1023 = vsub.f32 1.0, %v1022
      %v1024 = vmul.f32 %v1021, %v1023
      %v1025 = vadd.f32 %v1021, %v1024
      %vm1026 = vweird.f32 %v1020
      %vm1027 = vweird.f32 %v1021
      %vm1028 = vmor %vm1026, %vm1027
      %v1029 = vsel %vm1028, %v1021, %v1025
      %v1030 = vand.u32 2147483647, %v1020
      %vm1031 = vcmp.eq.f32.partialorder %v1030, 8.507059e+37
      %v1032 = vand.u32 %v1020, 2147483648
      %v1033 = vor.u32 1.1754944e-38, %v1032
      %v1034 = vsel %vm1031, %v1033, %v1029
      %v1035 = vmul.f32 %v1010, %v1034
      %v1036 = vmin.f32 %v1035, 1.0
      %v1037 = vmax.f32 %v1036, -1.0
      %v1038 = vmul.f32 %v796, %v796
      %v1039 = vmin.f32 16.0, %v1038
      %v1040 = vmul.f32 %v1039, 2.1237322e-06
      %v1041 = vadd.f32 %v1040, 0.00028619796
      %v1042 = vmul.f32 %v1039, %v1041
      %v1043 = vadd.f32 %v1042, 0.0036580483
      %v1044 = vmul.f32 %v1039, %v1043
      %v1045 = vadd.f32 %v1044, 0.05243302
      %v1046 = vmul.f32 %v1039, %v1045
      %v1047 = vadd.f32 %v1046, 0.18741608
      %v1048 = vmul.f32 %v1039, %v1047
      %v1049 = vadd.f32 %v1048, 1.1283791
      %v1050 = vmul.f32 %v796, %v1049
      %v1051 = vmul.f32 %v1039, 3.8918573e-05
      %v1052 = vadd.f32 %v1051, 0.001143296
      %v1053 = vmul.f32 %v1039, %v1052
      %v1054 = vadd.f32 %v1053, 0.014752088
      %v1055 = vmul.f32 %v1039, %v1054
      %v1056 = vadd.f32 %v1055, 0.112945676
      %v1057 = vmul.f32 %v1039, %v1056
      %v1058 = vadd.f32 %v1057, 0.4994258
      %v1059 = vmul.f32 %v1039, %v1058
      %v1060 = vadd.f32 %v1059, 1.0
      %v1061 = vrcp.pop %v1060
      %v1062 = vmul.f32 %v1060, %v1061
      %v1063 = vsub.f32 1.0, %v1062
      %v1064 = vmul.f32 %v1061, %v1063
      %v1065 = vadd.f32 %v1061, %v1064
      %vm1066 = vweird.f32 %v1060
      %vm1067 = vweird.f32 %v1061
      %vm1068 = vmor %vm1066, %vm1067
      %v1069 = vsel %vm1068, %v1061, %v1065
      %v1070 = vand.u32 2147483647, %v1060
      %vm1071 = vcmp.eq.f32.partialorder %v1070, 8.507059e+37
      %v1072 = vand.u32 %v1060, 2147483648
      %v1073 = vor.u32 1.1754944e-38, %v1072
      %v1074 = vsel %vm1071, %v1073, %v1069
      %v1075 = vmul.f32 %v1050, %v1074
      %v1076 = vmin.f32 %v1075, 1.0
      %v1077 = vmax.f32 %v1076, -1.0
      %v1078 = vmul.f32 %v797, %v797
      %v1079 = vmin.f32 16.0, %v1078
      %v1080 = vmul.f32 %v1079, 2.1237322e-06
      %v1081 = vadd.f32 %v1080, 0.00028619796
      %v1082 = vmul.f32 %v1079, %v1081
      %v1083 = vadd.f32 %v1082, 0.0036580483
      %v1084 = vmul.f32 %v1079, %v1083
      %v1085 = vadd.f32 %v1084, 0.05243302
      %v1086 = vmul.f32 %v1079, %v1085
      %v1087 = vadd.f32 %v1086, 0.18741608
      %v1088 = vmul.f32 %v1079, %v1087
      %v1089 = vadd.f32 %v1088, 1.1283791
      %v1090 = vmul.f32 %v797, %v1089
      %v1091 = vmul.f32 %v1079, 3.8918573e-05
      %v1092 = vadd.f32 %v1091, 0.001143296
      %v1093 = vmul.f32 %v1079, %v1092
      %v1094 = vadd.f32 %v1093, 0.014752088
      %v1095 = vmul.f32 %v1079, %v1094
      %v1096 = vadd.f32 %v1095, 0.112945676
      %v1097 = vmul.f32 %v1079, %v1096
      %v1098 = vadd.f32 %v1097, 0.4994258
      %v1099 = vmul.f32 %v1079, %v1098
      %v1100 = vadd.f32 %v1099, 1.0
      %v1101 = vrcp.pop %v1100
      %v1102 = vmul.f32 %v1100, %v1101
      %v1103 = vsub.f32 1.0, %v1102
      %v1104 = vmul.f32 %v1101, %v1103
      %v1105 = vadd.f32 %v1101, %v1104
      %vm1106 = vweird.f32 %v1100
      %vm1107 = vweird.f32 %v1101
      %vm1108 = vmor %vm1106, %vm1107
      %v1109 = vsel %vm1108, %v1101, %v1105
      %v1110 = vand.u32 2147483647, %v1100
      %vm1111 = vcmp.eq.f32.partialorder %v1110, 8.507059e+37
      %v1112 = vand.u32 %v1100, 2147483648
      %v1113 = vor.u32 1.1754944e-38, %v1112
      %v1114 = vsel %vm1111, %v1113, %v1109
      %v1115 = vmul.f32 %v1090, %v1114
      %v1116 = vmin.f32 %v1115, 1.0
      %v1117 = vmax.f32 %v1116, -1.0
      %v1118 = vadd.f32 %v837, 1.0
      %v1119 = vadd.f32 %v877, 1.0
      %v1120 = vadd.f32 %v917, 1.0
      %v1121 = vadd.f32 %v957, 1.0
      %v1122 = vadd.f32 %v997, 1.0
      %v1123 = vadd.f32 %v1037, 1.0
      %v1124 = vadd.f32 %v1077, 1.0
      %v1125 = vadd.f32 %v1117, 1.0
      %v1126 = vmul.f32 %v782, %v1118
      %v1127 = vmul.f32 %v783, %v1119
      %v1128 = vmul.f32 %v784, %v1120
      %v1129 = vmul.f32 %v785, %v1121
      %v1130 = vmul.f32 %v786, %v1122
      %v1131 = vmul.f32 %v787, %v1123
      %v1132 = vmul.f32 %v788, %v1124
      %v1133 = vmul.f32 %v789, %v1125
      %v1134 = vpack.c.bf16 %v1126, %v1126
      %v1135 = vpack.c.bf16 %v1127, %v1127
      %v1136 = vpack.c.bf16 %v1128, %v1128
      %v1137 = vpack.c.bf16 %v1129, %v1129
      %v1138 = vpack.c.bf16 %v1130, %v1130
      %v1139 = vpack.c.bf16 %v1131, %v1131
      %v1140 = vpack.c.bf16 %v1132, %v1132
      %v1141 = vpack.c.bf16 %v1133, %v1133
      %vm1142 = vcmask 519168
      %1143 = vst.msk [vmem:[%s197] sm:$0xf] %vm1142, %v1134
      %1144 = vst.msk [vmem:[%s197 + $0x4] sm:$0xf] %vm1142, %v1135
      %1145 = vst.msk [vmem:[%s197 + $0x8] sm:$0xf] %vm1142, %v1136
      %1146 = vst.msk [vmem:[%s197 + $0xc] sm:$0xf] %vm1142, %v1137
      %1147 = vst.msk [vmem:[%s197 + $0x10] sm:$0xf] %vm1142, %v1138
      %1148 = vst.msk [vmem:[%s197 + $0x14] sm:$0xf] %vm1142, %v1139
      %1149 = vst.msk [vmem:[%s197 + $0x18] sm:$0xf] %vm1142, %v1140
      %1150 = vst.msk [vmem:[%s197 + $0x1c] sm:$0xf] %vm1142, %v1141
      %p1151 = scmp.lt.s32.totalorder %s15, 1
      %s1152 = scalar_select %p1151, %s15, 1
      %s1153 = smul.addr %s1152, 8
      %s1154 = smul.addr %s1153, 4
      %s1155 = scalar_lea.vmem %s4, %s1154
      // Predicated region
      $region37: #{glu_block_forward.11} parent=35 // pred_check
        %p1156 = pneg %p122
      $region38: #{glu_block_forward.11} parent=35 // pred_check_branch
        %1158 = sbr.rel (%p1156) target = $region40
      $region39: #{glu_block_forward.11} parent=35 // pred_region
        _
      $region40: #{glu_block_forward.11} parent=35 // pred_fallthru
        _
    $region36: #{glu_block_forward.11} parent=5 // pred_fallthru
      _
    %p1159 = scmp.le.s32.totalorder 2, %s10
    // Predicated region
    $region41: #{glu_block_forward.11} parent=5 // pred_check
      %p1160 = pneg %p1159
    $region42: #{glu_block_forward.11} parent=5 // pred_check_branch
      %1162 = sbr.rel (%p1160) target = $region44
    $region43: #{glu_block_forward.11} parent=5 // pred_region
      %s1163 = ssub.s32 %s10, 2
      // Predicated region
      $region45: #{glu_block_forward.11} parent=43 // pred_check
        %p1164 = pneg %p128
      $region46: #{glu_block_forward.11} parent=43 // pred_check_branch
        %1166 = sbr.rel (%p1164) target = $region48
      $region47: #{glu_block_forward.11} parent=43 // pred_region
        %p1167 = scmp.lt.s32.totalorder %s16, 1
        %s1168 = scalar_select %p1167, %s16, 1
        %s1169 = smul.addr %s1168, 8
        %s1170 = smul.addr %s1169, 4
        %s1171 = scalar_lea.vmem %s4, %s1170
      $region48: #{glu_block_forward.11} parent=43 // pred_fallthru
        _
    $region44: #{glu_block_forward.11} parent=5 // pred_fallthru
      _
  $region6: #{glu_block_forward.11} parent=0 // loop_footer
    %s14 = sadd.s32 1, %s10
  $region7: #{glu_block_forward.11} parent=0 // loop_footer_branch
    %9 = sbr.rel target = $region3
  $region8: #{glu_block_forward.11} parent=0 // loop_exit
    _

// kernel: glu_block_forward.15
$region0: #{glu_block_forward.15}
  #allocation0 [shape = 'u32[]', space=smem, size = 0x4, offset = 0x4, fixed_abs, tag = 'smem constant byte address 0x4 - core index']
  #allocation1 [shape = 'u32[72,128]{1,0:T(1,128)}', space=vmem, size = 0x9000, scoped, tag = 'internal scratch']
  %s0 = inlined_call_operand.vmem [shape: bf16[128,64], index: 0, kind: input, shape index: {}]
  %s1 = inlined_call_operand.vmem [shape: bf16[64,16], index: 1, kind: input, shape index: {}]
  %s2 = inlined_call_operand.vmem [shape: f32[128,16], index: 2, kind: input, shape index: {}]
  %s3 = inlined_call_operand.hbm [shape: f32[128,16], index: 3, kind: output, shape index: {}]
  %s4 = sld [smem:[#allocation0]]
  $region22: #{glu_block_forward.15} parent=0
    _
  %s6 = ssub.s32 1, %s4
  %s7 = scalar_select 0, %s6, %s4
  $region1: #{glu_block_forward.15} parent=0
    #allocation2 [shape = 'u8[65536]{0}', space=vmem, size = 0x10000, scoped, tag = 'output window, operand 0, single buffered']
    #allocation3 [shape = 's32[1]{0}', space=sflag, size = 0x4, scoped, tag = 'scoped memory for glu_block_forward.15']
    %8 = vsyncpa [#allocation3], 0
    // Predicated region
    $region2: #{glu_block_forward.15} parent=1 // pred_check
      _
    $region3: #{glu_block_forward.15} parent=1 // pred_check_branch
      %10 = sbr.rel (0) target = $region5
    $region4: #{glu_block_forward.15} parent=1 // pred_region
      _
    $region5: #{glu_block_forward.15} parent=1 // pred_fallthru
      _
    // Predicated region
    $region6: #{glu_block_forward.15} parent=1 // pred_check
      _
    $region7: #{glu_block_forward.15} parent=1 // pred_check_branch
      %12 = sbr.rel (0) target = $region9
    $region8: #{glu_block_forward.15} parent=1 // pred_region
      _
    $region9: #{glu_block_forward.15} parent=1 // pred_fallthru
      _
    // Predicated region
    $region10: #{glu_block_forward.15} parent=1 // pred_check
      _
    $region11: #{glu_block_forward.15} parent=1 // pred_check_branch
      %14 = sbr.rel (0) target = $region13
    $region12: #{glu_block_forward.15} parent=1 // pred_region
      _
    $region13: #{glu_block_forward.15} parent=1 // pred_fallthru
      _
    %v16 = vld [vmem:[%s0] sm:$0xf]
    %v17 = vld [vmem:[%s0 + $0x4] sm:$0xf]
    %v18 = vld [vmem:[%s0 + $0x8] sm:$0xf]
    %v19 = vld [vmem:[%s0 + $0xc] sm:$0xf]
    %v20 = vld [vmem:[%s0 + $0x10] sm:$0xf]
    %v21 = vld [vmem:[%s0 + $0x14] sm:$0xf]
    %v22 = vld [vmem:[%s0 + $0x18] sm:$0xf]
    %v23 = vld [vmem:[%s0 + $0x1c] sm:$0xf]
    %v24 = vld [vmem:[%s0 + $0x20] sm:$0xf]
    %v25 = vld [vmem:[%s0 + $0x24] sm:$0xf]
    %v26 = vld [vmem:[%s0 + $0x28] sm:$0xf]
    %v27 = vld [vmem:[%s0 + $0x2c] sm:$0xf]
    %v28 = vld [vmem:[%s0 + $0x30] sm:$0xf]
    %v29 = vld [vmem:[%s0 + $0x34] sm:$0xf]
    %v30 = vld [vmem:[%s0 + $0x38] sm:$0xf]
    %v31 = vld [vmem:[%s0 + $0x3c] sm:$0xf]
    %v32 = vld [vmem:[%s1] sm:$0xf]
    %v33 = vld [vmem:[%s1 + $0x4] sm:$0xf]
    %v34 = vld [vmem:[%s1 + $0x8] sm:$0xf]
    %v35 = vld [vmem:[%s1 + $0xc] sm:$0xf]
    %v36 = vld [vmem:[%s1 + $0x10] sm:$0xf]
    %v37 = vld [vmem:[%s1 + $0x14] sm:$0xf]
    %v38 = vld [vmem:[%s1 + $0x18] sm:$0xf]
    %v39 = vld [vmem:[%s1 + $0x1c] sm:$0xf]
    %v56 = vunpack.c.l.b16 %v16
    %v57 = vunpack.c.l.b16 %v17
    %v58 = vunpack.c.l.b16 %v18
    %v59 = vunpack.c.l.b16 %v19
    %v60 = vunpack.c.l.b16 %v20
    %v61 = vunpack.c.l.b16 %v21
    %v62 = vunpack.c.l.b16 %v22
    %v63 = vunpack.c.l.b16 %v23
    %v64 = vunpack.c.l.b16 %v24
    %v65 = vunpack.c.l.b16 %v25
    %v66 = vunpack.c.l.b16 %v26
    %v67 = vunpack.c.l.b16 %v27
    %v68 = vunpack.c.l.b16 %v28
    %v69 = vunpack.c.l.b16 %v29
    %v70 = vunpack.c.l.b16 %v30
    %v71 = vunpack.c.l.b16 %v31
    %v72 = vpack.c.b16 %v57, %v56
    %v73 = vpack.c.b16 %v59, %v58
    %v74 = vpack.c.b16 %v61, %v60
    %v75 = vpack.c.b16 %v63, %v62
    %v76 = vpack.c.b16 %v65, %v64
    %v77 = vpack.c.b16 %v67, %v66
    %v78 = vpack.c.b16 %v69, %v68
    %v79 = vpack.c.b16 %v71, %v70
    %v88 = vunpack.c.l.b16 %v32
    %v89 = vunpack.c.l.b16 %v33
    %v90 = vunpack.c.l.b16 %v34
    %v91 = vunpack.c.l.b16 %v35
    %v92 = vunpack.c.l.b16 %v36
    %v93 = vunpack.c.l.b16 %v37
    %v94 = vunpack.c.l.b16 %v38
    %v95 = vunpack.c.l.b16 %v39
    %v96 = vpack.c.b16 %v89, %v88
    %v97 = vpack.c.b16 %v91, %v90
    %v98 = vpack.c.b16 %v93, %v92
    %v99 = vpack.c.b16 %v95, %v94
    %vm104 = vcmask 523264
    %v106 = vsel %vm104, %v72, 0
    %v109 = vsel %vm104, %v73, 0
    %v112 = vsel %vm104, %v74, 0
    %v115 = vsel %vm104, %v75, 0
    %v118 = vsel %vm104, %v76, 0
    %v121 = vsel %vm104, %v77, 0
    %v124 = vsel %vm104, %v78, 0
    %v127 = vsel %vm104, %v79, 0
    %129 = vmatpush.bf16.msra.mxu0 0
    %130 = vmatpush.bf16.msra.mxu0 0
    %131 = vmatpush.bf16.msra.mxu0 0
    %132 = vmatpush.bf16.msra.mxu0 0
    %133 = vmatpush.bf16.msra.mxu0 %v99
    %134 = vmatpush.bf16.msra.mxu0 %v98
    %135 = vmatpush.bf16.msra.mxu0 %v97
    %136 = vmatpush.bf16.msra.mxu0 %v96
    %137 = vmatmul.bf16.gmra.mxu0 %v106
    %v138 = vpop.f32.mrf.mxu0
    %v139 = vadd.f32 0.0, %v138
    %v140 = vpop.f32.mrf.mxu0
    %v141 = vadd.f32 0.0, %v140
    %142 = vmatmul.bf16.gmra.mxu0 %v109
    %v143 = vpop.f32.mrf.mxu0
    %v144 = vadd.f32 0.0, %v143
    %v145 = vpop.f32.mrf.mxu0
    %v146 = vadd.f32 0.0, %v145
    %147 = vmatmul.bf16.gmra.mxu0 %v112
    %v148 = vpop.f32.mrf.mxu0
    %v149 = vadd.f32 0.0, %v148
    %v150 = vpop.f32.mrf.mxu0
    %v151 = vadd.f32 0.0, %v150
    %152 = vmatmul.bf16.gmra.mxu0 %v115
    %v153 = vpop.f32.mrf.mxu0
    %v154 = vadd.f32 0.0, %v153
    %v155 = vpop.f32.mrf.mxu0
    %v156 = vadd.f32 0.0, %v155
    %157 = vmatmul.bf16.gmra.mxu0 %v118
    %v158 = vpop.f32.mrf.mxu0
    %v159 = vadd.f32 0.0, %v158
    %v160 = vpop.f32.mrf.mxu0
    %v161 = vadd.f32 0.0, %v160
    %162 = vmatmul.bf16.gmra.mxu0 %v121
    %v163 = vpop.f32.mrf.mxu0
    %v164 = vadd.f32 0.0, %v163
    %v165 = vpop.f32.mrf.mxu0
    %v166 = vadd.f32 0.0, %v165
    %167 = vmatmul.bf16.gmra.mxu0 %v124
    %v168 = vpop.f32.mrf.mxu0
    %v169 = vadd.f32 0.0, %v168
    %v170 = vpop.f32.mrf.mxu0
    %v171 = vadd.f32 0.0, %v170
    %172 = vmatmul.bf16.gmra.mxu0 %v127
    %v173 = vpop.f32.mrf.mxu0
    %v174 = vadd.f32 0.0, %v173
    %v175 = vpop.f32.mrf.mxu0
    %v176 = vadd.f32 0.0, %v175
    %177 = vdwg.mxu0
    %v178 = vld [vmem:[%s2] sm:$0xff]
    %v179 = vld [vmem:[%s2 + $0x8] sm:$0xff]
    %v180 = vld [vmem:[%s2 + $0x10] sm:$0xff]
    %v181 = vld [vmem:[%s2 + $0x18] sm:$0xff]
    %v182 = vld [vmem:[%s2 + $0x20] sm:$0xff]
    %v183 = vld [vmem:[%s2 + $0x28] sm:$0xff]
    %v184 = vld [vmem:[%s2 + $0x30] sm:$0xff]
    %v185 = vld [vmem:[%s2 + $0x38] sm:$0xff]
    %v186 = vld [vmem:[%s2 + $0x40] sm:$0xff]
    %v187 = vld [vmem:[%s2 + $0x48] sm:$0xff]
    %v188 = vld [vmem:[%s2 + $0x50] sm:$0xff]
    %v189 = vld [vmem:[%s2 + $0x58] sm:$0xff]
    %v190 = vld [vmem:[%s2 + $0x60] sm:$0xff]
    %v191 = vld [vmem:[%s2 + $0x68] sm:$0xff]
    %v192 = vld [vmem:[%s2 + $0x70] sm:$0xff]
    %v193 = vld [vmem:[%s2 + $0x78] sm:$0xff]
    %v194 = vmul.f32 %v178, 0.5
    %v195 = vmul.f32 %v179, 0.5
    %v196 = vmul.f32 %v180, 0.5
    %v197 = vmul.f32 %v181, 0.5
    %v198 = vmul.f32 %v182, 0.5
    %v199 = vmul.f32 %v183, 0.5
    %v200 = vmul.f32 %v184, 0.5
    %v201 = vmul.f32 %v185, 0.5
    %v202 = vmul.f32 %v186, 0.5
    %v203 = vmul.f32 %v187, 0.5
    %v204 = vmul.f32 %v188, 0.5
    %v205 = vmul.f32 %v189, 0.5
    %v206 = vmul.f32 %v190, 0.5
    %v207 = vmul.f32 %v191, 0.5
    %v208 = vmul.f32 %v192, 0.5
    %v209 = vmul.f32 %v193, 0.5
    %v210 = vmul.f32 %v139, 0.5
    %v211 = vmul.f32 %v141, 0.5
    %v212 = vmul.f32 %v144, 0.5
    %v213 = vmul.f32 %v146, 0.5
    %v214 = vmul.f32 %v149, 0.5
    %v215 = vmul.f32 %v151, 0.5
    %v216 = vmul.f32 %v154, 0.5
    %v217 = vmul.f32 %v156, 0.5
    %v218 = vmul.f32 %v159, 0.5
    %v219 = vmul.f32 %v161, 0.5
    %v220 = vmul.f32 %v164, 0.5
    %v221 = vmul.f32 %v166, 0.5
    %v222 = vmul.f32 %v169, 0.5
    %v223 = vmul.f32 %v171, 0.5
    %v224 = vmul.f32 %v174, 0.5
    %v225 = vmul.f32 %v176, 0.5
    %v226 = vadd.f32 %v194, %v210
    %v227 = vadd.f32 %v195, %v211
    %v228 = vadd.f32 %v196, %v212
    %v229 = vadd.f32 %v197, %v213
    %v230 = vadd.f32 %v198, %v214
    %v231 = vadd.f32 %v199, %v215
    %v232 = vadd.f32 %v200, %v216
    %v233 = vadd.f32 %v201, %v217
    %v234 = vadd.f32 %v202, %v218
    %v235 = vadd.f32 %v203, %v219
    %v236 = vadd.f32 %v204, %v220
    %v237 = vadd.f32 %v205, %v221
    %v238 = vadd.f32 %v206, %v222
    %v239 = vadd.f32 %v207, %v223
    %v240 = vadd.f32 %v208, %v224
    %v241 = vadd.f32 %v209, %v225
    %vm242 = vcmask 130048
    %243 = vst.msk [vmem:[#allocation2] sm:$0xff] %vm242, %v226
    %244 = vst.msk [vmem:[#allocation2 + $0x8] sm:$0xff] %vm242, %v227
    %245 = vst.msk [vmem:[#allocation2 + $0x10] sm:$0xff] %vm242, %v228
    %246 = vst.msk [vmem:[#allocation2 + $0x18] sm:$0xff] %vm242, %v229
    %247 = vst.msk [vmem:[#allocation2 + $0x20] sm:$0xff] %vm242, %v230
    %248 = vst.msk [vmem:[#allocation2 + $0x28] sm:$0xff] %vm242, %v231
    %249 = vst.msk [vmem:[#allocation2 + $0x30] sm:$0xff] %vm242, %v232
    %250 = vst.msk [vmem:[#allocation2 + $0x38] sm:$0xff] %vm242, %v233
    %251 = vst.msk [vmem:[#allocation2 + $0x40] sm:$0xff] %vm242, %v234
    %252 = vst.msk [vmem:[#allocation2 + $0x48] sm:$0xff] %vm242, %v235
    %253 = vst.msk [vmem:[#allocation2 + $0x50] sm:$0xff] %vm242, %v236
    %254 = vst.msk [vmem:[#allocation2 + $0x58] sm:$0xff] %vm242, %v237
    %255 = vst.msk [vmem:[#allocation2 + $0x60] sm:$0xff] %vm242, %v238
    %256 = vst.msk [vmem:[#allocation2 + $0x68] sm:$0xff] %vm242, %v239
    %257 = vst.msk [vmem:[#allocation2 + $0x70] sm:$0xff] %vm242, %v240
    %258 = vst.msk [vmem:[#allocation2 + $0x78] sm:$0xff] %vm242, %v241
    // Predicated region
    $region14: #{glu_block_forward.15} parent=1 // pred_check
      _
    $region15: #{glu_block_forward.15} parent=1 // pred_check_branch
      %260 = sbr.rel (0) target = $region17
    $region16: #{glu_block_forward.15} parent=1 // pred_region
      %262 = vsyncadd [#allocation3], 0
      %s263 = sshll.u32 [#allocation2], 4
      %s264 = int_to_ptr.vmem [resolvable:$true] %s263
      %s265 = sshll.u32 %s3, 4
      %s266 = int_to_ptr.hbm [resolvable:$true] %s265
      %271 = dma.vmem_to_hbm [thread:$0]  %s264, 2048, %s266, [#allocation3], 128, 128, 8
    $region17: #{glu_block_forward.15} parent=1 // pred_fallthru
      _
    // Predicated region
    $region18: #{glu_block_forward.15} parent=1 // pred_check
      _
    $region19: #{glu_block_forward.15} parent=1 // pred_check_branch
      %273 = sbr.rel (0) target = $region21
    $region20: #{glu_block_forward.15} parent=1 // pred_region
      %275 = dma.done [#allocation3], 2048
    $region21: #{glu_block_forward.15} parent=1 // pred_fallthru
      _
    %276 = vsyncpa [#allocation3], 1

</llo_original>
